<compile_context>
chip_gen: v6e
topology: v6e:2x2x1
jax: 0.10.0
libtpu: 0.0.40
codegen_flags: <defaults>
</compile_context>

<pallas_src>
import functools
import math

import jax
import jax.numpy as jnp
import numpy as np
from jax.experimental import pallas as pl
from jax.experimental.pallas import tpu as pltpu

EPS = 1e-6

# adaLN chunk order (matches torch .chunk(9, dim=1))
SH_SA, SC_SA, G_SA, SH_CA, SC_CA, G_CA, SH_MLP, SC_MLP, G_MLP = range(9)


def _vmem_limit_bytes():
    """Per-chip VMEM budget: physical capacity minus headroom, 48 MiB fallback."""
    default = 48 * 1024 * 1024
    try:
        info = pltpu.get_tpu_info()
        cap = int(getattr(info, "vmem_capacity_bytes", 0))
        if cap > 0:
            return int(min(max(default, cap - 16 * 1024 * 1024), 112 * 1024 * 1024))
    except Exception:
        pass
    return default


VMEM_LIMIT = _vmem_limit_bytes()


def _tile(dim, pref, align):
    """Largest multiple of `align` <= pref that divides `dim`; else the full dim."""
    if dim <= pref or dim % align != 0:
        return dim
    t = (pref // align) * align
    while t >= align:
        if dim % t == 0:
            return t
        t -= align
    return dim


def _cparams(semantics):
    return pltpu.CompilerParams(
        dimension_semantics=semantics,
        vmem_limit_bytes=VMEM_LIMIT,
    )


def _gelu_tanh(x):
    # tanh-approx GELU (EUP tanh); erf-GELU deviation ~1e-3, under test tolerance.
    c = math.sqrt(2.0 / math.pi)
    return 0.5 * x * (1.0 + jnp.tanh(c * (x + 0.044715 * x * x * x)))


# ----------------------------- Pallas kernels -----------------------------

def _normmod_linear_kernel(x_ref, nw_ref, mod_ref, w_ref, b_ref, o_ref,
                           *, sc_idx, sh_idx, eps, gelu, n_chunk):
    """RMSNorm + adaLN modulate + Linear(+bias, optional GELU).

    x_ref  : (1, tl, H) f32      nw_ref : (1, H) f32
    mod_ref: (1, 9, H) f32       w_ref  : (H, N) bf16 (VMEM-resident)
    b_ref  : (1, N) f32          o_ref  : (1, tl, N) bf16
    """
    x = x_ref[0].astype(jnp.float32)
    r = jax.lax.rsqrt(jnp.mean(x * x, axis=-1, keepdims=True) + eps)
    y = x * r * nw_ref[...].astype(jnp.float32)                 # RMSNorm (trainable w)
    sc = mod_ref[0, sc_idx:sc_idx + 1, :]
    sh = mod_ref[0, sh_idx:sh_idx + 1, :]
    y = y * (1.0 + sc) + sh                                      # adaLN modulate
    yb = y.astype(jnp.bfloat16)                                  # prologue computed once

    N = o_ref.shape[-1]
    for j0 in range(0, N, n_chunk):                              # static chunk loop
        acc = jnp.dot(yb, w_ref[:, j0:j0 + n_chunk],
                      preferred_element_type=jnp.float32)
        acc = acc + b_ref[:, j0:j0 + n_chunk]
        if gelu:
            acc = _gelu_tanh(acc)
        o_ref[0, :, j0:j0 + n_chunk] = acc.astype(o_ref.dtype)


def _attn_proj_res_kernel(q_ref, k_ref, v_ref, pw_ref, mod_ref, x_ref, o_ref,
                          *, nh, d, gate_idx, eps, scale):
    """QK-RMSNorm attention + fused output projection + gated residual.

    q_ref : (1, tq, H) bf16     k_ref/v_ref : (1, Lk, H) bf16 (K/V resident per batch)
    pw_ref: (H, H) bf16         mod_ref     : (1, 9, H) f32
    x_ref : (1, tq, H) f32      o_ref       : (1, tq, H) f32  (aliased with x)
    """
    tq = q_ref.shape[1]
    H = pw_ref.shape[1]
    acc = jnp.zeros((tq, H), jnp.float32)
    # TODO(synk): batch head groups of 128//d heads into one dot_general for small d.
    for h in range(nh):
        lo, hi = h * d, (h + 1) * d
        q = q_ref[0, :, lo:hi].astype(jnp.float32)
        k = k_ref[0, :, lo:hi].astype(jnp.float32)
        q = q * (jax.lax.rsqrt(jnp.mean(q * q, axis=-1, keepdims=True) + eps) * scale)
        k = k * jax.lax.rsqrt(jnp.mean(k * k, axis=-1, keepdims=True) + eps)
        s = jax.lax.dot_general(q.astype(jnp.bfloat16), k.astype(jnp.bfloat16),
                                (((1,), (1,)), ((), ())),
                                preferred_element_type=jnp.float32)
        m = jnp.max(s, axis=-1, keepdims=True)
        p = jnp.exp(s - m)
        p = p * pl.reciprocal(jnp.sum(p, axis=-1, keepdims=True), approx=True)
        og = jnp.dot(p.astype(jnp.bfloat16), v_ref[0, :, lo:hi],
                     preferred_element_type=jnp.float32)
        # fused per-head projection: out += og @ proj_w[h*d:(h+1)*d, :]
        acc = acc + jnp.dot(og.astype(jnp.bfloat16), pw_ref[lo:hi, :],
                            preferred_element_type=jnp.float32)
    gate = mod_ref[0, gate_idx:gate_idx + 1, :]
    o_ref[0] = x_ref[0] + acc * gate


def _linear_gated_res_kernel(y_ref, w_ref, b_ref, x_ref, mod_ref, o_ref, *, gate_idx):
    """out = x + (y @ W + b) * gate  (MLP output projection)."""
    acc = jnp.dot(y_ref[0], w_ref[...], preferred_element_type=jnp.float32)
    acc = acc + b_ref[...]
    gate = mod_ref[0, gate_idx:gate_idx + 1, :]
    o_ref[0] = x_ref[0] + acc * gate


def _linear_kernel(x_ref, w_ref, b_ref, o_ref):
    acc = jnp.dot(x_ref[0].astype(jnp.bfloat16), w_ref[...],
                  preferred_element_type=jnp.float32)
    o_ref[0] = (acc + b_ref[...]).astype(o_ref.dtype)


# ----------------------------- wrappers -----------------------------

def normmod_linear(x, norm_w, mod, sc_idx, sh_idx, w_bf16, bias,
                   *, gelu=False, out_dtype=jnp.bfloat16, eps=EPS):
    B, L, H = x.shape
    N = w_bf16.shape[1]
    tl = _tile(L, 512, 16)
    n_chunk = _tile(N, 512, 128)
    kern = functools.partial(_normmod_linear_kernel, sc_idx=sc_idx, sh_idx=sh_idx,
                             eps=eps, gelu=gelu, n_chunk=n_chunk)
    return pl.pallas_call(
        kern,
        grid=(B, L // tl),
        in_specs=[
            pl.BlockSpec((1, tl, H), lambda b, i: (b, i, 0)),
            pl.BlockSpec((1, H), lambda b, i: (0, 0)),
            pl.BlockSpec((1, 9, H), lambda b, i: (b, 0, 0)),
            pl.BlockSpec((H, N), lambda b, i: (0, 0)),      # resident weight
            pl.BlockSpec((1, N), lambda b, i: (0, 0)),
        ],
        out_specs=pl.BlockSpec((1, tl, N), lambda b, i: (b, i, 0)),
        out_shape=jax.ShapeDtypeStruct((B, L, N), out_dtype),
        compiler_params=_cparams(("parallel", "parallel")),
    )(x, norm_w.reshape(1, H), mod, w_bf16, bias.reshape(1, N))


def attention_proj_residual(q_arr, kv_arr, k_col, v_col, proj_w, x, mod, gate_idx,
                            *, nh, d, eps=EPS):
    """softmax((RMS(q) RMS(k)^T)/sqrt(d)) V, projection and gated residual fused."""
    B, L, H = x.shape
    Lk = kv_arr.shape[1]
    tq = _tile(L, 256, 16)
    kern = functools.partial(_attn_proj_res_kernel, nh=nh, d=d, gate_idx=gate_idx,
                             eps=eps, scale=1.0 / math.sqrt(d))
    return pl.pallas_call(
        kern,
        grid=(B, L // tq),
        in_specs=[
            pl.BlockSpec((1, tq, H), lambda b, i: (b, i, 0)),        # Q tile
            pl.BlockSpec((1, Lk, H), lambda b, i: (b, 0, k_col)),    # K (resident / batch)
            pl.BlockSpec((1, Lk, H), lambda b, i: (b, 0, v_col)),    # V (resident / batch)
            pl.BlockSpec((H, H), lambda b, i: (0, 0)),               # resident proj weight
            pl.BlockSpec((1, 9, H), lambda b, i: (b, 0, 0)),         # adaLN table
            pl.BlockSpec((1, tq, H), lambda b, i: (b, i, 0)),        # residual x
        ],
        out_specs=pl.BlockSpec((1, tq, H), lambda b, i: (b, i, 0)),
        out_shape=jax.ShapeDtypeStruct((B, L, H), jnp.float32),
        input_output_aliases={5: 0},     # reuse x's HBM buffer for the new residual
        compiler_params=_cparams(("parallel", "parallel")),
    )(q_arr, kv_arr, kv_arr, proj_w, mod, x)


def linear_gated_residual(y, w_bf16, bias, x, mod, gate_idx):
    B, L, K = y.shape
    H = x.shape[-1]
    tl = _tile(L, 512, 16)
    kern = functools.partial(_linear_gated_res_kernel, gate_idx=gate_idx)
    return pl.pallas_call(
        kern,
        grid=(B, L // tl),
        in_specs=[
            pl.BlockSpec((1, tl, K), lambda b, i: (b, i, 0)),
            pl.BlockSpec((K, H), lambda b, i: (0, 0)),       # resident weight
            pl.BlockSpec((1, H), lambda b, i: (0, 0)),
            pl.BlockSpec((1, tl, H), lambda b, i: (b, i, 0)),
            pl.BlockSpec((1, 9, H), lambda b, i: (b, 0, 0)),
        ],
        out_specs=pl.BlockSpec((1, tl, H), lambda b, i: (b, i, 0)),
        out_shape=jax.ShapeDtypeStruct((B, L, H), jnp.float32),
        input_output_aliases={3: 0},
        compiler_params=_cparams(("parallel", "parallel")),
    )(y, w_bf16, bias.reshape(1, H), x, mod)


def linear3d(x, w_bf16, bias, *, out_dtype=jnp.bfloat16):
    B, L, K = x.shape
    N = w_bf16.shape[1]
    tl = _tile(L, 512, 16)
    return pl.pallas_call(
        _linear_kernel,
        grid=(B, L // tl),
        in_specs=[
            pl.BlockSpec((1, tl, K), lambda b, i: (b, i, 0)),
            pl.BlockSpec((K, N), lambda b, i: (0, 0)),       # resident weight
            pl.BlockSpec((1, N), lambda b, i: (0, 0)),
        ],
        out_specs=pl.BlockSpec((1, tl, N), lambda b, i: (b, i, 0)),
        out_shape=jax.ShapeDtypeStruct((B, L, N), out_dtype),
        compiler_params=_cparams(("parallel", "parallel")),
    )(x, w_bf16, bias.reshape(1, N))


# ----------------------------- DiTBlock forward -----------------------------

_MATMUL_WEIGHTS = ("qkv_w", "proj_w", "q_w", "ckv_w", "proj_ca_w", "mlp_w1", "mlp_w2")


def prepare_params(raw):
    """Cast matmul weights to bf16 (MXU operands); biases / norm / adaLN stay f32."""
    p = dict(raw)
    for k in _MATMUL_WEIGHTS:
        p[k] = raw[k].astype(jnp.bfloat16)
    return p


def dit_block_forward(params, x, context, c, *, num_heads):
    B, L, H = x.shape
    nh = num_heads
    d = H // nh

    # adaLN: SiLU + Linear in plain XLA (only B rows of MXU work -> not worth a kernel).
    mod = (jax.nn.silu(c) @ params["ada_w"] + params["ada_b"]).reshape(B, 9, H)

    # ---- self attention (qkv linear -> attention + proj + gated residual) ----
    qkv = normmod_linear(x, params["norm1_w"], mod, SC_SA, SH_SA,
                         params["qkv_w"], params["qkv_b"])              # (B, L, 3H) bf16
    x = attention_proj_residual(qkv, qkv, 1, 2, params["proj_w"], x, mod, G_SA,
                                nh=nh, d=d)

    # returned v in (B, nh, L, d) layout, matching the torch module
    v_out = (qkv[:, :, 2 * H:].astype(jnp.float32)
             .reshape(B, L, nh, d).transpose(0, 2, 1, 3))

    # ---- cross attention ----
    q_ca = normmod_linear(x, params["norm2_w"], mod, SC_CA, SH_CA,
                          params["q_w"], params["q_b"])                  # (B, L, H) bf16
    kv_ca = linear3d(context, params["ckv_w"], params["ckv_b"])          # (B, Lc, 2H) bf16
    x = attention_proj_residual(q_ca, kv_ca, 0, 1, params["proj_ca_w"], x, mod, G_CA,
                                nh=nh, d=d)

    # ---- MLP ----
    h = normmod_linear(x, params["norm3_w"], mod, SC_MLP, SH_MLP,
                       params["mlp_w1"], params["mlp_b1"], gelu=True)    # (B, L, 4H) bf16
    x = linear_gated_residual(h, params["mlp_w2"], params["mlp_b2"], x, mod, G_MLP)

    return x, v_out


# ----------------------------- pure-JAX reference (f32) -----------------------------

def _rms(x, w=None, eps=EPS):
    xf = x.astype(jnp.float32)
    n = jax.lax.rsqrt(jnp.mean(xf * xf, axis=-1, keepdims=True) + eps)
    y = xf * n
    return y * w if w is not None else y


def ref_forward(params, x, context, c, *, num_heads):
    B, L, H = x.shape
    nh = num_heads
    d = H // nh
    s = jax.nn.silu(c)
    mod = s @ params["ada_w"] + params["ada_b"]
    ch = [mod[:, i * H:(i + 1) * H][:, None, :] for i in range(9)]
    (sh_sa, sc_sa, g_sa, sh_ca, sc_ca, g_ca, sh_m, sc_m, g_m) = ch

    def sdpa(q, k, v):
        a = jnp.einsum("bhld,bhmd->bhlm", _rms(q), _rms(k)) / math.sqrt(d)
        p = jax.nn.softmax(a, axis=-1)
        return jnp.einsum("bhlm,bhmd->bhld", p, v)

    nx = _rms(x, params["norm1_w"]) * (1 + sc_sa) + sh_sa
    qkv = (nx.reshape(B * L, H) @ params["qkv_w"] + params["qkv_b"]).reshape(B, L, 3, nh, d)
    q = jnp.transpose(qkv[:, :, 0], (0, 2, 1, 3))
    k = jnp.transpose(qkv[:, :, 1], (0, 2, 1, 3))
    v = jnp.transpose(qkv[:, :, 2], (0, 2, 1, 3))
    o = jnp.transpose(sdpa(q, k, v), (0, 2, 1, 3)).reshape(B, L, H) @ params["proj_w"]
    x = x + o * g_sa

    Lc, C = context.shape[1], context.shape[2]
    nx = _rms(x, params["norm2_w"]) * (1 + sc_ca) + sh_ca
    qc = (nx.reshape(B * L, H) @ params["q_w"] + params["q_b"]).reshape(B, L, nh, d)
    qc = jnp.transpose(qc, (0, 2, 1, 3))
    kv = (context.reshape(B * Lc, C) @ params["ckv_w"] + params["ckv_b"]).reshape(B, Lc, 2, nh, d)
    kc = jnp.transpose(kv[:, :, 0], (0, 2, 1, 3))
    vc = jnp.transpose(kv[:, :, 1], (0, 2, 1, 3))
    o = jnp.transpose(sdpa(qc, kc, vc), (0, 2, 1, 3)).reshape(B, L, H) @ params["proj_ca_w"]
    x = x + o * g_ca

    nx = _rms(x, params["norm3_w"]) * (1 + sc_m) + sh_m
    h = nx.reshape(B * L, H) @ params["mlp_w1"] + params["mlp_b1"]
    h = 0.5 * h * (1.0 + jax.lax.erf(h / math.sqrt(2.0)))     # exact erf-GELU reference
    o = (h @ params["mlp_w2"] + params["mlp_b2"]).reshape(B, L, H)
    x = x + o * g_m
    return x, v


# ----------------------------- main -----------------------------

if __name__ == "__main__":
    B, L, H = 2, 32, 128
    num_heads = 4                       # head_dim = 32
    Lc, C = 16, 64
    mlp_hidden = int(H * 4.0)

    key = jax.random.PRNGKey(0)
    ks = jax.random.split(key, 20)

    def rnd(k, shape, scale=0.05):
        return (scale * jax.random.normal(k, shape)).astype(jnp.float32)

    # NOTE: the module zero-inits adaLN weights; small random values are used here
    # so the modulation path is actually exercised (synthetic init).
    raw_params = {
        "norm1_w": jnp.ones((H,), jnp.float32),
        "norm2_w": jnp.ones((H,), jnp.float32),
        "norm3_w": jnp.ones((H,), jnp.float32),
        "ada_w": rnd(ks[0], (H, 9 * H)),
        "ada_b": rnd(ks[1], (9 * H,)),
        "qkv_w": rnd(ks[2], (H, 3 * H)),
        "qkv_b": rnd(ks[3], (3 * H,)),
        "proj_w": rnd(ks[4], (H, H)),
        "q_w": rnd(ks[5], (H, H)),
        "q_b": rnd(ks[6], (H,)),
        "ckv_w": rnd(ks[7], (C, 2 * H)),
        "ckv_b": rnd(ks[8], (2 * H,)),
        "proj_ca_w": rnd(ks[9], (H, H)),
        "mlp_w1": rnd(ks[10], (H, mlp_hidden)),
        "mlp_b1": rnd(ks[11], (mlp_hidden,)),
        "mlp_w2": rnd(ks[12], (mlp_hidden, H)),
        "mlp_b2": rnd(ks[13], (H,)),
    }

    x = jax.random.normal(ks[14], (B, L, H), jnp.float32)
    context = jax.random.normal(ks[15], (B, Lc, C), jnp.float32)
    c = jax.random.normal(ks[16], (B, H), jnp.float32)

    params = prepare_params(raw_params)
    fwd = jax.jit(functools.partial(dit_block_forward, num_heads=num_heads))
    out_x, out_v = fwd(params, x, context, c)
    out_x = jax.block_until_ready(out_x)
    out_v = jax.block_until_ready(out_v)

    ref_x, ref_v = ref_forward(raw_params, x, context, c, num_heads=num_heads)
    # bf16 MXU operands / bf16 intermediates / tanh-GELU set the numerical noise floor.
    np.testing.assert_allclose(np.asarray(out_x), np.asarray(ref_x), rtol=2e-2, atol=2e-2)
    np.testing.assert_allclose(np.asarray(out_v), np.asarray(ref_v), rtol=2e-2, atol=2e-2)

    print("KERNEL_OK")
</pallas_src>

<mosaic_0001>
module attributes {stable_mosaic.version = 11 : i64} {
  func.func @_linear_kernel(%arg0: i32, %arg1: i32, %arg2: memref<1x16x64xf32, #tpu.memory_space<vmem>>, %arg3: memref<64x256xbf16, #tpu.memory_space<vmem>>, %arg4: memref<1x256xf32, #tpu.memory_space<vmem>>, %arg5: memref<1x16x256xbf16, #tpu.memory_space<vmem>>) attributes {dimension_semantics = [#tpu.dimension_semantics<parallel>, #tpu.dimension_semantics<parallel>], iteration_bounds = array<i64: 2, 1>, scalar_prefetch = 0 : i64, scratch_operands = 0 : i64, tpu.core_type = #tpu.core_type<tc>, window_params = [{transform_indices = @transform_0, window_bounds = array<i64: 1, 16, 64>}, {pipeline_mode = #tpu.pipeline_mode<synchronous>, transform_indices = @transform_1, window_bounds = array<i64: 64, 256>}, {pipeline_mode = #tpu.pipeline_mode<synchronous>, transform_indices = @transform_2, window_bounds = array<i64: 1, 256>}, {transform_indices = @transform_3, window_bounds = array<i64: 1, 16, 256>}]} {
    %c0 = arith.constant 0 : index
    %c0_0 = arith.constant 0 : index
    %c0_1 = arith.constant 0 : index
    %0 = vector.load %arg2[%c0, %c0_0, %c0_1] : memref<1x16x64xf32, #tpu.memory_space<vmem>>, vector<1x16x64xf32>
    %1 = vector.shape_cast %0 : vector<1x16x64xf32> to vector<16x64xf32>
    %2 = arith.truncf %1 : vector<16x64xf32> to vector<16x64xbf16>
    %c0_2 = arith.constant 0 : index
    %c0_3 = arith.constant 0 : index
    %3 = vector.load %arg3[%c0_2, %c0_3] : memref<64x256xbf16, #tpu.memory_space<vmem>>, vector<64x256xbf16>
    %cst = arith.constant dense<0.000000e+00> : vector<16x256xf32>
    %4 = tpu.matmul %2, %3, %cst {dimension_numbers = #tpu.dot_dimension_numbers<[1], [0], [0], [1], [0, 0, 1, 1], [], []>} : vector<16x64xbf16>, vector<64x256xbf16>, vector<16x256xf32> -> vector<16x256xf32>
    %c0_4 = arith.constant 0 : index
    %c0_5 = arith.constant 0 : index
    %5 = vector.load %arg4[%c0_4, %c0_5] : memref<1x256xf32, #tpu.memory_space<vmem>>, vector<1x256xf32>
    %6 = vector.broadcast %5 : vector<1x256xf32> to vector<16x256xf32>
    %7 = arith.addf %4, %6 : vector<16x256xf32>
    %8 = arith.truncf %7 : vector<16x256xf32> to vector<16x256xbf16>
    %c0_6 = arith.constant 0 : index
    %c0_7 = arith.constant 0 : index
    %c0_8 = arith.constant 0 : index
    %9 = vector.load %arg5[%c0_6, %c0_7, %c0_8] : memref<1x16x256xbf16, #tpu.memory_space<vmem>>, vector<1x16x256xbf16>
    %10 = vector.shape_cast %9 : vector<1x16x256xbf16> to vector<16x256xbf16>
    %11 = vector.shape_cast %8 : vector<16x256xbf16> to vector<1x16x256xbf16>
    tpu.vector_store %arg5[%c0_6, %c0_7, %c0_8], %11 {strides = array<i32>} : memref<1x16x256xbf16, #tpu.memory_space<vmem>>, vector<1x16x256xbf16>,
    return
  }
  func.func @transform_0(%arg0: i32, %arg1: i32) -> (i32, i32, i32) {
    %c0_i32 = arith.constant 0 : i32
    %c0_i32_0 = arith.constant 0 : i32
    return %arg0, %arg1, %c0_i32 : i32, i32, i32
  }
  func.func @transform_1(%arg0: i32, %arg1: i32) -> (i32, i32) {
    %c0_i32 = arith.constant 0 : i32
    %c0_i32_0 = arith.constant 0 : i32
    %c0_i32_1 = arith.constant 0 : i32
    return %c0_i32, %c0_i32_0 : i32, i32
  }
  func.func @transform_2(%arg0: i32, %arg1: i32) -> (i32, i32) {
    %c0_i32 = arith.constant 0 : i32
    %c0_i32_0 = arith.constant 0 : i32
    %c0_i32_1 = arith.constant 0 : i32
    return %c0_i32, %c0_i32_0 : i32, i32
  }
  func.func @transform_3(%arg0: i32, %arg1: i32) -> (i32, i32, i32) {
    %c0_i32 = arith.constant 0 : i32
    %c0_i32_0 = arith.constant 0 : i32
    return %arg0, %arg1, %c0_i32 : i32, i32, i32
  }
}

module attributes {stable_mosaic.version = 11 : i64} {
  func.func @_normmod_linear_kernel(%arg0: i32, %arg1: i32, %arg2: memref<1x32x128xf32, #tpu.memory_space<vmem>>, %arg3: memref<1x128xf32, #tpu.memory_space<vmem>>, %arg4: memref<1x9x128xf32, #tpu.memory_space<vmem>>, %arg5: memref<128x128xbf16, #tpu.memory_space<vmem>>, %arg6: memref<1x128xf32, #tpu.memory_space<vmem>>, %arg7: memref<1x32x128xbf16, #tpu.memory_space<vmem>>) attributes {dimension_semantics = [#tpu.dimension_semantics<parallel>, #tpu.dimension_semantics<parallel>], iteration_bounds = array<i64: 2, 1>, scalar_prefetch = 0 : i64, scratch_operands = 0 : i64, tpu.core_type = #tpu.core_type<tc>, window_params = [{transform_indices = @transform_0, window_bounds = array<i64: 1, 32, 128>}, {pipeline_mode = #tpu.pipeline_mode<synchronous>, transform_indices = @transform_1, window_bounds = array<i64: 1, 128>}, {transform_indices = @transform_2, window_bounds = array<i64: 1, 9, 128>}, {pipeline_mode = #tpu.pipeline_mode<synchronous>, transform_indices = @transform_3, window_bounds = array<i64: 128, 128>}, {pipeline_mode = #tpu.pipeline_mode<synchronous>, transform_indices = @transform_4, window_bounds = array<i64: 1, 128>}, {transform_indices = @transform_5, window_bounds = array<i64: 1, 32, 128>}]} {
    %c0 = arith.constant 0 : index
    %c0_0 = arith.constant 0 : index
    %c0_1 = arith.constant 0 : index
    %0 = vector.load %arg2[%c0, %c0_0, %c0_1] : memref<1x32x128xf32, #tpu.memory_space<vmem>>, vector<1x32x128xf32>
    %1 = vector.shape_cast %0 : vector<1x32x128xf32> to vector<32x128xf32>
    %2 = arith.mulf %1, %1 : vector<32x128xf32>
    %cst = arith.constant dense<0.000000e+00> : vector<32xf32>
    %3 = vector.multi_reduction <add>, %2, %cst [1] : vector<32x128xf32> to vector<32xf32>
    %4 = vector.shape_cast %3 : vector<32xf32> to vector<32x1xf32>
    %cst_2 = arith.constant 1.280000e+02 : f32
    %5 = vector.broadcast %cst_2 : f32 to vector<32x1xf32>
    %6 = arith.divf %4, %5 : vector<32x1xf32>
    %cst_3 = arith.constant 9.99999997E-7 : f32
    %7 = vector.broadcast %cst_3 : f32 to vector<32x1xf32>
    %8 = arith.addf %6, %7 : vector<32x1xf32>
    %9 = math.rsqrt %8 : vector<32x1xf32>
    %10 = vector.broadcast %9 : vector<32x1xf32> to vector<32x128xf32>
    %11 = arith.mulf %1, %10 : vector<32x128xf32>
    %c0_4 = arith.constant 0 : index
    %c0_5 = arith.constant 0 : index
    %12 = vector.load %arg3[%c0_4, %c0_5] : memref<1x128xf32, #tpu.memory_space<vmem>>, vector<1x128xf32>
    %13 = vector.broadcast %12 : vector<1x128xf32> to vector<32x128xf32>
    %14 = arith.mulf %11, %13 : vector<32x128xf32>
    %c0_6 = arith.constant 0 : index
    %c4 = arith.constant 4 : index
    %c0_7 = arith.constant 0 : index
    %15 = vector.load %arg4[%c0_6, %c4, %c0_7] : memref<1x9x128xf32, #tpu.memory_space<vmem>>, vector<1x1x128xf32>
    %16 = vector.shape_cast %15 : vector<1x1x128xf32> to vector<1x128xf32>
    %c0_8 = arith.constant 0 : index
    %c3 = arith.constant 3 : index
    %c0_9 = arith.constant 0 : index
    %17 = vector.load %arg4[%c0_8, %c3, %c0_9] : memref<1x9x128xf32, #tpu.memory_space<vmem>>, vector<1x1x128xf32>
    %18 = vector.shape_cast %17 : vector<1x1x128xf32> to vector<1x128xf32>
    %cst_10 = arith.constant 1.000000e+00 : f32
    %19 = vector.broadcast %cst_10 : f32 to vector<1x128xf32>
    %20 = arith.addf %19, %16 : vector<1x128xf32>
    %21 = vector.broadcast %20 : vector<1x128xf32> to vector<32x128xf32>
    %22 = arith.mulf %14, %21 : vector<32x128xf32>
    %23 = vector.broadcast %18 : vector<1x128xf32> to vector<32x128xf32>
    %24 = arith.addf %22, %23 : vector<32x128xf32>
    %25 = arith.truncf %24 : vector<32x128xf32> to vector<32x128xbf16>
    %c0_11 = arith.constant 0 : index
    %c0_12 = arith.constant 0 : index
    %26 = vector.load %arg5[%c0_11, %c0_12] : memref<128x128xbf16, #tpu.memory_space<vmem>>, vector<128x128xbf16>
    %cst_13 = arith.constant dense<0.000000e+00> : vector<32x128xf32>
    %27 = tpu.matmul %25, %26, %cst_13 {dimension_numbers = #tpu.dot_dimension_numbers<[1], [0], [0], [1], [0, 0, 1, 1], [], []>} : vector<32x128xbf16>, vector<128x128xbf16>, vector<32x128xf32> -> vector<32x128xf32>
    %c0_14 = arith.constant 0 : index
    %c0_15 = arith.constant 0 : index
    %28 = vector.load %arg6[%c0_14, %c0_15] : memref<1x128xf32, #tpu.memory_space<vmem>>, vector<1x128xf32>
    %29 = vector.broadcast %28 : vector<1x128xf32> to vector<32x128xf32>
    %30 = arith.addf %27, %29 : vector<32x128xf32>
    %31 = arith.truncf %30 : vector<32x128xf32> to vector<32x128xbf16>
    %c0_16 = arith.constant 0 : index
    %c0_17 = arith.constant 0 : index
    %c0_18 = arith.constant 0 : index
    %32 = vector.load %arg7[%c0_16, %c0_17, %c0_18] : memref<1x32x128xbf16, #tpu.memory_space<vmem>>, vector<1x32x128xbf16>
    %33 = vector.shape_cast %32 : vector<1x32x128xbf16> to vector<32x128xbf16>
    %34 = vector.shape_cast %31 : vector<32x128xbf16> to vector<1x32x128xbf16>
    tpu.vector_store %arg7[%c0_16, %c0_17, %c0_18], %34 {strides = array<i32>} : memref<1x32x128xbf16, #tpu.memory_space<vmem>>, vector<1x32x128xbf16>,
    return
  }
  func.func @transform_0(%arg0: i32, %arg1: i32) -> (i32, i32, i32) {
    %c0_i32 = arith.constant 0 : i32
    %c0_i32_0 = arith.constant 0 : i32
    return %arg0, %arg1, %c0_i32 : i32, i32, i32
  }
  func.func @transform_1(%arg0: i32, %arg1: i32) -> (i32, i32) {
    %c0_i32 = arith.constant 0 : i32
    %c0_i32_0 = arith.constant 0 : i32
    %c0_i32_1 = arith.constant 0 : i32
    return %c0_i32, %c0_i32_0 : i32, i32
  }
  func.func @transform_2(%arg0: i32, %arg1: i32) -> (i32, i32, i32) {
    %c0_i32 = arith.constant 0 : i32
    %c0_i32_0 = arith.constant 0 : i32
    %c0_i32_1 = arith.constant 0 : i32
    return %arg0, %c0_i32, %c0_i32_0 : i32, i32, i32
  }
  func.func @transform_3(%arg0: i32, %arg1: i32) -> (i32, i32) {
    %c0_i32 = arith.constant 0 : i32
    %c0_i32_0 = arith.constant 0 : i32
    %c0_i32_1 = arith.constant 0 : i32
    return %c0_i32, %c0_i32_0 : i32, i32
  }
  func.func @transform_4(%arg0: i32, %arg1: i32) -> (i32, i32) {
    %c0_i32 = arith.constant 0 : i32
    %c0_i32_0 = arith.constant 0 : i32
    %c0_i32_1 = arith.constant 0 : i32
    return %c0_i32, %c0_i32_0 : i32, i32
  }
  func.func @transform_5(%arg0: i32, %arg1: i32) -> (i32, i32, i32) {
    %c0_i32 = arith.constant 0 : i32
    %c0_i32_0 = arith.constant 0 : i32
    return %arg0, %arg1, %c0_i32 : i32, i32, i32
  }
}

module attributes {stable_mosaic.version = 11 : i64} {
  func.func @_normmod_linear_kernel(%arg0: i32, %arg1: i32, %arg2: memref<1x32x128xf32, #tpu.memory_space<vmem>>, %arg3: memref<1x128xf32, #tpu.memory_space<vmem>>, %arg4: memref<1x9x128xf32, #tpu.memory_space<vmem>>, %arg5: memref<128x384xbf16, #tpu.memory_space<vmem>>, %arg6: memref<1x384xf32, #tpu.memory_space<vmem>>, %arg7: memref<1x32x384xbf16, #tpu.memory_space<vmem>>) attributes {dimension_semantics = [#tpu.dimension_semantics<parallel>, #tpu.dimension_semantics<parallel>], iteration_bounds = array<i64: 2, 1>, scalar_prefetch = 0 : i64, scratch_operands = 0 : i64, tpu.core_type = #tpu.core_type<tc>, window_params = [{transform_indices = @transform_0, window_bounds = array<i64: 1, 32, 128>}, {pipeline_mode = #tpu.pipeline_mode<synchronous>, transform_indices = @transform_1, window_bounds = array<i64: 1, 128>}, {transform_indices = @transform_2, window_bounds = array<i64: 1, 9, 128>}, {pipeline_mode = #tpu.pipeline_mode<synchronous>, transform_indices = @transform_3, window_bounds = array<i64: 128, 384>}, {pipeline_mode = #tpu.pipeline_mode<synchronous>, transform_indices = @transform_4, window_bounds = array<i64: 1, 384>}, {transform_indices = @transform_5, window_bounds = array<i64: 1, 32, 384>}]} {
    %c0 = arith.constant 0 : index
    %c0_0 = arith.constant 0 : index
    %c0_1 = arith.constant 0 : index
    %0 = vector.load %arg2[%c0, %c0_0, %c0_1] : memref<1x32x128xf32, #tpu.memory_space<vmem>>, vector<1x32x128xf32>
    %1 = vector.shape_cast %0 : vector<1x32x128xf32> to vector<32x128xf32>
    %2 = arith.mulf %1, %1 : vector<32x128xf32>
    %cst = arith.constant dense<0.000000e+00> : vector<32xf32>
    %3 = vector.multi_reduction <add>, %2, %cst [1] : vector<32x128xf32> to vector<32xf32>
    %4 = vector.shape_cast %3 : vector<32xf32> to vector<32x1xf32>
    %cst_2 = arith.constant 1.280000e+02 : f32
    %5 = vector.broadcast %cst_2 : f32 to vector<32x1xf32>
    %6 = arith.divf %4, %5 : vector<32x1xf32>
    %cst_3 = arith.constant 9.99999997E-7 : f32
    %7 = vector.broadcast %cst_3 : f32 to vector<32x1xf32>
    %8 = arith.addf %6, %7 : vector<32x1xf32>
    %9 = math.rsqrt %8 : vector<32x1xf32>
    %10 = vector.broadcast %9 : vector<32x1xf32> to vector<32x128xf32>
    %11 = arith.mulf %1, %10 : vector<32x128xf32>
    %c0_4 = arith.constant 0 : index
    %c0_5 = arith.constant 0 : index
    %12 = vector.load %arg3[%c0_4, %c0_5] : memref<1x128xf32, #tpu.memory_space<vmem>>, vector<1x128xf32>
    %13 = vector.broadcast %12 : vector<1x128xf32> to vector<32x128xf32>
    %14 = arith.mulf %11, %13 : vector<32x128xf32>
    %c0_6 = arith.constant 0 : index
    %c1 = arith.constant 1 : index
    %c0_7 = arith.constant 0 : index
    %15 = vector.load %arg4[%c0_6, %c1, %c0_7] : memref<1x9x128xf32, #tpu.memory_space<vmem>>, vector<1x1x128xf32>
    %16 = vector.shape_cast %15 : vector<1x1x128xf32> to vector<1x128xf32>
    %c0_8 = arith.constant 0 : index
    %c0_9 = arith.constant 0 : index
    %c0_10 = arith.constant 0 : index
    %17 = vector.load %arg4[%c0_8, %c0_9, %c0_10] : memref<1x9x128xf32, #tpu.memory_space<vmem>>, vector<1x1x128xf32>
    %18 = vector.shape_cast %17 : vector<1x1x128xf32> to vector<1x128xf32>
    %cst_11 = arith.constant 1.000000e+00 : f32
    %19 = vector.broadcast %cst_11 : f32 to vector<1x128xf32>
    %20 = arith.addf %19, %16 : vector<1x128xf32>
    %21 = vector.broadcast %20 : vector<1x128xf32> to vector<32x128xf32>
    %22 = arith.mulf %14, %21 : vector<32x128xf32>
    %23 = vector.broadcast %18 : vector<1x128xf32> to vector<32x128xf32>
    %24 = arith.addf %22, %23 : vector<32x128xf32>
    %25 = arith.truncf %24 : vector<32x128xf32> to vector<32x128xbf16>
    %c0_12 = arith.constant 0 : index
    %c0_13 = arith.constant 0 : index
    %26 = vector.load %arg5[%c0_12, %c0_13] : memref<128x384xbf16, #tpu.memory_space<vmem>>, vector<128x384xbf16>
    %cst_14 = arith.constant dense<0.000000e+00> : vector<32x384xf32>
    %27 = tpu.matmul %25, %26, %cst_14 {dimension_numbers = #tpu.dot_dimension_numbers<[1], [0], [0], [1], [0, 0, 1, 1], [], []>} : vector<32x128xbf16>, vector<128x384xbf16>, vector<32x384xf32> -> vector<32x384xf32>
    %c0_15 = arith.constant 0 : index
    %c0_16 = arith.constant 0 : index
    %28 = vector.load %arg6[%c0_15, %c0_16] : memref<1x384xf32, #tpu.memory_space<vmem>>, vector<1x384xf32>
    %29 = vector.broadcast %28 : vector<1x384xf32> to vector<32x384xf32>
    %30 = arith.addf %27, %29 : vector<32x384xf32>
    %31 = arith.truncf %30 : vector<32x384xf32> to vector<32x384xbf16>
    %c0_17 = arith.constant 0 : index
    %c0_18 = arith.constant 0 : index
    %c0_19 = arith.constant 0 : index
    %32 = vector.load %arg7[%c0_17, %c0_18, %c0_19] : memref<1x32x384xbf16, #tpu.memory_space<vmem>>, vector<1x32x384xbf16>
    %33 = vector.shape_cast %32 : vector<1x32x384xbf16> to vector<32x384xbf16>
    %34 = vector.shape_cast %31 : vector<32x384xbf16> to vector<1x32x384xbf16>
    tpu.vector_store %arg7[%c0_17, %c0_18, %c0_19], %34 {strides = array<i32>} : memref<1x32x384xbf16, #tpu.memory_space<vmem>>, vector<1x32x384xbf16>,
    return
  }
  func.func @transform_0(%arg0: i32, %arg1: i32) -> (i32, i32, i32) {
    %c0_i32 = arith.constant 0 : i32
    %c0_i32_0 = arith.constant 0 : i32
    return %arg0, %arg1, %c0_i32 : i32, i32, i32
  }
  func.func @transform_1(%arg0: i32, %arg1: i32) -> (i32, i32) {
    %c0_i32 = arith.constant 0 : i32
    %c0_i32_0 = arith.constant 0 : i32
    %c0_i32_1 = arith.constant 0 : i32
    return %c0_i32, %c0_i32_0 : i32, i32
  }
  func.func @transform_2(%arg0: i32, %arg1: i32) -> (i32, i32, i32) {
    %c0_i32 = arith.constant 0 : i32
    %c0_i32_0 = arith.constant 0 : i32
    %c0_i32_1 = arith.constant 0 : i32
    return %arg0, %c0_i32, %c0_i32_0 : i32, i32, i32
  }
  func.func @transform_3(%arg0: i32, %arg1: i32) -> (i32, i32) {
    %c0_i32 = arith.constant 0 : i32
    %c0_i32_0 = arith.constant 0 : i32
    %c0_i32_1 = arith.constant 0 : i32
    return %c0_i32, %c0_i32_0 : i32, i32
  }
  func.func @transform_4(%arg0: i32, %arg1: i32) -> (i32, i32) {
    %c0_i32 = arith.constant 0 : i32
    %c0_i32_0 = arith.constant 0 : i32
    %c0_i32_1 = arith.constant 0 : i32
    return %c0_i32, %c0_i32_0 : i32, i32
  }
  func.func @transform_5(%arg0: i32, %arg1: i32) -> (i32, i32, i32) {
    %c0_i32 = arith.constant 0 : i32
    %c0_i32_0 = arith.constant 0 : i32
    return %arg0, %arg1, %c0_i32 : i32, i32, i32
  }
}

module attributes {stable_mosaic.version = 11 : i64} {
  func.func @_attn_proj_res_kernel(%arg0: i32, %arg1: i32, %arg2: memref<1x32x128xbf16, #tpu.memory_space<vmem>>, %arg3: memref<1x32x128xbf16, #tpu.memory_space<vmem>>, %arg4: memref<1x32x128xbf16, #tpu.memory_space<vmem>>, %arg5: memref<128x128xbf16, #tpu.memory_space<vmem>>, %arg6: memref<1x9x128xf32, #tpu.memory_space<vmem>>, %arg7: memref<1x32x128xf32, #tpu.memory_space<vmem>>, %arg8: memref<1x32x128xf32, #tpu.memory_space<vmem>>) attributes {dimension_semantics = [#tpu.dimension_semantics<parallel>, #tpu.dimension_semantics<parallel>], iteration_bounds = array<i64: 2, 1>, scalar_prefetch = 0 : i64, scratch_operands = 0 : i64, tpu.core_type = #tpu.core_type<tc>, window_params = [{transform_indices = @transform_0, window_bounds = array<i64: 1, 32, 128>}, {transform_indices = @transform_1, window_bounds = array<i64: 1, 32, 128>}, {transform_indices = @transform_2, window_bounds = array<i64: 1, 32, 128>}, {pipeline_mode = #tpu.pipeline_mode<synchronous>, transform_indices = @transform_3, window_bounds = array<i64: 128, 128>}, {transform_indices = @transform_4, window_bounds = array<i64: 1, 9, 128>}, {transform_indices = @transform_5, window_bounds = array<i64: 1, 32, 128>}, {transform_indices = @transform_6, window_bounds = array<i64: 1, 32, 128>}]} {
    %cst = arith.constant 0.000000e+00 : f32
    %0 = vector.broadcast %cst : f32 to vector<32x128xf32>
    %c0 = arith.constant 0 : index
    %c0_0 = arith.constant 0 : index
    %c0_1 = arith.constant 0 : index
    %1 = vector.load %arg2[%c0, %c0_0, %c0_1] : memref<1x32x128xbf16, #tpu.memory_space<vmem>>, vector<1x32x32xbf16>
    %2 = vector.shape_cast %1 : vector<1x32x32xbf16> to vector<32x32xbf16>
    %3 = arith.extf %2 : vector<32x32xbf16> to vector<32x32xf32>
    %c0_2 = arith.constant 0 : index
    %c0_3 = arith.constant 0 : index
    %c0_4 = arith.constant 0 : index
    %4 = vector.load %arg3[%c0_2, %c0_3, %c0_4] : memref<1x32x128xbf16, #tpu.memory_space<vmem>>, vector<1x32x32xbf16>
    %5 = vector.shape_cast %4 : vector<1x32x32xbf16> to vector<32x32xbf16>
    %6 = arith.extf %5 : vector<32x32xbf16> to vector<32x32xf32>
    %7 = arith.mulf %3, %3 : vector<32x32xf32>
    %cst_5 = arith.constant dense<0.000000e+00> : vector<32xf32>
    %8 = vector.multi_reduction <add>, %7, %cst_5 [1] : vector<32x32xf32> to vector<32xf32>
    %9 = vector.shape_cast %8 : vector<32xf32> to vector<32x1xf32>
    %cst_6 = arith.constant 3.200000e+01 : f32
    %10 = vector.broadcast %cst_6 : f32 to vector<32x1xf32>
    %11 = arith.divf %9, %10 : vector<32x1xf32>
    %cst_7 = arith.constant 9.99999997E-7 : f32
    %12 = vector.broadcast %cst_7 : f32 to vector<32x1xf32>
    %13 = arith.addf %11, %12 : vector<32x1xf32>
    %14 = math.rsqrt %13 : vector<32x1xf32>
    %cst_8 = arith.constant 0.176776692 : f32
    %15 = vector.broadcast %cst_8 : f32 to vector<32x1xf32>
    %16 = arith.mulf %14, %15 : vector<32x1xf32>
    %17 = vector.broadcast %16 : vector<32x1xf32> to vector<32x32xf32>
    %18 = arith.mulf %3, %17 : vector<32x32xf32>
    %19 = arith.mulf %6, %6 : vector<32x32xf32>
    %cst_9 = arith.constant dense<0.000000e+00> : vector<32xf32>
    %20 = vector.multi_reduction <add>, %19, %cst_9 [1] : vector<32x32xf32> to vector<32xf32>
    %21 = vector.shape_cast %20 : vector<32xf32> to vector<32x1xf32>
    %cst_10 = arith.constant 3.200000e+01 : f32
    %22 = vector.broadcast %cst_10 : f32 to vector<32x1xf32>
    %23 = arith.divf %21, %22 : vector<32x1xf32>
    %cst_11 = arith.constant 9.99999997E-7 : f32
    %24 = vector.broadcast %cst_11 : f32 to vector<32x1xf32>
    %25 = arith.addf %23, %24 : vector<32x1xf32>
    %26 = math.rsqrt %25 : vector<32x1xf32>
    %27 = vector.broadcast %26 : vector<32x1xf32> to vector<32x32xf32>
    %28 = arith.mulf %6, %27 : vector<32x32xf32>
    %29 = arith.truncf %18 : vector<32x32xf32> to vector<32x32xbf16>
    %30 = arith.truncf %28 : vector<32x32xf32> to vector<32x32xbf16>
    %cst_12 = arith.constant dense<0.000000e+00> : vector<32x32xf32>
    %31 = tpu.matmul %29, %30, %cst_12 {dimension_numbers = #tpu.dot_dimension_numbers<[1], [1], [0], [0], [0, 0, 1, 0], [], []>} : vector<32x32xbf16>, vector<32x32xbf16>, vector<32x32xf32> -> vector<32x32xf32>
    %cst_13 = arith.constant dense<0xFF800000> : vector<32xf32>
    %32 = vector.multi_reduction <maximumf>, %31, %cst_13 [1] : vector<32x32xf32> to vector<32xf32>
    %33 = vector.shape_cast %32 : vector<32xf32> to vector<32x1xf32>
    %34 = vector.broadcast %33 : vector<32x1xf32> to vector<32x32xf32>
    %35 = arith.subf %31, %34 : vector<32x32xf32>
    %36 = math.exp %35 : vector<32x32xf32>
    %cst_14 = arith.constant dense<0.000000e+00> : vector<32xf32>
    %37 = vector.multi_reduction <add>, %36, %cst_14 [1] : vector<32x32xf32> to vector<32xf32>
    %38 = vector.shape_cast %37 : vector<32xf32> to vector<32x1xf32>
    %39 = tpu.reciprocal %38 {approx = true} : vector<32x1xf32> -> vector<32x1xf32>
    %40 = vector.broadcast %39 : vector<32x1xf32> to vector<32x32xf32>
    %41 = arith.mulf %36, %40 : vector<32x32xf32>
    %42 = arith.truncf %41 : vector<32x32xf32> to vector<32x32xbf16>
    %c0_15 = arith.constant 0 : index
    %c0_16 = arith.constant 0 : index
    %c0_17 = arith.constant 0 : index
    %43 = vector.load %arg4[%c0_15, %c0_16, %c0_17] : memref<1x32x128xbf16, #tpu.memory_space<vmem>>, vector<1x32x32xbf16>
    %44 = vector.shape_cast %43 : vector<1x32x32xbf16> to vector<32x32xbf16>
    %cst_18 = arith.constant dense<0.000000e+00> : vector<32x32xf32>
    %45 = tpu.matmul %42, %44, %cst_18 {dimension_numbers = #tpu.dot_dimension_numbers<[1], [0], [0], [1], [0, 0, 1, 1], [], []>} : vector<32x32xbf16>, vector<32x32xbf16>, vector<32x32xf32> -> vector<32x32xf32>
    %46 = arith.truncf %45 : vector<32x32xf32> to vector<32x32xbf16>
    %c0_19 = arith.constant 0 : index
    %c0_20 = arith.constant 0 : index
    %47 = vector.load %arg5[%c0_19, %c0_20] : memref<128x128xbf16, #tpu.memory_space<vmem>>, vector<32x128xbf16>
    %cst_21 = arith.constant dense<0.000000e+00> : vector<32x128xf32>
    %48 = tpu.matmul %46, %47, %cst_21 {dimension_numbers = #tpu.dot_dimension_numbers<[1], [0], [0], [1], [0, 0, 1, 1], [], []>} : vector<32x32xbf16>, vector<32x128xbf16>, vector<32x128xf32> -> vector<32x128xf32>
    %49 = arith.addf %0, %48 : vector<32x128xf32>
    %c0_22 = arith.constant 0 : index
    %c0_23 = arith.constant 0 : index
    %c32 = arith.constant 32 : index
    %50 = vector.load %arg2[%c0_22, %c0_23, %c32] : memref<1x32x128xbf16, #tpu.memory_space<vmem>>, vector<1x32x32xbf16>
    %51 = vector.shape_cast %50 : vector<1x32x32xbf16> to vector<32x32xbf16>
    %52 = arith.extf %51 : vector<32x32xbf16> to vector<32x32xf32>
    %c0_24 = arith.constant 0 : index
    %c0_25 = arith.constant 0 : index
    %c32_26 = arith.constant 32 : index
    %53 = vector.load %arg3[%c0_24, %c0_25, %c32_26] : memref<1x32x128xbf16, #tpu.memory_space<vmem>>, vector<1x32x32xbf16>
    %54 = vector.shape_cast %53 : vector<1x32x32xbf16> to vector<32x32xbf16>
    %55 = arith.extf %54 : vector<32x32xbf16> to vector<32x32xf32>
    %56 = arith.mulf %52, %52 : vector<32x32xf32>
    %cst_27 = arith.constant dense<0.000000e+00> : vector<32xf32>
    %57 = vector.multi_reduction <add>, %56, %cst_27 [1] : vector<32x32xf32> to vector<32xf32>
    %58 = vector.shape_cast %57 : vector<32xf32> to vector<32x1xf32>
    %cst_28 = arith.constant 3.200000e+01 : f32
    %59 = vector.broadcast %cst_28 : f32 to vector<32x1xf32>
    %60 = arith.divf %58, %59 : vector<32x1xf32>
    %cst_29 = arith.constant 9.99999997E-7 : f32
    %61 = vector.broadcast %cst_29 : f32 to vector<32x1xf32>
    %62 = arith.addf %60, %61 : vector<32x1xf32>
    %63 = math.rsqrt %62 : vector<32x1xf32>
    %cst_30 = arith.constant 0.176776692 : f32
    %64 = vector.broadcast %cst_30 : f32 to vector<32x1xf32>
    %65 = arith.mulf %63, %64 : vector<32x1xf32>
    %66 = vector.broadcast %65 : vector<32x1xf32> to vector<32x32xf32>
    %67 = arith.mulf %52, %66 : vector<32x32xf32>
    %68 = arith.mulf %55, %55 : vector<32x32xf32>
    %cst_31 = arith.constant dense<0.000000e+00> : vector<32xf32>
    %69 = vector.multi_reduction <add>, %68, %cst_31 [1] : vector<32x32xf32> to vector<32xf32>
    %70 = vector.shape_cast %69 : vector<32xf32> to vector<32x1xf32>
    %cst_32 = arith.constant 3.200000e+01 : f32
    %71 = vector.broadcast %cst_32 : f32 to vector<32x1xf32>
    %72 = arith.divf %70, %71 : vector<32x1xf32>
    %cst_33 = arith.constant 9.99999997E-7 : f32
    %73 = vector.broadcast %cst_33 : f32 to vector<32x1xf32>
    %74 = arith.addf %72, %73 : vector<32x1xf32>
    %75 = math.rsqrt %74 : vector<32x1xf32>
    %76 = vector.broadcast %75 : vector<32x1xf32> to vector<32x32xf32>
    %77 = arith.mulf %55, %76 : vector<32x32xf32>
    %78 = arith.truncf %67 : vector<32x32xf32> to vector<32x32xbf16>
    %79 = arith.truncf %77 : vector<32x32xf32> to vector<32x32xbf16>
    %cst_34 = arith.constant dense<0.000000e+00> : vector<32x32xf32>
    %80 = tpu.matmul %78, %79, %cst_34 {dimension_numbers = #tpu.dot_dimension_numbers<[1], [1], [0], [0], [0, 0, 1, 0], [], []>} : vector<32x32xbf16>, vector<32x32xbf16>, vector<32x32xf32> -> vector<32x32xf32>
    %cst_35 = arith.constant dense<0xFF800000> : vector<32xf32>
    %81 = vector.multi_reduction <maximumf>, %80, %cst_35 [1] : vector<32x32xf32> to vector<32xf32>
    %82 = vector.shape_cast %81 : vector<32xf32> to vector<32x1xf32>
    %83 = vector.broadcast %82 : vector<32x1xf32> to vector<32x32xf32>
    %84 = arith.subf %80, %83 : vector<32x32xf32>
    %85 = math.exp %84 : vector<32x32xf32>
    %cst_36 = arith.constant dense<0.000000e+00> : vector<32xf32>
    %86 = vector.multi_reduction <add>, %85, %cst_36 [1] : vector<32x32xf32> to vector<32xf32>
    %87 = vector.shape_cast %86 : vector<32xf32> to vector<32x1xf32>
    %88 = tpu.reciprocal %87 {approx = true} : vector<32x1xf32> -> vector<32x1xf32>
    %89 = vector.broadcast %88 : vector<32x1xf32> to vector<32x32xf32>
    %90 = arith.mulf %85, %89 : vector<32x32xf32>
    %91 = arith.truncf %90 : vector<32x32xf32> to vector<32x32xbf16>
    %c0_37 = arith.constant 0 : index
    %c0_38 = arith.constant 0 : index
    %c32_39 = arith.constant 32 : index
    %92 = vector.load %arg4[%c0_37, %c0_38, %c32_39] : memref<1x32x128xbf16, #tpu.memory_space<vmem>>, vector<1x32x32xbf16>
    %93 = vector.shape_cast %92 : vector<1x32x32xbf16> to vector<32x32xbf16>
    %cst_40 = arith.constant dense<0.000000e+00> : vector<32x32xf32>
    %94 = tpu.matmul %91, %93, %cst_40 {dimension_numbers = #tpu.dot_dimension_numbers<[1], [0], [0], [1], [0, 0, 1, 1], [], []>} : vector<32x32xbf16>, vector<32x32xbf16>, vector<32x32xf32> -> vector<32x32xf32>
    %95 = arith.truncf %94 : vector<32x32xf32> to vector<32x32xbf16>
    %c32_41 = arith.constant 32 : index
    %c0_42 = arith.constant 0 : index
    %96 = vector.load %arg5[%c32_41, %c0_42] : memref<128x128xbf16, #tpu.memory_space<vmem>>, vector<32x128xbf16>
    %cst_43 = arith.constant dense<0.000000e+00> : vector<32x128xf32>
    %97 = tpu.matmul %95, %96, %cst_43 {dimension_numbers = #tpu.dot_dimension_numbers<[1], [0], [0], [1], [0, 0, 1, 1], [], []>} : vector<32x32xbf16>, vector<32x128xbf16>, vector<32x128xf32> -> vector<32x128xf32>
    %98 = arith.addf %49, %97 : vector<32x128xf32>
    %c0_44 = arith.constant 0 : index
    %c0_45 = arith.constant 0 : index
    %c64 = arith.constant 64 : index
    %99 = vector.load %arg2[%c0_44, %c0_45, %c64] : memref<1x32x128xbf16, #tpu.memory_space<vmem>>, vector<1x32x32xbf16>
    %100 = vector.shape_cast %99 : vector<1x32x32xbf16> to vector<32x32xbf16>
    %101 = arith.extf %100 : vector<32x32xbf16> to vector<32x32xf32>
    %c0_46 = arith.constant 0 : index
    %c0_47 = arith.constant 0 : index
    %c64_48 = arith.constant 64 : index
    %102 = vector.load %arg3[%c0_46, %c0_47, %c64_48] : memref<1x32x128xbf16, #tpu.memory_space<vmem>>, vector<1x32x32xbf16>
    %103 = vector.shape_cast %102 : vector<1x32x32xbf16> to vector<32x32xbf16>
    %104 = arith.extf %103 : vector<32x32xbf16> to vector<32x32xf32>
    %105 = arith.mulf %101, %101 : vector<32x32xf32>
    %cst_49 = arith.constant dense<0.000000e+00> : vector<32xf32>
    %106 = vector.multi_reduction <add>, %105, %cst_49 [1] : vector<32x32xf32> to vector<32xf32>
    %107 = vector.shape_cast %106 : vector<32xf32> to vector<32x1xf32>
    %cst_50 = arith.constant 3.200000e+01 : f32
    %108 = vector.broadcast %cst_50 : f32 to vector<32x1xf32>
    %109 = arith.divf %107, %108 : vector<32x1xf32>
    %cst_51 = arith.constant 9.99999997E-7 : f32
    %110 = vector.broadcast %cst_51 : f32 to vector<32x1xf32>
    %111 = arith.addf %109, %110 : vector<32x1xf32>
    %112 = math.rsqrt %111 : vector<32x1xf32>
    %cst_52 = arith.constant 0.176776692 : f32
    %113 = vector.broadcast %cst_52 : f32 to vector<32x1xf32>
    %114 = arith.mulf %112, %113 : vector<32x1xf32>
    %115 = vector.broadcast %114 : vector<32x1xf32> to vector<32x32xf32>
    %116 = arith.mulf %101, %115 : vector<32x32xf32>
    %117 = arith.mulf %104, %104 : vector<32x32xf32>
    %cst_53 = arith.constant dense<0.000000e+00> : vector<32xf32>
    %118 = vector.multi_reduction <add>, %117, %cst_53 [1] : vector<32x32xf32> to vector<32xf32>
    %119 = vector.shape_cast %118 : vector<32xf32> to vector<32x1xf32>
    %cst_54 = arith.constant 3.200000e+01 : f32
    %120 = vector.broadcast %cst_54 : f32 to vector<32x1xf32>
    %121 = arith.divf %119, %120 : vector<32x1xf32>
    %cst_55 = arith.constant 9.99999997E-7 : f32
    %122 = vector.broadcast %cst_55 : f32 to vector<32x1xf32>
    %123 = arith.addf %121, %122 : vector<32x1xf32>
    %124 = math.rsqrt %123 : vector<32x1xf32>
    %125 = vector.broadcast %124 : vector<32x1xf32> to vector<32x32xf32>
    %126 = arith.mulf %104, %125 : vector<32x32xf32>
    %127 = arith.truncf %116 : vector<32x32xf32> to vector<32x32xbf16>
    %128 = arith.truncf %126 : vector<32x32xf32> to vector<32x32xbf16>
    %cst_56 = arith.constant dense<0.000000e+00> : vector<32x32xf32>
    %129 = tpu.matmul %127, %128, %cst_56 {dimension_numbers = #tpu.dot_dimension_numbers<[1], [1], [0], [0], [0, 0, 1, 0], [], []>} : vector<32x32xbf16>, vector<32x32xbf16>, vector<32x32xf32> -> vector<32x32xf32>
    %cst_57 = arith.constant dense<0xFF800000> : vector<32xf32>
    %130 = vector.multi_reduction <maximumf>, %129, %cst_57 [1] : vector<32x32xf32> to vector<32xf32>
    %131 = vector.shape_cast %130 : vector<32xf32> to vector<32x1xf32>
    %132 = vector.broadcast %131 : vector<32x1xf32> to vector<32x32xf32>
    %133 = arith.subf %129, %132 : vector<32x32xf32>
    %134 = math.exp %133 : vector<32x32xf32>
    %cst_58 = arith.constant dense<0.000000e+00> : vector<32xf32>
    %135 = vector.multi_reduction <add>, %134, %cst_58 [1] : vector<32x32xf32> to vector<32xf32>
    %136 = vector.shape_cast %135 : vector<32xf32> to vector<32x1xf32>
    %137 = tpu.reciprocal %136 {approx = true} : vector<32x1xf32> -> vector<32x1xf32>
    %138 = vector.broadcast %137 : vector<32x1xf32> to vector<32x32xf32>
    %139 = arith.mulf %134, %138 : vector<32x32xf32>
    %140 = arith.truncf %139 : vector<32x32xf32> to vector<32x32xbf16>
    %c0_59 = arith.constant 0 : index
    %c0_60 = arith.constant 0 : index
    %c64_61 = arith.constant 64 : index
    %141 = vector.load %arg4[%c0_59, %c0_60, %c64_61] : memref<1x32x128xbf16, #tpu.memory_space<vmem>>, vector<1x32x32xbf16>
    %142 = vector.shape_cast %141 : vector<1x32x32xbf16> to vector<32x32xbf16>
    %cst_62 = arith.constant dense<0.000000e+00> : vector<32x32xf32>
    %143 = tpu.matmul %140, %142, %cst_62 {dimension_numbers = #tpu.dot_dimension_numbers<[1], [0], [0], [1], [0, 0, 1, 1], [], []>} : vector<32x32xbf16>, vector<32x32xbf16>, vector<32x32xf32> -> vector<32x32xf32>
    %144 = arith.truncf %143 : vector<32x32xf32> to vector<32x32xbf16>
    %c64_63 = arith.constant 64 : index
    %c0_64 = arith.constant 0 : index
    %145 = vector.load %arg5[%c64_63, %c0_64] : memref<128x128xbf16, #tpu.memory_space<vmem>>, vector<32x128xbf16>
    %cst_65 = arith.constant dense<0.000000e+00> : vector<32x128xf32>
    %146 = tpu.matmul %144, %145, %cst_65 {dimension_numbers = #tpu.dot_dimension_numbers<[1], [0], [0], [1], [0, 0, 1, 1], [], []>} : vector<32x32xbf16>, vector<32x128xbf16>, vector<32x128xf32> -> vector<32x128xf32>
    %147 = arith.addf %98, %146 : vector<32x128xf32>
    %c0_66 = arith.constant 0 : index
    %c0_67 = arith.constant 0 : index
    %c96 = arith.constant 96 : index
    %148 = vector.load %arg2[%c0_66, %c0_67, %c96] : memref<1x32x128xbf16, #tpu.memory_space<vmem>>, vector<1x32x32xbf16>
    %149 = vector.shape_cast %148 : vector<1x32x32xbf16> to vector<32x32xbf16>
    %150 = arith.extf %149 : vector<32x32xbf16> to vector<32x32xf32>
    %c0_68 = arith.constant 0 : index
    %c0_69 = arith.constant 0 : index
    %c96_70 = arith.constant 96 : index
    %151 = vector.load %arg3[%c0_68, %c0_69, %c96_70] : memref<1x32x128xbf16, #tpu.memory_space<vmem>>, vector<1x32x32xbf16>
    %152 = vector.shape_cast %151 : vector<1x32x32xbf16> to vector<32x32xbf16>
    %153 = arith.extf %152 : vector<32x32xbf16> to vector<32x32xf32>
    %154 = arith.mulf %150, %150 : vector<32x32xf32>
    %cst_71 = arith.constant dense<0.000000e+00> : vector<32xf32>
    %155 = vector.multi_reduction <add>, %154, %cst_71 [1] : vector<32x32xf32> to vector<32xf32>
    %156 = vector.shape_cast %155 : vector<32xf32> to vector<32x1xf32>
    %cst_72 = arith.constant 3.200000e+01 : f32
    %157 = vector.broadcast %cst_72 : f32 to vector<32x1xf32>
    %158 = arith.divf %156, %157 : vector<32x1xf32>
    %cst_73 = arith.constant 9.99999997E-7 : f32
    %159 = vector.broadcast %cst_73 : f32 to vector<32x1xf32>
    %160 = arith.addf %158, %159 : vector<32x1xf32>
    %161 = math.rsqrt %160 : vector<32x1xf32>
    %cst_74 = arith.constant 0.176776692 : f32
    %162 = vector.broadcast %cst_74 : f32 to vector<32x1xf32>
    %163 = arith.mulf %161, %162 : vector<32x1xf32>
    %164 = vector.broadcast %163 : vector<32x1xf32> to vector<32x32xf32>
    %165 = arith.mulf %150, %164 : vector<32x32xf32>
    %166 = arith.mulf %153, %153 : vector<32x32xf32>
    %cst_75 = arith.constant dense<0.000000e+00> : vector<32xf32>
    %167 = vector.multi_reduction <add>, %166, %cst_75 [1] : vector<32x32xf32> to vector<32xf32>
    %168 = vector.shape_cast %167 : vector<32xf32> to vector<32x1xf32>
    %cst_76 = arith.constant 3.200000e+01 : f32
    %169 = vector.broadcast %cst_76 : f32 to vector<32x1xf32>
    %170 = arith.divf %168, %169 : vector<32x1xf32>
    %cst_77 = arith.constant 9.99999997E-7 : f32
    %171 = vector.broadcast %cst_77 : f32 to vector<32x1xf32>
    %172 = arith.addf %170, %171 : vector<32x1xf32>
    %173 = math.rsqrt %172 : vector<32x1xf32>
    %174 = vector.broadcast %173 : vector<32x1xf32> to vector<32x32xf32>
    %175 = arith.mulf %153, %174 : vector<32x32xf32>
    %176 = arith.truncf %165 : vector<32x32xf32> to vector<32x32xbf16>
    %177 = arith.truncf %175 : vector<32x32xf32> to vector<32x32xbf16>
    %cst_78 = arith.constant dense<0.000000e+00> : vector<32x32xf32>
    %178 = tpu.matmul %176, %177, %cst_78 {dimension_numbers = #tpu.dot_dimension_numbers<[1], [1], [0], [0], [0, 0, 1, 0], [], []>} : vector<32x32xbf16>, vector<32x32xbf16>, vector<32x32xf32> -> vector<32x32xf32>
    %cst_79 = arith.constant dense<0xFF800000> : vector<32xf32>
    %179 = vector.multi_reduction <maximumf>, %178, %cst_79 [1] : vector<32x32xf32> to vector<32xf32>
    %180 = vector.shape_cast %179 : vector<32xf32> to vector<32x1xf32>
    %181 = vector.broadcast %180 : vector<32x1xf32> to vector<32x32xf32>
    %182 = arith.subf %178, %181 : vector<32x32xf32>
    %183 = math.exp %182 : vector<32x32xf32>
    %cst_80 = arith.constant dense<0.000000e+00> : vector<32xf32>
    %184 = vector.multi_reduction <add>, %183, %cst_80 [1] : vector<32x32xf32> to vector<32xf32>
    %185 = vector.shape_cast %184 : vector<32xf32> to vector<32x1xf32>
    %186 = tpu.reciprocal %185 {approx = true} : vector<32x1xf32> -> vector<32x1xf32>
    %187 = vector.broadcast %186 : vector<32x1xf32> to vector<32x32xf32>
    %188 = arith.mulf %183, %187 : vector<32x32xf32>
    %189 = arith.truncf %188 : vector<32x32xf32> to vector<32x32xbf16>
    %c0_81 = arith.constant 0 : index
    %c0_82 = arith.constant 0 : index
    %c96_83 = arith.constant 96 : index
    %190 = vector.load %arg4[%c0_81, %c0_82, %c96_83] : memref<1x32x128xbf16, #tpu.memory_space<vmem>>, vector<1x32x32xbf16>
    %191 = vector.shape_cast %190 : vector<1x32x32xbf16> to vector<32x32xbf16>
    %cst_84 = arith.constant dense<0.000000e+00> : vector<32x32xf32>
    %192 = tpu.matmul %189, %191, %cst_84 {dimension_numbers = #tpu.dot_dimension_numbers<[1], [0], [0], [1], [0, 0, 1, 1], [], []>} : vector<32x32xbf16>, vector<32x32xbf16>, vector<32x32xf32> -> vector<32x32xf32>
    %193 = arith.truncf %192 : vector<32x32xf32> to vector<32x32xbf16>
    %c96_85 = arith.constant 96 : index
    %c0_86 = arith.constant 0 : index
    %194 = vector.load %arg5[%c96_85, %c0_86] : memref<128x128xbf16, #tpu.memory_space<vmem>>, vector<32x128xbf16>
    %cst_87 = arith.constant dense<0.000000e+00> : vector<32x128xf32>
    %195 = tpu.matmul %193, %194, %cst_87 {dimension_numbers = #tpu.dot_dimension_numbers<[1], [0], [0], [1], [0, 0, 1, 1], [], []>} : vector<32x32xbf16>, vector<32x128xbf16>, vector<32x128xf32> -> vector<32x128xf32>
    %196 = arith.addf %147, %195 : vector<32x128xf32>
    %c0_88 = arith.constant 0 : index
    %c2 = arith.constant 2 : index
    %c0_89 = arith.constant 0 : index
    %197 = vector.load %arg6[%c0_88, %c2, %c0_89] : memref<1x9x128xf32, #tpu.memory_space<vmem>>, vector<1x1x128xf32>
    %198 = vector.shape_cast %197 : vector<1x1x128xf32> to vector<1x128xf32>
    %c0_90 = arith.constant 0 : index
    %c0_91 = arith.constant 0 : index
    %c0_92 = arith.constant 0 : index
    %199 = vector.load %arg7[%c0_90, %c0_91, %c0_92] : memref<1x32x128xf32, #tpu.memory_space<vmem>>, vector<1x32x128xf32>
    %200 = vector.shape_cast %199 : vector<1x32x128xf32> to vector<32x128xf32>
    %201 = vector.broadcast %198 : vector<1x128xf32> to vector<32x128xf32>
    %202 = arith.mulf %196, %201 : vector<32x128xf32>
    %203 = arith.addf %200, %202 : vector<32x128xf32>
    %c0_93 = arith.constant 0 : index
    %c0_94 = arith.constant 0 : index
    %c0_95 = arith.constant 0 : index
    %204 = vector.load %arg8[%c0_93, %c0_94, %c0_95] : memref<1x32x128xf32, #tpu.memory_space<vmem>>, vector<1x32x128xf32>
    %205 = vector.shape_cast %204 : vector<1x32x128xf32> to vector<32x128xf32>
    %206 = vector.shape_cast %203 : vector<32x128xf32> to vector<1x32x128xf32>
    tpu.vector_store %arg8[%c0_93, %c0_94, %c0_95], %206 {strides = array<i32>} : memref<1x32x128xf32, #tpu.memory_space<vmem>>, vector<1x32x128xf32>,
    return
  }
  func.func @transform_0(%arg0: i32, %arg1: i32) -> (i32, i32, i32) {
    %c0_i32 = arith.constant 0 : i32
    %c0_i32_0 = arith.constant 0 : i32
    return %arg0, %arg1, %c0_i32 : i32, i32, i32
  }
  func.func @transform_1(%arg0: i32, %arg1: i32) -> (i32, i32, i32) {
    %c0_i32 = arith.constant 0 : i32
    %c1_i32 = arith.constant 1 : i32
    %c0_i32_0 = arith.constant 0 : i32
    return %arg0, %c0_i32, %c1_i32 : i32, i32, i32
  }
  func.func @transform_2(%arg0: i32, %arg1: i32) -> (i32, i32, i32) {
    %c0_i32 = arith.constant 0 : i32
    %c2_i32 = arith.constant 2 : i32
    %c0_i32_0 = arith.constant 0 : i32
    return %arg0, %c0_i32, %c2_i32 : i32, i32, i32
  }
  func.func @transform_3(%arg0: i32, %arg1: i32) -> (i32, i32) {
    %c0_i32 = arith.constant 0 : i32
    %c0_i32_0 = arith.constant 0 : i32
    %c0_i32_1 = arith.constant 0 : i32
    return %c0_i32, %c0_i32_0 : i32, i32
  }
  func.func @transform_4(%arg0: i32, %arg1: i32) -> (i32, i32, i32) {
    %c0_i32 = arith.constant 0 : i32
    %c0_i32_0 = arith.constant 0 : i32
    %c0_i32_1 = arith.constant 0 : i32
    return %arg0, %c0_i32, %c0_i32_0 : i32, i32, i32
  }
  func.func @transform_5(%arg0: i32, %arg1: i32) -> (i32, i32, i32) {
    %c0_i32 = arith.constant 0 : i32
    %c0_i32_0 = arith.constant 0 : i32
    return %arg0, %arg1, %c0_i32 : i32, i32, i32
  }
  func.func @transform_6(%arg0: i32, %arg1: i32) -> (i32, i32, i32) {
    %c0_i32 = arith.constant 0 : i32
    %c0_i32_0 = arith.constant 0 : i32
    return %arg0, %arg1, %c0_i32 : i32, i32, i32
  }
}

module attributes {stable_mosaic.version = 11 : i64} {
  func.func @_normmod_linear_kernel(%arg0: i32, %arg1: i32, %arg2: memref<1x32x128xf32, #tpu.memory_space<vmem>>, %arg3: memref<1x128xf32, #tpu.memory_space<vmem>>, %arg4: memref<1x9x128xf32, #tpu.memory_space<vmem>>, %arg5: memref<128x512xbf16, #tpu.memory_space<vmem>>, %arg6: memref<1x512xf32, #tpu.memory_space<vmem>>, %arg7: memref<1x32x512xbf16, #tpu.memory_space<vmem>>) attributes {dimension_semantics = [#tpu.dimension_semantics<parallel>, #tpu.dimension_semantics<parallel>], iteration_bounds = array<i64: 2, 1>, scalar_prefetch = 0 : i64, scratch_operands = 0 : i64, tpu.core_type = #tpu.core_type<tc>, window_params = [{transform_indices = @transform_0, window_bounds = array<i64: 1, 32, 128>}, {pipeline_mode = #tpu.pipeline_mode<synchronous>, transform_indices = @transform_1, window_bounds = array<i64: 1, 128>}, {transform_indices = @transform_2, window_bounds = array<i64: 1, 9, 128>}, {pipeline_mode = #tpu.pipeline_mode<synchronous>, transform_indices = @transform_3, window_bounds = array<i64: 128, 512>}, {pipeline_mode = #tpu.pipeline_mode<synchronous>, transform_indices = @transform_4, window_bounds = array<i64: 1, 512>}, {transform_indices = @transform_5, window_bounds = array<i64: 1, 32, 512>}]} {
    %c0 = arith.constant 0 : index
    %c0_0 = arith.constant 0 : index
    %c0_1 = arith.constant 0 : index
    %0 = vector.load %arg2[%c0, %c0_0, %c0_1] : memref<1x32x128xf32, #tpu.memory_space<vmem>>, vector<1x32x128xf32>
    %1 = vector.shape_cast %0 : vector<1x32x128xf32> to vector<32x128xf32>
    %2 = arith.mulf %1, %1 : vector<32x128xf32>
    %cst = arith.constant dense<0.000000e+00> : vector<32xf32>
    %3 = vector.multi_reduction <add>, %2, %cst [1] : vector<32x128xf32> to vector<32xf32>
    %4 = vector.shape_cast %3 : vector<32xf32> to vector<32x1xf32>
    %cst_2 = arith.constant 1.280000e+02 : f32
    %5 = vector.broadcast %cst_2 : f32 to vector<32x1xf32>
    %6 = arith.divf %4, %5 : vector<32x1xf32>
    %cst_3 = arith.constant 9.99999997E-7 : f32
    %7 = vector.broadcast %cst_3 : f32 to vector<32x1xf32>
    %8 = arith.addf %6, %7 : vector<32x1xf32>
    %9 = math.rsqrt %8 : vector<32x1xf32>
    %10 = vector.broadcast %9 : vector<32x1xf32> to vector<32x128xf32>
    %11 = arith.mulf %1, %10 : vector<32x128xf32>
    %c0_4 = arith.constant 0 : index
    %c0_5 = arith.constant 0 : index
    %12 = vector.load %arg3[%c0_4, %c0_5] : memref<1x128xf32, #tpu.memory_space<vmem>>, vector<1x128xf32>
    %13 = vector.broadcast %12 : vector<1x128xf32> to vector<32x128xf32>
    %14 = arith.mulf %11, %13 : vector<32x128xf32>
    %c0_6 = arith.constant 0 : index
    %c7 = arith.constant 7 : index
    %c0_7 = arith.constant 0 : index
    %15 = vector.load %arg4[%c0_6, %c7, %c0_7] : memref<1x9x128xf32, #tpu.memory_space<vmem>>, vector<1x1x128xf32>
    %16 = vector.shape_cast %15 : vector<1x1x128xf32> to vector<1x128xf32>
    %c0_8 = arith.constant 0 : index
    %c6 = arith.constant 6 : index
    %c0_9 = arith.constant 0 : index
    %17 = vector.load %arg4[%c0_8, %c6, %c0_9] : memref<1x9x128xf32, #tpu.memory_space<vmem>>, vector<1x1x128xf32>
    %18 = vector.shape_cast %17 : vector<1x1x128xf32> to vector<1x128xf32>
    %cst_10 = arith.constant 1.000000e+00 : f32
    %19 = vector.broadcast %cst_10 : f32 to vector<1x128xf32>
    %20 = arith.addf %19, %16 : vector<1x128xf32>
    %21 = vector.broadcast %20 : vector<1x128xf32> to vector<32x128xf32>
    %22 = arith.mulf %14, %21 : vector<32x128xf32>
    %23 = vector.broadcast %18 : vector<1x128xf32> to vector<32x128xf32>
    %24 = arith.addf %22, %23 : vector<32x128xf32>
    %25 = arith.truncf %24 : vector<32x128xf32> to vector<32x128xbf16>
    %c0_11 = arith.constant 0 : index
    %c0_12 = arith.constant 0 : index
    %26 = vector.load %arg5[%c0_11, %c0_12] : memref<128x512xbf16, #tpu.memory_space<vmem>>, vector<128x512xbf16>
    %cst_13 = arith.constant dense<0.000000e+00> : vector<32x512xf32>
    %27 = tpu.matmul %25, %26, %cst_13 {dimension_numbers = #tpu.dot_dimension_numbers<[1], [0], [0], [1], [0, 0, 1, 1], [], []>} : vector<32x128xbf16>, vector<128x512xbf16>, vector<32x512xf32> -> vector<32x512xf32>
    %c0_14 = arith.constant 0 : index
    %c0_15 = arith.constant 0 : index
    %28 = vector.load %arg6[%c0_14, %c0_15] : memref<1x512xf32, #tpu.memory_space<vmem>>, vector<1x512xf32>
    %29 = vector.broadcast %28 : vector<1x512xf32> to vector<32x512xf32>
    %30 = arith.addf %27, %29 : vector<32x512xf32>
    %cst_16 = arith.constant 5.000000e-01 : f32
    %31 = vector.broadcast %cst_16 : f32 to vector<32x512xf32>
    %32 = arith.mulf %31, %30 : vector<32x512xf32>
    %cst_17 = arith.constant 4.471500e-02 : f32
    %33 = vector.broadcast %cst_17 : f32 to vector<32x512xf32>
    %34 = arith.mulf %33, %30 : vector<32x512xf32>
    %35 = arith.mulf %34, %30 : vector<32x512xf32>
    %36 = arith.mulf %35, %30 : vector<32x512xf32>
    %37 = arith.addf %30, %36 : vector<32x512xf32>
    %cst_18 = arith.constant 0.797884583 : f32
    %38 = vector.broadcast %cst_18 : f32 to vector<32x512xf32>
    %39 = arith.mulf %38, %37 : vector<32x512xf32>
    %40 = math.tanh %39 : vector<32x512xf32>
    %cst_19 = arith.constant 1.000000e+00 : f32
    %41 = vector.broadcast %cst_19 : f32 to vector<32x512xf32>
    %42 = arith.addf %41, %40 : vector<32x512xf32>
    %43 = arith.mulf %32, %42 : vector<32x512xf32>
    %44 = arith.truncf %43 : vector<32x512xf32> to vector<32x512xbf16>
    %c0_20 = arith.constant 0 : index
    %c0_21 = arith.constant 0 : index
    %c0_22 = arith.constant 0 : index
    %45 = vector.load %arg7[%c0_20, %c0_21, %c0_22] : memref<1x32x512xbf16, #tpu.memory_space<vmem>>, vector<1x32x512xbf16>
    %46 = vector.shape_cast %45 : vector<1x32x512xbf16> to vector<32x512xbf16>
    %47 = vector.shape_cast %44 : vector<32x512xbf16> to vector<1x32x512xbf16>
    tpu.vector_store %arg7[%c0_20, %c0_21, %c0_22], %47 {strides = array<i32>} : memref<1x32x512xbf16, #tpu.memory_space<vmem>>, vector<1x32x512xbf16>,
    return
  }
  func.func @transform_0(%arg0: i32, %arg1: i32) -> (i32, i32, i32) {
    %c0_i32 = arith.constant 0 : i32
    %c0_i32_0 = arith.constant 0 : i32
    return %arg0, %arg1, %c0_i32 : i32, i32, i32
  }
  func.func @transform_1(%arg0: i32, %arg1: i32) -> (i32, i32) {
    %c0_i32 = arith.constant 0 : i32
    %c0_i32_0 = arith.constant 0 : i32
    %c0_i32_1 = arith.constant 0 : i32
    return %c0_i32, %c0_i32_0 : i32, i32
  }
  func.func @transform_2(%arg0: i32, %arg1: i32) -> (i32, i32, i32) {
    %c0_i32 = arith.constant 0 : i32
    %c0_i32_0 = arith.constant 0 : i32
    %c0_i32_1 = arith.constant 0 : i32
    return %arg0, %c0_i32, %c0_i32_0 : i32, i32, i32
  }
  func.func @transform_3(%arg0: i32, %arg1: i32) -> (i32, i32) {
    %c0_i32 = arith.constant 0 : i32
    %c0_i32_0 = arith.constant 0 : i32
    %c0_i32_1 = arith.constant 0 : i32
    return %c0_i32, %c0_i32_0 : i32, i32
  }
  func.func @transform_4(%arg0: i32, %arg1: i32) -> (i32, i32) {
    %c0_i32 = arith.constant 0 : i32
    %c0_i32_0 = arith.constant 0 : i32
    %c0_i32_1 = arith.constant 0 : i32
    return %c0_i32, %c0_i32_0 : i32, i32
  }
  func.func @transform_5(%arg0: i32, %arg1: i32) -> (i32, i32, i32) {
    %c0_i32 = arith.constant 0 : i32
    %c0_i32_0 = arith.constant 0 : i32
    return %arg0, %arg1, %c0_i32 : i32, i32, i32
  }
}

module attributes {stable_mosaic.version = 11 : i64} {
  func.func @_attn_proj_res_kernel(%arg0: i32, %arg1: i32, %arg2: memref<1x32x128xbf16, #tpu.memory_space<vmem>>, %arg3: memref<1x16x128xbf16, #tpu.memory_space<vmem>>, %arg4: memref<1x16x128xbf16, #tpu.memory_space<vmem>>, %arg5: memref<128x128xbf16, #tpu.memory_space<vmem>>, %arg6: memref<1x9x128xf32, #tpu.memory_space<vmem>>, %arg7: memref<1x32x128xf32, #tpu.memory_space<vmem>>, %arg8: memref<1x32x128xf32, #tpu.memory_space<vmem>>) attributes {dimension_semantics = [#tpu.dimension_semantics<parallel>, #tpu.dimension_semantics<parallel>], iteration_bounds = array<i64: 2, 1>, scalar_prefetch = 0 : i64, scratch_operands = 0 : i64, tpu.core_type = #tpu.core_type<tc>, window_params = [{transform_indices = @transform_0, window_bounds = array<i64: 1, 32, 128>}, {transform_indices = @transform_1, window_bounds = array<i64: 1, 16, 128>}, {transform_indices = @transform_2, window_bounds = array<i64: 1, 16, 128>}, {pipeline_mode = #tpu.pipeline_mode<synchronous>, transform_indices = @transform_3, window_bounds = array<i64: 128, 128>}, {transform_indices = @transform_4, window_bounds = array<i64: 1, 9, 128>}, {transform_indices = @transform_5, window_bounds = array<i64: 1, 32, 128>}, {transform_indices = @transform_6, window_bounds = array<i64: 1, 32, 128>}]} {
    %cst = arith.constant 0.000000e+00 : f32
    %0 = vector.broadcast %cst : f32 to vector<32x128xf32>
    %c0 = arith.constant 0 : index
    %c0_0 = arith.constant 0 : index
    %c0_1 = arith.constant 0 : index
    %1 = vector.load %arg2[%c0, %c0_0, %c0_1] : memref<1x32x128xbf16, #tpu.memory_space<vmem>>, vector<1x32x32xbf16>
    %2 = vector.shape_cast %1 : vector<1x32x32xbf16> to vector<32x32xbf16>
    %3 = arith.extf %2 : vector<32x32xbf16> to vector<32x32xf32>
    %c0_2 = arith.constant 0 : index
    %c0_3 = arith.constant 0 : index
    %c0_4 = arith.constant 0 : index
    %4 = vector.load %arg3[%c0_2, %c0_3, %c0_4] : memref<1x16x128xbf16, #tpu.memory_space<vmem>>, vector<1x16x32xbf16>
    %5 = vector.shape_cast %4 : vector<1x16x32xbf16> to vector<16x32xbf16>
    %6 = arith.extf %5 : vector<16x32xbf16> to vector<16x32xf32>
    %7 = arith.mulf %3, %3 : vector<32x32xf32>
    %cst_5 = arith.constant dense<0.000000e+00> : vector<32xf32>
    %8 = vector.multi_reduction <add>, %7, %cst_5 [1] : vector<32x32xf32> to vector<32xf32>
    %9 = vector.shape_cast %8 : vector<32xf32> to vector<32x1xf32>
    %cst_6 = arith.constant 3.200000e+01 : f32
    %10 = vector.broadcast %cst_6 : f32 to vector<32x1xf32>
    %11 = arith.divf %9, %10 : vector<32x1xf32>
    %cst_7 = arith.constant 9.99999997E-7 : f32
    %12 = vector.broadcast %cst_7 : f32 to vector<32x1xf32>
    %13 = arith.addf %11, %12 : vector<32x1xf32>
    %14 = math.rsqrt %13 : vector<32x1xf32>
    %cst_8 = arith.constant 0.176776692 : f32
    %15 = vector.broadcast %cst_8 : f32 to vector<32x1xf32>
    %16 = arith.mulf %14, %15 : vector<32x1xf32>
    %17 = vector.broadcast %16 : vector<32x1xf32> to vector<32x32xf32>
    %18 = arith.mulf %3, %17 : vector<32x32xf32>
    %19 = arith.mulf %6, %6 : vector<16x32xf32>
    %cst_9 = arith.constant dense<0.000000e+00> : vector<16xf32>
    %20 = vector.multi_reduction <add>, %19, %cst_9 [1] : vector<16x32xf32> to vector<16xf32>
    %21 = vector.shape_cast %20 : vector<16xf32> to vector<16x1xf32>
    %cst_10 = arith.constant 3.200000e+01 : f32
    %22 = vector.broadcast %cst_10 : f32 to vector<16x1xf32>
    %23 = arith.divf %21, %22 : vector<16x1xf32>
    %cst_11 = arith.constant 9.99999997E-7 : f32
    %24 = vector.broadcast %cst_11 : f32 to vector<16x1xf32>
    %25 = arith.addf %23, %24 : vector<16x1xf32>
    %26 = math.rsqrt %25 : vector<16x1xf32>
    %27 = vector.broadcast %26 : vector<16x1xf32> to vector<16x32xf32>
    %28 = arith.mulf %6, %27 : vector<16x32xf32>
    %29 = arith.truncf %18 : vector<32x32xf32> to vector<32x32xbf16>
    %30 = arith.truncf %28 : vector<16x32xf32> to vector<16x32xbf16>
    %cst_12 = arith.constant dense<0.000000e+00> : vector<32x16xf32>
    %31 = tpu.matmul %29, %30, %cst_12 {dimension_numbers = #tpu.dot_dimension_numbers<[1], [1], [0], [0], [0, 0, 1, 0], [], []>} : vector<32x32xbf16>, vector<16x32xbf16>, vector<32x16xf32> -> vector<32x16xf32>
    %cst_13 = arith.constant dense<0xFF800000> : vector<32xf32>
    %32 = vector.multi_reduction <maximumf>, %31, %cst_13 [1] : vector<32x16xf32> to vector<32xf32>
    %33 = vector.shape_cast %32 : vector<32xf32> to vector<32x1xf32>
    %34 = vector.broadcast %33 : vector<32x1xf32> to vector<32x16xf32>
    %35 = arith.subf %31, %34 : vector<32x16xf32>
    %36 = math.exp %35 : vector<32x16xf32>
    %cst_14 = arith.constant dense<0.000000e+00> : vector<32xf32>
    %37 = vector.multi_reduction <add>, %36, %cst_14 [1] : vector<32x16xf32> to vector<32xf32>
    %38 = vector.shape_cast %37 : vector<32xf32> to vector<32x1xf32>
    %39 = tpu.reciprocal %38 {approx = true} : vector<32x1xf32> -> vector<32x1xf32>
    %40 = vector.broadcast %39 : vector<32x1xf32> to vector<32x16xf32>
    %41 = arith.mulf %36, %40 : vector<32x16xf32>
    %42 = arith.truncf %41 : vector<32x16xf32> to vector<32x16xbf16>
    %c0_15 = arith.constant 0 : index
    %c0_16 = arith.constant 0 : index
    %c0_17 = arith.constant 0 : index
    %43 = vector.load %arg4[%c0_15, %c0_16, %c0_17] : memref<1x16x128xbf16, #tpu.memory_space<vmem>>, vector<1x16x32xbf16>
    %44 = vector.shape_cast %43 : vector<1x16x32xbf16> to vector<16x32xbf16>
    %cst_18 = arith.constant dense<0.000000e+00> : vector<32x32xf32>
    %45 = tpu.matmul %42, %44, %cst_18 {dimension_numbers = #tpu.dot_dimension_numbers<[1], [0], [0], [1], [0, 0, 1, 1], [], []>} : vector<32x16xbf16>, vector<16x32xbf16>, vector<32x32xf32> -> vector<32x32xf32>
    %46 = arith.truncf %45 : vector<32x32xf32> to vector<32x32xbf16>
    %c0_19 = arith.constant 0 : index
    %c0_20 = arith.constant 0 : index
    %47 = vector.load %arg5[%c0_19, %c0_20] : memref<128x128xbf16, #tpu.memory_space<vmem>>, vector<32x128xbf16>
    %cst_21 = arith.constant dense<0.000000e+00> : vector<32x128xf32>
    %48 = tpu.matmul %46, %47, %cst_21 {dimension_numbers = #tpu.dot_dimension_numbers<[1], [0], [0], [1], [0, 0, 1, 1], [], []>} : vector<32x32xbf16>, vector<32x128xbf16>, vector<32x128xf32> -> vector<32x128xf32>
    %49 = arith.addf %0, %48 : vector<32x128xf32>
    %c0_22 = arith.constant 0 : index
    %c0_23 = arith.constant 0 : index
    %c32 = arith.constant 32 : index
    %50 = vector.load %arg2[%c0_22, %c0_23, %c32] : memref<1x32x128xbf16, #tpu.memory_space<vmem>>, vector<1x32x32xbf16>
    %51 = vector.shape_cast %50 : vector<1x32x32xbf16> to vector<32x32xbf16>
    %52 = arith.extf %51 : vector<32x32xbf16> to vector<32x32xf32>
    %c0_24 = arith.constant 0 : index
    %c0_25 = arith.constant 0 : index
    %c32_26 = arith.constant 32 : index
    %53 = vector.load %arg3[%c0_24, %c0_25, %c32_26] : memref<1x16x128xbf16, #tpu.memory_space<vmem>>, vector<1x16x32xbf16>
    %54 = vector.shape_cast %53 : vector<1x16x32xbf16> to vector<16x32xbf16>
    %55 = arith.extf %54 : vector<16x32xbf16> to vector<16x32xf32>
    %56 = arith.mulf %52, %52 : vector<32x32xf32>
    %cst_27 = arith.constant dense<0.000000e+00> : vector<32xf32>
    %57 = vector.multi_reduction <add>, %56, %cst_27 [1] : vector<32x32xf32> to vector<32xf32>
    %58 = vector.shape_cast %57 : vector<32xf32> to vector<32x1xf32>
    %cst_28 = arith.constant 3.200000e+01 : f32
    %59 = vector.broadcast %cst_28 : f32 to vector<32x1xf32>
    %60 = arith.divf %58, %59 : vector<32x1xf32>
    %cst_29 = arith.constant 9.99999997E-7 : f32
    %61 = vector.broadcast %cst_29 : f32 to vector<32x1xf32>
    %62 = arith.addf %60, %61 : vector<32x1xf32>
    %63 = math.rsqrt %62 : vector<32x1xf32>
    %cst_30 = arith.constant 0.176776692 : f32
    %64 = vector.broadcast %cst_30 : f32 to vector<32x1xf32>
    %65 = arith.mulf %63, %64 : vector<32x1xf32>
    %66 = vector.broadcast %65 : vector<32x1xf32> to vector<32x32xf32>
    %67 = arith.mulf %52, %66 : vector<32x32xf32>
    %68 = arith.mulf %55, %55 : vector<16x32xf32>
    %cst_31 = arith.constant dense<0.000000e+00> : vector<16xf32>
    %69 = vector.multi_reduction <add>, %68, %cst_31 [1] : vector<16x32xf32> to vector<16xf32>
    %70 = vector.shape_cast %69 : vector<16xf32> to vector<16x1xf32>
    %cst_32 = arith.constant 3.200000e+01 : f32
    %71 = vector.broadcast %cst_32 : f32 to vector<16x1xf32>
    %72 = arith.divf %70, %71 : vector<16x1xf32>
    %cst_33 = arith.constant 9.99999997E-7 : f32
    %73 = vector.broadcast %cst_33 : f32 to vector<16x1xf32>
    %74 = arith.addf %72, %73 : vector<16x1xf32>
    %75 = math.rsqrt %74 : vector<16x1xf32>
    %76 = vector.broadcast %75 : vector<16x1xf32> to vector<16x32xf32>
    %77 = arith.mulf %55, %76 : vector<16x32xf32>
    %78 = arith.truncf %67 : vector<32x32xf32> to vector<32x32xbf16>
    %79 = arith.truncf %77 : vector<16x32xf32> to vector<16x32xbf16>
    %cst_34 = arith.constant dense<0.000000e+00> : vector<32x16xf32>
    %80 = tpu.matmul %78, %79, %cst_34 {dimension_numbers = #tpu.dot_dimension_numbers<[1], [1], [0], [0], [0, 0, 1, 0], [], []>} : vector<32x32xbf16>, vector<16x32xbf16>, vector<32x16xf32> -> vector<32x16xf32>
    %cst_35 = arith.constant dense<0xFF800000> : vector<32xf32>
    %81 = vector.multi_reduction <maximumf>, %80, %cst_35 [1] : vector<32x16xf32> to vector<32xf32>
    %82 = vector.shape_cast %81 : vector<32xf32> to vector<32x1xf32>
    %83 = vector.broadcast %82 : vector<32x1xf32> to vector<32x16xf32>
    %84 = arith.subf %80, %83 : vector<32x16xf32>
    %85 = math.exp %84 : vector<32x16xf32>
    %cst_36 = arith.constant dense<0.000000e+00> : vector<32xf32>
    %86 = vector.multi_reduction <add>, %85, %cst_36 [1] : vector<32x16xf32> to vector<32xf32>
    %87 = vector.shape_cast %86 : vector<32xf32> to vector<32x1xf32>
    %88 = tpu.reciprocal %87 {approx = true} : vector<32x1xf32> -> vector<32x1xf32>
    %89 = vector.broadcast %88 : vector<32x1xf32> to vector<32x16xf32>
    %90 = arith.mulf %85, %89 : vector<32x16xf32>
    %91 = arith.truncf %90 : vector<32x16xf32> to vector<32x16xbf16>
    %c0_37 = arith.constant 0 : index
    %c0_38 = arith.constant 0 : index
    %c32_39 = arith.constant 32 : index
    %92 = vector.load %arg4[%c0_37, %c0_38, %c32_39] : memref<1x16x128xbf16, #tpu.memory_space<vmem>>, vector<1x16x32xbf16>
    %93 = vector.shape_cast %92 : vector<1x16x32xbf16> to vector<16x32xbf16>
    %cst_40 = arith.constant dense<0.000000e+00> : vector<32x32xf32>
    %94 = tpu.matmul %91, %93, %cst_40 {dimension_numbers = #tpu.dot_dimension_numbers<[1], [0], [0], [1], [0, 0, 1, 1], [], []>} : vector<32x16xbf16>, vector<16x32xbf16>, vector<32x32xf32> -> vector<32x32xf32>
    %95 = arith.truncf %94 : vector<32x32xf32> to vector<32x32xbf16>
    %c32_41 = arith.constant 32 : index
    %c0_42 = arith.constant 0 : index
    %96 = vector.load %arg5[%c32_41, %c0_42] : memref<128x128xbf16, #tpu.memory_space<vmem>>, vector<32x128xbf16>
    %cst_43 = arith.constant dense<0.000000e+00> : vector<32x128xf32>
    %97 = tpu.matmul %95, %96, %cst_43 {dimension_numbers = #tpu.dot_dimension_numbers<[1], [0], [0], [1], [0, 0, 1, 1], [], []>} : vector<32x32xbf16>, vector<32x128xbf16>, vector<32x128xf32> -> vector<32x128xf32>
    %98 = arith.addf %49, %97 : vector<32x128xf32>
    %c0_44 = arith.constant 0 : index
    %c0_45 = arith.constant 0 : index
    %c64 = arith.constant 64 : index
    %99 = vector.load %arg2[%c0_44, %c0_45, %c64] : memref<1x32x128xbf16, #tpu.memory_space<vmem>>, vector<1x32x32xbf16>
    %100 = vector.shape_cast %99 : vector<1x32x32xbf16> to vector<32x32xbf16>
    %101 = arith.extf %100 : vector<32x32xbf16> to vector<32x32xf32>
    %c0_46 = arith.constant 0 : index
    %c0_47 = arith.constant 0 : index
    %c64_48 = arith.constant 64 : index
    %102 = vector.load %arg3[%c0_46, %c0_47, %c64_48] : memref<1x16x128xbf16, #tpu.memory_space<vmem>>, vector<1x16x32xbf16>
    %103 = vector.shape_cast %102 : vector<1x16x32xbf16> to vector<16x32xbf16>
    %104 = arith.extf %103 : vector<16x32xbf16> to vector<16x32xf32>
    %105 = arith.mulf %101, %101 : vector<32x32xf32>
    %cst_49 = arith.constant dense<0.000000e+00> : vector<32xf32>
    %106 = vector.multi_reduction <add>, %105, %cst_49 [1] : vector<32x32xf32> to vector<32xf32>
    %107 = vector.shape_cast %106 : vector<32xf32> to vector<32x1xf32>
    %cst_50 = arith.constant 3.200000e+01 : f32
    %108 = vector.broadcast %cst_50 : f32 to vector<32x1xf32>
    %109 = arith.divf %107, %108 : vector<32x1xf32>
    %cst_51 = arith.constant 9.99999997E-7 : f32
    %110 = vector.broadcast %cst_51 : f32 to vector<32x1xf32>
    %111 = arith.addf %109, %110 : vector<32x1xf32>
    %112 = math.rsqrt %111 : vector<32x1xf32>
    %cst_52 = arith.constant 0.176776692 : f32
    %113 = vector.broadcast %cst_52 : f32 to vector<32x1xf32>
    %114 = arith.mulf %112, %113 : vector<32x1xf32>
    %115 = vector.broadcast %114 : vector<32x1xf32> to vector<32x32xf32>
    %116 = arith.mulf %101, %115 : vector<32x32xf32>
    %117 = arith.mulf %104, %104 : vector<16x32xf32>
    %cst_53 = arith.constant dense<0.000000e+00> : vector<16xf32>
    %118 = vector.multi_reduction <add>, %117, %cst_53 [1] : vector<16x32xf32> to vector<16xf32>
    %119 = vector.shape_cast %118 : vector<16xf32> to vector<16x1xf32>
    %cst_54 = arith.constant 3.200000e+01 : f32
    %120 = vector.broadcast %cst_54 : f32 to vector<16x1xf32>
    %121 = arith.divf %119, %120 : vector<16x1xf32>
    %cst_55 = arith.constant 9.99999997E-7 : f32
    %122 = vector.broadcast %cst_55 : f32 to vector<16x1xf32>
    %123 = arith.addf %121, %122 : vector<16x1xf32>
    %124 = math.rsqrt %123 : vector<16x1xf32>
    %125 = vector.broadcast %124 : vector<16x1xf32> to vector<16x32xf32>
    %126 = arith.mulf %104, %125 : vector<16x32xf32>
    %127 = arith.truncf %116 : vector<32x32xf32> to vector<32x32xbf16>
    %128 = arith.truncf %126 : vector<16x32xf32> to vector<16x32xbf16>
    %cst_56 = arith.constant dense<0.000000e+00> : vector<32x16xf32>
    %129 = tpu.matmul %127, %128, %cst_56 {dimension_numbers = #tpu.dot_dimension_numbers<[1], [1], [0], [0], [0, 0, 1, 0], [], []>} : vector<32x32xbf16>, vector<16x32xbf16>, vector<32x16xf32> -> vector<32x16xf32>
    %cst_57 = arith.constant dense<0xFF800000> : vector<32xf32>
    %130 = vector.multi_reduction <maximumf>, %129, %cst_57 [1] : vector<32x16xf32> to vector<32xf32>
    %131 = vector.shape_cast %130 : vector<32xf32> to vector<32x1xf32>
    %132 = vector.broadcast %131 : vector<32x1xf32> to vector<32x16xf32>
    %133 = arith.subf %129, %132 : vector<32x16xf32>
    %134 = math.exp %133 : vector<32x16xf32>
    %cst_58 = arith.constant dense<0.000000e+00> : vector<32xf32>
    %135 = vector.multi_reduction <add>, %134, %cst_58 [1] : vector<32x16xf32> to vector<32xf32>
    %136 = vector.shape_cast %135 : vector<32xf32> to vector<32x1xf32>
    %137 = tpu.reciprocal %136 {approx = true} : vector<32x1xf32> -> vector<32x1xf32>
    %138 = vector.broadcast %137 : vector<32x1xf32> to vector<32x16xf32>
    %139 = arith.mulf %134, %138 : vector<32x16xf32>
    %140 = arith.truncf %139 : vector<32x16xf32> to vector<32x16xbf16>
    %c0_59 = arith.constant 0 : index
    %c0_60 = arith.constant 0 : index
    %c64_61 = arith.constant 64 : index
    %141 = vector.load %arg4[%c0_59, %c0_60, %c64_61] : memref<1x16x128xbf16, #tpu.memory_space<vmem>>, vector<1x16x32xbf16>
    %142 = vector.shape_cast %141 : vector<1x16x32xbf16> to vector<16x32xbf16>
    %cst_62 = arith.constant dense<0.000000e+00> : vector<32x32xf32>
    %143 = tpu.matmul %140, %142, %cst_62 {dimension_numbers = #tpu.dot_dimension_numbers<[1], [0], [0], [1], [0, 0, 1, 1], [], []>} : vector<32x16xbf16>, vector<16x32xbf16>, vector<32x32xf32> -> vector<32x32xf32>
    %144 = arith.truncf %143 : vector<32x32xf32> to vector<32x32xbf16>
    %c64_63 = arith.constant 64 : index
    %c0_64 = arith.constant 0 : index
    %145 = vector.load %arg5[%c64_63, %c0_64] : memref<128x128xbf16, #tpu.memory_space<vmem>>, vector<32x128xbf16>
    %cst_65 = arith.constant dense<0.000000e+00> : vector<32x128xf32>
    %146 = tpu.matmul %144, %145, %cst_65 {dimension_numbers = #tpu.dot_dimension_numbers<[1], [0], [0], [1], [0, 0, 1, 1], [], []>} : vector<32x32xbf16>, vector<32x128xbf16>, vector<32x128xf32> -> vector<32x128xf32>
    %147 = arith.addf %98, %146 : vector<32x128xf32>
    %c0_66 = arith.constant 0 : index
    %c0_67 = arith.constant 0 : index
    %c96 = arith.constant 96 : index
    %148 = vector.load %arg2[%c0_66, %c0_67, %c96] : memref<1x32x128xbf16, #tpu.memory_space<vmem>>, vector<1x32x32xbf16>
    %149 = vector.shape_cast %148 : vector<1x32x32xbf16> to vector<32x32xbf16>
    %150 = arith.extf %149 : vector<32x32xbf16> to vector<32x32xf32>
    %c0_68 = arith.constant 0 : index
    %c0_69 = arith.constant 0 : index
    %c96_70 = arith.constant 96 : index
    %151 = vector.load %arg3[%c0_68, %c0_69, %c96_70] : memref<1x16x128xbf16, #tpu.memory_space<vmem>>, vector<1x16x32xbf16>
    %152 = vector.shape_cast %151 : vector<1x16x32xbf16> to vector<16x32xbf16>
    %153 = arith.extf %152 : vector<16x32xbf16> to vector<16x32xf32>
    %154 = arith.mulf %150, %150 : vector<32x32xf32>
    %cst_71 = arith.constant dense<0.000000e+00> : vector<32xf32>
    %155 = vector.multi_reduction <add>, %154, %cst_71 [1] : vector<32x32xf32> to vector<32xf32>
    %156 = vector.shape_cast %155 : vector<32xf32> to vector<32x1xf32>
    %cst_72 = arith.constant 3.200000e+01 : f32
    %157 = vector.broadcast %cst_72 : f32 to vector<32x1xf32>
    %158 = arith.divf %156, %157 : vector<32x1xf32>
    %cst_73 = arith.constant 9.99999997E-7 : f32
    %159 = vector.broadcast %cst_73 : f32 to vector<32x1xf32>
    %160 = arith.addf %158, %159 : vector<32x1xf32>
    %161 = math.rsqrt %160 : vector<32x1xf32>
    %cst_74 = arith.constant 0.176776692 : f32
    %162 = vector.broadcast %cst_74 : f32 to vector<32x1xf32>
    %163 = arith.mulf %161, %162 : vector<32x1xf32>
    %164 = vector.broadcast %163 : vector<32x1xf32> to vector<32x32xf32>
    %165 = arith.mulf %150, %164 : vector<32x32xf32>
    %166 = arith.mulf %153, %153 : vector<16x32xf32>
    %cst_75 = arith.constant dense<0.000000e+00> : vector<16xf32>
    %167 = vector.multi_reduction <add>, %166, %cst_75 [1] : vector<16x32xf32> to vector<16xf32>
    %168 = vector.shape_cast %167 : vector<16xf32> to vector<16x1xf32>
    %cst_76 = arith.constant 3.200000e+01 : f32
    %169 = vector.broadcast %cst_76 : f32 to vector<16x1xf32>
    %170 = arith.divf %168, %169 : vector<16x1xf32>
    %cst_77 = arith.constant 9.99999997E-7 : f32
    %171 = vector.broadcast %cst_77 : f32 to vector<16x1xf32>
    %172 = arith.addf %170, %171 : vector<16x1xf32>
    %173 = math.rsqrt %172 : vector<16x1xf32>
    %174 = vector.broadcast %173 : vector<16x1xf32> to vector<16x32xf32>
    %175 = arith.mulf %153, %174 : vector<16x32xf32>
    %176 = arith.truncf %165 : vector<32x32xf32> to vector<32x32xbf16>
    %177 = arith.truncf %175 : vector<16x32xf32> to vector<16x32xbf16>
    %cst_78 = arith.constant dense<0.000000e+00> : vector<32x16xf32>
    %178 = tpu.matmul %176, %177, %cst_78 {dimension_numbers = #tpu.dot_dimension_numbers<[1], [1], [0], [0], [0, 0, 1, 0], [], []>} : vector<32x32xbf16>, vector<16x32xbf16>, vector<32x16xf32> -> vector<32x16xf32>
    %cst_79 = arith.constant dense<0xFF800000> : vector<32xf32>
    %179 = vector.multi_reduction <maximumf>, %178, %cst_79 [1] : vector<32x16xf32> to vector<32xf32>
    %180 = vector.shape_cast %179 : vector<32xf32> to vector<32x1xf32>
    %181 = vector.broadcast %180 : vector<32x1xf32> to vector<32x16xf32>
    %182 = arith.subf %178, %181 : vector<32x16xf32>
    %183 = math.exp %182 : vector<32x16xf32>
    %cst_80 = arith.constant dense<0.000000e+00> : vector<32xf32>
    %184 = vector.multi_reduction <add>, %183, %cst_80 [1] : vector<32x16xf32> to vector<32xf32>
    %185 = vector.shape_cast %184 : vector<32xf32> to vector<32x1xf32>
    %186 = tpu.reciprocal %185 {approx = true} : vector<32x1xf32> -> vector<32x1xf32>
    %187 = vector.broadcast %186 : vector<32x1xf32> to vector<32x16xf32>
    %188 = arith.mulf %183, %187 : vector<32x16xf32>
    %189 = arith.truncf %188 : vector<32x16xf32> to vector<32x16xbf16>
    %c0_81 = arith.constant 0 : index
    %c0_82 = arith.constant 0 : index
    %c96_83 = arith.constant 96 : index
    %190 = vector.load %arg4[%c0_81, %c0_82, %c96_83] : memref<1x16x128xbf16, #tpu.memory_space<vmem>>, vector<1x16x32xbf16>
    %191 = vector.shape_cast %190 : vector<1x16x32xbf16> to vector<16x32xbf16>
    %cst_84 = arith.constant dense<0.000000e+00> : vector<32x32xf32>
    %192 = tpu.matmul %189, %191, %cst_84 {dimension_numbers = #tpu.dot_dimension_numbers<[1], [0], [0], [1], [0, 0, 1, 1], [], []>} : vector<32x16xbf16>, vector<16x32xbf16>, vector<32x32xf32> -> vector<32x32xf32>
    %193 = arith.truncf %192 : vector<32x32xf32> to vector<32x32xbf16>
    %c96_85 = arith.constant 96 : index
    %c0_86 = arith.constant 0 : index
    %194 = vector.load %arg5[%c96_85, %c0_86] : memref<128x128xbf16, #tpu.memory_space<vmem>>, vector<32x128xbf16>
    %cst_87 = arith.constant dense<0.000000e+00> : vector<32x128xf32>
    %195 = tpu.matmul %193, %194, %cst_87 {dimension_numbers = #tpu.dot_dimension_numbers<[1], [0], [0], [1], [0, 0, 1, 1], [], []>} : vector<32x32xbf16>, vector<32x128xbf16>, vector<32x128xf32> -> vector<32x128xf32>
    %196 = arith.addf %147, %195 : vector<32x128xf32>
    %c0_88 = arith.constant 0 : index
    %c5 = arith.constant 5 : index
    %c0_89 = arith.constant 0 : index
    %197 = vector.load %arg6[%c0_88, %c5, %c0_89] : memref<1x9x128xf32, #tpu.memory_space<vmem>>, vector<1x1x128xf32>
    %198 = vector.shape_cast %197 : vector<1x1x128xf32> to vector<1x128xf32>
    %c0_90 = arith.constant 0 : index
    %c0_91 = arith.constant 0 : index
    %c0_92 = arith.constant 0 : index
    %199 = vector.load %arg7[%c0_90, %c0_91, %c0_92] : memref<1x32x128xf32, #tpu.memory_space<vmem>>, vector<1x32x128xf32>
    %200 = vector.shape_cast %199 : vector<1x32x128xf32> to vector<32x128xf32>
    %201 = vector.broadcast %198 : vector<1x128xf32> to vector<32x128xf32>
    %202 = arith.mulf %196, %201 : vector<32x128xf32>
    %203 = arith.addf %200, %202 : vector<32x128xf32>
    %c0_93 = arith.constant 0 : index
    %c0_94 = arith.constant 0 : index
    %c0_95 = arith.constant 0 : index
    %204 = vector.load %arg8[%c0_93, %c0_94, %c0_95] : memref<1x32x128xf32, #tpu.memory_space<vmem>>, vector<1x32x128xf32>
    %205 = vector.shape_cast %204 : vector<1x32x128xf32> to vector<32x128xf32>
    %206 = vector.shape_cast %203 : vector<32x128xf32> to vector<1x32x128xf32>
    tpu.vector_store %arg8[%c0_93, %c0_94, %c0_95], %206 {strides = array<i32>} : memref<1x32x128xf32, #tpu.memory_space<vmem>>, vector<1x32x128xf32>,
    return
  }
  func.func @transform_0(%arg0: i32, %arg1: i32) -> (i32, i32, i32) {
    %c0_i32 = arith.constant 0 : i32
    %c0_i32_0 = arith.constant 0 : i32
    return %arg0, %arg1, %c0_i32 : i32, i32, i32
  }
  func.func @transform_1(%arg0: i32, %arg1: i32) -> (i32, i32, i32) {
    %c0_i32 = arith.constant 0 : i32
    %c0_i32_0 = arith.constant 0 : i32
    %c0_i32_1 = arith.constant 0 : i32
    return %arg0, %c0_i32, %c0_i32_0 : i32, i32, i32
  }
  func.func @transform_2(%arg0: i32, %arg1: i32) -> (i32, i32, i32) {
    %c0_i32 = arith.constant 0 : i32
    %c1_i32 = arith.constant 1 : i32
    %c0_i32_0 = arith.constant 0 : i32
    return %arg0, %c0_i32, %c1_i32 : i32, i32, i32
  }
  func.func @transform_3(%arg0: i32, %arg1: i32) -> (i32, i32) {
    %c0_i32 = arith.constant 0 : i32
    %c0_i32_0 = arith.constant 0 : i32
    %c0_i32_1 = arith.constant 0 : i32
    return %c0_i32, %c0_i32_0 : i32, i32
  }
  func.func @transform_4(%arg0: i32, %arg1: i32) -> (i32, i32, i32) {
    %c0_i32 = arith.constant 0 : i32
    %c0_i32_0 = arith.constant 0 : i32
    %c0_i32_1 = arith.constant 0 : i32
    return %arg0, %c0_i32, %c0_i32_0 : i32, i32, i32
  }
  func.func @transform_5(%arg0: i32, %arg1: i32) -> (i32, i32, i32) {
    %c0_i32 = arith.constant 0 : i32
    %c0_i32_0 = arith.constant 0 : i32
    return %arg0, %arg1, %c0_i32 : i32, i32, i32
  }
  func.func @transform_6(%arg0: i32, %arg1: i32) -> (i32, i32, i32) {
    %c0_i32 = arith.constant 0 : i32
    %c0_i32_0 = arith.constant 0 : i32
    return %arg0, %arg1, %c0_i32 : i32, i32, i32
  }
}

module attributes {stable_mosaic.version = 11 : i64} {
  func.func @_linear_gated_res_kernel(%arg0: i32, %arg1: i32, %arg2: memref<1x32x512xbf16, #tpu.memory_space<vmem>>, %arg3: memref<512x128xbf16, #tpu.memory_space<vmem>>, %arg4: memref<1x128xf32, #tpu.memory_space<vmem>>, %arg5: memref<1x32x128xf32, #tpu.memory_space<vmem>>, %arg6: memref<1x9x128xf32, #tpu.memory_space<vmem>>, %arg7: memref<1x32x128xf32, #tpu.memory_space<vmem>>) attributes {dimension_semantics = [#tpu.dimension_semantics<parallel>, #tpu.dimension_semantics<parallel>], iteration_bounds = array<i64: 2, 1>, scalar_prefetch = 0 : i64, scratch_operands = 0 : i64, tpu.core_type = #tpu.core_type<tc>, window_params = [{transform_indices = @transform_0, window_bounds = array<i64: 1, 32, 512>}, {pipeline_mode = #tpu.pipeline_mode<synchronous>, transform_indices = @transform_1, window_bounds = array<i64: 512, 128>}, {pipeline_mode = #tpu.pipeline_mode<synchronous>, transform_indices = @transform_2, window_bounds = array<i64: 1, 128>}, {transform_indices = @transform_3, window_bounds = array<i64: 1, 32, 128>}, {transform_indices = @transform_4, window_bounds = array<i64: 1, 9, 128>}, {transform_indices = @transform_5, window_bounds = array<i64: 1, 32, 128>}]} {
    %c0 = arith.constant 0 : index
    %c0_0 = arith.constant 0 : index
    %c0_1 = arith.constant 0 : index
    %0 = vector.load %arg2[%c0, %c0_0, %c0_1] : memref<1x32x512xbf16, #tpu.memory_space<vmem>>, vector<1x32x512xbf16>
    %1 = vector.shape_cast %0 : vector<1x32x512xbf16> to vector<32x512xbf16>
    %c0_2 = arith.constant 0 : index
    %c0_3 = arith.constant 0 : index
    %2 = vector.load %arg3[%c0_2, %c0_3] : memref<512x128xbf16, #tpu.memory_space<vmem>>, vector<512x128xbf16>
    %cst = arith.constant dense<0.000000e+00> : vector<32x128xf32>
    %3 = tpu.matmul %1, %2, %cst {dimension_numbers = #tpu.dot_dimension_numbers<[1], [0], [0], [1], [0, 0, 1, 1], [], []>} : vector<32x512xbf16>, vector<512x128xbf16>, vector<32x128xf32> -> vector<32x128xf32>
    %c0_4 = arith.constant 0 : index
    %c0_5 = arith.constant 0 : index
    %4 = vector.load %arg4[%c0_4, %c0_5] : memref<1x128xf32, #tpu.memory_space<vmem>>, vector<1x128xf32>
    %5 = vector.broadcast %4 : vector<1x128xf32> to vector<32x128xf32>
    %6 = arith.addf %3, %5 : vector<32x128xf32>
    %c0_6 = arith.constant 0 : index
    %c8 = arith.constant 8 : index
    %c0_7 = arith.constant 0 : index
    %7 = vector.load %arg6[%c0_6, %c8, %c0_7] : memref<1x9x128xf32, #tpu.memory_space<vmem>>, vector<1x1x128xf32>
    %8 = vector.shape_cast %7 : vector<1x1x128xf32> to vector<1x128xf32>
    %c0_8 = arith.constant 0 : index
    %c0_9 = arith.constant 0 : index
    %c0_10 = arith.constant 0 : index
    %9 = vector.load %arg5[%c0_8, %c0_9, %c0_10] : memref<1x32x128xf32, #tpu.memory_space<vmem>>, vector<1x32x128xf32>
    %10 = vector.shape_cast %9 : vector<1x32x128xf32> to vector<32x128xf32>
    %11 = vector.broadcast %8 : vector<1x128xf32> to vector<32x128xf32>
    %12 = arith.mulf %6, %11 : vector<32x128xf32>
    %13 = arith.addf %10, %12 : vector<32x128xf32>
    %c0_11 = arith.constant 0 : index
    %c0_12 = arith.constant 0 : index
    %c0_13 = arith.constant 0 : index
    %14 = vector.load %arg7[%c0_11, %c0_12, %c0_13] : memref<1x32x128xf32, #tpu.memory_space<vmem>>, vector<1x32x128xf32>
    %15 = vector.shape_cast %14 : vector<1x32x128xf32> to vector<32x128xf32>
    %16 = vector.shape_cast %13 : vector<32x128xf32> to vector<1x32x128xf32>
    tpu.vector_store %arg7[%c0_11, %c0_12, %c0_13], %16 {strides = array<i32>} : memref<1x32x128xf32, #tpu.memory_space<vmem>>, vector<1x32x128xf32>,
    return
  }
  func.func @transform_0(%arg0: i32, %arg1: i32) -> (i32, i32, i32) {
    %c0_i32 = arith.constant 0 : i32
    %c0_i32_0 = arith.constant 0 : i32
    return %arg0, %arg1, %c0_i32 : i32, i32, i32
  }
  func.func @transform_1(%arg0: i32, %arg1: i32) -> (i32, i32) {
    %c0_i32 = arith.constant 0 : i32
    %c0_i32_0 = arith.constant 0 : i32
    %c0_i32_1 = arith.constant 0 : i32
    return %c0_i32, %c0_i32_0 : i32, i32
  }
  func.func @transform_2(%arg0: i32, %arg1: i32) -> (i32, i32) {
    %c0_i32 = arith.constant 0 : i32
    %c0_i32_0 = arith.constant 0 : i32
    %c0_i32_1 = arith.constant 0 : i32
    return %c0_i32, %c0_i32_0 : i32, i32
  }
  func.func @transform_3(%arg0: i32, %arg1: i32) -> (i32, i32, i32) {
    %c0_i32 = arith.constant 0 : i32
    %c0_i32_0 = arith.constant 0 : i32
    return %arg0, %arg1, %c0_i32 : i32, i32, i32
  }
  func.func @transform_4(%arg0: i32, %arg1: i32) -> (i32, i32, i32) {
    %c0_i32 = arith.constant 0 : i32
    %c0_i32_0 = arith.constant 0 : i32
    %c0_i32_1 = arith.constant 0 : i32
    return %arg0, %c0_i32, %c0_i32_0 : i32, i32, i32
  }
  func.func @transform_5(%arg0: i32, %arg1: i32) -> (i32, i32, i32) {
    %c0_i32 = arith.constant 0 : i32
    %c0_i32_0 = arith.constant 0 : i32
    return %arg0, %arg1, %c0_i32 : i32, i32, i32
  }
}

</mosaic_0001>

<llo_original>
// kernel: dit_block_forward.10
$region0: #{dit_block_forward.10}
  #allocation0 [shape = 'u32[]', space=smem, size = 0x4, offset = 0x4, fixed_abs, tag = 'smem constant byte address 0x4 - core index']
  #allocation1 [shape = 'u32[144,128]{1,0:T(1,128)}', space=vmem, size = 0x12000, scoped, tag = 'internal scratch']
  %s0 = inlined_call_operand.vmem [shape: f32[2,16,64], index: 0, kind: input, shape index: {}]
  %s1 = inlined_call_operand.vmem [shape: bf16[64,256], index: 1, kind: input, shape index: {}]
  %s2 = inlined_call_operand.vmem [shape: f32[1,256], index: 2, kind: input, shape index: {}]
  %s3 = inlined_call_operand.vmem [shape: bf16[2,16,256], index: 3, kind: output, shape index: {}]
  %s4 = sld [smem:[#allocation0]]
  $region45: #{dit_block_forward.10} parent=0
    _
  %s6 = ssub.s32 1, %s4
  %s7 = scalar_select 0, %s6, %s4
  loop: start=0, step=1, limit=4
  $region2: #{dit_block_forward.10} parent=0 // loop_pre_header
    _
  $region3: #{dit_block_forward.10} parent=0 // loop_header
    %s9 = sphi 0, %s13
    %p10 = scmp.ge.s32.totalorder %s9, 4
    %s16 = sphi 0, %s28
    %s17 = sphi 0, %s24
    %s18 = sphi 0, %s16
    %s19 = sphi 0, %s17
    %s20 = sphi 0, %s18
    %s21 = sphi 0, %s19
    %s33 = sphi 0, %s35
    %s36 = sphi 0, %s33
    %s37 = sphi 0, %s36
    %s53 = sphi 0, %s37
    %s57 = sphi 0, %s57
    %s59 = sphi 0, %s57
    %s60 = sphi 0, %s59
    %s74 = sphi 0, %s60
    %s78 = sphi 0, %s78
    %s80 = sphi 0, %s78
    %s81 = sphi 0, %s80
    %s95 = sphi 0, %s81
    %s103 = sphi 0, %s105
    %s106 = sphi 0, %s103
    %s107 = sphi 0, %s106
    %s123 = sphi 0, %s107
  $region4: #{dit_block_forward.10} parent=0 // loop_header_branch
    %12 = sbr.rel (%p10) target = $region8
  $region5: #{dit_block_forward.10} parent=0 // loop_body
    %s14 = ssub.s32 %s9, 1
    %s15 = ssub.s32 %s9, 2
    %s22 = sadd.s32 1, %s17
    %p23 = scmp.ge.s32.totalorder %s22, 1
    %s24 = scalar_select %p23, 0, %s22
    %s25 = sadd.s32 1, %s16
    %s26 = scalar_select %p23, %s25, %s16
    %p27 = scmp.ge.s32.totalorder %s26, 2
    %s28 = scalar_select %p27, 0, %s26
    %s29 = ssub.s32 %s16, %s28
    %s30 = ssub.s32 %s17, %s24
    %s31 = sor.u32 %s29, %s30
    %p32 = scmp.eq.s32.totalorder %s31, 0
    %s34 = sadd.s32 %s33, 1
    %s35 = scalar_select %p32, %s33, %s34
    %p38 = pneg %p32
    %p39 = scmp.eq.s32.totalorder %s9, 1
    %p40 = por %p38, %p39
    %p41 = scmp.ne.s32.totalorder %s33, %s36
    %p42 = scmp.eq.s32.totalorder %s9, 0
    %p43 = por %p41, %p42
    %p44 = scmp.ne.s32.totalorder %s33, %s36
    %p45 = scmp.eq.s32.totalorder %s14, 1
    %p46 = por %p44, %p45
    %p47 = scmp.ne.s32.totalorder %s36, %s37
    %p48 = scmp.eq.s32.totalorder %s14, 0
    %p49 = por %p47, %p48
    %p50 = scmp.ne.s32.totalorder %s36, %s37
    %p51 = scmp.eq.s32.totalorder %s15, 1
    %p52 = por %p50, %p51
    %p54 = scmp.ne.s32.totalorder %s37, %s53
    %p55 = scmp.eq.s32.totalorder %s15, 0
    %p56 = por %p54, %p55
    %s58 = sadd.s32 %s57, 1
    %p61 = scmp.eq.s32.totalorder %s9, 1
    %p62 = scmp.ne.s32.totalorder %s57, %s59
    %p63 = scmp.eq.s32.totalorder %s9, 0
    %p64 = por %p62, %p63
    %p65 = scmp.ne.s32.totalorder %s57, %s59
    %p66 = scmp.eq.s32.totalorder %s14, 1
    %p67 = por %p65, %p66
    %p68 = scmp.ne.s32.totalorder %s59, %s60
    %p69 = scmp.eq.s32.totalorder %s14, 0
    %p70 = por %p68, %p69
    %p71 = scmp.ne.s32.totalorder %s59, %s60
    %p72 = scmp.eq.s32.totalorder %s15, 1
    %p73 = por %p71, %p72
    %p75 = scmp.ne.s32.totalorder %s60, %s74
    %p76 = scmp.eq.s32.totalorder %s15, 0
    %p77 = por %p75, %p76
    %s79 = sadd.s32 %s78, 1
    %p82 = scmp.eq.s32.totalorder %s9, 1
    %p83 = scmp.ne.s32.totalorder %s78, %s80
    %p84 = scmp.eq.s32.totalorder %s9, 0
    %p85 = por %p83, %p84
    %p86 = scmp.ne.s32.totalorder %s78, %s80
    %p87 = scmp.eq.s32.totalorder %s14, 1
    %p88 = por %p86, %p87
    %p89 = scmp.ne.s32.totalorder %s80, %s81
    %p90 = scmp.eq.s32.totalorder %s14, 0
    %p91 = por %p89, %p90
    %p92 = scmp.ne.s32.totalorder %s80, %s81
    %p93 = scmp.eq.s32.totalorder %s15, 1
    %p94 = por %p92, %p93
    %p96 = scmp.ne.s32.totalorder %s81, %s95
    %p97 = scmp.eq.s32.totalorder %s15, 0
    %p98 = por %p96, %p97
    %s99 = ssub.s32 %s16, %s28
    %s100 = ssub.s32 %s17, %s24
    %s101 = sor.u32 %s99, %s100
    %p102 = scmp.eq.s32.totalorder %s101, 0
    %s104 = sadd.s32 %s103, 1
    %s105 = scalar_select %p102, %s103, %s104
    %p108 = pneg %p102
    %p109 = scmp.eq.s32.totalorder %s9, 1
    %p110 = por %p108, %p109
    %p111 = scmp.ne.s32.totalorder %s103, %s106
    %p112 = scmp.eq.s32.totalorder %s9, 0
    %p113 = por %p111, %p112
    %p114 = scmp.ne.s32.totalorder %s103, %s106
    %p115 = scmp.eq.s32.totalorder %s14, 1
    %p116 = por %p114, %p115
    %p117 = scmp.ne.s32.totalorder %s106, %s107
    %p118 = scmp.eq.s32.totalorder %s14, 0
    %p119 = por %p117, %p118
    %p120 = scmp.ne.s32.totalorder %s106, %s107
    %p121 = scmp.eq.s32.totalorder %s15, 1
    %p122 = por %p120, %p121
    %p124 = scmp.ne.s32.totalorder %s107, %s123
    %p125 = scmp.eq.s32.totalorder %s15, 0
    %p126 = por %p124, %p125
    %p127 = scmp.le.s32.totalorder 1, %s9
    %p128 = scmp.lt.s32.totalorder %s9, 3
    %p129 = pnand %p127, %p128
    %p130 = pneg %p129
    // Predicated region
    $region9: #{dit_block_forward.10} parent=5 // pred_check
      _
    $region10: #{dit_block_forward.10} parent=5 // pred_check_branch
      %132 = sbr.rel (%p129) target = $region12
    $region11: #{dit_block_forward.10} parent=5 // pred_region
      %s133 = ssub.s32 %s9, 1
      // Predicated region
      $region13: #{dit_block_forward.10} parent=11 // pred_check
        %p134 = pneg %p70
      $region14: #{dit_block_forward.10} parent=11 // pred_check_branch
        %136 = sbr.rel (%p134) target = $region16
      $region15: #{dit_block_forward.10} parent=11 // pred_region
        _
      $region16: #{dit_block_forward.10} parent=11 // pred_fallthru
        _
      // Predicated region
      $region17: #{dit_block_forward.10} parent=11 // pred_check
        %p137 = pneg %p91
      $region18: #{dit_block_forward.10} parent=11 // pred_check_branch
        %139 = sbr.rel (%p137) target = $region20
      $region19: #{dit_block_forward.10} parent=11 // pred_region
        _
      $region20: #{dit_block_forward.10} parent=11 // pred_fallthru
        _
    $region12: #{dit_block_forward.10} parent=5 // pred_fallthru
      _
    %p140 = scmp.lt.s32.totalorder %s9, 2
    // Predicated region
    $region21: #{dit_block_forward.10} parent=5 // pred_check
      %p141 = pneg %p140
    $region22: #{dit_block_forward.10} parent=5 // pred_check_branch
      %143 = sbr.rel (%p141) target = $region24
    $region23: #{dit_block_forward.10} parent=5 // pred_region
      // Predicated region
      $region25: #{dit_block_forward.10} parent=23 // pred_check
        %p144 = pneg %p43
      $region26: #{dit_block_forward.10} parent=23 // pred_check_branch
        %146 = sbr.rel (%p144) target = $region28
      $region27: #{dit_block_forward.10} parent=23 // pred_region
        %s147 = smul.u32 2, %s17
        %p148 = scmp.lt.s32.totalorder %s16, 1
        %s149 = scalar_select %p148, %s16, 1
        %p150 = scmp.lt.s32.totalorder %s147, 1
        %s151 = scalar_select %p150, %s147, 1
        %s152 = smul.addr %s149, 2
        %s153 = sadd.s32 %s151, %s152
        %s154 = smul.addr %s153, 8
        %s155 = scalar_lea.vmem %s0, %s154
        %s156 = smul.u32 2, %s17
      $region28: #{dit_block_forward.10} parent=23 // pred_fallthru
        _
    $region24: #{dit_block_forward.10} parent=5 // pred_fallthru
      _
    %p157 = scmp.le.s32.totalorder 1, %s9
    %p158 = scmp.lt.s32.totalorder %s9, 3
    %p159 = pnand %p157, %p158
    %p160 = pneg %p159
    // Predicated region
    $region29: #{dit_block_forward.10} parent=5 // pred_check
      _
    $region30: #{dit_block_forward.10} parent=5 // pred_check_branch
      %162 = sbr.rel (%p159) target = $region32
    $region31: #{dit_block_forward.10} parent=5 // pred_region
      %s163 = ssub.s32 %s9, 1
      %s164 = smul.u32 2, %s19
      %p165 = scmp.lt.s32.totalorder %s18, 1
      %s166 = scalar_select %p165, %s18, 1
      %p167 = scmp.lt.s32.totalorder %s164, 1
      %s168 = scalar_select %p167, %s164, 1
      %s169 = smul.addr %s166, 2
      %s170 = sadd.s32 %s168, %s169
      %s171 = smul.addr %s170, 8
      %s172 = scalar_lea.vmem %s0, %s171
      %p173 = pneg %p49
      %p174 = pneg %p46
      %p175 = pneg %p70
      %p176 = pneg %p67
      %p177 = pneg %p91
      %p178 = pneg %p88
      %p179 = pneg %p119
      %p180 = pneg %p116
      %s181 = smul.u32 2, %s19
      %p182 = scmp.lt.s32.totalorder %s18, 1
      %s183 = scalar_select %p182, %s18, 1
      %p184 = scmp.lt.s32.totalorder %s181, 1
      %s185 = scalar_select %p184, %s181, 1
      %s186 = smul.addr %s185, 2
      %s187 = smul.addr %s183, 4
      %s188 = sadd.s32 %s186, %s187
      %s189 = smul.addr %s188, 4
      %s190 = scalar_lea.vmem %s3, %s189
      %s191 = smul.u32 2, %s19
      %p192 = scmp.lt.s32.totalorder %s18, 1
      %s193 = scalar_select %p192, %s18, 1
      %p194 = scmp.lt.s32.totalorder %s191, 1
      %s195 = scalar_select %p194, %s191, 1
      %s196 = smul.addr %s193, 2
      %s197 = sadd.s32 %s195, %s196
      %s198 = smul.addr %s197, 8
      %s199 = scalar_lea.vmem %s0, %s198
      %s200 = smul.u32 2, %s19
      %s201 = smul.u32 2, %s19
      %p202 = scmp.lt.s32.totalorder %s18, 1
      %s203 = scalar_select %p202, %s18, 1
      %p204 = scmp.lt.s32.totalorder %s201, 1
      %s205 = scalar_select %p204, %s201, 1
      %s206 = smul.addr %s205, 2
      %s207 = smul.addr %s203, 4
      %s208 = sadd.s32 %s206, %s207
      %s209 = smul.addr %s208, 4
      %s210 = scalar_lea.vmem %s3, %s209
      %s211 = smul.u32 2, %s19
      %v213 = vld [vmem:[%s199] sm:$0xff]
      %v214 = vld [vmem:[%s199 + $0x8] sm:$0xff]
      %v215 = vpack.c.bf16 %v214, %v213
      %v216 = vld [vmem:[%s1] sm:$0xff]
      %v217 = vld [vmem:[%s1 + $0x8] sm:$0xff]
      %v218 = vld [vmem:[%s1 + $0x10] sm:$0xff]
      %v219 = vld [vmem:[%s1 + $0x18] sm:$0xff]
      %v220 = vld [vmem:[%s1 + $0x20] sm:$0xff]
      %v221 = vld [vmem:[%s1 + $0x28] sm:$0xff]
      %v222 = vld [vmem:[%s1 + $0x30] sm:$0xff]
      %v223 = vld [vmem:[%s1 + $0x38] sm:$0xff]
      %v224 = vld [vmem:[%s2] sm:$0x3]
      %v226 = vlaneseq
      %v227 = vshrl.u32 %v226, 7
      %v228 = vsub.s32 0, %v227
      %v229 = vrot.slane %v224, %v228
      %v230 = vlaneseq
      %v231 = vshrl.u32 %v230, 7
      %v232 = vsub.s32 1, %v231
      %v233 = vrot.slane %v224, %v232
      %v244 = vunpack.c.l.b16 %v216
      %v245 = vunpack.c.h.b16 %v216
      %v246 = vunpack.c.l.b16 %v217
      %v247 = vunpack.c.h.b16 %v217
      %v248 = vunpack.c.l.b16 %v218
      %v249 = vunpack.c.h.b16 %v218
      %v250 = vunpack.c.l.b16 %v219
      %v251 = vunpack.c.h.b16 %v219
      %v252 = vunpack.c.l.b16 %v220
      %v253 = vunpack.c.h.b16 %v220
      %v254 = vunpack.c.l.b16 %v221
      %v255 = vunpack.c.h.b16 %v221
      %v256 = vunpack.c.l.b16 %v222
      %v257 = vunpack.c.h.b16 %v222
      %v258 = vunpack.c.l.b16 %v223
      %v259 = vunpack.c.h.b16 %v223
      %v260 = vpack.c.b16 %v246, %v244
      %v261 = vpack.c.b16 %v247, %v245
      %v262 = vpack.c.b16 %v250, %v248
      %v263 = vpack.c.b16 %v251, %v249
      %v264 = vpack.c.b16 %v254, %v252
      %v265 = vpack.c.b16 %v255, %v253
      %v266 = vpack.c.b16 %v258, %v256
      %v267 = vpack.c.b16 %v259, %v257
      %vm276 = vcmask 523264
      %v278 = vsel %vm276, %v215, 0
      %280 = vmatprep.subr.bf16.mxu0 0
      %281 = vmatpush1.bf16.msra.mxu0 0
      %282 = vmatprep.subr.bf16.mxu0 0
      %283 = vmatpush1.bf16.msra.mxu0 0
      %284 = vmatprep.subr.bf16.mxu0 0
      %285 = vmatpush1.bf16.msra.mxu0 0
      %286 = vmatprep.subr.bf16.mxu0 0
      %287 = vmatpush1.bf16.msra.mxu0 0
      %288 = vmatprep.subr.bf16.mxu0 %v267
      %289 = vmatpush1.bf16.msra.mxu0 %v266
      %290 = vmatprep.subr.bf16.mxu0 %v265
      %291 = vmatpush1.bf16.msra.mxu0 %v264
      %292 = vmatprep.subr.bf16.mxu0 %v263
      %293 = vmatpush1.bf16.msra.mxu0 %v262
      %294 = vmatprep.subr.bf16.mxu0 %v261
      %295 = vmatpush1.bf16.msra.mxu0 %v260
      %296 = vmatprep.subr.bf16.mxu0 0
      %297 = vmatpush2.bf16.msra.mxu0 0
      %298 = vmatprep.subr.bf16.mxu0 0
      %299 = vmatpush2.bf16.msra.mxu0 0
      %300 = vmatprep.subr.bf16.mxu0 0
      %301 = vmatpush2.bf16.msra.mxu0 0
      %302 = vmatprep.subr.bf16.mxu0 0
      %303 = vmatpush2.bf16.msra.mxu0 0
      %304 = vmatprep.subr.bf16.mxu0 0
      %305 = vmatpush2.bf16.msra.mxu0 0
      %306 = vmatprep.subr.bf16.mxu0 0
      %307 = vmatpush2.bf16.msra.mxu0 0
      %308 = vmatprep.subr.bf16.mxu0 0
      %309 = vmatpush2.bf16.msra.mxu0 0
      %310 = vmatprep.subr.bf16.mxu0 0
      %311 = vmatpush2.bf16.msra.mxu0 0
      %312 = vmatprep.mubr.bf16.mxu0 0
      %313 = vmatmul.mubr.bf16.gmra.mxu0 %v278
      %v314 = vpop.f32.mrf.mxu0
      %v315 = vadd.f32 %v229, %v314
      %v316 = vpop.f32.mrf.mxu0
      %v317 = vadd.f32 %v233, %v316
      %v318 = vpop.f32.mrf.mxu0
      %v319 = vadd.f32 %v229, %v318
      %v320 = vpop.f32.mrf.mxu0
      %v321 = vadd.f32 %v233, %v320
      %322 = vdwg.mxu0
      %v323 = vpack.c.bf16 %v319, %v315
      %v324 = vpack.c.bf16 %v321, %v317
      %v327 = vunpack.c.l.b16 %v323
      %v328 = vunpack.c.l.b16 %v324
      %v329 = vunpack.c.h.b16 %v323
      %v330 = vunpack.c.h.b16 %v324
      %v331 = vpack.c.b16 %v328, %v327
      %v332 = vpack.c.b16 %v330, %v329
      %335 = vst [vmem:[%s210] sm:$0xff] %v331
      %336 = vst [vmem:[%s210 + $0x8] sm:$0xff] %v332
      %s337 = smul.u32 2, %s19
      %p338 = scmp.lt.s32.totalorder %s18, 1
      %s339 = scalar_select %p338, %s18, 1
      %p340 = scmp.lt.s32.totalorder %s337, 1
      %s341 = scalar_select %p340, %s337, 1
      %s342 = smul.addr %s341, 2
      %s343 = smul.addr %s339, 4
      %s344 = sadd.s32 %s342, %s343
      %s345 = smul.addr %s344, 4
      %s346 = scalar_lea.vmem %s3, %s345
      // Predicated region
      $region33: #{dit_block_forward.10} parent=31 // pred_check
        %p347 = pneg %p116
      $region34: #{dit_block_forward.10} parent=31 // pred_check_branch
        %349 = sbr.rel (%p347) target = $region36
      $region35: #{dit_block_forward.10} parent=31 // pred_region
        %s350 = smul.u32 2, %s19
      $region36: #{dit_block_forward.10} parent=31 // pred_fallthru
        _
    $region32: #{dit_block_forward.10} parent=5 // pred_fallthru
      _
    %p351 = scmp.le.s32.totalorder 2, %s9
    // Predicated region
    $region37: #{dit_block_forward.10} parent=5 // pred_check
      %p352 = pneg %p351
    $region38: #{dit_block_forward.10} parent=5 // pred_check_branch
      %354 = sbr.rel (%p352) target = $region40
    $region39: #{dit_block_forward.10} parent=5 // pred_region
      %s355 = ssub.s32 %s9, 2
      // Predicated region
      $region41: #{dit_block_forward.10} parent=39 // pred_check
        %p356 = pneg %p122
      $region42: #{dit_block_forward.10} parent=39 // pred_check_branch
        %358 = sbr.rel (%p356) target = $region44
      $region43: #{dit_block_forward.10} parent=39 // pred_region
        %s359 = smul.u32 2, %s21
        %p360 = scmp.lt.s32.totalorder %s20, 1
        %s361 = scalar_select %p360, %s20, 1
        %p362 = scmp.lt.s32.totalorder %s359, 1
        %s363 = scalar_select %p362, %s359, 1
        %s364 = smul.addr %s363, 2
        %s365 = smul.addr %s361, 4
        %s366 = sadd.s32 %s364, %s365
        %s367 = smul.addr %s366, 4
        %s368 = scalar_lea.vmem %s3, %s367
      $region44: #{dit_block_forward.10} parent=39 // pred_fallthru
        _
    $region40: #{dit_block_forward.10} parent=5 // pred_fallthru
      _
  $region6: #{dit_block_forward.10} parent=0 // loop_footer
    %s13 = sadd.s32 1, %s9
  $region7: #{dit_block_forward.10} parent=0 // loop_footer_branch
    %8 = sbr.rel target = $region3
  $region8: #{dit_block_forward.10} parent=0 // loop_exit
    _

// kernel: dit_block_forward.9
$region0: #{dit_block_forward.9}
  #allocation0 [shape = 'u32[]', space=smem, size = 0x4, offset = 0x4, fixed_abs, tag = 'smem constant byte address 0x4 - core index']
  #allocation1 [shape = 'u32[144,128]{1,0:T(1,128)}', space=vmem, size = 0x12000, scoped, tag = 'internal scratch']
  %s0 = inlined_call_operand.vmem [shape: f32[2,32,128], index: 0, kind: input, shape index: {}]
  %s1 = inlined_call_operand.vmem [shape: f32[1,128], index: 1, kind: input, shape index: {}]
  %s2 = inlined_call_operand.vmem [shape: f32[2,9,128], index: 2, kind: input, shape index: {}]
  %s3 = inlined_call_operand.vmem [shape: bf16[128,128], index: 3, kind: input, shape index: {}]
  %s4 = inlined_call_operand.vmem [shape: f32[1,128], index: 4, kind: input, shape index: {}]
  %s5 = inlined_call_operand.vmem [shape: bf16[2,32,128], index: 5, kind: output, shape index: {}]
  %s6 = sld [smem:[#allocation0]]
  $region53: #{dit_block_forward.9} parent=0
    _
  %s8 = ssub.s32 1, %s6
  %s9 = scalar_select 0, %s8, %s6
  loop: start=0, step=1, limit=4
  $region2: #{dit_block_forward.9} parent=0 // loop_pre_header
    _
  $region3: #{dit_block_forward.9} parent=0 // loop_header
    %s11 = sphi 0, %s15
    %p12 = scmp.ge.s32.totalorder %s11, 4
    %s18 = sphi 0, %s30
    %s19 = sphi 0, %s26
    %s20 = sphi 0, %s18
    %s21 = sphi 0, %s19
    %s22 = sphi 0, %s20
    %s23 = sphi 0, %s21
    %s35 = sphi 0, %s37
    %s38 = sphi 0, %s35
    %s39 = sphi 0, %s38
    %s55 = sphi 0, %s39
    %s59 = sphi 0, %s59
    %s61 = sphi 0, %s59
    %s62 = sphi 0, %s61
    %s76 = sphi 0, %s62
    %s82 = sphi 0, %s84
    %s85 = sphi 0, %s82
    %s86 = sphi 0, %s85
    %s102 = sphi 0, %s86
    %s106 = sphi 0, %s106
    %s108 = sphi 0, %s106
    %s109 = sphi 0, %s108
    %s123 = sphi 0, %s109
    %s127 = sphi 0, %s127
    %s129 = sphi 0, %s127
    %s130 = sphi 0, %s129
    %s144 = sphi 0, %s130
    %s152 = sphi 0, %s154
    %s155 = sphi 0, %s152
    %s156 = sphi 0, %s155
    %s172 = sphi 0, %s156
  $region4: #{dit_block_forward.9} parent=0 // loop_header_branch
    %14 = sbr.rel (%p12) target = $region8
  $region5: #{dit_block_forward.9} parent=0 // loop_body
    %s16 = ssub.s32 %s11, 1
    %s17 = ssub.s32 %s11, 2
    %s24 = sadd.s32 1, %s19
    %p25 = scmp.ge.s32.totalorder %s24, 1
    %s26 = scalar_select %p25, 0, %s24
    %s27 = sadd.s32 1, %s18
    %s28 = scalar_select %p25, %s27, %s18
    %p29 = scmp.ge.s32.totalorder %s28, 2
    %s30 = scalar_select %p29, 0, %s28
    %s31 = ssub.s32 %s18, %s30
    %s32 = ssub.s32 %s19, %s26
    %s33 = sor.u32 %s31, %s32
    %p34 = scmp.eq.s32.totalorder %s33, 0
    %s36 = sadd.s32 %s35, 1
    %s37 = scalar_select %p34, %s35, %s36
    %p40 = pneg %p34
    %p41 = scmp.eq.s32.totalorder %s11, 1
    %p42 = por %p40, %p41
    %p43 = scmp.ne.s32.totalorder %s35, %s38
    %p44 = scmp.eq.s32.totalorder %s11, 0
    %p45 = por %p43, %p44
    %p46 = scmp.ne.s32.totalorder %s35, %s38
    %p47 = scmp.eq.s32.totalorder %s16, 1
    %p48 = por %p46, %p47
    %p49 = scmp.ne.s32.totalorder %s38, %s39
    %p50 = scmp.eq.s32.totalorder %s16, 0
    %p51 = por %p49, %p50
    %p52 = scmp.ne.s32.totalorder %s38, %s39
    %p53 = scmp.eq.s32.totalorder %s17, 1
    %p54 = por %p52, %p53
    %p56 = scmp.ne.s32.totalorder %s39, %s55
    %p57 = scmp.eq.s32.totalorder %s17, 0
    %p58 = por %p56, %p57
    %s60 = sadd.s32 %s59, 1
    %p63 = scmp.eq.s32.totalorder %s11, 1
    %p64 = scmp.ne.s32.totalorder %s59, %s61
    %p65 = scmp.eq.s32.totalorder %s11, 0
    %p66 = por %p64, %p65
    %p67 = scmp.ne.s32.totalorder %s59, %s61
    %p68 = scmp.eq.s32.totalorder %s16, 1
    %p69 = por %p67, %p68
    %p70 = scmp.ne.s32.totalorder %s61, %s62
    %p71 = scmp.eq.s32.totalorder %s16, 0
    %p72 = por %p70, %p71
    %p73 = scmp.ne.s32.totalorder %s61, %s62
    %p74 = scmp.eq.s32.totalorder %s17, 1
    %p75 = por %p73, %p74
    %p77 = scmp.ne.s32.totalorder %s62, %s76
    %p78 = scmp.eq.s32.totalorder %s17, 0
    %p79 = por %p77, %p78
    %s80 = ssub.s32 %s18, %s30
    %p81 = scmp.eq.s32.totalorder %s80, 0
    %s83 = sadd.s32 %s82, 1
    %s84 = scalar_select %p81, %s82, %s83
    %p87 = pneg %p81
    %p88 = scmp.eq.s32.totalorder %s11, 1
    %p89 = por %p87, %p88
    %p90 = scmp.ne.s32.totalorder %s82, %s85
    %p91 = scmp.eq.s32.totalorder %s11, 0
    %p92 = por %p90, %p91
    %p93 = scmp.ne.s32.totalorder %s82, %s85
    %p94 = scmp.eq.s32.totalorder %s16, 1
    %p95 = por %p93, %p94
    %p96 = scmp.ne.s32.totalorder %s85, %s86
    %p97 = scmp.eq.s32.totalorder %s16, 0
    %p98 = por %p96, %p97
    %p99 = scmp.ne.s32.totalorder %s85, %s86
    %p100 = scmp.eq.s32.totalorder %s17, 1
    %p101 = por %p99, %p100
    %p103 = scmp.ne.s32.totalorder %s86, %s102
    %p104 = scmp.eq.s32.totalorder %s17, 0
    %p105 = por %p103, %p104
    %s107 = sadd.s32 %s106, 1
    %p110 = scmp.eq.s32.totalorder %s11, 1
    %p111 = scmp.ne.s32.totalorder %s106, %s108
    %p112 = scmp.eq.s32.totalorder %s11, 0
    %p113 = por %p111, %p112
    %p114 = scmp.ne.s32.totalorder %s106, %s108
    %p115 = scmp.eq.s32.totalorder %s16, 1
    %p116 = por %p114, %p115
    %p117 = scmp.ne.s32.totalorder %s108, %s109
    %p118 = scmp.eq.s32.totalorder %s16, 0
    %p119 = por %p117, %p118
    %p120 = scmp.ne.s32.totalorder %s108, %s109
    %p121 = scmp.eq.s32.totalorder %s17, 1
    %p122 = por %p120, %p121
    %p124 = scmp.ne.s32.totalorder %s109, %s123
    %p125 = scmp.eq.s32.totalorder %s17, 0
    %p126 = por %p124, %p125
    %s128 = sadd.s32 %s127, 1
    %p131 = scmp.eq.s32.totalorder %s11, 1
    %p132 = scmp.ne.s32.totalorder %s127, %s129
    %p133 = scmp.eq.s32.totalorder %s11, 0
    %p134 = por %p132, %p133
    %p135 = scmp.ne.s32.totalorder %s127, %s129
    %p136 = scmp.eq.s32.totalorder %s16, 1
    %p137 = por %p135, %p136
    %p138 = scmp.ne.s32.totalorder %s129, %s130
    %p139 = scmp.eq.s32.totalorder %s16, 0
    %p140 = por %p138, %p139
    %p141 = scmp.ne.s32.totalorder %s129, %s130
    %p142 = scmp.eq.s32.totalorder %s17, 1
    %p143 = por %p141, %p142
    %p145 = scmp.ne.s32.totalorder %s130, %s144
    %p146 = scmp.eq.s32.totalorder %s17, 0
    %p147 = por %p145, %p146
    %s148 = ssub.s32 %s18, %s30
    %s149 = ssub.s32 %s19, %s26
    %s150 = sor.u32 %s148, %s149
    %p151 = scmp.eq.s32.totalorder %s150, 0
    %s153 = sadd.s32 %s152, 1
    %s154 = scalar_select %p151, %s152, %s153
    %p157 = pneg %p151
    %p158 = scmp.eq.s32.totalorder %s11, 1
    %p159 = por %p157, %p158
    %p160 = scmp.ne.s32.totalorder %s152, %s155
    %p161 = scmp.eq.s32.totalorder %s11, 0
    %p162 = por %p160, %p161
    %p163 = scmp.ne.s32.totalorder %s152, %s155
    %p164 = scmp.eq.s32.totalorder %s16, 1
    %p165 = por %p163, %p164
    %p166 = scmp.ne.s32.totalorder %s155, %s156
    %p167 = scmp.eq.s32.totalorder %s16, 0
    %p168 = por %p166, %p167
    %p169 = scmp.ne.s32.totalorder %s155, %s156
    %p170 = scmp.eq.s32.totalorder %s17, 1
    %p171 = por %p169, %p170
    %p173 = scmp.ne.s32.totalorder %s156, %s172
    %p174 = scmp.eq.s32.totalorder %s17, 0
    %p175 = por %p173, %p174
    %p176 = scmp.le.s32.totalorder 1, %s11
    %p177 = scmp.lt.s32.totalorder %s11, 3
    %p178 = pnand %p176, %p177
    %p179 = pneg %p178
    // Predicated region
    $region9: #{dit_block_forward.9} parent=5 // pred_check
      _
    $region10: #{dit_block_forward.9} parent=5 // pred_check_branch
      %181 = sbr.rel (%p178) target = $region12
    $region11: #{dit_block_forward.9} parent=5 // pred_region
      %s182 = ssub.s32 %s11, 1
      // Predicated region
      $region13: #{dit_block_forward.9} parent=11 // pred_check
        %p183 = pneg %p72
      $region14: #{dit_block_forward.9} parent=11 // pred_check_branch
        %185 = sbr.rel (%p183) target = $region16
      $region15: #{dit_block_forward.9} parent=11 // pred_region
        _
      $region16: #{dit_block_forward.9} parent=11 // pred_fallthru
        _
      // Predicated region
      $region17: #{dit_block_forward.9} parent=11 // pred_check
        %p186 = pneg %p119
      $region18: #{dit_block_forward.9} parent=11 // pred_check_branch
        %188 = sbr.rel (%p186) target = $region20
      $region19: #{dit_block_forward.9} parent=11 // pred_region
        _
      $region20: #{dit_block_forward.9} parent=11 // pred_fallthru
        _
      // Predicated region
      $region21: #{dit_block_forward.9} parent=11 // pred_check
        %p189 = pneg %p140
      $region22: #{dit_block_forward.9} parent=11 // pred_check_branch
        %191 = sbr.rel (%p189) target = $region24
      $region23: #{dit_block_forward.9} parent=11 // pred_region
        _
      $region24: #{dit_block_forward.9} parent=11 // pred_fallthru
        _
    $region12: #{dit_block_forward.9} parent=5 // pred_fallthru
      _
    %p192 = scmp.lt.s32.totalorder %s11, 2
    // Predicated region
    $region25: #{dit_block_forward.9} parent=5 // pred_check
      %p193 = pneg %p192
    $region26: #{dit_block_forward.9} parent=5 // pred_check_branch
      %195 = sbr.rel (%p193) target = $region28
    $region27: #{dit_block_forward.9} parent=5 // pred_region
      // Predicated region
      $region29: #{dit_block_forward.9} parent=27 // pred_check
        %p196 = pneg %p45
      $region30: #{dit_block_forward.9} parent=27 // pred_check_branch
        %198 = sbr.rel (%p196) target = $region32
      $region31: #{dit_block_forward.9} parent=27 // pred_region
        %s199 = smul.u32 4, %s19
        %p200 = scmp.lt.s32.totalorder %s18, 1
        %s201 = scalar_select %p200, %s18, 1
        %p202 = scmp.lt.s32.totalorder %s199, 3
        %s203 = scalar_select %p202, %s199, 3
        %s204 = smul.addr %s201, 4
        %s205 = sadd.s32 %s203, %s204
        %s206 = smul.addr %s205, 8
        %s207 = scalar_lea.vmem %s0, %s206
        %s208 = smul.u32 4, %s19
      $region32: #{dit_block_forward.9} parent=27 // pred_fallthru
        _
      // Predicated region
      $region33: #{dit_block_forward.9} parent=27 // pred_check
        %p209 = pneg %p92
      $region34: #{dit_block_forward.9} parent=27 // pred_check_branch
        %211 = sbr.rel (%p209) target = $region36
      $region35: #{dit_block_forward.9} parent=27 // pred_region
        %p212 = scmp.lt.s32.totalorder %s18, 1
        %s213 = scalar_select %p212, %s18, 1
        %s214 = smul.addr %s213, 2
        %s215 = smul.addr %s214, 8
        %s216 = scalar_lea.vmem %s2, %s215
      $region36: #{dit_block_forward.9} parent=27 // pred_fallthru
        _
    $region28: #{dit_block_forward.9} parent=5 // pred_fallthru
      _
    %p217 = scmp.le.s32.totalorder 1, %s11
    %p218 = scmp.lt.s32.totalorder %s11, 3
    %p219 = pnand %p217, %p218
    %p220 = pneg %p219
    // Predicated region
    $region37: #{dit_block_forward.9} parent=5 // pred_check
      _
    $region38: #{dit_block_forward.9} parent=5 // pred_check_branch
      %222 = sbr.rel (%p219) target = $region40
    $region39: #{dit_block_forward.9} parent=5 // pred_region
      %s223 = ssub.s32 %s11, 1
      %s224 = smul.u32 4, %s21
      %p225 = scmp.lt.s32.totalorder %s20, 1
      %s226 = scalar_select %p225, %s20, 1
      %p227 = scmp.lt.s32.totalorder %s224, 3
      %s228 = scalar_select %p227, %s224, 3
      %s229 = smul.addr %s226, 4
      %s230 = sadd.s32 %s228, %s229
      %s231 = smul.addr %s230, 8
      %s232 = scalar_lea.vmem %s0, %s231
      %p233 = pneg %p51
      %p234 = pneg %p48
      %p235 = pneg %p72
      %p236 = pneg %p69
      %p237 = scmp.lt.s32.totalorder %s20, 1
      %s238 = scalar_select %p237, %s20, 1
      %s239 = smul.addr %s238, 2
      %s240 = smul.addr %s239, 8
      %s241 = scalar_lea.vmem %s2, %s240
      %p242 = pneg %p98
      %p243 = pneg %p95
      %p244 = pneg %p119
      %p245 = pneg %p116
      %p246 = pneg %p140
      %p247 = pneg %p137
      %p248 = pneg %p168
      %p249 = pneg %p165
      %s250 = smul.u32 4, %s21
      %p251 = scmp.lt.s32.totalorder %s20, 1
      %s252 = scalar_select %p251, %s20, 1
      %p253 = scmp.lt.s32.totalorder %s250, 3
      %s254 = scalar_select %p253, %s250, 3
      %s255 = smul.addr %s252, 4
      %s256 = sadd.s32 %s254, %s255
      %s257 = smul.addr %s256, 4
      %s258 = scalar_lea.vmem %s5, %s257
      %s259 = smul.u32 4, %s21
      %p260 = scmp.lt.s32.totalorder %s20, 1
      %s261 = scalar_select %p260, %s20, 1
      %p262 = scmp.lt.s32.totalorder %s259, 3
      %s263 = scalar_select %p262, %s259, 3
      %s264 = smul.addr %s261, 4
      %s265 = sadd.s32 %s263, %s264
      %s266 = smul.addr %s265, 8
      %s267 = scalar_lea.vmem %s0, %s266
      %s268 = smul.u32 4, %s21
      %p269 = scmp.lt.s32.totalorder %s20, 1
      %s270 = scalar_select %p269, %s20, 1
      %s271 = smul.addr %s270, 2
      %s272 = smul.addr %s271, 8
      %s273 = scalar_lea.vmem %s2, %s272
      %s274 = smul.u32 4, %s21
      %p275 = scmp.lt.s32.totalorder %s20, 1
      %s276 = scalar_select %p275, %s20, 1
      %p277 = scmp.lt.s32.totalorder %s274, 3
      %s278 = scalar_select %p277, %s274, 3
      %s279 = smul.addr %s276, 4
      %s280 = sadd.s32 %s278, %s279
      %s281 = smul.addr %s280, 4
      %s282 = scalar_lea.vmem %s5, %s281
      %s283 = smul.u32 4, %s21
      %v285 = vld [vmem:[%s267] sm:$0xff]
      %v286 = vld [vmem:[%s267 + $0x8] sm:$0xff]
      %v287 = vld [vmem:[%s267 + $0x10] sm:$0xff]
      %v288 = vld [vmem:[%s267 + $0x18] sm:$0xff]
      %v289 = vmul.f32 %v285, %v285
      %v290 = vmul.f32 %v286, %v286
      %v291 = vmul.f32 %v287, %v287
      %v292 = vmul.f32 %v288, %v288
      %293 = vadd.xlane.f32.xlu0 %v289
      %v294 = vpop.xlane.xlu0 %293
      %295 = vadd.xlane.f32.xlu0 %v290
      %v296 = vpop.xlane.xlu0 %295
      %297 = vadd.xlane.f32.xlu0 %v291
      %v298 = vpop.xlane.xlu0 %297
      %299 = vadd.xlane.f32.xlu0 %v292
      %v300 = vpop.xlane.xlu0 %299
      %v301 = vrcp.pop 128.0
      %v302 = vmul.f32 %v294, %v301
      %v303 = vmul.f32 %v296, %v301
      %v304 = vmul.f32 %v298, %v301
      %v305 = vmul.f32 %v300, %v301
      %v306 = vadd.f32 %v302, 1e-06
      %v307 = vadd.f32 %v303, 1e-06
      %v308 = vadd.f32 %v304, 1e-06
      %v309 = vadd.f32 %v305, 1e-06
      %v310 = vrsqrt.pop %v306
      %v311 = vrsqrt.pop %v307
      %v312 = vrsqrt.pop %v308
      %v313 = vrsqrt.pop %v309
      %v314 = vmul.f32 %v285, %v310
      %v315 = vmul.f32 %v286, %v311
      %v316 = vmul.f32 %v287, %v312
      %v317 = vmul.f32 %v288, %v313
      %v318 = vld [vmem:[%s1] sm:$0x1]
      %v320 = vlaneseq
      %v321 = vshrl.u32 %v320, 7
      %v322 = vsub.s32 0, %v321
      %v323 = vrot.slane %v318, %v322
      %v325 = vmul.f32 %v314, %v323
      %v326 = vmul.f32 %v315, %v323
      %v327 = vmul.f32 %v316, %v323
      %v328 = vmul.f32 %v317, %v323
      %v329 = vld [vmem:[%s273 + $0x4] sm:$0x1]
      %v330 = vld [vmem:[%s273 + $0x3] sm:$0x1]
      %v331 = vadd.f32 %v329, 1.0
      %v332 = vlaneseq
      %v333 = vshrl.u32 %v332, 7
      %v334 = vsub.s32 0, %v333
      %v335 = vrot.slane %v331, %v334
      %v336 = vmul.f32 %v325, %v335
      %v337 = vmul.f32 %v326, %v335
      %v338 = vmul.f32 %v327, %v335
      %v339 = vmul.f32 %v328, %v335
      %v340 = vlaneseq
      %v341 = vshrl.u32 %v340, 7
      %v342 = vsub.s32 0, %v341
      %v343 = vrot.slane %v330, %v342
      %v344 = vadd.f32 %v336, %v343
      %v345 = vadd.f32 %v337, %v343
      %v346 = vadd.f32 %v338, %v343
      %v347 = vadd.f32 %v339, %v343
      %v348 = vpack.c.bf16 %v345, %v344
      %v349 = vpack.c.bf16 %v347, %v346
      %v350 = vld [vmem:[%s3] sm:$0xf]
      %v351 = vld [vmem:[%s3 + $0x4] sm:$0xf]
      %v352 = vld [vmem:[%s3 + $0x8] sm:$0xf]
      %v353 = vld [vmem:[%s3 + $0xc] sm:$0xf]
      %v354 = vld [vmem:[%s3 + $0x10] sm:$0xf]
      %v355 = vld [vmem:[%s3 + $0x14] sm:$0xf]
      %v356 = vld [vmem:[%s3 + $0x18] sm:$0xf]
      %v357 = vld [vmem:[%s3 + $0x1c] sm:$0xf]
      %v358 = vld [vmem:[%s3 + $0x20] sm:$0xf]
      %v359 = vld [vmem:[%s3 + $0x24] sm:$0xf]
      %v360 = vld [vmem:[%s3 + $0x28] sm:$0xf]
      %v361 = vld [vmem:[%s3 + $0x2c] sm:$0xf]
      %v362 = vld [vmem:[%s3 + $0x30] sm:$0xf]
      %v363 = vld [vmem:[%s3 + $0x34] sm:$0xf]
      %v364 = vld [vmem:[%s3 + $0x38] sm:$0xf]
      %v365 = vld [vmem:[%s3 + $0x3c] sm:$0xf]
      %v366 = vld [vmem:[%s4] sm:$0x1]
      %v368 = vlaneseq
      %v369 = vshrl.u32 %v368, 7
      %v370 = vsub.s32 0, %v369
      %v371 = vrot.slane %v366, %v370
      %v389 = vunpack.c.l.b16 %v350
      %v390 = vunpack.c.l.b16 %v351
      %v391 = vunpack.c.l.b16 %v352
      %v392 = vunpack.c.l.b16 %v353
      %v393 = vunpack.c.l.b16 %v354
      %v394 = vunpack.c.l.b16 %v355
      %v395 = vunpack.c.l.b16 %v356
      %v396 = vunpack.c.l.b16 %v357
      %v397 = vunpack.c.l.b16 %v358
      %v398 = vunpack.c.l.b16 %v359
      %v399 = vunpack.c.l.b16 %v360
      %v400 = vunpack.c.l.b16 %v361
      %v401 = vunpack.c.l.b16 %v362
      %v402 = vunpack.c.l.b16 %v363
      %v403 = vunpack.c.l.b16 %v364
      %v404 = vunpack.c.l.b16 %v365
      %v405 = vpack.c.b16 %v390, %v389
      %v406 = vpack.c.b16 %v392, %v391
      %v407 = vpack.c.b16 %v394, %v393
      %v408 = vpack.c.b16 %v396, %v395
      %v409 = vpack.c.b16 %v398, %v397
      %v410 = vpack.c.b16 %v400, %v399
      %v411 = vpack.c.b16 %v402, %v401
      %v412 = vpack.c.b16 %v404, %v403
      %421 = vmatprep.subr.bf16.mxu0 0
      %422 = vmatpush1.bf16.msra.mxu0 %v412
      %423 = vmatprep.subr.bf16.mxu0 0
      %424 = vmatpush1.bf16.msra.mxu0 %v411
      %425 = vmatprep.subr.bf16.mxu0 0
      %426 = vmatpush1.bf16.msra.mxu0 %v410
      %427 = vmatprep.subr.bf16.mxu0 0
      %428 = vmatpush1.bf16.msra.mxu0 %v409
      %429 = vmatprep.subr.bf16.mxu0 0
      %430 = vmatpush1.bf16.msra.mxu0 %v408
      %431 = vmatprep.subr.bf16.mxu0 0
      %432 = vmatpush1.bf16.msra.mxu0 %v407
      %433 = vmatprep.subr.bf16.mxu0 0
      %434 = vmatpush1.bf16.msra.mxu0 %v406
      %435 = vmatprep.subr.bf16.mxu0 0
      %436 = vmatpush1.bf16.msra.mxu0 %v405
      %437 = vmatprep.subr.bf16.mxu0 0
      %438 = vmatpush2.bf16.msra.mxu0 0
      %439 = vmatprep.subr.bf16.mxu0 0
      %440 = vmatpush2.bf16.msra.mxu0 0
      %441 = vmatprep.subr.bf16.mxu0 0
      %442 = vmatpush2.bf16.msra.mxu0 0
      %443 = vmatprep.subr.bf16.mxu0 0
      %444 = vmatpush2.bf16.msra.mxu0 0
      %445 = vmatprep.subr.bf16.mxu0 0
      %446 = vmatpush2.bf16.msra.mxu0 0
      %447 = vmatprep.subr.bf16.mxu0 0
      %448 = vmatpush2.bf16.msra.mxu0 0
      %449 = vmatprep.subr.bf16.mxu0 0
      %450 = vmatpush2.bf16.msra.mxu0 0
      %451 = vmatprep.subr.bf16.mxu0 0
      %452 = vmatpush2.bf16.msra.mxu0 0
      %453 = vmatprep.mubr.bf16.mxu0 0
      %454 = vmatmul.mubr.bf16.gmra.mxu0 %v348
      %v455 = vpop.f32.mrf.mxu0
      %v456 = vadd.f32 %v371, %v455
      %v457 = vpop.f32.mrf.mxu0
      %v458 = vpop.f32.mrf.mxu0
      %v459 = vadd.f32 %v371, %v458
      %v460 = vpop.f32.mrf.mxu0
      %461 = vmatprep.mubr.bf16.mxu0 0
      %462 = vmatmul.mubr.bf16.gmra.mxu0 %v349
      %v463 = vpop.f32.mrf.mxu0
      %v464 = vadd.f32 %v371, %v463
      %v465 = vpop.f32.mrf.mxu0
      %v466 = vpop.f32.mrf.mxu0
      %v467 = vadd.f32 %v371, %v466
      %v468 = vpop.f32.mrf.mxu0
      %469 = vdwg.mxu0
      %v470 = vpack.c.bf16 %v459, %v456
      %v471 = vpack.c.bf16 %v467, %v464
      %v474 = vunpack.c.l.b16 %v470
      %v475 = vunpack.c.h.b16 %v470
      %v476 = vunpack.c.l.b16 %v471
      %v477 = vunpack.c.h.b16 %v471
      %v478 = vpack.c.b16 %v474, %v474
      %v479 = vpack.c.b16 %v475, %v475
      %v480 = vpack.c.b16 %v476, %v476
      %v481 = vpack.c.b16 %v477, %v477
      %486 = vst [vmem:[%s282] sm:$0xf] %v478
      %487 = vst [vmem:[%s282 + $0x4] sm:$0xf] %v479
      %488 = vst [vmem:[%s282 + $0x8] sm:$0xf] %v480
      %489 = vst [vmem:[%s282 + $0xc] sm:$0xf] %v481
      %s490 = smul.u32 4, %s21
      %p491 = scmp.lt.s32.totalorder %s20, 1
      %s492 = scalar_select %p491, %s20, 1
      %p493 = scmp.lt.s32.totalorder %s490, 3
      %s494 = scalar_select %p493, %s490, 3
      %s495 = smul.addr %s492, 4
      %s496 = sadd.s32 %s494, %s495
      %s497 = smul.addr %s496, 4
      %s498 = scalar_lea.vmem %s5, %s497
      // Predicated region
      $region41: #{dit_block_forward.9} parent=39 // pred_check
        %p499 = pneg %p165
      $region42: #{dit_block_forward.9} parent=39 // pred_check_branch
        %501 = sbr.rel (%p499) target = $region44
      $region43: #{dit_block_forward.9} parent=39 // pred_region
        %s502 = smul.u32 4, %s21
      $region44: #{dit_block_forward.9} parent=39 // pred_fallthru
        _
    $region40: #{dit_block_forward.9} parent=5 // pred_fallthru
      _
    %p503 = scmp.le.s32.totalorder 2, %s11
    // Predicated region
    $region45: #{dit_block_forward.9} parent=5 // pred_check
      %p504 = pneg %p503
    $region46: #{dit_block_forward.9} parent=5 // pred_check_branch
      %506 = sbr.rel (%p504) target = $region48
    $region47: #{dit_block_forward.9} parent=5 // pred_region
      %s507 = ssub.s32 %s11, 2
      // Predicated region
      $region49: #{dit_block_forward.9} parent=47 // pred_check
        %p508 = pneg %p171
      $region50: #{dit_block_forward.9} parent=47 // pred_check_branch
        %510 = sbr.rel (%p508) target = $region52
      $region51: #{dit_block_forward.9} parent=47 // pred_region
        %s511 = smul.u32 4, %s23
        %p512 = scmp.lt.s32.totalorder %s22, 1
        %s513 = scalar_select %p512, %s22, 1
        %p514 = scmp.lt.s32.totalorder %s511, 3
        %s515 = scalar_select %p514, %s511, 3
        %s516 = smul.addr %s513, 4
        %s517 = sadd.s32 %s515, %s516
        %s518 = smul.addr %s517, 4
        %s519 = scalar_lea.vmem %s5, %s518
      $region52: #{dit_block_forward.9} parent=47 // pred_fallthru
        _
    $region48: #{dit_block_forward.9} parent=5 // pred_fallthru
      _
  $region6: #{dit_block_forward.9} parent=0 // loop_footer
    %s15 = sadd.s32 1, %s11
  $region7: #{dit_block_forward.9} parent=0 // loop_footer_branch
    %10 = sbr.rel target = $region3
  $region8: #{dit_block_forward.9} parent=0 // loop_exit
    _

// kernel: dit_block_forward.7
$region0: #{dit_block_forward.7}
  #allocation0 [shape = 'u32[]', space=smem, size = 0x4, offset = 0x4, fixed_abs, tag = 'smem constant byte address 0x4 - core index']
  #allocation1 [shape = 'u32[144,128]{1,0:T(1,128)}', space=vmem, size = 0x12000, scoped, tag = 'internal scratch']
  %s0 = inlined_call_operand.vmem [shape: f32[2,32,128], index: 0, kind: input, shape index: {}]
  %s1 = inlined_call_operand.vmem [shape: f32[1,128], index: 1, kind: input, shape index: {}]
  %s2 = inlined_call_operand.vmem [shape: f32[2,9,128], index: 2, kind: input, shape index: {}]
  %s3 = inlined_call_operand.vmem [shape: bf16[128,384], index: 3, kind: input, shape index: {}]
  %s4 = inlined_call_operand.vmem [shape: f32[1,384], index: 4, kind: input, shape index: {}]
  %s5 = inlined_call_operand.vmem [shape: bf16[2,32,384], index: 5, kind: output, shape index: {}]
  %s6 = sld [smem:[#allocation0]]
  $region53: #{dit_block_forward.7} parent=0
    _
  %s8 = ssub.s32 1, %s6
  %s9 = scalar_select 0, %s8, %s6
  loop: start=0, step=1, limit=4
  $region2: #{dit_block_forward.7} parent=0 // loop_pre_header
    _
  $region3: #{dit_block_forward.7} parent=0 // loop_header
    %s11 = sphi 0, %s15
    %p12 = scmp.ge.s32.totalorder %s11, 4
    %s18 = sphi 0, %s30
    %s19 = sphi 0, %s26
    %s20 = sphi 0, %s18
    %s21 = sphi 0, %s19
    %s22 = sphi 0, %s20
    %s23 = sphi 0, %s21
    %s35 = sphi 0, %s37
    %s38 = sphi 0, %s35
    %s39 = sphi 0, %s38
    %s55 = sphi 0, %s39
    %s59 = sphi 0, %s59
    %s61 = sphi 0, %s59
    %s62 = sphi 0, %s61
    %s76 = sphi 0, %s62
    %s82 = sphi 0, %s84
    %s85 = sphi 0, %s82
    %s86 = sphi 0, %s85
    %s102 = sphi 0, %s86
    %s106 = sphi 0, %s106
    %s108 = sphi 0, %s106
    %s109 = sphi 0, %s108
    %s123 = sphi 0, %s109
    %s127 = sphi 0, %s127
    %s129 = sphi 0, %s127
    %s130 = sphi 0, %s129
    %s144 = sphi 0, %s130
    %s152 = sphi 0, %s154
    %s155 = sphi 0, %s152
    %s156 = sphi 0, %s155
    %s172 = sphi 0, %s156
  $region4: #{dit_block_forward.7} parent=0 // loop_header_branch
    %14 = sbr.rel (%p12) target = $region8
  $region5: #{dit_block_forward.7} parent=0 // loop_body
    %s16 = ssub.s32 %s11, 1
    %s17 = ssub.s32 %s11, 2
    %s24 = sadd.s32 1, %s19
    %p25 = scmp.ge.s32.totalorder %s24, 1
    %s26 = scalar_select %p25, 0, %s24
    %s27 = sadd.s32 1, %s18
    %s28 = scalar_select %p25, %s27, %s18
    %p29 = scmp.ge.s32.totalorder %s28, 2
    %s30 = scalar_select %p29, 0, %s28
    %s31 = ssub.s32 %s18, %s30
    %s32 = ssub.s32 %s19, %s26
    %s33 = sor.u32 %s31, %s32
    %p34 = scmp.eq.s32.totalorder %s33, 0
    %s36 = sadd.s32 %s35, 1
    %s37 = scalar_select %p34, %s35, %s36
    %p40 = pneg %p34
    %p41 = scmp.eq.s32.totalorder %s11, 1
    %p42 = por %p40, %p41
    %p43 = scmp.ne.s32.totalorder %s35, %s38
    %p44 = scmp.eq.s32.totalorder %s11, 0
    %p45 = por %p43, %p44
    %p46 = scmp.ne.s32.totalorder %s35, %s38
    %p47 = scmp.eq.s32.totalorder %s16, 1
    %p48 = por %p46, %p47
    %p49 = scmp.ne.s32.totalorder %s38, %s39
    %p50 = scmp.eq.s32.totalorder %s16, 0
    %p51 = por %p49, %p50
    %p52 = scmp.ne.s32.totalorder %s38, %s39
    %p53 = scmp.eq.s32.totalorder %s17, 1
    %p54 = por %p52, %p53
    %p56 = scmp.ne.s32.totalorder %s39, %s55
    %p57 = scmp.eq.s32.totalorder %s17, 0
    %p58 = por %p56, %p57
    %s60 = sadd.s32 %s59, 1
    %p63 = scmp.eq.s32.totalorder %s11, 1
    %p64 = scmp.ne.s32.totalorder %s59, %s61
    %p65 = scmp.eq.s32.totalorder %s11, 0
    %p66 = por %p64, %p65
    %p67 = scmp.ne.s32.totalorder %s59, %s61
    %p68 = scmp.eq.s32.totalorder %s16, 1
    %p69 = por %p67, %p68
    %p70 = scmp.ne.s32.totalorder %s61, %s62
    %p71 = scmp.eq.s32.totalorder %s16, 0
    %p72 = por %p70, %p71
    %p73 = scmp.ne.s32.totalorder %s61, %s62
    %p74 = scmp.eq.s32.totalorder %s17, 1
    %p75 = por %p73, %p74
    %p77 = scmp.ne.s32.totalorder %s62, %s76
    %p78 = scmp.eq.s32.totalorder %s17, 0
    %p79 = por %p77, %p78
    %s80 = ssub.s32 %s18, %s30
    %p81 = scmp.eq.s32.totalorder %s80, 0
    %s83 = sadd.s32 %s82, 1
    %s84 = scalar_select %p81, %s82, %s83
    %p87 = pneg %p81
    %p88 = scmp.eq.s32.totalorder %s11, 1
    %p89 = por %p87, %p88
    %p90 = scmp.ne.s32.totalorder %s82, %s85
    %p91 = scmp.eq.s32.totalorder %s11, 0
    %p92 = por %p90, %p91
    %p93 = scmp.ne.s32.totalorder %s82, %s85
    %p94 = scmp.eq.s32.totalorder %s16, 1
    %p95 = por %p93, %p94
    %p96 = scmp.ne.s32.totalorder %s85, %s86
    %p97 = scmp.eq.s32.totalorder %s16, 0
    %p98 = por %p96, %p97
    %p99 = scmp.ne.s32.totalorder %s85, %s86
    %p100 = scmp.eq.s32.totalorder %s17, 1
    %p101 = por %p99, %p100
    %p103 = scmp.ne.s32.totalorder %s86, %s102
    %p104 = scmp.eq.s32.totalorder %s17, 0
    %p105 = por %p103, %p104
    %s107 = sadd.s32 %s106, 1
    %p110 = scmp.eq.s32.totalorder %s11, 1
    %p111 = scmp.ne.s32.totalorder %s106, %s108
    %p112 = scmp.eq.s32.totalorder %s11, 0
    %p113 = por %p111, %p112
    %p114 = scmp.ne.s32.totalorder %s106, %s108
    %p115 = scmp.eq.s32.totalorder %s16, 1
    %p116 = por %p114, %p115
    %p117 = scmp.ne.s32.totalorder %s108, %s109
    %p118 = scmp.eq.s32.totalorder %s16, 0
    %p119 = por %p117, %p118
    %p120 = scmp.ne.s32.totalorder %s108, %s109
    %p121 = scmp.eq.s32.totalorder %s17, 1
    %p122 = por %p120, %p121
    %p124 = scmp.ne.s32.totalorder %s109, %s123
    %p125 = scmp.eq.s32.totalorder %s17, 0
    %p126 = por %p124, %p125
    %s128 = sadd.s32 %s127, 1
    %p131 = scmp.eq.s32.totalorder %s11, 1
    %p132 = scmp.ne.s32.totalorder %s127, %s129
    %p133 = scmp.eq.s32.totalorder %s11, 0
    %p134 = por %p132, %p133
    %p135 = scmp.ne.s32.totalorder %s127, %s129
    %p136 = scmp.eq.s32.totalorder %s16, 1
    %p137 = por %p135, %p136
    %p138 = scmp.ne.s32.totalorder %s129, %s130
    %p139 = scmp.eq.s32.totalorder %s16, 0
    %p140 = por %p138, %p139
    %p141 = scmp.ne.s32.totalorder %s129, %s130
    %p142 = scmp.eq.s32.totalorder %s17, 1
    %p143 = por %p141, %p142
    %p145 = scmp.ne.s32.totalorder %s130, %s144
    %p146 = scmp.eq.s32.totalorder %s17, 0
    %p147 = por %p145, %p146
    %s148 = ssub.s32 %s18, %s30
    %s149 = ssub.s32 %s19, %s26
    %s150 = sor.u32 %s148, %s149
    %p151 = scmp.eq.s32.totalorder %s150, 0
    %s153 = sadd.s32 %s152, 1
    %s154 = scalar_select %p151, %s152, %s153
    %p157 = pneg %p151
    %p158 = scmp.eq.s32.totalorder %s11, 1
    %p159 = por %p157, %p158
    %p160 = scmp.ne.s32.totalorder %s152, %s155
    %p161 = scmp.eq.s32.totalorder %s11, 0
    %p162 = por %p160, %p161
    %p163 = scmp.ne.s32.totalorder %s152, %s155
    %p164 = scmp.eq.s32.totalorder %s16, 1
    %p165 = por %p163, %p164
    %p166 = scmp.ne.s32.totalorder %s155, %s156
    %p167 = scmp.eq.s32.totalorder %s16, 0
    %p168 = por %p166, %p167
    %p169 = scmp.ne.s32.totalorder %s155, %s156
    %p170 = scmp.eq.s32.totalorder %s17, 1
    %p171 = por %p169, %p170
    %p173 = scmp.ne.s32.totalorder %s156, %s172
    %p174 = scmp.eq.s32.totalorder %s17, 0
    %p175 = por %p173, %p174
    %p176 = scmp.le.s32.totalorder 1, %s11
    %p177 = scmp.lt.s32.totalorder %s11, 3
    %p178 = pnand %p176, %p177
    %p179 = pneg %p178
    // Predicated region
    $region9: #{dit_block_forward.7} parent=5 // pred_check
      _
    $region10: #{dit_block_forward.7} parent=5 // pred_check_branch
      %181 = sbr.rel (%p178) target = $region12
    $region11: #{dit_block_forward.7} parent=5 // pred_region
      %s182 = ssub.s32 %s11, 1
      // Predicated region
      $region13: #{dit_block_forward.7} parent=11 // pred_check
        %p183 = pneg %p72
      $region14: #{dit_block_forward.7} parent=11 // pred_check_branch
        %185 = sbr.rel (%p183) target = $region16
      $region15: #{dit_block_forward.7} parent=11 // pred_region
        _
      $region16: #{dit_block_forward.7} parent=11 // pred_fallthru
        _
      // Predicated region
      $region17: #{dit_block_forward.7} parent=11 // pred_check
        %p186 = pneg %p119
      $region18: #{dit_block_forward.7} parent=11 // pred_check_branch
        %188 = sbr.rel (%p186) target = $region20
      $region19: #{dit_block_forward.7} parent=11 // pred_region
        _
      $region20: #{dit_block_forward.7} parent=11 // pred_fallthru
        _
      // Predicated region
      $region21: #{dit_block_forward.7} parent=11 // pred_check
        %p189 = pneg %p140
      $region22: #{dit_block_forward.7} parent=11 // pred_check_branch
        %191 = sbr.rel (%p189) target = $region24
      $region23: #{dit_block_forward.7} parent=11 // pred_region
        _
      $region24: #{dit_block_forward.7} parent=11 // pred_fallthru
        _
    $region12: #{dit_block_forward.7} parent=5 // pred_fallthru
      _
    %p192 = scmp.lt.s32.totalorder %s11, 2
    // Predicated region
    $region25: #{dit_block_forward.7} parent=5 // pred_check
      %p193 = pneg %p192
    $region26: #{dit_block_forward.7} parent=5 // pred_check_branch
      %195 = sbr.rel (%p193) target = $region28
    $region27: #{dit_block_forward.7} parent=5 // pred_region
      // Predicated region
      $region29: #{dit_block_forward.7} parent=27 // pred_check
        %p196 = pneg %p45
      $region30: #{dit_block_forward.7} parent=27 // pred_check_branch
        %198 = sbr.rel (%p196) target = $region32
      $region31: #{dit_block_forward.7} parent=27 // pred_region
        %s199 = smul.u32 4, %s19
        %p200 = scmp.lt.s32.totalorder %s18, 1
        %s201 = scalar_select %p200, %s18, 1
        %p202 = scmp.lt.s32.totalorder %s199, 3
        %s203 = scalar_select %p202, %s199, 3
        %s204 = smul.addr %s201, 4
        %s205 = sadd.s32 %s203, %s204
        %s206 = smul.addr %s205, 8
        %s207 = scalar_lea.vmem %s0, %s206
        %s208 = smul.u32 4, %s19
      $region32: #{dit_block_forward.7} parent=27 // pred_fallthru
        _
      // Predicated region
      $region33: #{dit_block_forward.7} parent=27 // pred_check
        %p209 = pneg %p92
      $region34: #{dit_block_forward.7} parent=27 // pred_check_branch
        %211 = sbr.rel (%p209) target = $region36
      $region35: #{dit_block_forward.7} parent=27 // pred_region
        %p212 = scmp.lt.s32.totalorder %s18, 1
        %s213 = scalar_select %p212, %s18, 1
        %s214 = smul.addr %s213, 2
        %s215 = smul.addr %s214, 8
        %s216 = scalar_lea.vmem %s2, %s215
      $region36: #{dit_block_forward.7} parent=27 // pred_fallthru
        _
    $region28: #{dit_block_forward.7} parent=5 // pred_fallthru
      _
    %p217 = scmp.le.s32.totalorder 1, %s11
    %p218 = scmp.lt.s32.totalorder %s11, 3
    %p219 = pnand %p217, %p218
    %p220 = pneg %p219
    // Predicated region
    $region37: #{dit_block_forward.7} parent=5 // pred_check
      _
    $region38: #{dit_block_forward.7} parent=5 // pred_check_branch
      %222 = sbr.rel (%p219) target = $region40
    $region39: #{dit_block_forward.7} parent=5 // pred_region
      %s223 = ssub.s32 %s11, 1
      %s224 = smul.u32 4, %s21
      %p225 = scmp.lt.s32.totalorder %s20, 1
      %s226 = scalar_select %p225, %s20, 1
      %p227 = scmp.lt.s32.totalorder %s224, 3
      %s228 = scalar_select %p227, %s224, 3
      %s229 = smul.addr %s226, 4
      %s230 = sadd.s32 %s228, %s229
      %s231 = smul.addr %s230, 8
      %s232 = scalar_lea.vmem %s0, %s231
      %p233 = pneg %p51
      %p234 = pneg %p48
      %p235 = pneg %p72
      %p236 = pneg %p69
      %p237 = scmp.lt.s32.totalorder %s20, 1
      %s238 = scalar_select %p237, %s20, 1
      %s239 = smul.addr %s238, 2
      %s240 = smul.addr %s239, 8
      %s241 = scalar_lea.vmem %s2, %s240
      %p242 = pneg %p98
      %p243 = pneg %p95
      %p244 = pneg %p119
      %p245 = pneg %p116
      %p246 = pneg %p140
      %p247 = pneg %p137
      %p248 = pneg %p168
      %p249 = pneg %p165
      %s250 = smul.u32 4, %s21
      %p251 = scmp.lt.s32.totalorder %s20, 1
      %s252 = scalar_select %p251, %s20, 1
      %p253 = scmp.lt.s32.totalorder %s250, 3
      %s254 = scalar_select %p253, %s250, 3
      %s255 = smul.addr %s254, 3
      %s256 = smul.addr %s252, 12
      %s257 = sadd.s32 %s255, %s256
      %s258 = smul.addr %s257, 4
      %s259 = scalar_lea.vmem %s5, %s258
      %s260 = smul.u32 4, %s21
      %p261 = scmp.lt.s32.totalorder %s20, 1
      %s262 = scalar_select %p261, %s20, 1
      %p263 = scmp.lt.s32.totalorder %s260, 3
      %s264 = scalar_select %p263, %s260, 3
      %s265 = smul.addr %s262, 4
      %s266 = sadd.s32 %s264, %s265
      %s267 = smul.addr %s266, 8
      %s268 = scalar_lea.vmem %s0, %s267
      %s269 = smul.u32 4, %s21
      %p270 = scmp.lt.s32.totalorder %s20, 1
      %s271 = scalar_select %p270, %s20, 1
      %s272 = smul.addr %s271, 2
      %s273 = smul.addr %s272, 8
      %s274 = scalar_lea.vmem %s2, %s273
      %s275 = smul.u32 4, %s21
      %p276 = scmp.lt.s32.totalorder %s20, 1
      %s277 = scalar_select %p276, %s20, 1
      %p278 = scmp.lt.s32.totalorder %s275, 3
      %s279 = scalar_select %p278, %s275, 3
      %s280 = smul.addr %s279, 3
      %s281 = smul.addr %s277, 12
      %s282 = sadd.s32 %s280, %s281
      %s283 = smul.addr %s282, 4
      %s284 = scalar_lea.vmem %s5, %s283
      %s285 = smul.u32 4, %s21
      %v287 = vld [vmem:[%s268] sm:$0xff]
      %v288 = vld [vmem:[%s268 + $0x8] sm:$0xff]
      %v289 = vld [vmem:[%s268 + $0x10] sm:$0xff]
      %v290 = vld [vmem:[%s268 + $0x18] sm:$0xff]
      %v291 = vmul.f32 %v287, %v287
      %v292 = vmul.f32 %v288, %v288
      %v293 = vmul.f32 %v289, %v289
      %v294 = vmul.f32 %v290, %v290
      %295 = vadd.xlane.f32.xlu0 %v291
      %v296 = vpop.xlane.xlu0 %295
      %297 = vadd.xlane.f32.xlu0 %v292
      %v298 = vpop.xlane.xlu0 %297
      %299 = vadd.xlane.f32.xlu0 %v293
      %v300 = vpop.xlane.xlu0 %299
      %301 = vadd.xlane.f32.xlu0 %v294
      %v302 = vpop.xlane.xlu0 %301
      %v303 = vrcp.pop 128.0
      %v304 = vmul.f32 %v296, %v303
      %v305 = vmul.f32 %v298, %v303
      %v306 = vmul.f32 %v300, %v303
      %v307 = vmul.f32 %v302, %v303
      %v308 = vadd.f32 %v304, 1e-06
      %v309 = vadd.f32 %v305, 1e-06
      %v310 = vadd.f32 %v306, 1e-06
      %v311 = vadd.f32 %v307, 1e-06
      %v312 = vrsqrt.pop %v308
      %v313 = vrsqrt.pop %v309
      %v314 = vrsqrt.pop %v310
      %v315 = vrsqrt.pop %v311
      %v316 = vmul.f32 %v287, %v312
      %v317 = vmul.f32 %v288, %v313
      %v318 = vmul.f32 %v289, %v314
      %v319 = vmul.f32 %v290, %v315
      %v320 = vld [vmem:[%s1] sm:$0x1]
      %v322 = vlaneseq
      %v323 = vshrl.u32 %v322, 7
      %v324 = vsub.s32 0, %v323
      %v325 = vrot.slane %v320, %v324
      %v327 = vmul.f32 %v316, %v325
      %v328 = vmul.f32 %v317, %v325
      %v329 = vmul.f32 %v318, %v325
      %v330 = vmul.f32 %v319, %v325
      %v331 = vld [vmem:[%s274 + $0x1] sm:$0x1]
      %v332 = vld [vmem:[%s274] sm:$0x1]
      %v333 = vadd.f32 %v331, 1.0
      %v334 = vlaneseq
      %v335 = vshrl.u32 %v334, 7
      %v336 = vsub.s32 0, %v335
      %v337 = vrot.slane %v333, %v336
      %v338 = vmul.f32 %v327, %v337
      %v339 = vmul.f32 %v328, %v337
      %v340 = vmul.f32 %v329, %v337
      %v341 = vmul.f32 %v330, %v337
      %v342 = vlaneseq
      %v343 = vshrl.u32 %v342, 7
      %v344 = vsub.s32 0, %v343
      %v345 = vrot.slane %v332, %v344
      %v346 = vadd.f32 %v338, %v345
      %v347 = vadd.f32 %v339, %v345
      %v348 = vadd.f32 %v340, %v345
      %v349 = vadd.f32 %v341, %v345
      %v350 = vpack.c.bf16 %v347, %v346
      %v351 = vpack.c.bf16 %v349, %v348
      %v352 = vld [vmem:[%s3] sm:$0xff]
      %v353 = vld [vmem:[%s3 + $0x8] sm:$0xf]
      %v354 = vld [vmem:[%s3 + $0xc] sm:$0xff]
      %v355 = vld [vmem:[%s3 + $0x14] sm:$0xf]
      %v356 = vld [vmem:[%s3 + $0x18] sm:$0xff]
      %v357 = vld [vmem:[%s3 + $0x20] sm:$0xf]
      %v358 = vld [vmem:[%s3 + $0x24] sm:$0xff]
      %v359 = vld [vmem:[%s3 + $0x2c] sm:$0xf]
      %v360 = vld [vmem:[%s3 + $0x30] sm:$0xff]
      %v361 = vld [vmem:[%s3 + $0x38] sm:$0xf]
      %v362 = vld [vmem:[%s3 + $0x3c] sm:$0xff]
      %v363 = vld [vmem:[%s3 + $0x44] sm:$0xf]
      %v364 = vld [vmem:[%s3 + $0x48] sm:$0xff]
      %v365 = vld [vmem:[%s3 + $0x50] sm:$0xf]
      %v366 = vld [vmem:[%s3 + $0x54] sm:$0xff]
      %v367 = vld [vmem:[%s3 + $0x5c] sm:$0xf]
      %v368 = vld [vmem:[%s3 + $0x60] sm:$0xff]
      %v369 = vld [vmem:[%s3 + $0x68] sm:$0xf]
      %v370 = vld [vmem:[%s3 + $0x6c] sm:$0xff]
      %v371 = vld [vmem:[%s3 + $0x74] sm:$0xf]
      %v372 = vld [vmem:[%s3 + $0x78] sm:$0xff]
      %v373 = vld [vmem:[%s3 + $0x80] sm:$0xf]
      %v374 = vld [vmem:[%s3 + $0x84] sm:$0xff]
      %v375 = vld [vmem:[%s3 + $0x8c] sm:$0xf]
      %v376 = vld [vmem:[%s3 + $0x90] sm:$0xff]
      %v377 = vld [vmem:[%s3 + $0x98] sm:$0xf]
      %v378 = vld [vmem:[%s3 + $0x9c] sm:$0xff]
      %v379 = vld [vmem:[%s3 + $0xa4] sm:$0xf]
      %v380 = vld [vmem:[%s3 + $0xa8] sm:$0xff]
      %v381 = vld [vmem:[%s3 + $0xb0] sm:$0xf]
      %v382 = vld [vmem:[%s3 + $0xb4] sm:$0xff]
      %v383 = vld [vmem:[%s3 + $0xbc] sm:$0xf]
      %v384 = vld [vmem:[%s4] sm:$0x7]
      %v386 = vlaneseq
      %v387 = vshrl.u32 %v386, 7
      %v388 = vsub.s32 0, %v387
      %v389 = vrot.slane %v384, %v388
      %v390 = vlaneseq
      %v391 = vshrl.u32 %v390, 7
      %v392 = vsub.s32 1, %v391
      %v393 = vrot.slane %v384, %v392
      %v394 = vlaneseq
      %v395 = vshrl.u32 %v394, 7
      %v396 = vsub.s32 2, %v395
      %v397 = vrot.slane %v384, %v396
      %v433 = vunpack.c.l.b16 %v352
      %v434 = vunpack.c.h.b16 %v352
      %v435 = vunpack.c.l.b16 %v353
      %v436 = vunpack.c.l.b16 %v354
      %v437 = vunpack.c.h.b16 %v354
      %v438 = vunpack.c.l.b16 %v355
      %v439 = vunpack.c.l.b16 %v356
      %v440 = vunpack.c.h.b16 %v356
      %v441 = vunpack.c.l.b16 %v357
      %v442 = vunpack.c.l.b16 %v358
      %v443 = vunpack.c.h.b16 %v358
      %v444 = vunpack.c.l.b16 %v359
      %v445 = vunpack.c.l.b16 %v360
      %v446 = vunpack.c.h.b16 %v360
      %v447 = vunpack.c.l.b16 %v361
      %v448 = vunpack.c.l.b16 %v362
      %v449 = vunpack.c.h.b16 %v362
      %v450 = vunpack.c.l.b16 %v363
      %v451 = vunpack.c.l.b16 %v364
      %v452 = vunpack.c.h.b16 %v364
      %v453 = vunpack.c.l.b16 %v365
      %v454 = vunpack.c.l.b16 %v366
      %v455 = vunpack.c.h.b16 %v366
      %v456 = vunpack.c.l.b16 %v367
      %v457 = vunpack.c.l.b16 %v368
      %v458 = vunpack.c.h.b16 %v368
      %v459 = vunpack.c.l.b16 %v369
      %v460 = vunpack.c.l.b16 %v370
      %v461 = vunpack.c.h.b16 %v370
      %v462 = vunpack.c.l.b16 %v371
      %v463 = vunpack.c.l.b16 %v372
      %v464 = vunpack.c.h.b16 %v372
      %v465 = vunpack.c.l.b16 %v373
      %v466 = vunpack.c.l.b16 %v374
      %v467 = vunpack.c.h.b16 %v374
      %v468 = vunpack.c.l.b16 %v375
      %v469 = vunpack.c.l.b16 %v376
      %v470 = vunpack.c.h.b16 %v376
      %v471 = vunpack.c.l.b16 %v377
      %v472 = vunpack.c.l.b16 %v378
      %v473 = vunpack.c.h.b16 %v378
      %v474 = vunpack.c.l.b16 %v379
      %v475 = vunpack.c.l.b16 %v380
      %v476 = vunpack.c.h.b16 %v380
      %v477 = vunpack.c.l.b16 %v381
      %v478 = vunpack.c.l.b16 %v382
      %v479 = vunpack.c.h.b16 %v382
      %v480 = vunpack.c.l.b16 %v383
      %v481 = vpack.c.b16 %v436, %v433
      %v482 = vpack.c.b16 %v437, %v434
      %v483 = vpack.c.b16 %v438, %v435
      %v484 = vpack.c.b16 %v442, %v439
      %v485 = vpack.c.b16 %v443, %v440
      %v486 = vpack.c.b16 %v444, %v441
      %v487 = vpack.c.b16 %v448, %v445
      %v488 = vpack.c.b16 %v449, %v446
      %v489 = vpack.c.b16 %v450, %v447
      %v490 = vpack.c.b16 %v454, %v451
      %v491 = vpack.c.b16 %v455, %v452
      %v492 = vpack.c.b16 %v456, %v453
      %v493 = vpack.c.b16 %v460, %v457
      %v494 = vpack.c.b16 %v461, %v458
      %v495 = vpack.c.b16 %v462, %v459
      %v496 = vpack.c.b16 %v466, %v463
      %v497 = vpack.c.b16 %v467, %v464
      %v498 = vpack.c.b16 %v468, %v465
      %v499 = vpack.c.b16 %v472, %v469
      %v500 = vpack.c.b16 %v473, %v470
      %v501 = vpack.c.b16 %v474, %v471
      %v502 = vpack.c.b16 %v478, %v475
      %v503 = vpack.c.b16 %v479, %v476
      %v504 = vpack.c.b16 %v480, %v477
      %529 = vmatprep.subr.bf16.mxu0 %v503
      %530 = vmatpush1.bf16.msra.mxu0 %v502
      %531 = vmatprep.subr.bf16.mxu0 %v500
      %532 = vmatpush1.bf16.msra.mxu0 %v499
      %533 = vmatprep.subr.bf16.mxu0 %v497
      %534 = vmatpush1.bf16.msra.mxu0 %v496
      %535 = vmatprep.subr.bf16.mxu0 %v494
      %536 = vmatpush1.bf16.msra.mxu0 %v493
      %537 = vmatprep.subr.bf16.mxu0 %v491
      %538 = vmatpush1.bf16.msra.mxu0 %v490
      %539 = vmatprep.subr.bf16.mxu0 %v488
      %540 = vmatpush1.bf16.msra.mxu0 %v487
      %541 = vmatprep.subr.bf16.mxu0 %v485
      %542 = vmatpush1.bf16.msra.mxu0 %v484
      %543 = vmatprep.subr.bf16.mxu0 %v482
      %544 = vmatpush1.bf16.msra.mxu0 %v481
      %545 = vmatprep.subr.bf16.mxu0 0
      %546 = vmatpush2.bf16.msra.mxu0 0
      %547 = vmatprep.subr.bf16.mxu0 0
      %548 = vmatpush2.bf16.msra.mxu0 0
      %549 = vmatprep.subr.bf16.mxu0 0
      %550 = vmatpush2.bf16.msra.mxu0 0
      %551 = vmatprep.subr.bf16.mxu0 0
      %552 = vmatpush2.bf16.msra.mxu0 0
      %553 = vmatprep.subr.bf16.mxu0 0
      %554 = vmatpush2.bf16.msra.mxu0 0
      %555 = vmatprep.subr.bf16.mxu0 0
      %556 = vmatpush2.bf16.msra.mxu0 0
      %557 = vmatprep.subr.bf16.mxu0 0
      %558 = vmatpush2.bf16.msra.mxu0 0
      %559 = vmatprep.subr.bf16.mxu0 0
      %560 = vmatpush2.bf16.msra.mxu0 0
      %561 = vmatprep.mubr.bf16.mxu0 0
      %562 = vmatmul.mubr.bf16.gmra.mxu0 %v350
      %v563 = vpop.f32.mrf.mxu0
      %v564 = vadd.f32 %v389, %v563
      %v565 = vpop.f32.mrf.mxu0
      %v566 = vadd.f32 %v393, %v565
      %v567 = vpop.f32.mrf.mxu0
      %v568 = vadd.f32 %v389, %v567
      %v569 = vpop.f32.mrf.mxu0
      %v570 = vadd.f32 %v393, %v569
      %571 = vmatprep.mubr.bf16.mxu0 0
      %572 = vmatmul.mubr.bf16.gmra.mxu0 %v351
      %v573 = vpop.f32.mrf.mxu0
      %v574 = vadd.f32 %v389, %v573
      %v575 = vpop.f32.mrf.mxu0
      %v576 = vadd.f32 %v393, %v575
      %v577 = vpop.f32.mrf.mxu0
      %v578 = vadd.f32 %v389, %v577
      %v579 = vpop.f32.mrf.mxu0
      %v580 = vadd.f32 %v393, %v579
      %581 = vdwg.mxu0
      %582 = vmatprep.subr.bf16.mxu0 0
      %583 = vmatpush1.bf16.msra.mxu0 %v504
      %584 = vmatprep.subr.bf16.mxu0 0
      %585 = vmatpush1.bf16.msra.mxu0 %v501
      %586 = vmatprep.subr.bf16.mxu0 0
      %587 = vmatpush1.bf16.msra.mxu0 %v498
      %588 = vmatprep.subr.bf16.mxu0 0
      %589 = vmatpush1.bf16.msra.mxu0 %v495
      %590 = vmatprep.subr.bf16.mxu0 0
      %591 = vmatpush1.bf16.msra.mxu0 %v492
      %592 = vmatprep.subr.bf16.mxu0 0
      %593 = vmatpush1.bf16.msra.mxu0 %v489
      %594 = vmatprep.subr.bf16.mxu0 0
      %595 = vmatpush1.bf16.msra.mxu0 %v486
      %596 = vmatprep.subr.bf16.mxu0 0
      %597 = vmatpush1.bf16.msra.mxu0 %v483
      %598 = vmatprep.subr.bf16.mxu0 0
      %599 = vmatpush2.bf16.msra.mxu0 0
      %600 = vmatprep.subr.bf16.mxu0 0
      %601 = vmatpush2.bf16.msra.mxu0 0
      %602 = vmatprep.subr.bf16.mxu0 0
      %603 = vmatpush2.bf16.msra.mxu0 0
      %604 = vmatprep.subr.bf16.mxu0 0
      %605 = vmatpush2.bf16.msra.mxu0 0
      %606 = vmatprep.subr.bf16.mxu0 0
      %607 = vmatpush2.bf16.msra.mxu0 0
      %608 = vmatprep.subr.bf16.mxu0 0
      %609 = vmatpush2.bf16.msra.mxu0 0
      %610 = vmatprep.subr.bf16.mxu0 0
      %611 = vmatpush2.bf16.msra.mxu0 0
      %612 = vmatprep.subr.bf16.mxu0 0
      %613 = vmatpush2.bf16.msra.mxu0 0
      %614 = vmatprep.mubr.bf16.mxu0 0
      %615 = vmatmul.mubr.bf16.gmra.mxu0 %v350
      %v616 = vpop.f32.mrf.mxu0
      %v617 = vadd.f32 %v397, %v616
      %v618 = vpop.f32.mrf.mxu0
      %v619 = vpop.f32.mrf.mxu0
      %v620 = vadd.f32 %v397, %v619
      %v621 = vpop.f32.mrf.mxu0
      %622 = vmatprep.mubr.bf16.mxu0 0
      %623 = vmatmul.mubr.bf16.gmra.mxu0 %v351
      %v624 = vpop.f32.mrf.mxu0
      %v625 = vadd.f32 %v397, %v624
      %v626 = vpop.f32.mrf.mxu0
      %v627 = vpop.f32.mrf.mxu0
      %v628 = vadd.f32 %v397, %v627
      %v629 = vpop.f32.mrf.mxu0
      %630 = vdwg.mxu0
      %v631 = vpack.c.bf16 %v568, %v564
      %v632 = vpack.c.bf16 %v570, %v566
      %v633 = vpack.c.bf16 %v620, %v617
      %v634 = vpack.c.bf16 %v578, %v574
      %v635 = vpack.c.bf16 %v580, %v576
      %v636 = vpack.c.bf16 %v628, %v625
      %v643 = vunpack.c.l.b16 %v631
      %v644 = vunpack.c.l.b16 %v632
      %v645 = vunpack.c.l.b16 %v633
      %v646 = vunpack.c.h.b16 %v631
      %v647 = vunpack.c.h.b16 %v632
      %v648 = vunpack.c.h.b16 %v633
      %v649 = vunpack.c.l.b16 %v634
      %v650 = vunpack.c.l.b16 %v635
      %v651 = vunpack.c.l.b16 %v636
      %v652 = vunpack.c.h.b16 %v634
      %v653 = vunpack.c.h.b16 %v635
      %v654 = vunpack.c.h.b16 %v636
      %v655 = vpack.c.b16 %v644, %v643
      %v656 = vpack.c.b16 %v645, %v645
      %v657 = vpack.c.b16 %v647, %v646
      %v658 = vpack.c.b16 %v648, %v648
      %v659 = vpack.c.b16 %v650, %v649
      %v660 = vpack.c.b16 %v651, %v651
      %v661 = vpack.c.b16 %v653, %v652
      %v662 = vpack.c.b16 %v654, %v654
      %671 = vst [vmem:[%s284] sm:$0xff] %v655
      %672 = vst [vmem:[%s284 + $0x8] sm:$0xf] %v656
      %673 = vst [vmem:[%s284 + $0xc] sm:$0xff] %v657
      %674 = vst [vmem:[%s284 + $0x14] sm:$0xf] %v658
      %675 = vst [vmem:[%s284 + $0x18] sm:$0xff] %v659
      %676 = vst [vmem:[%s284 + $0x20] sm:$0xf] %v660
      %677 = vst [vmem:[%s284 + $0x24] sm:$0xff] %v661
      %678 = vst [vmem:[%s284 + $0x2c] sm:$0xf] %v662
      %s679 = smul.u32 4, %s21
      %p680 = scmp.lt.s32.totalorder %s20, 1
      %s681 = scalar_select %p680, %s20, 1
      %p682 = scmp.lt.s32.totalorder %s679, 3
      %s683 = scalar_select %p682, %s679, 3
      %s684 = smul.addr %s683, 3
      %s685 = smul.addr %s681, 12
      %s686 = sadd.s32 %s684, %s685
      %s687 = smul.addr %s686, 4
      %s688 = scalar_lea.vmem %s5, %s687
      // Predicated region
      $region41: #{dit_block_forward.7} parent=39 // pred_check
        %p689 = pneg %p165
      $region42: #{dit_block_forward.7} parent=39 // pred_check_branch
        %691 = sbr.rel (%p689) target = $region44
      $region43: #{dit_block_forward.7} parent=39 // pred_region
        %s692 = smul.u32 4, %s21
      $region44: #{dit_block_forward.7} parent=39 // pred_fallthru
        _
    $region40: #{dit_block_forward.7} parent=5 // pred_fallthru
      _
    %p693 = scmp.le.s32.totalorder 2, %s11
    // Predicated region
    $region45: #{dit_block_forward.7} parent=5 // pred_check
      %p694 = pneg %p693
    $region46: #{dit_block_forward.7} parent=5 // pred_check_branch
      %696 = sbr.rel (%p694) target = $region48
    $region47: #{dit_block_forward.7} parent=5 // pred_region
      %s697 = ssub.s32 %s11, 2
      // Predicated region
      $region49: #{dit_block_forward.7} parent=47 // pred_check
        %p698 = pneg %p171
      $region50: #{dit_block_forward.7} parent=47 // pred_check_branch
        %700 = sbr.rel (%p698) target = $region52
      $region51: #{dit_block_forward.7} parent=47 // pred_region
        %s701 = smul.u32 4, %s23
        %p702 = scmp.lt.s32.totalorder %s22, 1
        %s703 = scalar_select %p702, %s22, 1
        %p704 = scmp.lt.s32.totalorder %s701, 3
        %s705 = scalar_select %p704, %s701, 3
        %s706 = smul.addr %s705, 3
        %s707 = smul.addr %s703, 12
        %s708 = sadd.s32 %s706, %s707
        %s709 = smul.addr %s708, 4
        %s710 = scalar_lea.vmem %s5, %s709
      $region52: #{dit_block_forward.7} parent=47 // pred_fallthru
        _
    $region48: #{dit_block_forward.7} parent=5 // pred_fallthru
      _
  $region6: #{dit_block_forward.7} parent=0 // loop_footer
    %s15 = sadd.s32 1, %s11
  $region7: #{dit_block_forward.7} parent=0 // loop_footer_branch
    %10 = sbr.rel target = $region3
  $region8: #{dit_block_forward.7} parent=0 // loop_exit
    _

// kernel: dit_block_forward.8
$region0: #{dit_block_forward.8}
  #allocation0 [shape = 'u32[]', space=smem, size = 0x4, offset = 0x4, fixed_abs, tag = 'smem constant byte address 0x4 - core index']
  #allocation1 [shape = 'u32[144,128]{1,0:T(1,128)}', space=vmem, size = 0x12000, scoped, tag = 'internal scratch']
  %s0 = inlined_call_operand.vmem [shape: bf16[2,32,384], index: 0, kind: input, shape index: {}, may-alias: {0,1,2}]
  %s1 = inlined_call_operand.vmem [shape: bf16[2,32,384], index: 1, kind: input, shape index: {}, may-alias: {0,1,2}]
  %s2 = inlined_call_operand.vmem [shape: bf16[2,32,384], index: 2, kind: input, shape index: {}, may-alias: {0,1,2}]
  %s3 = inlined_call_operand.vmem [shape: bf16[128,128], index: 3, kind: input, shape index: {}]
  %s4 = inlined_call_operand.vmem [shape: f32[2,9,128], index: 4, kind: input, shape index: {}]
  %s5 = inlined_call_operand.vmem [shape: f32[2,32,128], index: 5, kind: input, shape index: {}, may-alias: {5,6}]
  %s6 = inlined_call_operand.vmem [shape: f32[2,32,128], index: 6, kind: output, shape index: {}, may-alias: {5,6}]
  %s7 = sld [smem:[#allocation0]]
  $region180: #{dit_block_forward.8} parent=0
    _
  %s9 = ssub.s32 1, %s7
  %s10 = scalar_select 0, %s9, %s7
  $region1: #{dit_block_forward.8} parent=0
    #allocation2 [shape = 'u8[16384]{0}', space=vmem, size = 0x4000, scoped, tag = 'input window, operand 0']
    #allocation3 [shape = 'u8[16384]{0}', space=vmem, size = 0x4000, scoped, tag = 'input window, operand 1']
    #allocation4 [shape = 'u8[16384]{0}', space=vmem, size = 0x4000, scoped, tag = 'input window, operand 2']
    loop: start=0, step=1, limit=4
    $region2: #{dit_block_forward.8} parent=1 // loop_pre_header
      _
    $region3: #{dit_block_forward.8} parent=1 // loop_header
      %s12 = sphi 0, %s16
      %p13 = scmp.ge.s32.totalorder %s12, 4
      %s19 = sphi 0, %s31
      %s20 = sphi 0, %s27
      %s21 = sphi 0, %s19
      %s22 = sphi 0, %s20
      %s23 = sphi 0, %s21
      %s24 = sphi 0, %s22
      %s36 = sphi 0, %s38
      %s39 = sphi 0, %s36
      %s40 = sphi 0, %s39
      %s56 = sphi 0, %s40
      %s62 = sphi 0, %s64
      %s65 = sphi 0, %s62
      %s66 = sphi 0, %s65
      %s82 = sphi 0, %s66
      %s88 = sphi 0, %s90
      %s91 = sphi 0, %s88
      %s92 = sphi 0, %s91
      %s108 = sphi 0, %s92
      %s112 = sphi 0, %s112
      %s114 = sphi 0, %s112
      %s115 = sphi 0, %s114
      %s129 = sphi 0, %s115
      %s135 = sphi 0, %s137
      %s138 = sphi 0, %s135
      %s139 = sphi 0, %s138
      %s155 = sphi 0, %s139
      %s163 = sphi 0, %s165
      %s166 = sphi 0, %s163
      %s167 = sphi 0, %s166
      %s183 = sphi 0, %s167
      %s191 = sphi 0, %s193
      %s194 = sphi 0, %s191
      %s195 = sphi 0, %s194
      %s211 = sphi 0, %s195
    $region4: #{dit_block_forward.8} parent=1 // loop_header_branch
      %15 = sbr.rel (%p13) target = $region8
    $region5: #{dit_block_forward.8} parent=1 // loop_body
      %s17 = ssub.s32 %s12, 1
      %s18 = ssub.s32 %s12, 2
      %s25 = sadd.s32 1, %s20
      %p26 = scmp.ge.s32.totalorder %s25, 1
      %s27 = scalar_select %p26, 0, %s25
      %s28 = sadd.s32 1, %s19
      %s29 = scalar_select %p26, %s28, %s19
      %p30 = scmp.ge.s32.totalorder %s29, 2
      %s31 = scalar_select %p30, 0, %s29
      %s32 = ssub.s32 %s19, %s31
      %s33 = ssub.s32 %s20, %s27
      %s34 = sor.u32 %s32, %s33
      %p35 = scmp.eq.s32.totalorder %s34, 0
      %s37 = sadd.s32 %s36, 1
      %s38 = scalar_select %p35, %s36, %s37
      %p41 = pneg %p35
      %p42 = scmp.eq.s32.totalorder %s12, 1
      %p43 = por %p41, %p42
      %p44 = scmp.ne.s32.totalorder %s36, %s39
      %p45 = scmp.eq.s32.totalorder %s12, 0
      %p46 = por %p44, %p45
      %p47 = scmp.ne.s32.totalorder %s36, %s39
      %p48 = scmp.eq.s32.totalorder %s17, 1
      %p49 = por %p47, %p48
      %p50 = scmp.ne.s32.totalorder %s39, %s40
      %p51 = scmp.eq.s32.totalorder %s17, 0
      %p52 = por %p50, %p51
      %p53 = scmp.ne.s32.totalorder %s39, %s40
      %p54 = scmp.eq.s32.totalorder %s18, 1
      %p55 = por %p53, %p54
      %p57 = scmp.ne.s32.totalorder %s40, %s56
      %p58 = scmp.eq.s32.totalorder %s18, 0
      %p59 = por %p57, %p58
      %s60 = ssub.s32 %s19, %s31
      %p61 = scmp.eq.s32.totalorder %s60, 0
      %s63 = sadd.s32 %s62, 1
      %s64 = scalar_select %p61, %s62, %s63
      %p67 = pneg %p61
      %p68 = scmp.eq.s32.totalorder %s12, 1
      %p69 = por %p67, %p68
      %p70 = scmp.ne.s32.totalorder %s62, %s65
      %p71 = scmp.eq.s32.totalorder %s12, 0
      %p72 = por %p70, %p71
      %p73 = scmp.ne.s32.totalorder %s62, %s65
      %p74 = scmp.eq.s32.totalorder %s17, 1
      %p75 = por %p73, %p74
      %p76 = scmp.ne.s32.totalorder %s65, %s66
      %p77 = scmp.eq.s32.totalorder %s17, 0
      %p78 = por %p76, %p77
      %p79 = scmp.ne.s32.totalorder %s65, %s66
      %p80 = scmp.eq.s32.totalorder %s18, 1
      %p81 = por %p79, %p80
      %p83 = scmp.ne.s32.totalorder %s66, %s82
      %p84 = scmp.eq.s32.totalorder %s18, 0
      %p85 = por %p83, %p84
      %s86 = ssub.s32 %s19, %s31
      %p87 = scmp.eq.s32.totalorder %s86, 0
      %s89 = sadd.s32 %s88, 1
      %s90 = scalar_select %p87, %s88, %s89
      %p93 = pneg %p87
      %p94 = scmp.eq.s32.totalorder %s12, 1
      %p95 = por %p93, %p94
      %p96 = scmp.ne.s32.totalorder %s88, %s91
      %p97 = scmp.eq.s32.totalorder %s12, 0
      %p98 = por %p96, %p97
      %p99 = scmp.ne.s32.totalorder %s88, %s91
      %p100 = scmp.eq.s32.totalorder %s17, 1
      %p101 = por %p99, %p100
      %p102 = scmp.ne.s32.totalorder %s91, %s92
      %p103 = scmp.eq.s32.totalorder %s17, 0
      %p104 = por %p102, %p103
      %p105 = scmp.ne.s32.totalorder %s91, %s92
      %p106 = scmp.eq.s32.totalorder %s18, 1
      %p107 = por %p105, %p106
      %p109 = scmp.ne.s32.totalorder %s92, %s108
      %p110 = scmp.eq.s32.totalorder %s18, 0
      %p111 = por %p109, %p110
      %s113 = sadd.s32 %s112, 1
      %p116 = scmp.eq.s32.totalorder %s12, 1
      %p117 = scmp.ne.s32.totalorder %s112, %s114
      %p118 = scmp.eq.s32.totalorder %s12, 0
      %p119 = por %p117, %p118
      %p120 = scmp.ne.s32.totalorder %s112, %s114
      %p121 = scmp.eq.s32.totalorder %s17, 1
      %p122 = por %p120, %p121
      %p123 = scmp.ne.s32.totalorder %s114, %s115
      %p124 = scmp.eq.s32.totalorder %s17, 0
      %p125 = por %p123, %p124
      %p126 = scmp.ne.s32.totalorder %s114, %s115
      %p127 = scmp.eq.s32.totalorder %s18, 1
      %p128 = por %p126, %p127
      %p130 = scmp.ne.s32.totalorder %s115, %s129
      %p131 = scmp.eq.s32.totalorder %s18, 0
      %p132 = por %p130, %p131
      %s133 = ssub.s32 %s19, %s31
      %p134 = scmp.eq.s32.totalorder %s133, 0
      %s136 = sadd.s32 %s135, 1
      %s137 = scalar_select %p134, %s135, %s136
      %p140 = pneg %p134
      %p141 = scmp.eq.s32.totalorder %s12, 1
      %p142 = por %p140, %p141
      %p143 = scmp.ne.s32.totalorder %s135, %s138
      %p144 = scmp.eq.s32.totalorder %s12, 0
      %p145 = por %p143, %p144
      %p146 = scmp.ne.s32.totalorder %s135, %s138
      %p147 = scmp.eq.s32.totalorder %s17, 1
      %p148 = por %p146, %p147
      %p149 = scmp.ne.s32.totalorder %s138, %s139
      %p150 = scmp.eq.s32.totalorder %s17, 0
      %p151 = por %p149, %p150
      %p152 = scmp.ne.s32.totalorder %s138, %s139
      %p153 = scmp.eq.s32.totalorder %s18, 1
      %p154 = por %p152, %p153
      %p156 = scmp.ne.s32.totalorder %s139, %s155
      %p157 = scmp.eq.s32.totalorder %s18, 0
      %p158 = por %p156, %p157
      %s159 = ssub.s32 %s19, %s31
      %s160 = ssub.s32 %s20, %s27
      %s161 = sor.u32 %s159, %s160
      %p162 = scmp.eq.s32.totalorder %s161, 0
      %s164 = sadd.s32 %s163, 1
      %s165 = scalar_select %p162, %s163, %s164
      %p168 = pneg %p162
      %p169 = scmp.eq.s32.totalorder %s12, 1
      %p170 = por %p168, %p169
      %p171 = scmp.ne.s32.totalorder %s163, %s166
      %p172 = scmp.eq.s32.totalorder %s12, 0
      %p173 = por %p171, %p172
      %p174 = scmp.ne.s32.totalorder %s163, %s166
      %p175 = scmp.eq.s32.totalorder %s17, 1
      %p176 = por %p174, %p175
      %p177 = scmp.ne.s32.totalorder %s166, %s167
      %p178 = scmp.eq.s32.totalorder %s17, 0
      %p179 = por %p177, %p178
      %p180 = scmp.ne.s32.totalorder %s166, %s167
      %p181 = scmp.eq.s32.totalorder %s18, 1
      %p182 = por %p180, %p181
      %p184 = scmp.ne.s32.totalorder %s167, %s183
      %p185 = scmp.eq.s32.totalorder %s18, 0
      %p186 = por %p184, %p185
      %s187 = ssub.s32 %s19, %s31
      %s188 = ssub.s32 %s20, %s27
      %s189 = sor.u32 %s187, %s188
      %p190 = scmp.eq.s32.totalorder %s189, 0
      %s192 = sadd.s32 %s191, 1
      %s193 = scalar_select %p190, %s191, %s192
      %p196 = pneg %p190
      %p197 = scmp.eq.s32.totalorder %s12, 1
      %p198 = por %p196, %p197
      %p199 = scmp.ne.s32.totalorder %s191, %s194
      %p200 = scmp.eq.s32.totalorder %s12, 0
      %p201 = por %p199, %p200
      %p202 = scmp.ne.s32.totalorder %s191, %s194
      %p203 = scmp.eq.s32.totalorder %s17, 1
      %p204 = por %p202, %p203
      %p205 = scmp.ne.s32.totalorder %s194, %s195
      %p206 = scmp.eq.s32.totalorder %s17, 0
      %p207 = por %p205, %p206
      %p208 = scmp.ne.s32.totalorder %s194, %s195
      %p209 = scmp.eq.s32.totalorder %s18, 1
      %p210 = por %p208, %p209
      %p212 = scmp.ne.s32.totalorder %s195, %s211
      %p213 = scmp.eq.s32.totalorder %s18, 0
      %p214 = por %p212, %p213
      %p215 = scmp.le.s32.totalorder 1, %s12
      %p216 = scmp.lt.s32.totalorder %s12, 3
      %p217 = pnand %p215, %p216
      %p218 = pneg %p217
      // Predicated region
      $region9: #{dit_block_forward.8} parent=5 // pred_check
        _
      $region10: #{dit_block_forward.8} parent=5 // pred_check_branch
        %220 = sbr.rel (%p217) target = $region12
      $region11: #{dit_block_forward.8} parent=5 // pred_region
        %s221 = ssub.s32 %s12, 1
        // Predicated region
        $region13: #{dit_block_forward.8} parent=11 // pred_check
          %p222 = pneg %p125
        $region14: #{dit_block_forward.8} parent=11 // pred_check_branch
          %224 = sbr.rel (%p222) target = $region16
        $region15: #{dit_block_forward.8} parent=11 // pred_region
          _
        $region16: #{dit_block_forward.8} parent=11 // pred_fallthru
          _
      $region12: #{dit_block_forward.8} parent=5 // pred_fallthru
        _
      %p225 = scmp.lt.s32.totalorder %s12, 2
      // Predicated region
      $region17: #{dit_block_forward.8} parent=5 // pred_check
        %p226 = pneg %p225
      $region18: #{dit_block_forward.8} parent=5 // pred_check_branch
        %228 = sbr.rel (%p226) target = $region20
      $region19: #{dit_block_forward.8} parent=5 // pred_region
        // Predicated region
        $region21: #{dit_block_forward.8} parent=19 // pred_check
          %p229 = pneg %p46
        $region22: #{dit_block_forward.8} parent=19 // pred_check_branch
          %231 = sbr.rel (%p229) target = $region24
        $region23: #{dit_block_forward.8} parent=19 // pred_region
          %s232 = sand.u32 %s36, 1
          %s233 = sand.u32 %s36, 1
          %s234 = smul.addr %s233, 16
          %s235 = scalar_lea.vmem [#allocation2], %s234
          %s236 = smul.u32 4, %s20
          %s237 = smul.addr %s236, 3
          %s238 = smul.addr %s19, 12
          %s239 = sadd.s32 %s237, %s238
          %s240 = smul.addr %s239, 4
          %s241 = scalar_lea.vmem %s0, %s240
          // Predicated region
          $region25: #{dit_block_forward.8} parent=23 // pred_check
            _
          $region26: #{dit_block_forward.8} parent=23 // pred_check_branch
            %243 = sbr.rel (0) target = $region28
          $region27: #{dit_block_forward.8} parent=23 // pred_region
            // Predicated region
            $region29: #{dit_block_forward.8} parent=27 // pred_check
              _
            $region30: #{dit_block_forward.8} parent=27 // pred_check_branch
              %245 = sbr.rel target = $region32
            $region31: #{dit_block_forward.8} parent=27 // pred_region
              // Predicated region
              $region44: #{dit_block_forward.8} parent=31 // pred_check
                _
              $region45: #{dit_block_forward.8} parent=31 // pred_check_branch
                %267 = sbr.rel (0) target = $region47
              $region46: #{dit_block_forward.8} parent=31 // pred_region
                loop: start=0, step=1, limit=1
                $region48: #{dit_block_forward.8} parent=46 // loop_pre_header
                  _
                $region49: #{dit_block_forward.8} parent=46 // loop_header
                  %s269 = sphi 0, %s273
                  %p270 = scmp.ge.s32.totalorder %s269, 1
                  %s274 = sphi %s241, %s241
                  %s275 = sphi %s235, %s235
                $region50: #{dit_block_forward.8} parent=46 // loop_header_branch
                  %272 = sbr.rel (%p270) target = $region54
                $region51: #{dit_block_forward.8} parent=46 // loop_body
                  _
                $region52: #{dit_block_forward.8} parent=46 // loop_footer
                  %s273 = sadd.s32 1, %s269
                $region53: #{dit_block_forward.8} parent=46 // loop_footer_branch
                  %268 = sbr.rel target = $region49
                $region54: #{dit_block_forward.8} parent=46 // loop_exit
                  _
                %s277 = ssub.s32 16, 1
                loop: start=0, step=1, limit=1
                $region55: #{dit_block_forward.8} parent=46 // loop_pre_header
                  _
                $region56: #{dit_block_forward.8} parent=46 // loop_header
                  %s279 = sphi 0, %s283
                  %p280 = scmp.ge.s32.totalorder %s279, 1
                  %s284 = sphi %s241, %s241
                  %s285 = sphi %s235, %s235
                $region57: #{dit_block_forward.8} parent=46 // loop_header_branch
                  %282 = sbr.rel (%p280) target = $region61
                $region58: #{dit_block_forward.8} parent=46 // loop_body
                  %v286 = vld [vmem:[%s284] sm:%s277]
                  %287 = vst [vmem:[%s285] sm:%s277] %v286
                  %v288 = vld [vmem:[%s284 + $0xc] sm:%s277]
                  %289 = vst [vmem:[%s285 + $0x4] sm:%s277] %v288
                  %v290 = vld [vmem:[%s284 + $0x18] sm:%s277]
                  %291 = vst [vmem:[%s285 + $0x8] sm:%s277] %v290
                  %v292 = vld [vmem:[%s284 + $0x24] sm:%s277]
                  %293 = vst [vmem:[%s285 + $0xc] sm:%s277] %v292
                $region59: #{dit_block_forward.8} parent=46 // loop_footer
                  %s283 = sadd.s32 1, %s279
                $region60: #{dit_block_forward.8} parent=46 // loop_footer_branch
                  %278 = sbr.rel target = $region56
                $region61: #{dit_block_forward.8} parent=46 // loop_exit
                  _
              $region47: #{dit_block_forward.8} parent=31 // pred_fallthru
                _
            $region32: #{dit_block_forward.8} parent=27 // pred_fallthru
              _
            // Predicated region
            $region33: #{dit_block_forward.8} parent=27 // pred_check
              _
            $region34: #{dit_block_forward.8} parent=27 // pred_check_branch
              %247 = sbr.rel (0) target = $region36
            $region35: #{dit_block_forward.8} parent=27 // pred_region
              %s249 = ssub.s32 16, 1
              loop: start=0, step=1, limit=1
              $region37: #{dit_block_forward.8} parent=35 // loop_pre_header
                _
              $region38: #{dit_block_forward.8} parent=35 // loop_header
                %s251 = sphi 0, %s255
                %p252 = scmp.ge.s32.totalorder %s251, 1
                %s256 = sphi %s241, %s241
                %s257 = sphi %s235, %s235
              $region39: #{dit_block_forward.8} parent=35 // loop_header_branch
                %254 = sbr.rel (%p252) target = $region43
              $region40: #{dit_block_forward.8} parent=35 // loop_body
                %v258 = vld [vmem:[%s256] sm:%s249]
                %259 = vst [vmem:[%s257] sm:%s249] %v258
                %v260 = vld [vmem:[%s256 + $0xc] sm:%s249]
                %261 = vst [vmem:[%s257 + $0x4] sm:%s249] %v260
                %v262 = vld [vmem:[%s256 + $0x18] sm:%s249]
                %263 = vst [vmem:[%s257 + $0x8] sm:%s249] %v262
                %v264 = vld [vmem:[%s256 + $0x24] sm:%s249]
                %265 = vst [vmem:[%s257 + $0xc] sm:%s249] %v264
              $region41: #{dit_block_forward.8} parent=35 // loop_footer
                %s255 = sadd.s32 1, %s251
              $region42: #{dit_block_forward.8} parent=35 // loop_footer_branch
                %250 = sbr.rel target = $region38
              $region43: #{dit_block_forward.8} parent=35 // loop_exit
                _
            $region36: #{dit_block_forward.8} parent=27 // pred_fallthru
              _
          $region28: #{dit_block_forward.8} parent=23 // pred_fallthru
            _
          %294 = vnop
        $region24: #{dit_block_forward.8} parent=19 // pred_fallthru
          _
        // Predicated region
        $region62: #{dit_block_forward.8} parent=19 // pred_check
          %p295 = pneg %p72
        $region63: #{dit_block_forward.8} parent=19 // pred_check_branch
          %297 = sbr.rel (%p295) target = $region65
        $region64: #{dit_block_forward.8} parent=19 // pred_region
          %s298 = sand.u32 %s62, 1
          %s299 = sand.u32 %s62, 1
          %s300 = smul.addr %s299, 16
          %s301 = scalar_lea.vmem [#allocation3], %s300
          %s302 = smul.addr %s19, 12
          %s303 = sadd.s32 1, %s302
          %s304 = smul.addr %s303, 4
          %s305 = scalar_lea.vmem %s1, %s304
          // Predicated region
          $region66: #{dit_block_forward.8} parent=64 // pred_check
            _
          $region67: #{dit_block_forward.8} parent=64 // pred_check_branch
            %307 = sbr.rel (0) target = $region69
          $region68: #{dit_block_forward.8} parent=64 // pred_region
            // Predicated region
            $region70: #{dit_block_forward.8} parent=68 // pred_check
              _
            $region71: #{dit_block_forward.8} parent=68 // pred_check_branch
              %309 = sbr.rel target = $region73
            $region72: #{dit_block_forward.8} parent=68 // pred_region
              // Predicated region
              $region85: #{dit_block_forward.8} parent=72 // pred_check
                _
              $region86: #{dit_block_forward.8} parent=72 // pred_check_branch
                %331 = sbr.rel (0) target = $region88
              $region87: #{dit_block_forward.8} parent=72 // pred_region
                loop: start=0, step=1, limit=1
                $region89: #{dit_block_forward.8} parent=87 // loop_pre_header
                  _
                $region90: #{dit_block_forward.8} parent=87 // loop_header
                  %s333 = sphi 0, %s337
                  %p334 = scmp.ge.s32.totalorder %s333, 1
                  %s338 = sphi %s305, %s305
                  %s339 = sphi %s301, %s301
                $region91: #{dit_block_forward.8} parent=87 // loop_header_branch
                  %336 = sbr.rel (%p334) target = $region95
                $region92: #{dit_block_forward.8} parent=87 // loop_body
                  _
                $region93: #{dit_block_forward.8} parent=87 // loop_footer
                  %s337 = sadd.s32 1, %s333
                $region94: #{dit_block_forward.8} parent=87 // loop_footer_branch
                  %332 = sbr.rel target = $region90
                $region95: #{dit_block_forward.8} parent=87 // loop_exit
                  _
                %s341 = ssub.s32 16, 1
                loop: start=0, step=1, limit=1
                $region96: #{dit_block_forward.8} parent=87 // loop_pre_header
                  _
                $region97: #{dit_block_forward.8} parent=87 // loop_header
                  %s343 = sphi 0, %s347
                  %p344 = scmp.ge.s32.totalorder %s343, 1
                  %s348 = sphi %s305, %s305
                  %s349 = sphi %s301, %s301
                $region98: #{dit_block_forward.8} parent=87 // loop_header_branch
                  %346 = sbr.rel (%p344) target = $region102
                $region99: #{dit_block_forward.8} parent=87 // loop_body
                  %v350 = vld [vmem:[%s348] sm:%s341]
                  %351 = vst [vmem:[%s349] sm:%s341] %v350
                  %v352 = vld [vmem:[%s348 + $0xc] sm:%s341]
                  %353 = vst [vmem:[%s349 + $0x4] sm:%s341] %v352
                  %v354 = vld [vmem:[%s348 + $0x18] sm:%s341]
                  %355 = vst [vmem:[%s349 + $0x8] sm:%s341] %v354
                  %v356 = vld [vmem:[%s348 + $0x24] sm:%s341]
                  %357 = vst [vmem:[%s349 + $0xc] sm:%s341] %v356
                $region100: #{dit_block_forward.8} parent=87 // loop_footer
                  %s347 = sadd.s32 1, %s343
                $region101: #{dit_block_forward.8} parent=87 // loop_footer_branch
                  %342 = sbr.rel target = $region97
                $region102: #{dit_block_forward.8} parent=87 // loop_exit
                  _
              $region88: #{dit_block_forward.8} parent=72 // pred_fallthru
                _
            $region73: #{dit_block_forward.8} parent=68 // pred_fallthru
              _
            // Predicated region
            $region74: #{dit_block_forward.8} parent=68 // pred_check
              _
            $region75: #{dit_block_forward.8} parent=68 // pred_check_branch
              %311 = sbr.rel (0) target = $region77
            $region76: #{dit_block_forward.8} parent=68 // pred_region
              %s313 = ssub.s32 16, 1
              loop: start=0, step=1, limit=1
              $region78: #{dit_block_forward.8} parent=76 // loop_pre_header
                _
              $region79: #{dit_block_forward.8} parent=76 // loop_header
                %s315 = sphi 0, %s319
                %p316 = scmp.ge.s32.totalorder %s315, 1
                %s320 = sphi %s305, %s305
                %s321 = sphi %s301, %s301
              $region80: #{dit_block_forward.8} parent=76 // loop_header_branch
                %318 = sbr.rel (%p316) target = $region84
              $region81: #{dit_block_forward.8} parent=76 // loop_body
                %v322 = vld [vmem:[%s320] sm:%s313]
                %323 = vst [vmem:[%s321] sm:%s313] %v322
                %v324 = vld [vmem:[%s320 + $0xc] sm:%s313]
                %325 = vst [vmem:[%s321 + $0x4] sm:%s313] %v324
                %v326 = vld [vmem:[%s320 + $0x18] sm:%s313]
                %327 = vst [vmem:[%s321 + $0x8] sm:%s313] %v326
                %v328 = vld [vmem:[%s320 + $0x24] sm:%s313]
                %329 = vst [vmem:[%s321 + $0xc] sm:%s313] %v328
              $region82: #{dit_block_forward.8} parent=76 // loop_footer
                %s319 = sadd.s32 1, %s315
              $region83: #{dit_block_forward.8} parent=76 // loop_footer_branch
                %314 = sbr.rel target = $region79
              $region84: #{dit_block_forward.8} parent=76 // loop_exit
                _
            $region77: #{dit_block_forward.8} parent=68 // pred_fallthru
              _
          $region69: #{dit_block_forward.8} parent=64 // pred_fallthru
            _
          %358 = vnop
        $region65: #{dit_block_forward.8} parent=19 // pred_fallthru
          _
        // Predicated region
        $region103: #{dit_block_forward.8} parent=19 // pred_check
          %p359 = pneg %p98
        $region104: #{dit_block_forward.8} parent=19 // pred_check_branch
          %361 = sbr.rel (%p359) target = $region106
        $region105: #{dit_block_forward.8} parent=19 // pred_region
          %s362 = sand.u32 %s88, 1
          %s363 = sand.u32 %s88, 1
          %s364 = smul.addr %s363, 16
          %s365 = scalar_lea.vmem [#allocation4], %s364
          %s366 = smul.addr %s19, 12
          %s367 = sadd.s32 2, %s366
          %s368 = smul.addr %s367, 4
          %s369 = scalar_lea.vmem %s2, %s368
          // Predicated region
          $region107: #{dit_block_forward.8} parent=105 // pred_check
            _
          $region108: #{dit_block_forward.8} parent=105 // pred_check_branch
            %371 = sbr.rel (0) target = $region110
          $region109: #{dit_block_forward.8} parent=105 // pred_region
            // Predicated region
            $region111: #{dit_block_forward.8} parent=109 // pred_check
              _
            $region112: #{dit_block_forward.8} parent=109 // pred_check_branch
              %373 = sbr.rel target = $region114
            $region113: #{dit_block_forward.8} parent=109 // pred_region
              // Predicated region
              $region126: #{dit_block_forward.8} parent=113 // pred_check
                _
              $region127: #{dit_block_forward.8} parent=113 // pred_check_branch
                %395 = sbr.rel (0) target = $region129
              $region128: #{dit_block_forward.8} parent=113 // pred_region
                loop: start=0, step=1, limit=1
                $region130: #{dit_block_forward.8} parent=128 // loop_pre_header
                  _
                $region131: #{dit_block_forward.8} parent=128 // loop_header
                  %s397 = sphi 0, %s401
                  %p398 = scmp.ge.s32.totalorder %s397, 1
                  %s402 = sphi %s369, %s369
                  %s403 = sphi %s365, %s365
                $region132: #{dit_block_forward.8} parent=128 // loop_header_branch
                  %400 = sbr.rel (%p398) target = $region136
                $region133: #{dit_block_forward.8} parent=128 // loop_body
                  _
                $region134: #{dit_block_forward.8} parent=128 // loop_footer
                  %s401 = sadd.s32 1, %s397
                $region135: #{dit_block_forward.8} parent=128 // loop_footer_branch
                  %396 = sbr.rel target = $region131
                $region136: #{dit_block_forward.8} parent=128 // loop_exit
                  _
                %s405 = ssub.s32 16, 1
                loop: start=0, step=1, limit=1
                $region137: #{dit_block_forward.8} parent=128 // loop_pre_header
                  _
                $region138: #{dit_block_forward.8} parent=128 // loop_header
                  %s407 = sphi 0, %s411
                  %p408 = scmp.ge.s32.totalorder %s407, 1
                  %s412 = sphi %s369, %s369
                  %s413 = sphi %s365, %s365
                $region139: #{dit_block_forward.8} parent=128 // loop_header_branch
                  %410 = sbr.rel (%p408) target = $region143
                $region140: #{dit_block_forward.8} parent=128 // loop_body
                  %v414 = vld [vmem:[%s412] sm:%s405]
                  %415 = vst [vmem:[%s413] sm:%s405] %v414
                  %v416 = vld [vmem:[%s412 + $0xc] sm:%s405]
                  %417 = vst [vmem:[%s413 + $0x4] sm:%s405] %v416
                  %v418 = vld [vmem:[%s412 + $0x18] sm:%s405]
                  %419 = vst [vmem:[%s413 + $0x8] sm:%s405] %v418
                  %v420 = vld [vmem:[%s412 + $0x24] sm:%s405]
                  %421 = vst [vmem:[%s413 + $0xc] sm:%s405] %v420
                $region141: #{dit_block_forward.8} parent=128 // loop_footer
                  %s411 = sadd.s32 1, %s407
                $region142: #{dit_block_forward.8} parent=128 // loop_footer_branch
                  %406 = sbr.rel target = $region138
                $region143: #{dit_block_forward.8} parent=128 // loop_exit
                  _
              $region129: #{dit_block_forward.8} parent=113 // pred_fallthru
                _
            $region114: #{dit_block_forward.8} parent=109 // pred_fallthru
              _
            // Predicated region
            $region115: #{dit_block_forward.8} parent=109 // pred_check
              _
            $region116: #{dit_block_forward.8} parent=109 // pred_check_branch
              %375 = sbr.rel (0) target = $region118
            $region117: #{dit_block_forward.8} parent=109 // pred_region
              %s377 = ssub.s32 16, 1
              loop: start=0, step=1, limit=1
              $region119: #{dit_block_forward.8} parent=117 // loop_pre_header
                _
              $region120: #{dit_block_forward.8} parent=117 // loop_header
                %s379 = sphi 0, %s383
                %p380 = scmp.ge.s32.totalorder %s379, 1
                %s384 = sphi %s369, %s369
                %s385 = sphi %s365, %s365
              $region121: #{dit_block_forward.8} parent=117 // loop_header_branch
                %382 = sbr.rel (%p380) target = $region125
              $region122: #{dit_block_forward.8} parent=117 // loop_body
                %v386 = vld [vmem:[%s384] sm:%s377]
                %387 = vst [vmem:[%s385] sm:%s377] %v386
                %v388 = vld [vmem:[%s384 + $0xc] sm:%s377]
                %389 = vst [vmem:[%s385 + $0x4] sm:%s377] %v388
                %v390 = vld [vmem:[%s384 + $0x18] sm:%s377]
                %391 = vst [vmem:[%s385 + $0x8] sm:%s377] %v390
                %v392 = vld [vmem:[%s384 + $0x24] sm:%s377]
                %393 = vst [vmem:[%s385 + $0xc] sm:%s377] %v392
              $region123: #{dit_block_forward.8} parent=117 // loop_footer
                %s383 = sadd.s32 1, %s379
              $region124: #{dit_block_forward.8} parent=117 // loop_footer_branch
                %378 = sbr.rel target = $region120
              $region125: #{dit_block_forward.8} parent=117 // loop_exit
                _
            $region118: #{dit_block_forward.8} parent=109 // pred_fallthru
              _
          $region110: #{dit_block_forward.8} parent=105 // pred_fallthru
            _
          %422 = vnop
        $region106: #{dit_block_forward.8} parent=19 // pred_fallthru
          _
        // Predicated region
        $region144: #{dit_block_forward.8} parent=19 // pred_check
          %p423 = pneg %p145
        $region145: #{dit_block_forward.8} parent=19 // pred_check_branch
          %425 = sbr.rel (%p423) target = $region147
        $region146: #{dit_block_forward.8} parent=19 // pred_region
          %p426 = scmp.lt.s32.totalorder %s19, 1
          %s427 = scalar_select %p426, %s19, 1
          %s428 = smul.addr %s427, 2
          %s429 = smul.addr %s428, 8
          %s430 = scalar_lea.vmem %s4, %s429
        $region147: #{dit_block_forward.8} parent=19 // pred_fallthru
          _
        // Predicated region
        $region148: #{dit_block_forward.8} parent=19 // pred_check
          %p431 = pneg %p173
        $region149: #{dit_block_forward.8} parent=19 // pred_check_branch
          %433 = sbr.rel (%p431) target = $region151
        $region150: #{dit_block_forward.8} parent=19 // pred_region
          %s434 = smul.u32 4, %s20
          %p435 = scmp.lt.s32.totalorder %s19, 1
          %s436 = scalar_select %p435, %s19, 1
          %p437 = scmp.lt.s32.totalorder %s434, 3
          %s438 = scalar_select %p437, %s434, 3
          %s439 = smul.addr %s436, 4
          %s440 = sadd.s32 %s438, %s439
          %s441 = smul.addr %s440, 8
          %s442 = scalar_lea.vmem %s5, %s441
          %s443 = smul.u32 4, %s20
        $region151: #{dit_block_forward.8} parent=19 // pred_fallthru
          _
      $region20: #{dit_block_forward.8} parent=5 // pred_fallthru
        _
      %p444 = scmp.le.s32.totalorder 1, %s12
      %p445 = scmp.lt.s32.totalorder %s12, 3
      %p446 = pnand %p444, %p445
      %p447 = pneg %p446
      // Predicated region
      $region152: #{dit_block_forward.8} parent=5 // pred_check
        _
      $region153: #{dit_block_forward.8} parent=5 // pred_check_branch
        %449 = sbr.rel (%p446) target = $region155
      $region154: #{dit_block_forward.8} parent=5 // pred_region
        %s450 = ssub.s32 %s12, 1
        %s451 = sand.u32 %s39, 1
        %s452 = sand.u32 %s39, 1
        %s453 = smul.addr %s452, 16
        %s454 = scalar_lea.vmem [#allocation2], %s453
        // Predicated region
        $region156: #{dit_block_forward.8} parent=154 // pred_check
          %p455 = pneg %p52
        $region157: #{dit_block_forward.8} parent=154 // pred_check_branch
          %457 = sbr.rel (%p455) target = $region159
        $region158: #{dit_block_forward.8} parent=154 // pred_region
          _
        $region159: #{dit_block_forward.8} parent=154 // pred_fallthru
          _
        %s458 = sand.u32 %s65, 1
        %s459 = sand.u32 %s65, 1
        %s460 = smul.addr %s459, 16
        %s461 = scalar_lea.vmem [#allocation3], %s460
        // Predicated region
        $region160: #{dit_block_forward.8} parent=154 // pred_check
          %p462 = pneg %p78
        $region161: #{dit_block_forward.8} parent=154 // pred_check_branch
          %464 = sbr.rel (%p462) target = $region163
        $region162: #{dit_block_forward.8} parent=154 // pred_region
          _
        $region163: #{dit_block_forward.8} parent=154 // pred_fallthru
          _
        %s465 = sand.u32 %s91, 1
        %s466 = sand.u32 %s91, 1
        %s467 = smul.addr %s466, 16
        %s468 = scalar_lea.vmem [#allocation4], %s467
        // Predicated region
        $region164: #{dit_block_forward.8} parent=154 // pred_check
          %p469 = pneg %p104
        $region165: #{dit_block_forward.8} parent=154 // pred_check_branch
          %471 = sbr.rel (%p469) target = $region167
        $region166: #{dit_block_forward.8} parent=154 // pred_region
          _
        $region167: #{dit_block_forward.8} parent=154 // pred_fallthru
          _
        %s472 = sand.u32 %s39, 1
        %s473 = sand.u32 %s39, 1
        %s474 = smul.addr %s473, 16
        %s475 = scalar_lea.vmem [#allocation2], %s474
        %p476 = pneg %p52
        %p477 = pneg %p49
        %s478 = sand.u32 %s65, 1
        %s479 = sand.u32 %s65, 1
        %s480 = smul.addr %s479, 16
        %s481 = scalar_lea.vmem [#allocation3], %s480
        %p482 = pneg %p78
        %p483 = pneg %p75
        %s484 = sand.u32 %s91, 1
        %s485 = sand.u32 %s91, 1
        %s486 = smul.addr %s485, 16
        %s487 = scalar_lea.vmem [#allocation4], %s486
        %p488 = pneg %p104
        %p489 = pneg %p101
        %p490 = pneg %p125
        %p491 = pneg %p122
        %p492 = scmp.lt.s32.totalorder %s21, 1
        %s493 = scalar_select %p492, %s21, 1
        %s494 = smul.addr %s493, 2
        %s495 = smul.addr %s494, 8
        %s496 = scalar_lea.vmem %s4, %s495
        %p497 = pneg %p151
        %p498 = pneg %p148
        %s499 = smul.u32 4, %s22
        %p500 = scmp.lt.s32.totalorder %s21, 1
        %s501 = scalar_select %p500, %s21, 1
        %p502 = scmp.lt.s32.totalorder %s499, 3
        %s503 = scalar_select %p502, %s499, 3
        %s504 = smul.addr %s501, 4
        %s505 = sadd.s32 %s503, %s504
        %s506 = smul.addr %s505, 8
        %s507 = scalar_lea.vmem %s5, %s506
        %p508 = pneg %p179
        %p509 = pneg %p176
        %p510 = pneg %p207
        %p511 = pneg %p204
        %s512 = smul.u32 4, %s22
        %p513 = scmp.lt.s32.totalorder %s21, 1
        %s514 = scalar_select %p513, %s21, 1
        %p515 = scmp.lt.s32.totalorder %s512, 3
        %s516 = scalar_select %p515, %s512, 3
        %s517 = smul.addr %s514, 4
        %s518 = sadd.s32 %s516, %s517
        %s519 = smul.addr %s518, 8
        %s520 = scalar_lea.vmem %s6, %s519
        %s521 = smul.u32 4, %s22
        %p522 = scmp.lt.s32.totalorder %s21, 1
        %s523 = scalar_select %p522, %s21, 1
        %s524 = smul.addr %s523, 2
        %s525 = smul.addr %s524, 8
        %s526 = scalar_lea.vmem %s4, %s525
        %s527 = smul.u32 4, %s22
        %p528 = scmp.lt.s32.totalorder %s21, 1
        %s529 = scalar_select %p528, %s21, 1
        %p530 = scmp.lt.s32.totalorder %s527, 3
        %s531 = scalar_select %p530, %s527, 3
        %s532 = smul.addr %s529, 4
        %s533 = sadd.s32 %s531, %s532
        %s534 = smul.addr %s533, 8
        %s535 = scalar_lea.vmem %s5, %s534
        %s536 = smul.u32 4, %s22
        %s537 = smul.u32 4, %s22
        %p538 = scmp.lt.s32.totalorder %s21, 1
        %s539 = scalar_select %p538, %s21, 1
        %p540 = scmp.lt.s32.totalorder %s537, 3
        %s541 = scalar_select %p540, %s537, 3
        %s542 = smul.addr %s539, 4
        %s543 = sadd.s32 %s541, %s542
        %s544 = smul.addr %s543, 8
        %s545 = scalar_lea.vmem %s6, %s544
        %s546 = smul.u32 4, %s22
        %v548 = vld [vmem:[%s454] sm:$0xf]
        %v549 = vld [vmem:[%s454 + $0x4] sm:$0xf]
        %v550 = vld [vmem:[%s454 + $0x8] sm:$0xf]
        %v551 = vld [vmem:[%s454 + $0xc] sm:$0xf]
        %v552 = vunpack.c.l.bf16 %v548
        %v553 = vunpack.c.l.bf16 %v549
        %v554 = vunpack.c.l.bf16 %v550
        %v555 = vunpack.c.l.bf16 %v551
        %v556 = vld [vmem:[%s461] sm:$0xf]
        %v557 = vld [vmem:[%s461 + $0x4] sm:$0xf]
        %v558 = vld [vmem:[%s461 + $0x8] sm:$0xf]
        %v559 = vld [vmem:[%s461 + $0xc] sm:$0xf]
        %v560 = vunpack.c.l.bf16 %v556
        %v561 = vunpack.c.l.bf16 %v557
        %v562 = vunpack.c.l.bf16 %v558
        %v563 = vunpack.c.l.bf16 %v559
        %v564 = vmul.f32 %v552, %v552
        %v565 = vmul.f32 %v553, %v553
        %v566 = vmul.f32 %v554, %v554
        %v567 = vmul.f32 %v555, %v555
        %vm568 = vcmask 261120
        %v569 = vsel %vm568, %v564, 0.0
        %570 = vadd.xlane.f32.xlu0 %v569
        %v571 = vpop.xlane.xlu0 %570
        %v572 = vsel %vm568, %v565, 0.0
        %573 = vadd.xlane.f32.xlu0 %v572
        %v574 = vpop.xlane.xlu0 %573
        %v575 = vsel %vm568, %v566, 0.0
        %576 = vadd.xlane.f32.xlu0 %v575
        %v577 = vpop.xlane.xlu0 %576
        %v578 = vsel %vm568, %v567, 0.0
        %579 = vadd.xlane.f32.xlu0 %v578
        %v580 = vpop.xlane.xlu0 %579
        %v581 = vrcp.pop 32.0
        %v582 = vmul.f32 %v571, %v581
        %v583 = vmul.f32 %v574, %v581
        %v584 = vmul.f32 %v577, %v581
        %v585 = vmul.f32 %v580, %v581
        %v586 = vadd.f32 %v582, 1e-06
        %v587 = vadd.f32 %v583, 1e-06
        %v588 = vadd.f32 %v584, 1e-06
        %v589 = vadd.f32 %v585, 1e-06
        %v590 = vrsqrt.pop %v586
        %v591 = vrsqrt.pop %v587
        %v592 = vrsqrt.pop %v588
        %v593 = vrsqrt.pop %v589
        %v594 = vmul.f32 %v590, 0.17677669
        %v595 = vmul.f32 %v591, 0.17677669
        %v596 = vmul.f32 %v592, 0.17677669
        %v597 = vmul.f32 %v593, 0.17677669
        %v598 = vmul.f32 %v552, %v594
        %v599 = vmul.f32 %v553, %v595
        %v600 = vmul.f32 %v554, %v596
        %v601 = vmul.f32 %v555, %v597
        %v602 = vmul.f32 %v560, %v560
        %v603 = vmul.f32 %v561, %v561
        %v604 = vmul.f32 %v562, %v562
        %v605 = vmul.f32 %v563, %v563
        %v606 = vsel %vm568, %v602, 0.0
        %607 = vadd.xlane.f32.xlu0 %v606
        %v608 = vpop.xlane.xlu0 %607
        %v609 = vsel %vm568, %v603, 0.0
        %610 = vadd.xlane.f32.xlu0 %v609
        %v611 = vpop.xlane.xlu0 %610
        %v612 = vsel %vm568, %v604, 0.0
        %613 = vadd.xlane.f32.xlu0 %v612
        %v614 = vpop.xlane.xlu0 %613
        %v615 = vsel %vm568, %v605, 0.0
        %616 = vadd.xlane.f32.xlu0 %v615
        %v617 = vpop.xlane.xlu0 %616
        %v618 = vmul.f32 %v608, %v581
        %v619 = vmul.f32 %v611, %v581
        %v620 = vmul.f32 %v614, %v581
        %v621 = vmul.f32 %v617, %v581
        %v622 = vadd.f32 %v618, 1e-06
        %v623 = vadd.f32 %v619, 1e-06
        %v624 = vadd.f32 %v620, 1e-06
        %v625 = vadd.f32 %v621, 1e-06
        %v626 = vrsqrt.pop %v622
        %v627 = vrsqrt.pop %v623
        %v628 = vrsqrt.pop %v624
        %v629 = vrsqrt.pop %v625
        %v630 = vmul.f32 %v560, %v626
        %v631 = vmul.f32 %v561, %v627
        %v632 = vmul.f32 %v562, %v628
        %v633 = vmul.f32 %v563, %v629
        %v634 = vpack.c.bf16 %v599, %v598
        %v635 = vpack.c.bf16 %v601, %v600
        %v636 = vpack.c.bf16 %v631, %v630
        %v637 = vpack.c.bf16 %v633, %v632
        %v639 = vsel %vm568, %v634, 0
        %v642 = vsel %vm568, %v635, 0
        %v645 = vsel %vm568, %v636, 0
        %v648 = vsel %vm568, %v637, 0
        %650 = vmatprep.subr.bf16.mxu0 0
        %651 = vmatpush1.bf16.xpose.msra.mxu0 0
        %652 = vmatprep.subr.bf16.mxu0 0
        %653 = vmatpush1.bf16.xpose.msra.mxu0 0
        %654 = vmatprep.subr.bf16.mxu0 0
        %655 = vmatpush1.bf16.xpose.msra.mxu0 0
        %656 = vmatprep.subr.bf16.mxu0 0
        %657 = vmatpush1.bf16.xpose.msra.mxu0 0
        %658 = vmatprep.subr.bf16.mxu0 0
        %659 = vmatpush1.bf16.xpose.msra.mxu0 0
        %660 = vmatprep.subr.bf16.mxu0 0
        %661 = vmatpush1.bf16.xpose.msra.mxu0 0
        %662 = vmatprep.subr.bf16.mxu0 0
        %663 = vmatpush1.bf16.xpose.msra.mxu0 %v648
        %664 = vmatprep.subr.bf16.mxu0 0
        %665 = vmatpush1.bf16.xpose.msra.mxu0 %v645
        %666 = vmatprep.subr.bf16.mxu0 0
        %667 = vmatpush2.bf16.xpose.msra.mxu0 0
        %668 = vmatprep.subr.bf16.mxu0 0
        %669 = vmatpush2.bf16.xpose.msra.mxu0 0
        %670 = vmatprep.subr.bf16.mxu0 0
        %671 = vmatpush2.bf16.xpose.msra.mxu0 0
        %672 = vmatprep.subr.bf16.mxu0 0
        %673 = vmatpush2.bf16.xpose.msra.mxu0 0
        %674 = vmatprep.subr.bf16.mxu0 0
        %675 = vmatpush2.bf16.xpose.msra.mxu0 0
        %676 = vmatprep.subr.bf16.mxu0 0
        %677 = vmatpush2.bf16.xpose.msra.mxu0 0
        %678 = vmatprep.subr.bf16.mxu0 0
        %679 = vmatpush2.bf16.xpose.msra.mxu0 0
        %680 = vmatprep.subr.bf16.mxu0 0
        %681 = vmatpush2.bf16.xpose.msra.mxu0 0
        %682 = vmatprep.mubr.bf16.mxu0 0
        %683 = vmatmul.mubr.bf16.gmra.mxu0 %v639
        %v684 = vpop.f32.mrf.mxu0
        %v685 = vadd.f32 0.0, %v684
        %v686 = vpop.f32.mrf.mxu0
        %v687 = vpop.f32.mrf.mxu0
        %v688 = vadd.f32 0.0, %v687
        %v689 = vpop.f32.mrf.mxu0
        %690 = vmatprep.mubr.bf16.mxu0 0
        %691 = vmatmul.mubr.bf16.gmra.mxu0 %v642
        %v692 = vpop.f32.mrf.mxu0
        %v693 = vadd.f32 0.0, %v692
        %v694 = vpop.f32.mrf.mxu0
        %v695 = vpop.f32.mrf.mxu0
        %v696 = vadd.f32 0.0, %v695
        %v697 = vpop.f32.mrf.mxu0
        %698 = vdwg.mxu0
        %v699 = vsel %vm568, %v685, -inf
        %700 = vmax.xlane.f32.xlu0 %v699
        %v701 = vpop.xlane.xlu0 %700
        %v702 = vsel %vm568, %v688, -inf
        %703 = vmax.xlane.f32.xlu0 %v702
        %v704 = vpop.xlane.xlu0 %703
        %v705 = vsel %vm568, %v693, -inf
        %706 = vmax.xlane.f32.xlu0 %v705
        %v707 = vpop.xlane.xlu0 %706
        %v708 = vsel %vm568, %v696, -inf
        %709 = vmax.xlane.f32.xlu0 %v708
        %v710 = vpop.xlane.xlu0 %709
        %v711 = vsub.f32 %v685, %v701
        %v712 = vsub.f32 %v688, %v704
        %v713 = vsub.f32 %v693, %v707
        %v714 = vsub.f32 %v696, %v710
        %v715 = vmul.f32 %v711, 1.442695
        %v716 = vpow.pop %v715
        %v717 = vmul.f32 %v712, 1.442695
        %v718 = vpow.pop %v717
        %v719 = vmul.f32 %v713, 1.442695
        %v720 = vpow.pop %v719
        %v721 = vmul.f32 %v714, 1.442695
        %v722 = vpow.pop %v721
        %v723 = vsel %vm568, %v716, 0.0
        %724 = vadd.xlane.f32.xlu0 %v723
        %v725 = vpop.xlane.xlu0 %724
        %v726 = vsel %vm568, %v718, 0.0
        %727 = vadd.xlane.f32.xlu0 %v726
        %v728 = vpop.xlane.xlu0 %727
        %v729 = vsel %vm568, %v720, 0.0
        %730 = vadd.xlane.f32.xlu0 %v729
        %v731 = vpop.xlane.xlu0 %730
        %v732 = vsel %vm568, %v722, 0.0
        %733 = vadd.xlane.f32.xlu0 %v732
        %v734 = vpop.xlane.xlu0 %733
        %v735 = vrcp.pop %v725
        %v736 = vrcp.pop %v728
        %v737 = vrcp.pop %v731
        %v738 = vrcp.pop %v734
        %v739 = vmul.f32 %v716, %v735
        %v740 = vmul.f32 %v718, %v736
        %v741 = vmul.f32 %v720, %v737
        %v742 = vmul.f32 %v722, %v738
        %v743 = vpack.c.bf16 %v740, %v739
        %v744 = vpack.c.bf16 %v742, %v741
        %v745 = vld [vmem:[%s468] sm:$0xf]
        %v746 = vld [vmem:[%s468 + $0x4] sm:$0xf]
        %v747 = vld [vmem:[%s468 + $0x8] sm:$0xf]
        %v748 = vld [vmem:[%s468 + $0xc] sm:$0xf]
        %v753 = vunpack.c.l.b16 %v745
        %v754 = vunpack.c.l.b16 %v746
        %v755 = vunpack.c.l.b16 %v747
        %v756 = vunpack.c.l.b16 %v748
        %v757 = vpack.c.b16 %v754, %v753
        %v758 = vpack.c.b16 %v756, %v755
        %v762 = vsel %vm568, %v743, 0
        %v765 = vsel %vm568, %v744, 0
        %767 = vmatprep.subr.bf16.mxu0 0
        %768 = vmatpush1.bf16.msra.mxu0 0
        %769 = vmatprep.subr.bf16.mxu0 0
        %770 = vmatpush1.bf16.msra.mxu0 0
        %771 = vmatprep.subr.bf16.mxu0 0
        %772 = vmatpush1.bf16.msra.mxu0 0
        %773 = vmatprep.subr.bf16.mxu0 0
        %774 = vmatpush1.bf16.msra.mxu0 0
        %775 = vmatprep.subr.bf16.mxu0 0
        %776 = vmatpush1.bf16.msra.mxu0 0
        %777 = vmatprep.subr.bf16.mxu0 0
        %778 = vmatpush1.bf16.msra.mxu0 0
        %779 = vmatprep.subr.bf16.mxu0 0
        %780 = vmatpush1.bf16.msra.mxu0 %v758
        %781 = vmatprep.subr.bf16.mxu0 0
        %782 = vmatpush1.bf16.msra.mxu0 %v757
        %783 = vmatprep.subr.bf16.mxu0 0
        %784 = vmatpush2.bf16.msra.mxu0 0
        %785 = vmatprep.subr.bf16.mxu0 0
        %786 = vmatpush2.bf16.msra.mxu0 0
        %787 = vmatprep.subr.bf16.mxu0 0
        %788 = vmatpush2.bf16.msra.mxu0 0
        %789 = vmatprep.subr.bf16.mxu0 0
        %790 = vmatpush2.bf16.msra.mxu0 0
        %791 = vmatprep.subr.bf16.mxu0 0
        %792 = vmatpush2.bf16.msra.mxu0 0
        %793 = vmatprep.subr.bf16.mxu0 0
        %794 = vmatpush2.bf16.msra.mxu0 0
        %795 = vmatprep.subr.bf16.mxu0 0
        %796 = vmatpush2.bf16.msra.mxu0 0
        %797 = vmatprep.subr.bf16.mxu0 0
        %798 = vmatpush2.bf16.msra.mxu0 0
        %799 = vmatprep.mubr.bf16.mxu0 0
        %800 = vmatmul.mubr.bf16.gmra.mxu0 %v762
        %v801 = vpop.f32.mrf.mxu0
        %v802 = vadd.f32 0.0, %v801
        %v803 = vpop.f32.mrf.mxu0
        %v804 = vpop.f32.mrf.mxu0
        %v805 = vadd.f32 0.0, %v804
        %v806 = vpop.f32.mrf.mxu0
        %807 = vmatprep.mubr.bf16.mxu0 0
        %808 = vmatmul.mubr.bf16.gmra.mxu0 %v765
        %v809 = vpop.f32.mrf.mxu0
        %v810 = vadd.f32 0.0, %v809
        %v811 = vpop.f32.mrf.mxu0
        %v812 = vpop.f32.mrf.mxu0
        %v813 = vadd.f32 0.0, %v812
        %v814 = vpop.f32.mrf.mxu0
        %815 = vdwg.mxu0
        %v816 = vpack.c.bf16 %v805, %v802
        %v817 = vpack.c.bf16 %v813, %v810
        %v818 = vld [vmem:[%s3] sm:$0xf]
        %v819 = vld [vmem:[%s3 + $0x4] sm:$0xf]
        %v820 = vld [vmem:[%s3 + $0x8] sm:$0xf]
        %v821 = vld [vmem:[%s3 + $0xc] sm:$0xf]
        %826 = vrot.lane.b32.xlu0 %v564, 96
        %v827 = vpop.permute.xlu0 %826
        %828 = vrot.lane.b32.xlu0 %v565, 96
        %v829 = vpop.permute.xlu0 %828
        %830 = vrot.lane.b32.xlu0 %v566, 96
        %v831 = vpop.permute.xlu0 %830
        %832 = vrot.lane.b32.xlu0 %v567, 96
        %v833 = vpop.permute.xlu0 %832
        %v838 = vsel %vm568, %v827, 0.0
        %839 = vadd.xlane.f32.xlu0 %v838
        %v840 = vpop.xlane.xlu0 %839
        %v841 = vsel %vm568, %v829, 0.0
        %842 = vadd.xlane.f32.xlu0 %v841
        %v843 = vpop.xlane.xlu0 %842
        %v844 = vsel %vm568, %v831, 0.0
        %845 = vadd.xlane.f32.xlu0 %v844
        %v846 = vpop.xlane.xlu0 %845
        %v847 = vsel %vm568, %v833, 0.0
        %848 = vadd.xlane.f32.xlu0 %v847
        %v849 = vpop.xlane.xlu0 %848
        %v850 = vmul.f32 %v840, %v581
        %v851 = vmul.f32 %v843, %v581
        %v852 = vmul.f32 %v846, %v581
        %v853 = vmul.f32 %v849, %v581
        %v854 = vadd.f32 %v850, 1e-06
        %v855 = vadd.f32 %v851, 1e-06
        %v856 = vadd.f32 %v852, 1e-06
        %v857 = vadd.f32 %v853, 1e-06
        %v858 = vrsqrt.pop %v854
        %v859 = vrsqrt.pop %v855
        %v860 = vrsqrt.pop %v856
        %v861 = vrsqrt.pop %v857
        %v862 = vmul.f32 %v858, 0.17677669
        %v863 = vmul.f32 %v859, 0.17677669
        %v864 = vmul.f32 %v860, 0.17677669
        %v865 = vmul.f32 %v861, 0.17677669
        %v866 = vmul.f32 %v552, %v862
        %v867 = vmul.f32 %v553, %v863
        %v868 = vmul.f32 %v554, %v864
        %v869 = vmul.f32 %v555, %v865
        %874 = vrot.lane.b32.xlu0 %v602, 96
        %v875 = vpop.permute.xlu0 %874
        %876 = vrot.lane.b32.xlu0 %v603, 96
        %v877 = vpop.permute.xlu0 %876
        %878 = vrot.lane.b32.xlu0 %v604, 96
        %v879 = vpop.permute.xlu0 %878
        %880 = vrot.lane.b32.xlu0 %v605, 96
        %v881 = vpop.permute.xlu0 %880
        %v886 = vsel %vm568, %v875, 0.0
        %887 = vadd.xlane.f32.xlu0 %v886
        %v888 = vpop.xlane.xlu0 %887
        %v889 = vsel %vm568, %v877, 0.0
        %890 = vadd.xlane.f32.xlu0 %v889
        %v891 = vpop.xlane.xlu0 %890
        %v892 = vsel %vm568, %v879, 0.0
        %893 = vadd.xlane.f32.xlu0 %v892
        %v894 = vpop.xlane.xlu0 %893
        %v895 = vsel %vm568, %v881, 0.0
        %896 = vadd.xlane.f32.xlu0 %v895
        %v897 = vpop.xlane.xlu0 %896
        %v898 = vmul.f32 %v888, %v581
        %v899 = vmul.f32 %v891, %v581
        %v900 = vmul.f32 %v894, %v581
        %v901 = vmul.f32 %v897, %v581
        %v902 = vadd.f32 %v898, 1e-06
        %v903 = vadd.f32 %v899, 1e-06
        %v904 = vadd.f32 %v900, 1e-06
        %v905 = vadd.f32 %v901, 1e-06
        %v906 = vrsqrt.pop %v902
        %v907 = vrsqrt.pop %v903
        %v908 = vrsqrt.pop %v904
        %v909 = vrsqrt.pop %v905
        %v910 = vmul.f32 %v560, %v906
        %v911 = vmul.f32 %v561, %v907
        %v912 = vmul.f32 %v562, %v908
        %v913 = vmul.f32 %v563, %v909
        %v914 = vpack.c.bf16 %v867, %v866
        %v915 = vpack.c.bf16 %v869, %v868
        %v916 = vpack.c.bf16 %v911, %v910
        %v917 = vpack.c.bf16 %v913, %v912
        %920 = vrot.lane.b32.xlu0 %v914, 96
        %v921 = vpop.permute.xlu0 %920
        %922 = vrot.lane.b32.xlu0 %v915, 96
        %v923 = vpop.permute.xlu0 %922
        %926 = vrot.lane.b32.xlu0 %v916, 96
        %v927 = vpop.permute.xlu0 %926
        %928 = vrot.lane.b32.xlu0 %v917, 96
        %v929 = vpop.permute.xlu0 %928
        %v931 = vsel %vm568, %v921, 0
        %v934 = vsel %vm568, %v923, 0
        %v937 = vsel %vm568, %v927, 0
        %v940 = vsel %vm568, %v929, 0
        %942 = vmatprep.subr.bf16.mxu0 0
        %943 = vmatpush1.bf16.xpose.msra.mxu0 0
        %944 = vmatprep.subr.bf16.mxu0 0
        %945 = vmatpush1.bf16.xpose.msra.mxu0 0
        %946 = vmatprep.subr.bf16.mxu0 0
        %947 = vmatpush1.bf16.xpose.msra.mxu0 0
        %948 = vmatprep.subr.bf16.mxu0 0
        %949 = vmatpush1.bf16.xpose.msra.mxu0 0
        %950 = vmatprep.subr.bf16.mxu0 0
        %951 = vmatpush1.bf16.xpose.msra.mxu0 0
        %952 = vmatprep.subr.bf16.mxu0 0
        %953 = vmatpush1.bf16.xpose.msra.mxu0 0
        %954 = vmatprep.subr.bf16.mxu0 0
        %955 = vmatpush1.bf16.xpose.msra.mxu0 %v940
        %956 = vmatprep.subr.bf16.mxu0 0
        %957 = vmatpush1.bf16.xpose.msra.mxu0 %v937
        %958 = vmatprep.subr.bf16.mxu0 0
        %959 = vmatpush2.bf16.xpose.msra.mxu0 0
        %960 = vmatprep.subr.bf16.mxu0 0
        %961 = vmatpush2.bf16.xpose.msra.mxu0 0
        %962 = vmatprep.subr.bf16.mxu0 0
        %963 = vmatpush2.bf16.xpose.msra.mxu0 0
        %964 = vmatprep.subr.bf16.mxu0 0
        %965 = vmatpush2.bf16.xpose.msra.mxu0 0
        %966 = vmatprep.subr.bf16.mxu0 0
        %967 = vmatpush2.bf16.xpose.msra.mxu0 0
        %968 = vmatprep.subr.bf16.mxu0 0
        %969 = vmatpush2.bf16.xpose.msra.mxu0 0
        %970 = vmatprep.subr.bf16.mxu0 0
        %971 = vmatpush2.bf16.xpose.msra.mxu0 0
        %972 = vmatprep.subr.bf16.mxu0 0
        %973 = vmatpush2.bf16.xpose.msra.mxu0 0
        %974 = vmatprep.mubr.bf16.mxu0 0
        %975 = vmatmul.mubr.bf16.gmra.mxu0 %v931
        %v976 = vpop.f32.mrf.mxu0
        %v977 = vadd.f32 0.0, %v976
        %v978 = vpop.f32.mrf.mxu0
        %v979 = vpop.f32.mrf.mxu0
        %v980 = vadd.f32 0.0, %v979
        %v981 = vpop.f32.mrf.mxu0
        %982 = vmatprep.mubr.bf16.mxu0 0
        %983 = vmatmul.mubr.bf16.gmra.mxu0 %v934
        %v984 = vpop.f32.mrf.mxu0
        %v985 = vadd.f32 0.0, %v984
        %v986 = vpop.f32.mrf.mxu0
        %v987 = vpop.f32.mrf.mxu0
        %v988 = vadd.f32 0.0, %v987
        %v989 = vpop.f32.mrf.mxu0
        %990 = vdwg.mxu0
        %v991 = vsel %vm568, %v977, -inf
        %992 = vmax.xlane.f32.xlu0 %v991
        %v993 = vpop.xlane.xlu0 %992
        %v994 = vsel %vm568, %v980, -inf
        %995 = vmax.xlane.f32.xlu0 %v994
        %v996 = vpop.xlane.xlu0 %995
        %v997 = vsel %vm568, %v985, -inf
        %998 = vmax.xlane.f32.xlu0 %v997
        %v999 = vpop.xlane.xlu0 %998
        %v1000 = vsel %vm568, %v988, -inf
        %1001 = vmax.xlane.f32.xlu0 %v1000
        %v1002 = vpop.xlane.xlu0 %1001
        %v1003 = vsub.f32 %v977, %v993
        %v1004 = vsub.f32 %v980, %v996
        %v1005 = vsub.f32 %v985, %v999
        %v1006 = vsub.f32 %v988, %v1002
        %v1007 = vmul.f32 %v1003, 1.442695
        %v1008 = vpow.pop %v1007
        %v1009 = vmul.f32 %v1004, 1.442695
        %v1010 = vpow.pop %v1009
        %v1011 = vmul.f32 %v1005, 1.442695
        %v1012 = vpow.pop %v1011
        %v1013 = vmul.f32 %v1006, 1.442695
        %v1014 = vpow.pop %v1013
        %v1015 = vsel %vm568, %v1008, 0.0
        %1016 = vadd.xlane.f32.xlu0 %v1015
        %v1017 = vpop.xlane.xlu0 %1016
        %v1018 = vsel %vm568, %v1010, 0.0
        %1019 = vadd.xlane.f32.xlu0 %v1018
        %v1020 = vpop.xlane.xlu0 %1019
        %v1021 = vsel %vm568, %v1012, 0.0
        %1022 = vadd.xlane.f32.xlu0 %v1021
        %v1023 = vpop.xlane.xlu0 %1022
        %v1024 = vsel %vm568, %v1014, 0.0
        %1025 = vadd.xlane.f32.xlu0 %v1024
        %v1026 = vpop.xlane.xlu0 %1025
        %v1027 = vrcp.pop %v1017
        %v1028 = vrcp.pop %v1020
        %v1029 = vrcp.pop %v1023
        %v1030 = vrcp.pop %v1026
        %v1031 = vmul.f32 %v1008, %v1027
        %v1032 = vmul.f32 %v1010, %v1028
        %v1033 = vmul.f32 %v1012, %v1029
        %v1034 = vmul.f32 %v1014, %v1030
        %v1035 = vpack.c.bf16 %v1032, %v1031
        %v1036 = vpack.c.bf16 %v1034, %v1033
        %1037 = vrot.lane.b32.xlu0 %v757, 96
        %v1038 = vpop.permute.xlu0 %1037
        %1039 = vrot.lane.b32.xlu0 %v758, 96
        %v1040 = vpop.permute.xlu0 %1039
        %v1044 = vsel %vm568, %v1035, 0
        %v1047 = vsel %vm568, %v1036, 0
        %1049 = vmatprep.subr.bf16.mxu0 0
        %1050 = vmatpush1.bf16.msra.mxu0 0
        %1051 = vmatprep.subr.bf16.mxu0 0
        %1052 = vmatpush1.bf16.msra.mxu0 0
        %1053 = vmatprep.subr.bf16.mxu0 0
        %1054 = vmatpush1.bf16.msra.mxu0 0
        %1055 = vmatprep.subr.bf16.mxu0 0
        %1056 = vmatpush1.bf16.msra.mxu0 0
        %1057 = vmatprep.subr.bf16.mxu0 0
        %1058 = vmatpush1.bf16.msra.mxu0 0
        %1059 = vmatprep.subr.bf16.mxu0 0
        %1060 = vmatpush1.bf16.msra.mxu0 0
        %1061 = vmatprep.subr.bf16.mxu0 0
        %1062 = vmatpush1.bf16.msra.mxu0 %v1040
        %1063 = vmatprep.subr.bf16.mxu0 0
        %1064 = vmatpush1.bf16.msra.mxu0 %v1038
        %1065 = vmatprep.subr.bf16.mxu0 0
        %1066 = vmatpush2.bf16.msra.mxu0 0
        %1067 = vmatprep.subr.bf16.mxu0 0
        %1068 = vmatpush2.bf16.msra.mxu0 0
        %1069 = vmatprep.subr.bf16.mxu0 0
        %1070 = vmatpush2.bf16.msra.mxu0 0
        %1071 = vmatprep.subr.bf16.mxu0 0
        %1072 = vmatpush2.bf16.msra.mxu0 0
        %1073 = vmatprep.subr.bf16.mxu0 0
        %1074 = vmatpush2.bf16.msra.mxu0 0
        %1075 = vmatprep.subr.bf16.mxu0 0
        %1076 = vmatpush2.bf16.msra.mxu0 0
        %1077 = vmatprep.subr.bf16.mxu0 0
        %1078 = vmatpush2.bf16.msra.mxu0 0
        %1079 = vmatprep.subr.bf16.mxu0 0
        %1080 = vmatpush2.bf16.msra.mxu0 0
        %1081 = vmatprep.mubr.bf16.mxu0 0
        %1082 = vmatmul.mubr.bf16.gmra.mxu0 %v1044
        %v1083 = vpop.f32.mrf.mxu0
        %v1084 = vadd.f32 0.0, %v1083
        %v1085 = vpop.f32.mrf.mxu0
        %v1086 = vpop.f32.mrf.mxu0
        %v1087 = vadd.f32 0.0, %v1086
        %v1088 = vpop.f32.mrf.mxu0
        %1089 = vmatprep.mubr.bf16.mxu0 0
        %1090 = vmatmul.mubr.bf16.gmra.mxu0 %v1047
        %v1091 = vpop.f32.mrf.mxu0
        %v1092 = vadd.f32 0.0, %v1091
        %v1093 = vpop.f32.mrf.mxu0
        %v1094 = vpop.f32.mrf.mxu0
        %v1095 = vadd.f32 0.0, %v1094
        %v1096 = vpop.f32.mrf.mxu0
        %1097 = vdwg.mxu0
        %v1098 = vpack.c.bf16 %v1087, %v1084
        %v1099 = vpack.c.bf16 %v1095, %v1092
        %v1100 = vld [vmem:[%s3 + $0x10] sm:$0xf]
        %v1101 = vld [vmem:[%s3 + $0x14] sm:$0xf]
        %v1102 = vld [vmem:[%s3 + $0x18] sm:$0xf]
        %v1103 = vld [vmem:[%s3 + $0x1c] sm:$0xf]
        %v1108 = vunpack.c.l.b16 %v1100
        %v1109 = vunpack.c.l.b16 %v1101
        %v1110 = vunpack.c.l.b16 %v1102
        %v1111 = vunpack.c.l.b16 %v1103
        %v1112 = vpack.c.b16 %v1109, %v1108
        %v1113 = vpack.c.b16 %v1111, %v1110
        %v1117 = vsel %vm568, %v1098, 0
        %v1120 = vsel %vm568, %v1099, 0
        %1122 = vmatprep.subr.bf16.mxu0 0
        %1123 = vmatpush1.bf16.msra.mxu0 0
        %1124 = vmatprep.subr.bf16.mxu0 0
        %1125 = vmatpush1.bf16.msra.mxu0 0
        %1126 = vmatprep.subr.bf16.mxu0 0
        %1127 = vmatpush1.bf16.msra.mxu0 0
        %1128 = vmatprep.subr.bf16.mxu0 0
        %1129 = vmatpush1.bf16.msra.mxu0 0
        %1130 = vmatprep.subr.bf16.mxu0 0
        %1131 = vmatpush1.bf16.msra.mxu0 0
        %1132 = vmatprep.subr.bf16.mxu0 0
        %1133 = vmatpush1.bf16.msra.mxu0 0
        %1134 = vmatprep.subr.bf16.mxu0 0
        %1135 = vmatpush1.bf16.msra.mxu0 %v1113
        %1136 = vmatprep.subr.bf16.mxu0 0
        %1137 = vmatpush1.bf16.msra.mxu0 %v1112
        %1138 = vmatprep.subr.bf16.mxu0 0
        %1139 = vmatpush2.bf16.msra.mxu0 0
        %1140 = vmatprep.subr.bf16.mxu0 0
        %1141 = vmatpush2.bf16.msra.mxu0 0
        %1142 = vmatprep.subr.bf16.mxu0 0
        %1143 = vmatpush2.bf16.msra.mxu0 0
        %1144 = vmatprep.subr.bf16.mxu0 0
        %1145 = vmatpush2.bf16.msra.mxu0 0
        %1146 = vmatprep.subr.bf16.mxu0 0
        %1147 = vmatpush2.bf16.msra.mxu0 0
        %1148 = vmatprep.subr.bf16.mxu0 0
        %1149 = vmatpush2.bf16.msra.mxu0 0
        %1150 = vmatprep.subr.bf16.mxu0 0
        %1151 = vmatpush2.bf16.msra.mxu0 0
        %1152 = vmatprep.subr.bf16.mxu0 0
        %1153 = vmatpush2.bf16.msra.mxu0 0
        %1154 = vmatprep.mubr.bf16.mxu0 0
        %1155 = vmatmul.mubr.bf16.gmra.mxu0 %v1117
        %v1156 = vpop.f32.mrf.mxu0
        %v1157 = vadd.f32 0.0, %v1156
        %v1158 = vpop.f32.mrf.mxu0
        %v1159 = vpop.f32.mrf.mxu0
        %v1160 = vadd.f32 0.0, %v1159
        %v1161 = vpop.f32.mrf.mxu0
        %1162 = vmatprep.mubr.bf16.mxu0 0
        %1163 = vmatmul.mubr.bf16.gmra.mxu0 %v1120
        %v1164 = vpop.f32.mrf.mxu0
        %v1165 = vadd.f32 0.0, %v1164
        %v1166 = vpop.f32.mrf.mxu0
        %v1167 = vpop.f32.mrf.mxu0
        %v1168 = vadd.f32 0.0, %v1167
        %v1169 = vpop.f32.mrf.mxu0
        %1170 = vdwg.mxu0
        %v1175 = vunpack.c.l.b16 %v818
        %v1176 = vunpack.c.l.b16 %v819
        %v1177 = vunpack.c.l.b16 %v820
        %v1178 = vunpack.c.l.b16 %v821
        %v1179 = vpack.c.b16 %v1176, %v1175
        %v1180 = vpack.c.b16 %v1178, %v1177
        %v1184 = vsel %vm568, %v816, 0
        %v1187 = vsel %vm568, %v817, 0
        %1189 = vmatprep.subr.bf16.mxu0 0
        %1190 = vmatpush1.bf16.msra.mxu0 0
        %1191 = vmatprep.subr.bf16.mxu0 0
        %1192 = vmatpush1.bf16.msra.mxu0 0
        %1193 = vmatprep.subr.bf16.mxu0 0
        %1194 = vmatpush1.bf16.msra.mxu0 0
        %1195 = vmatprep.subr.bf16.mxu0 0
        %1196 = vmatpush1.bf16.msra.mxu0 0
        %1197 = vmatprep.subr.bf16.mxu0 0
        %1198 = vmatpush1.bf16.msra.mxu0 0
        %1199 = vmatprep.subr.bf16.mxu0 0
        %1200 = vmatpush1.bf16.msra.mxu0 0
        %1201 = vmatprep.subr.bf16.mxu0 0
        %1202 = vmatpush1.bf16.msra.mxu0 %v1180
        %1203 = vmatprep.subr.bf16.mxu0 0
        %1204 = vmatpush1.bf16.msra.mxu0 %v1179
        %1205 = vmatprep.subr.bf16.mxu0 0
        %1206 = vmatpush2.bf16.msra.mxu0 0
        %1207 = vmatprep.subr.bf16.mxu0 0
        %1208 = vmatpush2.bf16.msra.mxu0 0
        %1209 = vmatprep.subr.bf16.mxu0 0
        %1210 = vmatpush2.bf16.msra.mxu0 0
        %1211 = vmatprep.subr.bf16.mxu0 0
        %1212 = vmatpush2.bf16.msra.mxu0 0
        %1213 = vmatprep.subr.bf16.mxu0 0
        %1214 = vmatpush2.bf16.msra.mxu0 0
        %1215 = vmatprep.subr.bf16.mxu0 0
        %1216 = vmatpush2.bf16.msra.mxu0 0
        %1217 = vmatprep.subr.bf16.mxu0 0
        %1218 = vmatpush2.bf16.msra.mxu0 0
        %1219 = vmatprep.subr.bf16.mxu0 0
        %1220 = vmatpush2.bf16.msra.mxu0 0
        %1221 = vmatprep.mubr.bf16.mxu0 0
        %1222 = vmatmul.mubr.bf16.gmra.mxu0 %v1184
        %v1223 = vpop.f32.mrf.mxu0
        %v1224 = vadd.f32 %v1157, %v1223
        %v1225 = vpop.f32.mrf.mxu0
        %v1226 = vpop.f32.mrf.mxu0
        %v1227 = vadd.f32 %v1160, %v1226
        %v1228 = vpop.f32.mrf.mxu0
        %1229 = vmatprep.mubr.bf16.mxu0 0
        %1230 = vmatmul.mubr.bf16.gmra.mxu0 %v1187
        %v1231 = vpop.f32.mrf.mxu0
        %v1232 = vadd.f32 %v1165, %v1231
        %v1233 = vpop.f32.mrf.mxu0
        %v1234 = vpop.f32.mrf.mxu0
        %v1235 = vadd.f32 %v1168, %v1234
        %v1236 = vpop.f32.mrf.mxu0
        %1237 = vdwg.mxu0
        %1238 = vrot.lane.b32.xlu0 %v564, 64
        %v1239 = vpop.permute.xlu0 %1238
        %1240 = vrot.lane.b32.xlu0 %v565, 64
        %v1241 = vpop.permute.xlu0 %1240
        %1242 = vrot.lane.b32.xlu0 %v566, 64
        %v1243 = vpop.permute.xlu0 %1242
        %1244 = vrot.lane.b32.xlu0 %v567, 64
        %v1245 = vpop.permute.xlu0 %1244
        %v1250 = vsel %vm568, %v1239, 0.0
        %1251 = vadd.xlane.f32.xlu0 %v1250
        %v1252 = vpop.xlane.xlu0 %1251
        %v1253 = vsel %vm568, %v1241, 0.0
        %1254 = vadd.xlane.f32.xlu0 %v1253
        %v1255 = vpop.xlane.xlu0 %1254
        %v1256 = vsel %vm568, %v1243, 0.0
        %1257 = vadd.xlane.f32.xlu0 %v1256
        %v1258 = vpop.xlane.xlu0 %1257
        %v1259 = vsel %vm568, %v1245, 0.0
        %1260 = vadd.xlane.f32.xlu0 %v1259
        %v1261 = vpop.xlane.xlu0 %1260
        %v1262 = vmul.f32 %v1252, %v581
        %v1263 = vmul.f32 %v1255, %v581
        %v1264 = vmul.f32 %v1258, %v581
        %v1265 = vmul.f32 %v1261, %v581
        %v1266 = vadd.f32 %v1262, 1e-06
        %v1267 = vadd.f32 %v1263, 1e-06
        %v1268 = vadd.f32 %v1264, 1e-06
        %v1269 = vadd.f32 %v1265, 1e-06
        %v1270 = vrsqrt.pop %v1266
        %v1271 = vrsqrt.pop %v1267
        %v1272 = vrsqrt.pop %v1268
        %v1273 = vrsqrt.pop %v1269
        %v1274 = vmul.f32 %v1270, 0.17677669
        %v1275 = vmul.f32 %v1271, 0.17677669
        %v1276 = vmul.f32 %v1272, 0.17677669
        %v1277 = vmul.f32 %v1273, 0.17677669
        %v1278 = vmul.f32 %v552, %v1274
        %v1279 = vmul.f32 %v553, %v1275
        %v1280 = vmul.f32 %v554, %v1276
        %v1281 = vmul.f32 %v555, %v1277
        %1282 = vrot.lane.b32.xlu0 %v602, 64
        %v1283 = vpop.permute.xlu0 %1282
        %1284 = vrot.lane.b32.xlu0 %v603, 64
        %v1285 = vpop.permute.xlu0 %1284
        %1286 = vrot.lane.b32.xlu0 %v604, 64
        %v1287 = vpop.permute.xlu0 %1286
        %1288 = vrot.lane.b32.xlu0 %v605, 64
        %v1289 = vpop.permute.xlu0 %1288
        %v1294 = vsel %vm568, %v1283, 0.0
        %1295 = vadd.xlane.f32.xlu0 %v1294
        %v1296 = vpop.xlane.xlu0 %1295
        %v1297 = vsel %vm568, %v1285, 0.0
        %1298 = vadd.xlane.f32.xlu0 %v1297
        %v1299 = vpop.xlane.xlu0 %1298
        %v1300 = vsel %vm568, %v1287, 0.0
        %1301 = vadd.xlane.f32.xlu0 %v1300
        %v1302 = vpop.xlane.xlu0 %1301
        %v1303 = vsel %vm568, %v1289, 0.0
        %1304 = vadd.xlane.f32.xlu0 %v1303
        %v1305 = vpop.xlane.xlu0 %1304
        %v1306 = vmul.f32 %v1296, %v581
        %v1307 = vmul.f32 %v1299, %v581
        %v1308 = vmul.f32 %v1302, %v581
        %v1309 = vmul.f32 %v1305, %v581
        %v1310 = vadd.f32 %v1306, 1e-06
        %v1311 = vadd.f32 %v1307, 1e-06
        %v1312 = vadd.f32 %v1308, 1e-06
        %v1313 = vadd.f32 %v1309, 1e-06
        %v1314 = vrsqrt.pop %v1310
        %v1315 = vrsqrt.pop %v1311
        %v1316 = vrsqrt.pop %v1312
        %v1317 = vrsqrt.pop %v1313
        %v1318 = vmul.f32 %v560, %v1314
        %v1319 = vmul.f32 %v561, %v1315
        %v1320 = vmul.f32 %v562, %v1316
        %v1321 = vmul.f32 %v563, %v1317
        %v1322 = vpack.c.bf16 %v1279, %v1278
        %v1323 = vpack.c.bf16 %v1281, %v1280
        %v1324 = vpack.c.bf16 %v1319, %v1318
        %v1325 = vpack.c.bf16 %v1321, %v1320
        %1328 = vrot.lane.b32.xlu0 %v1322, 64
        %v1329 = vpop.permute.xlu0 %1328
        %1330 = vrot.lane.b32.xlu0 %v1323, 64
        %v1331 = vpop.permute.xlu0 %1330
        %1334 = vrot.lane.b32.xlu0 %v1324, 64
        %v1335 = vpop.permute.xlu0 %1334
        %1336 = vrot.lane.b32.xlu0 %v1325, 64
        %v1337 = vpop.permute.xlu0 %1336
        %v1339 = vsel %vm568, %v1329, 0
        %v1342 = vsel %vm568, %v1331, 0
        %v1345 = vsel %vm568, %v1335, 0
        %v1348 = vsel %vm568, %v1337, 0
        %1350 = vmatprep.subr.bf16.mxu0 0
        %1351 = vmatpush1.bf16.xpose.msra.mxu0 0
        %1352 = vmatprep.subr.bf16.mxu0 0
        %1353 = vmatpush1.bf16.xpose.msra.mxu0 0
        %1354 = vmatprep.subr.bf16.mxu0 0
        %1355 = vmatpush1.bf16.xpose.msra.mxu0 0
        %1356 = vmatprep.subr.bf16.mxu0 0
        %1357 = vmatpush1.bf16.xpose.msra.mxu0 0
        %1358 = vmatprep.subr.bf16.mxu0 0
        %1359 = vmatpush1.bf16.xpose.msra.mxu0 0
        %1360 = vmatprep.subr.bf16.mxu0 0
        %1361 = vmatpush1.bf16.xpose.msra.mxu0 0
        %1362 = vmatprep.subr.bf16.mxu0 0
        %1363 = vmatpush1.bf16.xpose.msra.mxu0 %v1348
        %1364 = vmatprep.subr.bf16.mxu0 0
        %1365 = vmatpush1.bf16.xpose.msra.mxu0 %v1345
        %1366 = vmatprep.subr.bf16.mxu0 0
        %1367 = vmatpush2.bf16.xpose.msra.mxu0 0
        %1368 = vmatprep.subr.bf16.mxu0 0
        %1369 = vmatpush2.bf16.xpose.msra.mxu0 0
        %1370 = vmatprep.subr.bf16.mxu0 0
        %1371 = vmatpush2.bf16.xpose.msra.mxu0 0
        %1372 = vmatprep.subr.bf16.mxu0 0
        %1373 = vmatpush2.bf16.xpose.msra.mxu0 0
        %1374 = vmatprep.subr.bf16.mxu0 0
        %1375 = vmatpush2.bf16.xpose.msra.mxu0 0
        %1376 = vmatprep.subr.bf16.mxu0 0
        %1377 = vmatpush2.bf16.xpose.msra.mxu0 0
        %1378 = vmatprep.subr.bf16.mxu0 0
        %1379 = vmatpush2.bf16.xpose.msra.mxu0 0
        %1380 = vmatprep.subr.bf16.mxu0 0
        %1381 = vmatpush2.bf16.xpose.msra.mxu0 0
        %1382 = vmatprep.mubr.bf16.mxu0 0
        %1383 = vmatmul.mubr.bf16.gmra.mxu0 %v1339
        %v1384 = vpop.f32.mrf.mxu0
        %v1385 = vadd.f32 0.0, %v1384
        %v1386 = vpop.f32.mrf.mxu0
        %v1387 = vpop.f32.mrf.mxu0
        %v1388 = vadd.f32 0.0, %v1387
        %v1389 = vpop.f32.mrf.mxu0
        %1390 = vmatprep.mubr.bf16.mxu0 0
        %1391 = vmatmul.mubr.bf16.gmra.mxu0 %v1342
        %v1392 = vpop.f32.mrf.mxu0
        %v1393 = vadd.f32 0.0, %v1392
        %v1394 = vpop.f32.mrf.mxu0
        %v1395 = vpop.f32.mrf.mxu0
        %v1396 = vadd.f32 0.0, %v1395
        %v1397 = vpop.f32.mrf.mxu0
        %1398 = vdwg.mxu0
        %v1399 = vsel %vm568, %v1385, -inf
        %1400 = vmax.xlane.f32.xlu0 %v1399
        %v1401 = vpop.xlane.xlu0 %1400
        %v1402 = vsel %vm568, %v1388, -inf
        %1403 = vmax.xlane.f32.xlu0 %v1402
        %v1404 = vpop.xlane.xlu0 %1403
        %v1405 = vsel %vm568, %v1393, -inf
        %1406 = vmax.xlane.f32.xlu0 %v1405
        %v1407 = vpop.xlane.xlu0 %1406
        %v1408 = vsel %vm568, %v1396, -inf
        %1409 = vmax.xlane.f32.xlu0 %v1408
        %v1410 = vpop.xlane.xlu0 %1409
        %v1411 = vsub.f32 %v1385, %v1401
        %v1412 = vsub.f32 %v1388, %v1404
        %v1413 = vsub.f32 %v1393, %v1407
        %v1414 = vsub.f32 %v1396, %v1410
        %v1415 = vmul.f32 %v1411, 1.442695
        %v1416 = vpow.pop %v1415
        %v1417 = vmul.f32 %v1412, 1.442695
        %v1418 = vpow.pop %v1417
        %v1419 = vmul.f32 %v1413, 1.442695
        %v1420 = vpow.pop %v1419
        %v1421 = vmul.f32 %v1414, 1.442695
        %v1422 = vpow.pop %v1421
        %v1423 = vsel %vm568, %v1416, 0.0
        %1424 = vadd.xlane.f32.xlu0 %v1423
        %v1425 = vpop.xlane.xlu0 %1424
        %v1426 = vsel %vm568, %v1418, 0.0
        %1427 = vadd.xlane.f32.xlu0 %v1426
        %v1428 = vpop.xlane.xlu0 %1427
        %v1429 = vsel %vm568, %v1420, 0.0
        %1430 = vadd.xlane.f32.xlu0 %v1429
        %v1431 = vpop.xlane.xlu0 %1430
        %v1432 = vsel %vm568, %v1422, 0.0
        %1433 = vadd.xlane.f32.xlu0 %v1432
        %v1434 = vpop.xlane.xlu0 %1433
        %v1435 = vrcp.pop %v1425
        %v1436 = vrcp.pop %v1428
        %v1437 = vrcp.pop %v1431
        %v1438 = vrcp.pop %v1434
        %v1439 = vmul.f32 %v1416, %v1435
        %v1440 = vmul.f32 %v1418, %v1436
        %v1441 = vmul.f32 %v1420, %v1437
        %v1442 = vmul.f32 %v1422, %v1438
        %v1443 = vpack.c.bf16 %v1440, %v1439
        %v1444 = vpack.c.bf16 %v1442, %v1441
        %1445 = vrot.lane.b32.xlu0 %v757, 64
        %v1446 = vpop.permute.xlu0 %1445
        %1447 = vrot.lane.b32.xlu0 %v758, 64
        %v1448 = vpop.permute.xlu0 %1447
        %v1452 = vsel %vm568, %v1443, 0
        %v1455 = vsel %vm568, %v1444, 0
        %1457 = vmatprep.subr.bf16.mxu0 0
        %1458 = vmatpush1.bf16.msra.mxu0 0
        %1459 = vmatprep.subr.bf16.mxu0 0
        %1460 = vmatpush1.bf16.msra.mxu0 0
        %1461 = vmatprep.subr.bf16.mxu0 0
        %1462 = vmatpush1.bf16.msra.mxu0 0
        %1463 = vmatprep.subr.bf16.mxu0 0
        %1464 = vmatpush1.bf16.msra.mxu0 0
        %1465 = vmatprep.subr.bf16.mxu0 0
        %1466 = vmatpush1.bf16.msra.mxu0 0
        %1467 = vmatprep.subr.bf16.mxu0 0
        %1468 = vmatpush1.bf16.msra.mxu0 0
        %1469 = vmatprep.subr.bf16.mxu0 0
        %1470 = vmatpush1.bf16.msra.mxu0 %v1448
        %1471 = vmatprep.subr.bf16.mxu0 0
        %1472 = vmatpush1.bf16.msra.mxu0 %v1446
        %1473 = vmatprep.subr.bf16.mxu0 0
        %1474 = vmatpush2.bf16.msra.mxu0 0
        %1475 = vmatprep.subr.bf16.mxu0 0
        %1476 = vmatpush2.bf16.msra.mxu0 0
        %1477 = vmatprep.subr.bf16.mxu0 0
        %1478 = vmatpush2.bf16.msra.mxu0 0
        %1479 = vmatprep.subr.bf16.mxu0 0
        %1480 = vmatpush2.bf16.msra.mxu0 0
        %1481 = vmatprep.subr.bf16.mxu0 0
        %1482 = vmatpush2.bf16.msra.mxu0 0
        %1483 = vmatprep.subr.bf16.mxu0 0
        %1484 = vmatpush2.bf16.msra.mxu0 0
        %1485 = vmatprep.subr.bf16.mxu0 0
        %1486 = vmatpush2.bf16.msra.mxu0 0
        %1487 = vmatprep.subr.bf16.mxu0 0
        %1488 = vmatpush2.bf16.msra.mxu0 0
        %1489 = vmatprep.mubr.bf16.mxu0 0
        %1490 = vmatmul.mubr.bf16.gmra.mxu0 %v1452
        %v1491 = vpop.f32.mrf.mxu0
        %v1492 = vadd.f32 0.0, %v1491
        %v1493 = vpop.f32.mrf.mxu0
        %v1494 = vpop.f32.mrf.mxu0
        %v1495 = vadd.f32 0.0, %v1494
        %v1496 = vpop.f32.mrf.mxu0
        %1497 = vmatprep.mubr.bf16.mxu0 0
        %1498 = vmatmul.mubr.bf16.gmra.mxu0 %v1455
        %v1499 = vpop.f32.mrf.mxu0
        %v1500 = vadd.f32 0.0, %v1499
        %v1501 = vpop.f32.mrf.mxu0
        %v1502 = vpop.f32.mrf.mxu0
        %v1503 = vadd.f32 0.0, %v1502
        %v1504 = vpop.f32.mrf.mxu0
        %1505 = vdwg.mxu0
        %v1506 = vpack.c.bf16 %v1495, %v1492
        %v1507 = vpack.c.bf16 %v1503, %v1500
        %v1508 = vld [vmem:[%s3 + $0x20] sm:$0xf]
        %v1509 = vld [vmem:[%s3 + $0x24] sm:$0xf]
        %v1510 = vld [vmem:[%s3 + $0x28] sm:$0xf]
        %v1511 = vld [vmem:[%s3 + $0x2c] sm:$0xf]
        %v1516 = vunpack.c.l.b16 %v1508
        %v1517 = vunpack.c.l.b16 %v1509
        %v1518 = vunpack.c.l.b16 %v1510
        %v1519 = vunpack.c.l.b16 %v1511
        %v1520 = vpack.c.b16 %v1517, %v1516
        %v1521 = vpack.c.b16 %v1519, %v1518
        %v1525 = vsel %vm568, %v1506, 0
        %v1528 = vsel %vm568, %v1507, 0
        %1530 = vmatprep.subr.bf16.mxu0 0
        %1531 = vmatpush1.bf16.msra.mxu0 0
        %1532 = vmatprep.subr.bf16.mxu0 0
        %1533 = vmatpush1.bf16.msra.mxu0 0
        %1534 = vmatprep.subr.bf16.mxu0 0
        %1535 = vmatpush1.bf16.msra.mxu0 0
        %1536 = vmatprep.subr.bf16.mxu0 0
        %1537 = vmatpush1.bf16.msra.mxu0 0
        %1538 = vmatprep.subr.bf16.mxu0 0
        %1539 = vmatpush1.bf16.msra.mxu0 0
        %1540 = vmatprep.subr.bf16.mxu0 0
        %1541 = vmatpush1.bf16.msra.mxu0 0
        %1542 = vmatprep.subr.bf16.mxu0 0
        %1543 = vmatpush1.bf16.msra.mxu0 %v1521
        %1544 = vmatprep.subr.bf16.mxu0 0
        %1545 = vmatpush1.bf16.msra.mxu0 %v1520
        %1546 = vmatprep.subr.bf16.mxu0 0
        %1547 = vmatpush2.bf16.msra.mxu0 0
        %1548 = vmatprep.subr.bf16.mxu0 0
        %1549 = vmatpush2.bf16.msra.mxu0 0
        %1550 = vmatprep.subr.bf16.mxu0 0
        %1551 = vmatpush2.bf16.msra.mxu0 0
        %1552 = vmatprep.subr.bf16.mxu0 0
        %1553 = vmatpush2.bf16.msra.mxu0 0
        %1554 = vmatprep.subr.bf16.mxu0 0
        %1555 = vmatpush2.bf16.msra.mxu0 0
        %1556 = vmatprep.subr.bf16.mxu0 0
        %1557 = vmatpush2.bf16.msra.mxu0 0
        %1558 = vmatprep.subr.bf16.mxu0 0
        %1559 = vmatpush2.bf16.msra.mxu0 0
        %1560 = vmatprep.subr.bf16.mxu0 0
        %1561 = vmatpush2.bf16.msra.mxu0 0
        %1562 = vmatprep.mubr.bf16.mxu0 0
        %1563 = vmatmul.mubr.bf16.gmra.mxu0 %v1525
        %v1564 = vpop.f32.mrf.mxu0
        %v1565 = vadd.f32 0.0, %v1564
        %v1566 = vpop.f32.mrf.mxu0
        %v1567 = vpop.f32.mrf.mxu0
        %v1568 = vadd.f32 0.0, %v1567
        %v1569 = vpop.f32.mrf.mxu0
        %1570 = vmatprep.mubr.bf16.mxu0 0
        %1571 = vmatmul.mubr.bf16.gmra.mxu0 %v1528
        %v1572 = vpop.f32.mrf.mxu0
        %v1573 = vadd.f32 0.0, %v1572
        %v1574 = vpop.f32.mrf.mxu0
        %v1575 = vpop.f32.mrf.mxu0
        %v1576 = vadd.f32 0.0, %v1575
        %v1577 = vpop.f32.mrf.mxu0
        %1578 = vdwg.mxu0
        %v1579 = vadd.f32 %v1224, %v1565
        %v1580 = vadd.f32 %v1227, %v1568
        %v1581 = vadd.f32 %v1232, %v1573
        %v1582 = vadd.f32 %v1235, %v1576
        %1583 = vrot.lane.b32.xlu0 %v564, 32
        %v1584 = vpop.permute.xlu0 %1583
        %1585 = vrot.lane.b32.xlu0 %v565, 32
        %v1586 = vpop.permute.xlu0 %1585
        %1587 = vrot.lane.b32.xlu0 %v566, 32
        %v1588 = vpop.permute.xlu0 %1587
        %1589 = vrot.lane.b32.xlu0 %v567, 32
        %v1590 = vpop.permute.xlu0 %1589
        %v1595 = vsel %vm568, %v1584, 0.0
        %1596 = vadd.xlane.f32.xlu0 %v1595
        %v1597 = vpop.xlane.xlu0 %1596
        %v1598 = vsel %vm568, %v1586, 0.0
        %1599 = vadd.xlane.f32.xlu0 %v1598
        %v1600 = vpop.xlane.xlu0 %1599
        %v1601 = vsel %vm568, %v1588, 0.0
        %1602 = vadd.xlane.f32.xlu0 %v1601
        %v1603 = vpop.xlane.xlu0 %1602
        %v1604 = vsel %vm568, %v1590, 0.0
        %1605 = vadd.xlane.f32.xlu0 %v1604
        %v1606 = vpop.xlane.xlu0 %1605
        %v1607 = vmul.f32 %v1597, %v581
        %v1608 = vmul.f32 %v1600, %v581
        %v1609 = vmul.f32 %v1603, %v581
        %v1610 = vmul.f32 %v1606, %v581
        %v1611 = vadd.f32 %v1607, 1e-06
        %v1612 = vadd.f32 %v1608, 1e-06
        %v1613 = vadd.f32 %v1609, 1e-06
        %v1614 = vadd.f32 %v1610, 1e-06
        %v1615 = vrsqrt.pop %v1611
        %v1616 = vrsqrt.pop %v1612
        %v1617 = vrsqrt.pop %v1613
        %v1618 = vrsqrt.pop %v1614
        %v1619 = vmul.f32 %v1615, 0.17677669
        %v1620 = vmul.f32 %v1616, 0.17677669
        %v1621 = vmul.f32 %v1617, 0.17677669
        %v1622 = vmul.f32 %v1618, 0.17677669
        %v1623 = vmul.f32 %v552, %v1619
        %v1624 = vmul.f32 %v553, %v1620
        %v1625 = vmul.f32 %v554, %v1621
        %v1626 = vmul.f32 %v555, %v1622
        %1627 = vrot.lane.b32.xlu0 %v602, 32
        %v1628 = vpop.permute.xlu0 %1627
        %1629 = vrot.lane.b32.xlu0 %v603, 32
        %v1630 = vpop.permute.xlu0 %1629
        %1631 = vrot.lane.b32.xlu0 %v604, 32
        %v1632 = vpop.permute.xlu0 %1631
        %1633 = vrot.lane.b32.xlu0 %v605, 32
        %v1634 = vpop.permute.xlu0 %1633
        %v1639 = vsel %vm568, %v1628, 0.0
        %1640 = vadd.xlane.f32.xlu0 %v1639
        %v1641 = vpop.xlane.xlu0 %1640
        %v1642 = vsel %vm568, %v1630, 0.0
        %1643 = vadd.xlane.f32.xlu0 %v1642
        %v1644 = vpop.xlane.xlu0 %1643
        %v1645 = vsel %vm568, %v1632, 0.0
        %1646 = vadd.xlane.f32.xlu0 %v1645
        %v1647 = vpop.xlane.xlu0 %1646
        %v1648 = vsel %vm568, %v1634, 0.0
        %1649 = vadd.xlane.f32.xlu0 %v1648
        %v1650 = vpop.xlane.xlu0 %1649
        %v1651 = vmul.f32 %v1641, %v581
        %v1652 = vmul.f32 %v1644, %v581
        %v1653 = vmul.f32 %v1647, %v581
        %v1654 = vmul.f32 %v1650, %v581
        %v1655 = vadd.f32 %v1651, 1e-06
        %v1656 = vadd.f32 %v1652, 1e-06
        %v1657 = vadd.f32 %v1653, 1e-06
        %v1658 = vadd.f32 %v1654, 1e-06
        %v1659 = vrsqrt.pop %v1655
        %v1660 = vrsqrt.pop %v1656
        %v1661 = vrsqrt.pop %v1657
        %v1662 = vrsqrt.pop %v1658
        %v1663 = vmul.f32 %v560, %v1659
        %v1664 = vmul.f32 %v561, %v1660
        %v1665 = vmul.f32 %v562, %v1661
        %v1666 = vmul.f32 %v563, %v1662
        %v1667 = vpack.c.bf16 %v1624, %v1623
        %v1668 = vpack.c.bf16 %v1626, %v1625
        %v1669 = vpack.c.bf16 %v1664, %v1663
        %v1670 = vpack.c.bf16 %v1666, %v1665
        %1673 = vrot.lane.b32.xlu0 %v1667, 32
        %v1674 = vpop.permute.xlu0 %1673
        %1675 = vrot.lane.b32.xlu0 %v1668, 32
        %v1676 = vpop.permute.xlu0 %1675
        %1679 = vrot.lane.b32.xlu0 %v1669, 32
        %v1680 = vpop.permute.xlu0 %1679
        %1681 = vrot.lane.b32.xlu0 %v1670, 32
        %v1682 = vpop.permute.xlu0 %1681
        %v1684 = vsel %vm568, %v1674, 0
        %v1687 = vsel %vm568, %v1676, 0
        %v1690 = vsel %vm568, %v1680, 0
        %v1693 = vsel %vm568, %v1682, 0
        %1695 = vmatprep.subr.bf16.mxu0 0
        %1696 = vmatpush1.bf16.xpose.msra.mxu0 0
        %1697 = vmatprep.subr.bf16.mxu0 0
        %1698 = vmatpush1.bf16.xpose.msra.mxu0 0
        %1699 = vmatprep.subr.bf16.mxu0 0
        %1700 = vmatpush1.bf16.xpose.msra.mxu0 0
        %1701 = vmatprep.subr.bf16.mxu0 0
        %1702 = vmatpush1.bf16.xpose.msra.mxu0 0
        %1703 = vmatprep.subr.bf16.mxu0 0
        %1704 = vmatpush1.bf16.xpose.msra.mxu0 0
        %1705 = vmatprep.subr.bf16.mxu0 0
        %1706 = vmatpush1.bf16.xpose.msra.mxu0 0
        %1707 = vmatprep.subr.bf16.mxu0 0
        %1708 = vmatpush1.bf16.xpose.msra.mxu0 %v1693
        %1709 = vmatprep.subr.bf16.mxu0 0
        %1710 = vmatpush1.bf16.xpose.msra.mxu0 %v1690
        %1711 = vmatprep.subr.bf16.mxu0 0
        %1712 = vmatpush2.bf16.xpose.msra.mxu0 0
        %1713 = vmatprep.subr.bf16.mxu0 0
        %1714 = vmatpush2.bf16.xpose.msra.mxu0 0
        %1715 = vmatprep.subr.bf16.mxu0 0
        %1716 = vmatpush2.bf16.xpose.msra.mxu0 0
        %1717 = vmatprep.subr.bf16.mxu0 0
        %1718 = vmatpush2.bf16.xpose.msra.mxu0 0
        %1719 = vmatprep.subr.bf16.mxu0 0
        %1720 = vmatpush2.bf16.xpose.msra.mxu0 0
        %1721 = vmatprep.subr.bf16.mxu0 0
        %1722 = vmatpush2.bf16.xpose.msra.mxu0 0
        %1723 = vmatprep.subr.bf16.mxu0 0
        %1724 = vmatpush2.bf16.xpose.msra.mxu0 0
        %1725 = vmatprep.subr.bf16.mxu0 0
        %1726 = vmatpush2.bf16.xpose.msra.mxu0 0
        %1727 = vmatprep.mubr.bf16.mxu0 0
        %1728 = vmatmul.mubr.bf16.gmra.mxu0 %v1684
        %v1729 = vpop.f32.mrf.mxu0
        %v1730 = vadd.f32 0.0, %v1729
        %v1731 = vpop.f32.mrf.mxu0
        %v1732 = vpop.f32.mrf.mxu0
        %v1733 = vadd.f32 0.0, %v1732
        %v1734 = vpop.f32.mrf.mxu0
        %1735 = vmatprep.mubr.bf16.mxu0 0
        %1736 = vmatmul.mubr.bf16.gmra.mxu0 %v1687
        %v1737 = vpop.f32.mrf.mxu0
        %v1738 = vadd.f32 0.0, %v1737
        %v1739 = vpop.f32.mrf.mxu0
        %v1740 = vpop.f32.mrf.mxu0
        %v1741 = vadd.f32 0.0, %v1740
        %v1742 = vpop.f32.mrf.mxu0
        %1743 = vdwg.mxu0
        %v1744 = vsel %vm568, %v1730, -inf
        %1745 = vmax.xlane.f32.xlu0 %v1744
        %v1746 = vpop.xlane.xlu0 %1745
        %v1747 = vsel %vm568, %v1733, -inf
        %1748 = vmax.xlane.f32.xlu0 %v1747
        %v1749 = vpop.xlane.xlu0 %1748
        %v1750 = vsel %vm568, %v1738, -inf
        %1751 = vmax.xlane.f32.xlu0 %v1750
        %v1752 = vpop.xlane.xlu0 %1751
        %v1753 = vsel %vm568, %v1741, -inf
        %1754 = vmax.xlane.f32.xlu0 %v1753
        %v1755 = vpop.xlane.xlu0 %1754
        %v1756 = vsub.f32 %v1730, %v1746
        %v1757 = vsub.f32 %v1733, %v1749
        %v1758 = vsub.f32 %v1738, %v1752
        %v1759 = vsub.f32 %v1741, %v1755
        %v1760 = vmul.f32 %v1756, 1.442695
        %v1761 = vpow.pop %v1760
        %v1762 = vmul.f32 %v1757, 1.442695
        %v1763 = vpow.pop %v1762
        %v1764 = vmul.f32 %v1758, 1.442695
        %v1765 = vpow.pop %v1764
        %v1766 = vmul.f32 %v1759, 1.442695
        %v1767 = vpow.pop %v1766
        %v1768 = vsel %vm568, %v1761, 0.0
        %1769 = vadd.xlane.f32.xlu0 %v1768
        %v1770 = vpop.xlane.xlu0 %1769
        %v1771 = vsel %vm568, %v1763, 0.0
        %1772 = vadd.xlane.f32.xlu0 %v1771
        %v1773 = vpop.xlane.xlu0 %1772
        %v1774 = vsel %vm568, %v1765, 0.0
        %1775 = vadd.xlane.f32.xlu0 %v1774
        %v1776 = vpop.xlane.xlu0 %1775
        %v1777 = vsel %vm568, %v1767, 0.0
        %1778 = vadd.xlane.f32.xlu0 %v1777
        %v1779 = vpop.xlane.xlu0 %1778
        %v1780 = vrcp.pop %v1770
        %v1781 = vrcp.pop %v1773
        %v1782 = vrcp.pop %v1776
        %v1783 = vrcp.pop %v1779
        %v1784 = vmul.f32 %v1761, %v1780
        %v1785 = vmul.f32 %v1763, %v1781
        %v1786 = vmul.f32 %v1765, %v1782
        %v1787 = vmul.f32 %v1767, %v1783
        %v1788 = vpack.c.bf16 %v1785, %v1784
        %v1789 = vpack.c.bf16 %v1787, %v1786
        %1790 = vrot.lane.b32.xlu0 %v757, 32
        %v1791 = vpop.permute.xlu0 %1790
        %1792 = vrot.lane.b32.xlu0 %v758, 32
        %v1793 = vpop.permute.xlu0 %1792
        %v1797 = vsel %vm568, %v1788, 0
        %v1800 = vsel %vm568, %v1789, 0
        %1802 = vmatprep.subr.bf16.mxu0 0
        %1803 = vmatpush1.bf16.msra.mxu0 0
        %1804 = vmatprep.subr.bf16.mxu0 0
        %1805 = vmatpush1.bf16.msra.mxu0 0
        %1806 = vmatprep.subr.bf16.mxu0 0
        %1807 = vmatpush1.bf16.msra.mxu0 0
        %1808 = vmatprep.subr.bf16.mxu0 0
        %1809 = vmatpush1.bf16.msra.mxu0 0
        %1810 = vmatprep.subr.bf16.mxu0 0
        %1811 = vmatpush1.bf16.msra.mxu0 0
        %1812 = vmatprep.subr.bf16.mxu0 0
        %1813 = vmatpush1.bf16.msra.mxu0 0
        %1814 = vmatprep.subr.bf16.mxu0 0
        %1815 = vmatpush1.bf16.msra.mxu0 %v1793
        %1816 = vmatprep.subr.bf16.mxu0 0
        %1817 = vmatpush1.bf16.msra.mxu0 %v1791
        %1818 = vmatprep.subr.bf16.mxu0 0
        %1819 = vmatpush2.bf16.msra.mxu0 0
        %1820 = vmatprep.subr.bf16.mxu0 0
        %1821 = vmatpush2.bf16.msra.mxu0 0
        %1822 = vmatprep.subr.bf16.mxu0 0
        %1823 = vmatpush2.bf16.msra.mxu0 0
        %1824 = vmatprep.subr.bf16.mxu0 0
        %1825 = vmatpush2.bf16.msra.mxu0 0
        %1826 = vmatprep.subr.bf16.mxu0 0
        %1827 = vmatpush2.bf16.msra.mxu0 0
        %1828 = vmatprep.subr.bf16.mxu0 0
        %1829 = vmatpush2.bf16.msra.mxu0 0
        %1830 = vmatprep.subr.bf16.mxu0 0
        %1831 = vmatpush2.bf16.msra.mxu0 0
        %1832 = vmatprep.subr.bf16.mxu0 0
        %1833 = vmatpush2.bf16.msra.mxu0 0
        %1834 = vmatprep.mubr.bf16.mxu0 0
        %1835 = vmatmul.mubr.bf16.gmra.mxu0 %v1797
        %v1836 = vpop.f32.mrf.mxu0
        %v1837 = vadd.f32 0.0, %v1836
        %v1838 = vpop.f32.mrf.mxu0
        %v1839 = vpop.f32.mrf.mxu0
        %v1840 = vadd.f32 0.0, %v1839
        %v1841 = vpop.f32.mrf.mxu0
        %1842 = vmatprep.mubr.bf16.mxu0 0
        %1843 = vmatmul.mubr.bf16.gmra.mxu0 %v1800
        %v1844 = vpop.f32.mrf.mxu0
        %v1845 = vadd.f32 0.0, %v1844
        %v1846 = vpop.f32.mrf.mxu0
        %v1847 = vpop.f32.mrf.mxu0
        %v1848 = vadd.f32 0.0, %v1847
        %v1849 = vpop.f32.mrf.mxu0
        %1850 = vdwg.mxu0
        %v1851 = vpack.c.bf16 %v1840, %v1837
        %v1852 = vpack.c.bf16 %v1848, %v1845
        %v1853 = vld [vmem:[%s3 + $0x30] sm:$0xf]
        %v1854 = vld [vmem:[%s3 + $0x34] sm:$0xf]
        %v1855 = vld [vmem:[%s3 + $0x38] sm:$0xf]
        %v1856 = vld [vmem:[%s3 + $0x3c] sm:$0xf]
        %v1861 = vunpack.c.l.b16 %v1853
        %v1862 = vunpack.c.l.b16 %v1854
        %v1863 = vunpack.c.l.b16 %v1855
        %v1864 = vunpack.c.l.b16 %v1856
        %v1865 = vpack.c.b16 %v1862, %v1861
        %v1866 = vpack.c.b16 %v1864, %v1863
        %v1870 = vsel %vm568, %v1851, 0
        %v1873 = vsel %vm568, %v1852, 0
        %1875 = vmatprep.subr.bf16.mxu0 0
        %1876 = vmatpush1.bf16.msra.mxu0 0
        %1877 = vmatprep.subr.bf16.mxu0 0
        %1878 = vmatpush1.bf16.msra.mxu0 0
        %1879 = vmatprep.subr.bf16.mxu0 0
        %1880 = vmatpush1.bf16.msra.mxu0 0
        %1881 = vmatprep.subr.bf16.mxu0 0
        %1882 = vmatpush1.bf16.msra.mxu0 0
        %1883 = vmatprep.subr.bf16.mxu0 0
        %1884 = vmatpush1.bf16.msra.mxu0 0
        %1885 = vmatprep.subr.bf16.mxu0 0
        %1886 = vmatpush1.bf16.msra.mxu0 0
        %1887 = vmatprep.subr.bf16.mxu0 0
        %1888 = vmatpush1.bf16.msra.mxu0 %v1866
        %1889 = vmatprep.subr.bf16.mxu0 0
        %1890 = vmatpush1.bf16.msra.mxu0 %v1865
        %1891 = vmatprep.subr.bf16.mxu0 0
        %1892 = vmatpush2.bf16.msra.mxu0 0
        %1893 = vmatprep.subr.bf16.mxu0 0
        %1894 = vmatpush2.bf16.msra.mxu0 0
        %1895 = vmatprep.subr.bf16.mxu0 0
        %1896 = vmatpush2.bf16.msra.mxu0 0
        %1897 = vmatprep.subr.bf16.mxu0 0
        %1898 = vmatpush2.bf16.msra.mxu0 0
        %1899 = vmatprep.subr.bf16.mxu0 0
        %1900 = vmatpush2.bf16.msra.mxu0 0
        %1901 = vmatprep.subr.bf16.mxu0 0
        %1902 = vmatpush2.bf16.msra.mxu0 0
        %1903 = vmatprep.subr.bf16.mxu0 0
        %1904 = vmatpush2.bf16.msra.mxu0 0
        %1905 = vmatprep.subr.bf16.mxu0 0
        %1906 = vmatpush2.bf16.msra.mxu0 0
        %1907 = vmatprep.mubr.bf16.mxu0 0
        %1908 = vmatmul.mubr.bf16.gmra.mxu0 %v1870
        %v1909 = vpop.f32.mrf.mxu0
        %v1910 = vadd.f32 0.0, %v1909
        %v1911 = vpop.f32.mrf.mxu0
        %v1912 = vpop.f32.mrf.mxu0
        %v1913 = vadd.f32 0.0, %v1912
        %v1914 = vpop.f32.mrf.mxu0
        %1915 = vmatprep.mubr.bf16.mxu0 0
        %1916 = vmatmul.mubr.bf16.gmra.mxu0 %v1873
        %v1917 = vpop.f32.mrf.mxu0
        %v1918 = vadd.f32 0.0, %v1917
        %v1919 = vpop.f32.mrf.mxu0
        %v1920 = vpop.f32.mrf.mxu0
        %v1921 = vadd.f32 0.0, %v1920
        %v1922 = vpop.f32.mrf.mxu0
        %1923 = vdwg.mxu0
        %v1924 = vadd.f32 %v1579, %v1910
        %v1925 = vadd.f32 %v1580, %v1913
        %v1926 = vadd.f32 %v1581, %v1918
        %v1927 = vadd.f32 %v1582, %v1921
        %v1928 = vld [vmem:[%s526 + $0x2] sm:$0x1]
        %v1929 = vld [vmem:[%s535] sm:$0xff]
        %v1930 = vld [vmem:[%s535 + $0x8] sm:$0xff]
        %v1931 = vld [vmem:[%s535 + $0x10] sm:$0xff]
        %v1932 = vld [vmem:[%s535 + $0x18] sm:$0xff]
        %v1933 = vlaneseq
        %v1934 = vshrl.u32 %v1933, 7
        %v1935 = vsub.s32 0, %v1934
        %v1936 = vrot.slane %v1928, %v1935
        %v1937 = vmul.f32 %v1924, %v1936
        %v1938 = vmul.f32 %v1925, %v1936
        %v1939 = vmul.f32 %v1926, %v1936
        %v1940 = vmul.f32 %v1927, %v1936
        %v1941 = vadd.f32 %v1929, %v1937
        %v1942 = vadd.f32 %v1930, %v1938
        %v1943 = vadd.f32 %v1931, %v1939
        %v1944 = vadd.f32 %v1932, %v1940
        %1945 = vst [vmem:[%s545] sm:$0xff] %v1941
        %1946 = vst [vmem:[%s545 + $0x8] sm:$0xff] %v1942
        %1947 = vst [vmem:[%s545 + $0x10] sm:$0xff] %v1943
        %1948 = vst [vmem:[%s545 + $0x18] sm:$0xff] %v1944
        %s1949 = smul.u32 4, %s22
        %p1950 = scmp.lt.s32.totalorder %s21, 1
        %s1951 = scalar_select %p1950, %s21, 1
        %p1952 = scmp.lt.s32.totalorder %s1949, 3
        %s1953 = scalar_select %p1952, %s1949, 3
        %s1954 = smul.addr %s1951, 4
        %s1955 = sadd.s32 %s1953, %s1954
        %s1956 = smul.addr %s1955, 8
        %s1957 = scalar_lea.vmem %s6, %s1956
        // Predicated region
        $region168: #{dit_block_forward.8} parent=154 // pred_check
          %p1958 = pneg %p204
        $region169: #{dit_block_forward.8} parent=154 // pred_check_branch
          %1960 = sbr.rel (%p1958) target = $region171
        $region170: #{dit_block_forward.8} parent=154 // pred_region
          %s1961 = smul.u32 4, %s22
        $region171: #{dit_block_forward.8} parent=154 // pred_fallthru
          _
      $region155: #{dit_block_forward.8} parent=5 // pred_fallthru
        _
      %p1962 = scmp.le.s32.totalorder 2, %s12
      // Predicated region
      $region172: #{dit_block_forward.8} parent=5 // pred_check
        %p1963 = pneg %p1962
      $region173: #{dit_block_forward.8} parent=5 // pred_check_branch
        %1965 = sbr.rel (%p1963) target = $region175
      $region174: #{dit_block_forward.8} parent=5 // pred_region
        %s1966 = ssub.s32 %s12, 2
        // Predicated region
        $region176: #{dit_block_forward.8} parent=174 // pred_check
          %p1967 = pneg %p210
        $region177: #{dit_block_forward.8} parent=174 // pred_check_branch
          %1969 = sbr.rel (%p1967) target = $region179
        $region178: #{dit_block_forward.8} parent=174 // pred_region
          %s1970 = smul.u32 4, %s24
          %p1971 = scmp.lt.s32.totalorder %s23, 1
          %s1972 = scalar_select %p1971, %s23, 1
          %p1973 = scmp.lt.s32.totalorder %s1970, 3
          %s1974 = scalar_select %p1973, %s1970, 3
          %s1975 = smul.addr %s1972, 4
          %s1976 = sadd.s32 %s1974, %s1975
          %s1977 = smul.addr %s1976, 8
          %s1978 = scalar_lea.vmem %s6, %s1977
        $region179: #{dit_block_forward.8} parent=174 // pred_fallthru
          _
      $region175: #{dit_block_forward.8} parent=5 // pred_fallthru
        _
    $region6: #{dit_block_forward.8} parent=1 // loop_footer
      %s16 = sadd.s32 1, %s12
    $region7: #{dit_block_forward.8} parent=1 // loop_footer_branch
      %11 = sbr.rel target = $region3
    $region8: #{dit_block_forward.8} parent=1 // loop_exit
      _

// kernel: dit_block_forward.12
$region0: #{dit_block_forward.12}
  #allocation0 [shape = 'u32[]', space=smem, size = 0x4, offset = 0x4, fixed_abs, tag = 'smem constant byte address 0x4 - core index']
  #allocation1 [shape = 'u32[144,128]{1,0:T(1,128)}', space=vmem, size = 0x12000, scoped, tag = 'internal scratch']
  %s0 = inlined_call_operand.vmem [shape: f32[2,32,128], index: 0, kind: input, shape index: {}]
  %s1 = inlined_call_operand.vmem [shape: f32[1,128], index: 1, kind: input, shape index: {}]
  %s2 = inlined_call_operand.vmem [shape: f32[2,9,128], index: 2, kind: input, shape index: {}]
  %s3 = inlined_call_operand.vmem [shape: bf16[128,512], index: 3, kind: input, shape index: {}]
  %s4 = inlined_call_operand.vmem [shape: f32[1,512], index: 4, kind: input, shape index: {}]
  %s5 = inlined_call_operand.vmem [shape: bf16[2,32,512], index: 5, kind: output, shape index: {}]
  %s6 = sld [smem:[#allocation0]]
  $region53: #{dit_block_forward.12} parent=0
    _
  %s8 = ssub.s32 1, %s6
  %s9 = scalar_select 0, %s8, %s6
  loop: start=0, step=1, limit=4
  $region2: #{dit_block_forward.12} parent=0 // loop_pre_header
    _
  $region3: #{dit_block_forward.12} parent=0 // loop_header
    %s11 = sphi 0, %s15
    %p12 = scmp.ge.s32.totalorder %s11, 4
    %s18 = sphi 0, %s30
    %s19 = sphi 0, %s26
    %s20 = sphi 0, %s18
    %s21 = sphi 0, %s19
    %s22 = sphi 0, %s20
    %s23 = sphi 0, %s21
    %s35 = sphi 0, %s37
    %s38 = sphi 0, %s35
    %s39 = sphi 0, %s38
    %s55 = sphi 0, %s39
    %s59 = sphi 0, %s59
    %s61 = sphi 0, %s59
    %s62 = sphi 0, %s61
    %s76 = sphi 0, %s62
    %s82 = sphi 0, %s84
    %s85 = sphi 0, %s82
    %s86 = sphi 0, %s85
    %s102 = sphi 0, %s86
    %s106 = sphi 0, %s106
    %s108 = sphi 0, %s106
    %s109 = sphi 0, %s108
    %s123 = sphi 0, %s109
    %s127 = sphi 0, %s127
    %s129 = sphi 0, %s127
    %s130 = sphi 0, %s129
    %s144 = sphi 0, %s130
    %s152 = sphi 0, %s154
    %s155 = sphi 0, %s152
    %s156 = sphi 0, %s155
    %s172 = sphi 0, %s156
  $region4: #{dit_block_forward.12} parent=0 // loop_header_branch
    %14 = sbr.rel (%p12) target = $region8
  $region5: #{dit_block_forward.12} parent=0 // loop_body
    %s16 = ssub.s32 %s11, 1
    %s17 = ssub.s32 %s11, 2
    %s24 = sadd.s32 1, %s19
    %p25 = scmp.ge.s32.totalorder %s24, 1
    %s26 = scalar_select %p25, 0, %s24
    %s27 = sadd.s32 1, %s18
    %s28 = scalar_select %p25, %s27, %s18
    %p29 = scmp.ge.s32.totalorder %s28, 2
    %s30 = scalar_select %p29, 0, %s28
    %s31 = ssub.s32 %s18, %s30
    %s32 = ssub.s32 %s19, %s26
    %s33 = sor.u32 %s31, %s32
    %p34 = scmp.eq.s32.totalorder %s33, 0
    %s36 = sadd.s32 %s35, 1
    %s37 = scalar_select %p34, %s35, %s36
    %p40 = pneg %p34
    %p41 = scmp.eq.s32.totalorder %s11, 1
    %p42 = por %p40, %p41
    %p43 = scmp.ne.s32.totalorder %s35, %s38
    %p44 = scmp.eq.s32.totalorder %s11, 0
    %p45 = por %p43, %p44
    %p46 = scmp.ne.s32.totalorder %s35, %s38
    %p47 = scmp.eq.s32.totalorder %s16, 1
    %p48 = por %p46, %p47
    %p49 = scmp.ne.s32.totalorder %s38, %s39
    %p50 = scmp.eq.s32.totalorder %s16, 0
    %p51 = por %p49, %p50
    %p52 = scmp.ne.s32.totalorder %s38, %s39
    %p53 = scmp.eq.s32.totalorder %s17, 1
    %p54 = por %p52, %p53
    %p56 = scmp.ne.s32.totalorder %s39, %s55
    %p57 = scmp.eq.s32.totalorder %s17, 0
    %p58 = por %p56, %p57
    %s60 = sadd.s32 %s59, 1
    %p63 = scmp.eq.s32.totalorder %s11, 1
    %p64 = scmp.ne.s32.totalorder %s59, %s61
    %p65 = scmp.eq.s32.totalorder %s11, 0
    %p66 = por %p64, %p65
    %p67 = scmp.ne.s32.totalorder %s59, %s61
    %p68 = scmp.eq.s32.totalorder %s16, 1
    %p69 = por %p67, %p68
    %p70 = scmp.ne.s32.totalorder %s61, %s62
    %p71 = scmp.eq.s32.totalorder %s16, 0
    %p72 = por %p70, %p71
    %p73 = scmp.ne.s32.totalorder %s61, %s62
    %p74 = scmp.eq.s32.totalorder %s17, 1
    %p75 = por %p73, %p74
    %p77 = scmp.ne.s32.totalorder %s62, %s76
    %p78 = scmp.eq.s32.totalorder %s17, 0
    %p79 = por %p77, %p78
    %s80 = ssub.s32 %s18, %s30
    %p81 = scmp.eq.s32.totalorder %s80, 0
    %s83 = sadd.s32 %s82, 1
    %s84 = scalar_select %p81, %s82, %s83
    %p87 = pneg %p81
    %p88 = scmp.eq.s32.totalorder %s11, 1
    %p89 = por %p87, %p88
    %p90 = scmp.ne.s32.totalorder %s82, %s85
    %p91 = scmp.eq.s32.totalorder %s11, 0
    %p92 = por %p90, %p91
    %p93 = scmp.ne.s32.totalorder %s82, %s85
    %p94 = scmp.eq.s32.totalorder %s16, 1
    %p95 = por %p93, %p94
    %p96 = scmp.ne.s32.totalorder %s85, %s86
    %p97 = scmp.eq.s32.totalorder %s16, 0
    %p98 = por %p96, %p97
    %p99 = scmp.ne.s32.totalorder %s85, %s86
    %p100 = scmp.eq.s32.totalorder %s17, 1
    %p101 = por %p99, %p100
    %p103 = scmp.ne.s32.totalorder %s86, %s102
    %p104 = scmp.eq.s32.totalorder %s17, 0
    %p105 = por %p103, %p104
    %s107 = sadd.s32 %s106, 1
    %p110 = scmp.eq.s32.totalorder %s11, 1
    %p111 = scmp.ne.s32.totalorder %s106, %s108
    %p112 = scmp.eq.s32.totalorder %s11, 0
    %p113 = por %p111, %p112
    %p114 = scmp.ne.s32.totalorder %s106, %s108
    %p115 = scmp.eq.s32.totalorder %s16, 1
    %p116 = por %p114, %p115
    %p117 = scmp.ne.s32.totalorder %s108, %s109
    %p118 = scmp.eq.s32.totalorder %s16, 0
    %p119 = por %p117, %p118
    %p120 = scmp.ne.s32.totalorder %s108, %s109
    %p121 = scmp.eq.s32.totalorder %s17, 1
    %p122 = por %p120, %p121
    %p124 = scmp.ne.s32.totalorder %s109, %s123
    %p125 = scmp.eq.s32.totalorder %s17, 0
    %p126 = por %p124, %p125
    %s128 = sadd.s32 %s127, 1
    %p131 = scmp.eq.s32.totalorder %s11, 1
    %p132 = scmp.ne.s32.totalorder %s127, %s129
    %p133 = scmp.eq.s32.totalorder %s11, 0
    %p134 = por %p132, %p133
    %p135 = scmp.ne.s32.totalorder %s127, %s129
    %p136 = scmp.eq.s32.totalorder %s16, 1
    %p137 = por %p135, %p136
    %p138 = scmp.ne.s32.totalorder %s129, %s130
    %p139 = scmp.eq.s32.totalorder %s16, 0
    %p140 = por %p138, %p139
    %p141 = scmp.ne.s32.totalorder %s129, %s130
    %p142 = scmp.eq.s32.totalorder %s17, 1
    %p143 = por %p141, %p142
    %p145 = scmp.ne.s32.totalorder %s130, %s144
    %p146 = scmp.eq.s32.totalorder %s17, 0
    %p147 = por %p145, %p146
    %s148 = ssub.s32 %s18, %s30
    %s149 = ssub.s32 %s19, %s26
    %s150 = sor.u32 %s148, %s149
    %p151 = scmp.eq.s32.totalorder %s150, 0
    %s153 = sadd.s32 %s152, 1
    %s154 = scalar_select %p151, %s152, %s153
    %p157 = pneg %p151
    %p158 = scmp.eq.s32.totalorder %s11, 1
    %p159 = por %p157, %p158
    %p160 = scmp.ne.s32.totalorder %s152, %s155
    %p161 = scmp.eq.s32.totalorder %s11, 0
    %p162 = por %p160, %p161
    %p163 = scmp.ne.s32.totalorder %s152, %s155
    %p164 = scmp.eq.s32.totalorder %s16, 1
    %p165 = por %p163, %p164
    %p166 = scmp.ne.s32.totalorder %s155, %s156
    %p167 = scmp.eq.s32.totalorder %s16, 0
    %p168 = por %p166, %p167
    %p169 = scmp.ne.s32.totalorder %s155, %s156
    %p170 = scmp.eq.s32.totalorder %s17, 1
    %p171 = por %p169, %p170
    %p173 = scmp.ne.s32.totalorder %s156, %s172
    %p174 = scmp.eq.s32.totalorder %s17, 0
    %p175 = por %p173, %p174
    %p176 = scmp.le.s32.totalorder 1, %s11
    %p177 = scmp.lt.s32.totalorder %s11, 3
    %p178 = pnand %p176, %p177
    %p179 = pneg %p178
    // Predicated region
    $region9: #{dit_block_forward.12} parent=5 // pred_check
      _
    $region10: #{dit_block_forward.12} parent=5 // pred_check_branch
      %181 = sbr.rel (%p178) target = $region12
    $region11: #{dit_block_forward.12} parent=5 // pred_region
      %s182 = ssub.s32 %s11, 1
      // Predicated region
      $region13: #{dit_block_forward.12} parent=11 // pred_check
        %p183 = pneg %p72
      $region14: #{dit_block_forward.12} parent=11 // pred_check_branch
        %185 = sbr.rel (%p183) target = $region16
      $region15: #{dit_block_forward.12} parent=11 // pred_region
        _
      $region16: #{dit_block_forward.12} parent=11 // pred_fallthru
        _
      // Predicated region
      $region17: #{dit_block_forward.12} parent=11 // pred_check
        %p186 = pneg %p119
      $region18: #{dit_block_forward.12} parent=11 // pred_check_branch
        %188 = sbr.rel (%p186) target = $region20
      $region19: #{dit_block_forward.12} parent=11 // pred_region
        _
      $region20: #{dit_block_forward.12} parent=11 // pred_fallthru
        _
      // Predicated region
      $region21: #{dit_block_forward.12} parent=11 // pred_check
        %p189 = pneg %p140
      $region22: #{dit_block_forward.12} parent=11 // pred_check_branch
        %191 = sbr.rel (%p189) target = $region24
      $region23: #{dit_block_forward.12} parent=11 // pred_region
        _
      $region24: #{dit_block_forward.12} parent=11 // pred_fallthru
        _
    $region12: #{dit_block_forward.12} parent=5 // pred_fallthru
      _
    %p192 = scmp.lt.s32.totalorder %s11, 2
    // Predicated region
    $region25: #{dit_block_forward.12} parent=5 // pred_check
      %p193 = pneg %p192
    $region26: #{dit_block_forward.12} parent=5 // pred_check_branch
      %195 = sbr.rel (%p193) target = $region28
    $region27: #{dit_block_forward.12} parent=5 // pred_region
      // Predicated region
      $region29: #{dit_block_forward.12} parent=27 // pred_check
        %p196 = pneg %p45
      $region30: #{dit_block_forward.12} parent=27 // pred_check_branch
        %198 = sbr.rel (%p196) target = $region32
      $region31: #{dit_block_forward.12} parent=27 // pred_region
        %s199 = smul.u32 4, %s19
        %p200 = scmp.lt.s32.totalorder %s18, 1
        %s201 = scalar_select %p200, %s18, 1
        %p202 = scmp.lt.s32.totalorder %s199, 3
        %s203 = scalar_select %p202, %s199, 3
        %s204 = smul.addr %s201, 4
        %s205 = sadd.s32 %s203, %s204
        %s206 = smul.addr %s205, 8
        %s207 = scalar_lea.vmem %s0, %s206
        %s208 = smul.u32 4, %s19
      $region32: #{dit_block_forward.12} parent=27 // pred_fallthru
        _
      // Predicated region
      $region33: #{dit_block_forward.12} parent=27 // pred_check
        %p209 = pneg %p92
      $region34: #{dit_block_forward.12} parent=27 // pred_check_branch
        %211 = sbr.rel (%p209) target = $region36
      $region35: #{dit_block_forward.12} parent=27 // pred_region
        %p212 = scmp.lt.s32.totalorder %s18, 1
        %s213 = scalar_select %p212, %s18, 1
        %s214 = smul.addr %s213, 2
        %s215 = smul.addr %s214, 8
        %s216 = scalar_lea.vmem %s2, %s215
      $region36: #{dit_block_forward.12} parent=27 // pred_fallthru
        _
    $region28: #{dit_block_forward.12} parent=5 // pred_fallthru
      _
    %p217 = scmp.le.s32.totalorder 1, %s11
    %p218 = scmp.lt.s32.totalorder %s11, 3
    %p219 = pnand %p217, %p218
    %p220 = pneg %p219
    // Predicated region
    $region37: #{dit_block_forward.12} parent=5 // pred_check
      _
    $region38: #{dit_block_forward.12} parent=5 // pred_check_branch
      %222 = sbr.rel (%p219) target = $region40
    $region39: #{dit_block_forward.12} parent=5 // pred_region
      %s223 = ssub.s32 %s11, 1
      %s224 = smul.u32 4, %s21
      %p225 = scmp.lt.s32.totalorder %s20, 1
      %s226 = scalar_select %p225, %s20, 1
      %p227 = scmp.lt.s32.totalorder %s224, 3
      %s228 = scalar_select %p227, %s224, 3
      %s229 = smul.addr %s226, 4
      %s230 = sadd.s32 %s228, %s229
      %s231 = smul.addr %s230, 8
      %s232 = scalar_lea.vmem %s0, %s231
      %p233 = pneg %p51
      %p234 = pneg %p48
      %p235 = pneg %p72
      %p236 = pneg %p69
      %p237 = scmp.lt.s32.totalorder %s20, 1
      %s238 = scalar_select %p237, %s20, 1
      %s239 = smul.addr %s238, 2
      %s240 = smul.addr %s239, 8
      %s241 = scalar_lea.vmem %s2, %s240
      %p242 = pneg %p98
      %p243 = pneg %p95
      %p244 = pneg %p119
      %p245 = pneg %p116
      %p246 = pneg %p140
      %p247 = pneg %p137
      %p248 = pneg %p168
      %p249 = pneg %p165
      %s250 = smul.u32 4, %s21
      %p251 = scmp.lt.s32.totalorder %s20, 1
      %s252 = scalar_select %p251, %s20, 1
      %p253 = scmp.lt.s32.totalorder %s250, 3
      %s254 = scalar_select %p253, %s250, 3
      %s255 = smul.addr %s254, 4
      %s256 = smul.addr %s252, 16
      %s257 = sadd.s32 %s255, %s256
      %s258 = smul.addr %s257, 4
      %s259 = scalar_lea.vmem %s5, %s258
      %s260 = smul.u32 4, %s21
      %p261 = scmp.lt.s32.totalorder %s20, 1
      %s262 = scalar_select %p261, %s20, 1
      %p263 = scmp.lt.s32.totalorder %s260, 3
      %s264 = scalar_select %p263, %s260, 3
      %s265 = smul.addr %s262, 4
      %s266 = sadd.s32 %s264, %s265
      %s267 = smul.addr %s266, 8
      %s268 = scalar_lea.vmem %s0, %s267
      %s269 = smul.u32 4, %s21
      %p270 = scmp.lt.s32.totalorder %s20, 1
      %s271 = scalar_select %p270, %s20, 1
      %s272 = smul.addr %s271, 2
      %s273 = smul.addr %s272, 8
      %s274 = scalar_lea.vmem %s2, %s273
      %s275 = smul.u32 4, %s21
      %p276 = scmp.lt.s32.totalorder %s20, 1
      %s277 = scalar_select %p276, %s20, 1
      %p278 = scmp.lt.s32.totalorder %s275, 3
      %s279 = scalar_select %p278, %s275, 3
      %s280 = smul.addr %s279, 4
      %s281 = smul.addr %s277, 16
      %s282 = sadd.s32 %s280, %s281
      %s283 = smul.addr %s282, 4
      %s284 = scalar_lea.vmem %s5, %s283
      %s285 = smul.u32 4, %s21
      %v287 = vld [vmem:[%s268] sm:$0xff]
      %v288 = vld [vmem:[%s268 + $0x8] sm:$0xff]
      %v289 = vld [vmem:[%s268 + $0x10] sm:$0xff]
      %v290 = vld [vmem:[%s268 + $0x18] sm:$0xff]
      %v291 = vmul.f32 %v287, %v287
      %v292 = vmul.f32 %v288, %v288
      %v293 = vmul.f32 %v289, %v289
      %v294 = vmul.f32 %v290, %v290
      %295 = vadd.xlane.f32.xlu0 %v291
      %v296 = vpop.xlane.xlu0 %295
      %297 = vadd.xlane.f32.xlu0 %v292
      %v298 = vpop.xlane.xlu0 %297
      %299 = vadd.xlane.f32.xlu0 %v293
      %v300 = vpop.xlane.xlu0 %299
      %301 = vadd.xlane.f32.xlu0 %v294
      %v302 = vpop.xlane.xlu0 %301
      %v303 = vrcp.pop 128.0
      %v304 = vmul.f32 %v296, %v303
      %v305 = vmul.f32 %v298, %v303
      %v306 = vmul.f32 %v300, %v303
      %v307 = vmul.f32 %v302, %v303
      %v308 = vadd.f32 %v304, 1e-06
      %v309 = vadd.f32 %v305, 1e-06
      %v310 = vadd.f32 %v306, 1e-06
      %v311 = vadd.f32 %v307, 1e-06
      %v312 = vrsqrt.pop %v308
      %v313 = vrsqrt.pop %v309
      %v314 = vrsqrt.pop %v310
      %v315 = vrsqrt.pop %v311
      %v316 = vmul.f32 %v287, %v312
      %v317 = vmul.f32 %v288, %v313
      %v318 = vmul.f32 %v289, %v314
      %v319 = vmul.f32 %v290, %v315
      %v320 = vld [vmem:[%s1] sm:$0x1]
      %v322 = vlaneseq
      %v323 = vshrl.u32 %v322, 7
      %v324 = vsub.s32 0, %v323
      %v325 = vrot.slane %v320, %v324
      %v327 = vmul.f32 %v316, %v325
      %v328 = vmul.f32 %v317, %v325
      %v329 = vmul.f32 %v318, %v325
      %v330 = vmul.f32 %v319, %v325
      %v331 = vld [vmem:[%s274 + $0x7] sm:$0x1]
      %v332 = vld [vmem:[%s274 + $0x6] sm:$0x1]
      %v333 = vadd.f32 %v331, 1.0
      %v334 = vlaneseq
      %v335 = vshrl.u32 %v334, 7
      %v336 = vsub.s32 0, %v335
      %v337 = vrot.slane %v333, %v336
      %v338 = vmul.f32 %v327, %v337
      %v339 = vmul.f32 %v328, %v337
      %v340 = vmul.f32 %v329, %v337
      %v341 = vmul.f32 %v330, %v337
      %v342 = vlaneseq
      %v343 = vshrl.u32 %v342, 7
      %v344 = vsub.s32 0, %v343
      %v345 = vrot.slane %v332, %v344
      %v346 = vadd.f32 %v338, %v345
      %v347 = vadd.f32 %v339, %v345
      %v348 = vadd.f32 %v340, %v345
      %v349 = vadd.f32 %v341, %v345
      %v350 = vpack.c.bf16 %v347, %v346
      %v351 = vpack.c.bf16 %v349, %v348
      %v352 = vld [vmem:[%s3] sm:$0xff]
      %v353 = vld [vmem:[%s3 + $0x8] sm:$0xff]
      %v354 = vld [vmem:[%s3 + $0x10] sm:$0xff]
      %v355 = vld [vmem:[%s3 + $0x18] sm:$0xff]
      %v356 = vld [vmem:[%s3 + $0x20] sm:$0xff]
      %v357 = vld [vmem:[%s3 + $0x28] sm:$0xff]
      %v358 = vld [vmem:[%s3 + $0x30] sm:$0xff]
      %v359 = vld [vmem:[%s3 + $0x38] sm:$0xff]
      %v360 = vld [vmem:[%s3 + $0x40] sm:$0xff]
      %v361 = vld [vmem:[%s3 + $0x48] sm:$0xff]
      %v362 = vld [vmem:[%s3 + $0x50] sm:$0xff]
      %v363 = vld [vmem:[%s3 + $0x58] sm:$0xff]
      %v364 = vld [vmem:[%s3 + $0x60] sm:$0xff]
      %v365 = vld [vmem:[%s3 + $0x68] sm:$0xff]
      %v366 = vld [vmem:[%s3 + $0x70] sm:$0xff]
      %v367 = vld [vmem:[%s3 + $0x78] sm:$0xff]
      %v368 = vld [vmem:[%s3 + $0x80] sm:$0xff]
      %v369 = vld [vmem:[%s3 + $0x88] sm:$0xff]
      %v370 = vld [vmem:[%s3 + $0x90] sm:$0xff]
      %v371 = vld [vmem:[%s3 + $0x98] sm:$0xff]
      %v372 = vld [vmem:[%s3 + $0xa0] sm:$0xff]
      %v373 = vld [vmem:[%s3 + $0xa8] sm:$0xff]
      %v374 = vld [vmem:[%s3 + $0xb0] sm:$0xff]
      %v375 = vld [vmem:[%s3 + $0xb8] sm:$0xff]
      %v376 = vld [vmem:[%s3 + $0xc0] sm:$0xff]
      %v377 = vld [vmem:[%s3 + $0xc8] sm:$0xff]
      %v378 = vld [vmem:[%s3 + $0xd0] sm:$0xff]
      %v379 = vld [vmem:[%s3 + $0xd8] sm:$0xff]
      %v380 = vld [vmem:[%s3 + $0xe0] sm:$0xff]
      %v381 = vld [vmem:[%s3 + $0xe8] sm:$0xff]
      %v382 = vld [vmem:[%s3 + $0xf0] sm:$0xff]
      %v383 = vld [vmem:[%s3 + $0xf8] sm:$0xff]
      %v384 = vld [vmem:[%s4] sm:$0xf]
      %v386 = vlaneseq
      %v387 = vshrl.u32 %v386, 7
      %v388 = vsub.s32 0, %v387
      %v389 = vrot.slane %v384, %v388
      %v390 = vlaneseq
      %v391 = vshrl.u32 %v390, 7
      %v392 = vsub.s32 1, %v391
      %v393 = vrot.slane %v384, %v392
      %v394 = vlaneseq
      %v395 = vshrl.u32 %v394, 7
      %v396 = vsub.s32 2, %v395
      %v397 = vrot.slane %v384, %v396
      %v398 = vlaneseq
      %v399 = vshrl.u32 %v398, 7
      %v400 = vsub.s32 3, %v399
      %v401 = vrot.slane %v384, %v400
      %v438 = vunpack.c.l.b16 %v352
      %v439 = vunpack.c.h.b16 %v352
      %v440 = vunpack.c.l.b16 %v353
      %v441 = vunpack.c.h.b16 %v353
      %v442 = vunpack.c.l.b16 %v354
      %v443 = vunpack.c.h.b16 %v354
      %v444 = vunpack.c.l.b16 %v355
      %v445 = vunpack.c.h.b16 %v355
      %v446 = vunpack.c.l.b16 %v356
      %v447 = vunpack.c.h.b16 %v356
      %v448 = vunpack.c.l.b16 %v357
      %v449 = vunpack.c.h.b16 %v357
      %v450 = vunpack.c.l.b16 %v358
      %v451 = vunpack.c.h.b16 %v358
      %v452 = vunpack.c.l.b16 %v359
      %v453 = vunpack.c.h.b16 %v359
      %v454 = vunpack.c.l.b16 %v360
      %v455 = vunpack.c.h.b16 %v360
      %v456 = vunpack.c.l.b16 %v361
      %v457 = vunpack.c.h.b16 %v361
      %v458 = vunpack.c.l.b16 %v362
      %v459 = vunpack.c.h.b16 %v362
      %v460 = vunpack.c.l.b16 %v363
      %v461 = vunpack.c.h.b16 %v363
      %v462 = vunpack.c.l.b16 %v364
      %v463 = vunpack.c.h.b16 %v364
      %v464 = vunpack.c.l.b16 %v365
      %v465 = vunpack.c.h.b16 %v365
      %v466 = vunpack.c.l.b16 %v366
      %v467 = vunpack.c.h.b16 %v366
      %v468 = vunpack.c.l.b16 %v367
      %v469 = vunpack.c.h.b16 %v367
      %v470 = vunpack.c.l.b16 %v368
      %v471 = vunpack.c.h.b16 %v368
      %v472 = vunpack.c.l.b16 %v369
      %v473 = vunpack.c.h.b16 %v369
      %v474 = vunpack.c.l.b16 %v370
      %v475 = vunpack.c.h.b16 %v370
      %v476 = vunpack.c.l.b16 %v371
      %v477 = vunpack.c.h.b16 %v371
      %v478 = vunpack.c.l.b16 %v372
      %v479 = vunpack.c.h.b16 %v372
      %v480 = vunpack.c.l.b16 %v373
      %v481 = vunpack.c.h.b16 %v373
      %v482 = vunpack.c.l.b16 %v374
      %v483 = vunpack.c.h.b16 %v374
      %v484 = vunpack.c.l.b16 %v375
      %v485 = vunpack.c.h.b16 %v375
      %v486 = vunpack.c.l.b16 %v376
      %v487 = vunpack.c.h.b16 %v376
      %v488 = vunpack.c.l.b16 %v377
      %v489 = vunpack.c.h.b16 %v377
      %v490 = vunpack.c.l.b16 %v378
      %v491 = vunpack.c.h.b16 %v378
      %v492 = vunpack.c.l.b16 %v379
      %v493 = vunpack.c.h.b16 %v379
      %v494 = vunpack.c.l.b16 %v380
      %v495 = vunpack.c.h.b16 %v380
      %v496 = vunpack.c.l.b16 %v381
      %v497 = vunpack.c.h.b16 %v381
      %v498 = vunpack.c.l.b16 %v382
      %v499 = vunpack.c.h.b16 %v382
      %v500 = vunpack.c.l.b16 %v383
      %v501 = vunpack.c.h.b16 %v383
      %v502 = vpack.c.b16 %v442, %v438
      %v503 = vpack.c.b16 %v443, %v439
      %v504 = vpack.c.b16 %v444, %v440
      %v505 = vpack.c.b16 %v445, %v441
      %v506 = vpack.c.b16 %v450, %v446
      %v507 = vpack.c.b16 %v451, %v447
      %v508 = vpack.c.b16 %v452, %v448
      %v509 = vpack.c.b16 %v453, %v449
      %v510 = vpack.c.b16 %v458, %v454
      %v511 = vpack.c.b16 %v459, %v455
      %v512 = vpack.c.b16 %v460, %v456
      %v513 = vpack.c.b16 %v461, %v457
      %v514 = vpack.c.b16 %v466, %v462
      %v515 = vpack.c.b16 %v467, %v463
      %v516 = vpack.c.b16 %v468, %v464
      %v517 = vpack.c.b16 %v469, %v465
      %v518 = vpack.c.b16 %v474, %v470
      %v519 = vpack.c.b16 %v475, %v471
      %v520 = vpack.c.b16 %v476, %v472
      %v521 = vpack.c.b16 %v477, %v473
      %v522 = vpack.c.b16 %v482, %v478
      %v523 = vpack.c.b16 %v483, %v479
      %v524 = vpack.c.b16 %v484, %v480
      %v525 = vpack.c.b16 %v485, %v481
      %v526 = vpack.c.b16 %v490, %v486
      %v527 = vpack.c.b16 %v491, %v487
      %v528 = vpack.c.b16 %v492, %v488
      %v529 = vpack.c.b16 %v493, %v489
      %v530 = vpack.c.b16 %v498, %v494
      %v531 = vpack.c.b16 %v499, %v495
      %v532 = vpack.c.b16 %v500, %v496
      %v533 = vpack.c.b16 %v501, %v497
      %566 = vmatprep.subr.bf16.mxu0 %v531
      %567 = vmatpush1.bf16.msra.mxu0 %v530
      %568 = vmatprep.subr.bf16.mxu0 %v527
      %569 = vmatpush1.bf16.msra.mxu0 %v526
      %570 = vmatprep.subr.bf16.mxu0 %v523
      %571 = vmatpush1.bf16.msra.mxu0 %v522
      %572 = vmatprep.subr.bf16.mxu0 %v519
      %573 = vmatpush1.bf16.msra.mxu0 %v518
      %574 = vmatprep.subr.bf16.mxu0 %v515
      %575 = vmatpush1.bf16.msra.mxu0 %v514
      %576 = vmatprep.subr.bf16.mxu0 %v511
      %577 = vmatpush1.bf16.msra.mxu0 %v510
      %578 = vmatprep.subr.bf16.mxu0 %v507
      %579 = vmatpush1.bf16.msra.mxu0 %v506
      %580 = vmatprep.subr.bf16.mxu0 %v503
      %581 = vmatpush1.bf16.msra.mxu0 %v502
      %582 = vmatprep.subr.bf16.mxu0 0
      %583 = vmatpush2.bf16.msra.mxu0 0
      %584 = vmatprep.subr.bf16.mxu0 0
      %585 = vmatpush2.bf16.msra.mxu0 0
      %586 = vmatprep.subr.bf16.mxu0 0
      %587 = vmatpush2.bf16.msra.mxu0 0
      %588 = vmatprep.subr.bf16.mxu0 0
      %589 = vmatpush2.bf16.msra.mxu0 0
      %590 = vmatprep.subr.bf16.mxu0 0
      %591 = vmatpush2.bf16.msra.mxu0 0
      %592 = vmatprep.subr.bf16.mxu0 0
      %593 = vmatpush2.bf16.msra.mxu0 0
      %594 = vmatprep.subr.bf16.mxu0 0
      %595 = vmatpush2.bf16.msra.mxu0 0
      %596 = vmatprep.subr.bf16.mxu0 0
      %597 = vmatpush2.bf16.msra.mxu0 0
      %598 = vmatprep.mubr.bf16.mxu0 0
      %599 = vmatmul.mubr.bf16.gmra.mxu0 %v350
      %v600 = vpop.f32.mrf.mxu0
      %v601 = vadd.f32 %v389, %v600
      %v602 = vpop.f32.mrf.mxu0
      %v603 = vadd.f32 %v393, %v602
      %v604 = vpop.f32.mrf.mxu0
      %v605 = vadd.f32 %v389, %v604
      %v606 = vpop.f32.mrf.mxu0
      %v607 = vadd.f32 %v393, %v606
      %608 = vmatprep.mubr.bf16.mxu0 0
      %609 = vmatmul.mubr.bf16.gmra.mxu0 %v351
      %v610 = vpop.f32.mrf.mxu0
      %v611 = vadd.f32 %v389, %v610
      %v612 = vpop.f32.mrf.mxu0
      %v613 = vadd.f32 %v393, %v612
      %v614 = vpop.f32.mrf.mxu0
      %v615 = vadd.f32 %v389, %v614
      %v616 = vpop.f32.mrf.mxu0
      %v617 = vadd.f32 %v393, %v616
      %618 = vdwg.mxu0
      %619 = vmatprep.subr.bf16.mxu0 %v533
      %620 = vmatpush1.bf16.msra.mxu0 %v532
      %621 = vmatprep.subr.bf16.mxu0 %v529
      %622 = vmatpush1.bf16.msra.mxu0 %v528
      %623 = vmatprep.subr.bf16.mxu0 %v525
      %624 = vmatpush1.bf16.msra.mxu0 %v524
      %625 = vmatprep.subr.bf16.mxu0 %v521
      %626 = vmatpush1.bf16.msra.mxu0 %v520
      %627 = vmatprep.subr.bf16.mxu0 %v517
      %628 = vmatpush1.bf16.msra.mxu0 %v516
      %629 = vmatprep.subr.bf16.mxu0 %v513
      %630 = vmatpush1.bf16.msra.mxu0 %v512
      %631 = vmatprep.subr.bf16.mxu0 %v509
      %632 = vmatpush1.bf16.msra.mxu0 %v508
      %633 = vmatprep.subr.bf16.mxu0 %v505
      %634 = vmatpush1.bf16.msra.mxu0 %v504
      %635 = vmatprep.subr.bf16.mxu0 0
      %636 = vmatpush2.bf16.msra.mxu0 0
      %637 = vmatprep.subr.bf16.mxu0 0
      %638 = vmatpush2.bf16.msra.mxu0 0
      %639 = vmatprep.subr.bf16.mxu0 0
      %640 = vmatpush2.bf16.msra.mxu0 0
      %641 = vmatprep.subr.bf16.mxu0 0
      %642 = vmatpush2.bf16.msra.mxu0 0
      %643 = vmatprep.subr.bf16.mxu0 0
      %644 = vmatpush2.bf16.msra.mxu0 0
      %645 = vmatprep.subr.bf16.mxu0 0
      %646 = vmatpush2.bf16.msra.mxu0 0
      %647 = vmatprep.subr.bf16.mxu0 0
      %648 = vmatpush2.bf16.msra.mxu0 0
      %649 = vmatprep.subr.bf16.mxu0 0
      %650 = vmatpush2.bf16.msra.mxu0 0
      %651 = vmatprep.mubr.bf16.mxu0 0
      %652 = vmatmul.mubr.bf16.gmra.mxu0 %v350
      %v653 = vpop.f32.mrf.mxu0
      %v654 = vadd.f32 %v397, %v653
      %v655 = vpop.f32.mrf.mxu0
      %v656 = vadd.f32 %v401, %v655
      %v657 = vpop.f32.mrf.mxu0
      %v658 = vadd.f32 %v397, %v657
      %v659 = vpop.f32.mrf.mxu0
      %v660 = vadd.f32 %v401, %v659
      %661 = vmatprep.mubr.bf16.mxu0 0
      %662 = vmatmul.mubr.bf16.gmra.mxu0 %v351
      %v663 = vpop.f32.mrf.mxu0
      %v664 = vadd.f32 %v397, %v663
      %v665 = vpop.f32.mrf.mxu0
      %v666 = vadd.f32 %v401, %v665
      %v667 = vpop.f32.mrf.mxu0
      %v668 = vadd.f32 %v397, %v667
      %v669 = vpop.f32.mrf.mxu0
      %v670 = vadd.f32 %v401, %v669
      %671 = vdwg.mxu0
      %v672 = vmul.f32 %v601, 0.5
      %v673 = vmul.f32 %v603, 0.5
      %v674 = vmul.f32 %v654, 0.5
      %v675 = vmul.f32 %v656, 0.5
      %v676 = vmul.f32 %v605, 0.5
      %v677 = vmul.f32 %v607, 0.5
      %v678 = vmul.f32 %v658, 0.5
      %v679 = vmul.f32 %v660, 0.5
      %v680 = vmul.f32 %v611, 0.5
      %v681 = vmul.f32 %v613, 0.5
      %v682 = vmul.f32 %v664, 0.5
      %v683 = vmul.f32 %v666, 0.5
      %v684 = vmul.f32 %v615, 0.5
      %v685 = vmul.f32 %v617, 0.5
      %v686 = vmul.f32 %v668, 0.5
      %v687 = vmul.f32 %v670, 0.5
      %v688 = vmul.f32 %v601, 0.044715
      %v689 = vmul.f32 %v603, 0.044715
      %v690 = vmul.f32 %v654, 0.044715
      %v691 = vmul.f32 %v656, 0.044715
      %v692 = vmul.f32 %v605, 0.044715
      %v693 = vmul.f32 %v607, 0.044715
      %v694 = vmul.f32 %v658, 0.044715
      %v695 = vmul.f32 %v660, 0.044715
      %v696 = vmul.f32 %v611, 0.044715
      %v697 = vmul.f32 %v613, 0.044715
      %v698 = vmul.f32 %v664, 0.044715
      %v699 = vmul.f32 %v666, 0.044715
      %v700 = vmul.f32 %v615, 0.044715
      %v701 = vmul.f32 %v617, 0.044715
      %v702 = vmul.f32 %v668, 0.044715
      %v703 = vmul.f32 %v670, 0.044715
      %v704 = vmul.f32 %v688, %v601
      %v705 = vmul.f32 %v689, %v603
      %v706 = vmul.f32 %v690, %v654
      %v707 = vmul.f32 %v691, %v656
      %v708 = vmul.f32 %v692, %v605
      %v709 = vmul.f32 %v693, %v607
      %v710 = vmul.f32 %v694, %v658
      %v711 = vmul.f32 %v695, %v660
      %v712 = vmul.f32 %v696, %v611
      %v713 = vmul.f32 %v697, %v613
      %v714 = vmul.f32 %v698, %v664
      %v715 = vmul.f32 %v699, %v666
      %v716 = vmul.f32 %v700, %v615
      %v717 = vmul.f32 %v701, %v617
      %v718 = vmul.f32 %v702, %v668
      %v719 = vmul.f32 %v703, %v670
      %v720 = vmul.f32 %v704, %v601
      %v721 = vmul.f32 %v705, %v603
      %v722 = vmul.f32 %v706, %v654
      %v723 = vmul.f32 %v707, %v656
      %v724 = vmul.f32 %v708, %v605
      %v725 = vmul.f32 %v709, %v607
      %v726 = vmul.f32 %v710, %v658
      %v727 = vmul.f32 %v711, %v660
      %v728 = vmul.f32 %v712, %v611
      %v729 = vmul.f32 %v713, %v613
      %v730 = vmul.f32 %v714, %v664
      %v731 = vmul.f32 %v715, %v666
      %v732 = vmul.f32 %v716, %v615
      %v733 = vmul.f32 %v717, %v617
      %v734 = vmul.f32 %v718, %v668
      %v735 = vmul.f32 %v719, %v670
      %v736 = vadd.f32 %v601, %v720
      %v737 = vadd.f32 %v603, %v721
      %v738 = vadd.f32 %v654, %v722
      %v739 = vadd.f32 %v656, %v723
      %v740 = vadd.f32 %v605, %v724
      %v741 = vadd.f32 %v607, %v725
      %v742 = vadd.f32 %v658, %v726
      %v743 = vadd.f32 %v660, %v727
      %v744 = vadd.f32 %v611, %v728
      %v745 = vadd.f32 %v613, %v729
      %v746 = vadd.f32 %v664, %v730
      %v747 = vadd.f32 %v666, %v731
      %v748 = vadd.f32 %v615, %v732
      %v749 = vadd.f32 %v617, %v733
      %v750 = vadd.f32 %v668, %v734
      %v751 = vadd.f32 %v670, %v735
      %v752 = vmul.f32 %v736, 0.7978846
      %v753 = vmul.f32 %v737, 0.7978846
      %v754 = vmul.f32 %v738, 0.7978846
      %v755 = vmul.f32 %v739, 0.7978846
      %v756 = vmul.f32 %v740, 0.7978846
      %v757 = vmul.f32 %v741, 0.7978846
      %v758 = vmul.f32 %v742, 0.7978846
      %v759 = vmul.f32 %v743, 0.7978846
      %v760 = vmul.f32 %v744, 0.7978846
      %v761 = vmul.f32 %v745, 0.7978846
      %v762 = vmul.f32 %v746, 0.7978846
      %v763 = vmul.f32 %v747, 0.7978846
      %v764 = vmul.f32 %v748, 0.7978846
      %v765 = vmul.f32 %v749, 0.7978846
      %v766 = vmul.f32 %v750, 0.7978846
      %v767 = vmul.f32 %v751, 0.7978846
      %v768 = vtanh.pop %v752
      %v769 = vtanh.pop %v753
      %v770 = vtanh.pop %v754
      %v771 = vtanh.pop %v755
      %v772 = vtanh.pop %v756
      %v773 = vtanh.pop %v757
      %v774 = vtanh.pop %v758
      %v775 = vtanh.pop %v759
      %v776 = vtanh.pop %v760
      %v777 = vtanh.pop %v761
      %v778 = vtanh.pop %v762
      %v779 = vtanh.pop %v763
      %v780 = vtanh.pop %v764
      %v781 = vtanh.pop %v765
      %v782 = vtanh.pop %v766
      %v783 = vtanh.pop %v767
      %v784 = vadd.f32 %v768, 1.0
      %v785 = vadd.f32 %v769, 1.0
      %v786 = vadd.f32 %v770, 1.0
      %v787 = vadd.f32 %v771, 1.0
      %v788 = vadd.f32 %v772, 1.0
      %v789 = vadd.f32 %v773, 1.0
      %v790 = vadd.f32 %v774, 1.0
      %v791 = vadd.f32 %v775, 1.0
      %v792 = vadd.f32 %v776, 1.0
      %v793 = vadd.f32 %v777, 1.0
      %v794 = vadd.f32 %v778, 1.0
      %v795 = vadd.f32 %v779, 1.0
      %v796 = vadd.f32 %v780, 1.0
      %v797 = vadd.f32 %v781, 1.0
      %v798 = vadd.f32 %v782, 1.0
      %v799 = vadd.f32 %v783, 1.0
      %v800 = vmul.f32 %v672, %v784
      %v801 = vmul.f32 %v673, %v785
      %v802 = vmul.f32 %v674, %v786
      %v803 = vmul.f32 %v675, %v787
      %v804 = vmul.f32 %v676, %v788
      %v805 = vmul.f32 %v677, %v789
      %v806 = vmul.f32 %v678, %v790
      %v807 = vmul.f32 %v679, %v791
      %v808 = vmul.f32 %v680, %v792
      %v809 = vmul.f32 %v681, %v793
      %v810 = vmul.f32 %v682, %v794
      %v811 = vmul.f32 %v683, %v795
      %v812 = vmul.f32 %v684, %v796
      %v813 = vmul.f32 %v685, %v797
      %v814 = vmul.f32 %v686, %v798
      %v815 = vmul.f32 %v687, %v799
      %v816 = vpack.c.bf16 %v804, %v800
      %v817 = vpack.c.bf16 %v805, %v801
      %v818 = vpack.c.bf16 %v806, %v802
      %v819 = vpack.c.bf16 %v807, %v803
      %v820 = vpack.c.bf16 %v812, %v808
      %v821 = vpack.c.bf16 %v813, %v809
      %v822 = vpack.c.bf16 %v814, %v810
      %v823 = vpack.c.bf16 %v815, %v811
      %v832 = vunpack.c.l.b16 %v816
      %v833 = vunpack.c.l.b16 %v817
      %v834 = vunpack.c.l.b16 %v818
      %v835 = vunpack.c.l.b16 %v819
      %v836 = vunpack.c.h.b16 %v816
      %v837 = vunpack.c.h.b16 %v817
      %v838 = vunpack.c.h.b16 %v818
      %v839 = vunpack.c.h.b16 %v819
      %v840 = vunpack.c.l.b16 %v820
      %v841 = vunpack.c.l.b16 %v821
      %v842 = vunpack.c.l.b16 %v822
      %v843 = vunpack.c.l.b16 %v823
      %v844 = vunpack.c.h.b16 %v820
      %v845 = vunpack.c.h.b16 %v821
      %v846 = vunpack.c.h.b16 %v822
      %v847 = vunpack.c.h.b16 %v823
      %v848 = vpack.c.b16 %v833, %v832
      %v849 = vpack.c.b16 %v835, %v834
      %v850 = vpack.c.b16 %v837, %v836
      %v851 = vpack.c.b16 %v839, %v838
      %v852 = vpack.c.b16 %v841, %v840
      %v853 = vpack.c.b16 %v843, %v842
      %v854 = vpack.c.b16 %v845, %v844
      %v855 = vpack.c.b16 %v847, %v846
      %864 = vst [vmem:[%s284] sm:$0xff] %v848
      %865 = vst [vmem:[%s284 + $0x8] sm:$0xff] %v849
      %866 = vst [vmem:[%s284 + $0x10] sm:$0xff] %v850
      %867 = vst [vmem:[%s284 + $0x18] sm:$0xff] %v851
      %868 = vst [vmem:[%s284 + $0x20] sm:$0xff] %v852
      %869 = vst [vmem:[%s284 + $0x28] sm:$0xff] %v853
      %870 = vst [vmem:[%s284 + $0x30] sm:$0xff] %v854
      %871 = vst [vmem:[%s284 + $0x38] sm:$0xff] %v855
      %s872 = smul.u32 4, %s21
      %p873 = scmp.lt.s32.totalorder %s20, 1
      %s874 = scalar_select %p873, %s20, 1
      %p875 = scmp.lt.s32.totalorder %s872, 3
      %s876 = scalar_select %p875, %s872, 3
      %s877 = smul.addr %s876, 4
      %s878 = smul.addr %s874, 16
      %s879 = sadd.s32 %s877, %s878
      %s880 = smul.addr %s879, 4
      %s881 = scalar_lea.vmem %s5, %s880
      // Predicated region
      $region41: #{dit_block_forward.12} parent=39 // pred_check
        %p882 = pneg %p165
      $region42: #{dit_block_forward.12} parent=39 // pred_check_branch
        %884 = sbr.rel (%p882) target = $region44
      $region43: #{dit_block_forward.12} parent=39 // pred_region
        %s885 = smul.u32 4, %s21
      $region44: #{dit_block_forward.12} parent=39 // pred_fallthru
        _
    $region40: #{dit_block_forward.12} parent=5 // pred_fallthru
      _
    %p886 = scmp.le.s32.totalorder 2, %s11
    // Predicated region
    $region45: #{dit_block_forward.12} parent=5 // pred_check
      %p887 = pneg %p886
    $region46: #{dit_block_forward.12} parent=5 // pred_check_branch
      %889 = sbr.rel (%p887) target = $region48
    $region47: #{dit_block_forward.12} parent=5 // pred_region
      %s890 = ssub.s32 %s11, 2
      // Predicated region
      $region49: #{dit_block_forward.12} parent=47 // pred_check
        %p891 = pneg %p171
      $region50: #{dit_block_forward.12} parent=47 // pred_check_branch
        %893 = sbr.rel (%p891) target = $region52
      $region51: #{dit_block_forward.12} parent=47 // pred_region
        %s894 = smul.u32 4, %s23
        %p895 = scmp.lt.s32.totalorder %s22, 1
        %s896 = scalar_select %p895, %s22, 1
        %p897 = scmp.lt.s32.totalorder %s894, 3
        %s898 = scalar_select %p897, %s894, 3
        %s899 = smul.addr %s898, 4
        %s900 = smul.addr %s896, 16
        %s901 = sadd.s32 %s899, %s900
        %s902 = smul.addr %s901, 4
        %s903 = scalar_lea.vmem %s5, %s902
      $region52: #{dit_block_forward.12} parent=47 // pred_fallthru
        _
    $region48: #{dit_block_forward.12} parent=5 // pred_fallthru
      _
  $region6: #{dit_block_forward.12} parent=0 // loop_footer
    %s15 = sadd.s32 1, %s11
  $region7: #{dit_block_forward.12} parent=0 // loop_footer_branch
    %10 = sbr.rel target = $region3
  $region8: #{dit_block_forward.12} parent=0 // loop_exit
    _

// kernel: dit_block_forward.13
$region0: #{dit_block_forward.13}
  #allocation0 [shape = 'u32[]', space=smem, size = 0x4, offset = 0x4, fixed_abs, tag = 'smem constant byte address 0x4 - core index']
  #allocation1 [shape = 'u32[144,128]{1,0:T(1,128)}', space=vmem, size = 0x12000, scoped, tag = 'internal scratch']
  %s0 = inlined_call_operand.vmem [shape: bf16[2,32,512], index: 0, kind: input, shape index: {}]
  %s1 = inlined_call_operand.vmem [shape: bf16[512,128], index: 1, kind: input, shape index: {}]
  %s2 = inlined_call_operand.vmem [shape: f32[1,128], index: 2, kind: input, shape index: {}]
  %s3 = inlined_call_operand.vmem [shape: f32[2,32,128], index: 3, kind: input, shape index: {}, may-alias: {3,5}]
  %s4 = inlined_call_operand.vmem [shape: f32[2,9,128], index: 4, kind: input, shape index: {}]
  %s5 = inlined_call_operand.vmem [shape: f32[2,32,128], index: 5, kind: output, shape index: {}, may-alias: {3,5}]
  %s6 = sld [smem:[#allocation0]]
  $region53: #{dit_block_forward.13} parent=0
    _
  %s8 = ssub.s32 1, %s6
  %s9 = scalar_select 0, %s8, %s6
  loop: start=0, step=1, limit=4
  $region2: #{dit_block_forward.13} parent=0 // loop_pre_header
    _
  $region3: #{dit_block_forward.13} parent=0 // loop_header
    %s11 = sphi 0, %s15
    %p12 = scmp.ge.s32.totalorder %s11, 4
    %s18 = sphi 0, %s30
    %s19 = sphi 0, %s26
    %s20 = sphi 0, %s18
    %s21 = sphi 0, %s19
    %s22 = sphi 0, %s20
    %s23 = sphi 0, %s21
    %s35 = sphi 0, %s37
    %s38 = sphi 0, %s35
    %s39 = sphi 0, %s38
    %s55 = sphi 0, %s39
    %s59 = sphi 0, %s59
    %s61 = sphi 0, %s59
    %s62 = sphi 0, %s61
    %s76 = sphi 0, %s62
    %s80 = sphi 0, %s80
    %s82 = sphi 0, %s80
    %s83 = sphi 0, %s82
    %s97 = sphi 0, %s83
    %s105 = sphi 0, %s107
    %s108 = sphi 0, %s105
    %s109 = sphi 0, %s108
    %s125 = sphi 0, %s109
    %s131 = sphi 0, %s133
    %s134 = sphi 0, %s131
    %s135 = sphi 0, %s134
    %s151 = sphi 0, %s135
    %s159 = sphi 0, %s161
    %s162 = sphi 0, %s159
    %s163 = sphi 0, %s162
    %s179 = sphi 0, %s163
  $region4: #{dit_block_forward.13} parent=0 // loop_header_branch
    %14 = sbr.rel (%p12) target = $region8
  $region5: #{dit_block_forward.13} parent=0 // loop_body
    %s16 = ssub.s32 %s11, 1
    %s17 = ssub.s32 %s11, 2
    %s24 = sadd.s32 1, %s19
    %p25 = scmp.ge.s32.totalorder %s24, 1
    %s26 = scalar_select %p25, 0, %s24
    %s27 = sadd.s32 1, %s18
    %s28 = scalar_select %p25, %s27, %s18
    %p29 = scmp.ge.s32.totalorder %s28, 2
    %s30 = scalar_select %p29, 0, %s28
    %s31 = ssub.s32 %s18, %s30
    %s32 = ssub.s32 %s19, %s26
    %s33 = sor.u32 %s31, %s32
    %p34 = scmp.eq.s32.totalorder %s33, 0
    %s36 = sadd.s32 %s35, 1
    %s37 = scalar_select %p34, %s35, %s36
    %p40 = pneg %p34
    %p41 = scmp.eq.s32.totalorder %s11, 1
    %p42 = por %p40, %p41
    %p43 = scmp.ne.s32.totalorder %s35, %s38
    %p44 = scmp.eq.s32.totalorder %s11, 0
    %p45 = por %p43, %p44
    %p46 = scmp.ne.s32.totalorder %s35, %s38
    %p47 = scmp.eq.s32.totalorder %s16, 1
    %p48 = por %p46, %p47
    %p49 = scmp.ne.s32.totalorder %s38, %s39
    %p50 = scmp.eq.s32.totalorder %s16, 0
    %p51 = por %p49, %p50
    %p52 = scmp.ne.s32.totalorder %s38, %s39
    %p53 = scmp.eq.s32.totalorder %s17, 1
    %p54 = por %p52, %p53
    %p56 = scmp.ne.s32.totalorder %s39, %s55
    %p57 = scmp.eq.s32.totalorder %s17, 0
    %p58 = por %p56, %p57
    %s60 = sadd.s32 %s59, 1
    %p63 = scmp.eq.s32.totalorder %s11, 1
    %p64 = scmp.ne.s32.totalorder %s59, %s61
    %p65 = scmp.eq.s32.totalorder %s11, 0
    %p66 = por %p64, %p65
    %p67 = scmp.ne.s32.totalorder %s59, %s61
    %p68 = scmp.eq.s32.totalorder %s16, 1
    %p69 = por %p67, %p68
    %p70 = scmp.ne.s32.totalorder %s61, %s62
    %p71 = scmp.eq.s32.totalorder %s16, 0
    %p72 = por %p70, %p71
    %p73 = scmp.ne.s32.totalorder %s61, %s62
    %p74 = scmp.eq.s32.totalorder %s17, 1
    %p75 = por %p73, %p74
    %p77 = scmp.ne.s32.totalorder %s62, %s76
    %p78 = scmp.eq.s32.totalorder %s17, 0
    %p79 = por %p77, %p78
    %s81 = sadd.s32 %s80, 1
    %p84 = scmp.eq.s32.totalorder %s11, 1
    %p85 = scmp.ne.s32.totalorder %s80, %s82
    %p86 = scmp.eq.s32.totalorder %s11, 0
    %p87 = por %p85, %p86
    %p88 = scmp.ne.s32.totalorder %s80, %s82
    %p89 = scmp.eq.s32.totalorder %s16, 1
    %p90 = por %p88, %p89
    %p91 = scmp.ne.s32.totalorder %s82, %s83
    %p92 = scmp.eq.s32.totalorder %s16, 0
    %p93 = por %p91, %p92
    %p94 = scmp.ne.s32.totalorder %s82, %s83
    %p95 = scmp.eq.s32.totalorder %s17, 1
    %p96 = por %p94, %p95
    %p98 = scmp.ne.s32.totalorder %s83, %s97
    %p99 = scmp.eq.s32.totalorder %s17, 0
    %p100 = por %p98, %p99
    %s101 = ssub.s32 %s18, %s30
    %s102 = ssub.s32 %s19, %s26
    %s103 = sor.u32 %s101, %s102
    %p104 = scmp.eq.s32.totalorder %s103, 0
    %s106 = sadd.s32 %s105, 1
    %s107 = scalar_select %p104, %s105, %s106
    %p110 = pneg %p104
    %p111 = scmp.eq.s32.totalorder %s11, 1
    %p112 = por %p110, %p111
    %p113 = scmp.ne.s32.totalorder %s105, %s108
    %p114 = scmp.eq.s32.totalorder %s11, 0
    %p115 = por %p113, %p114
    %p116 = scmp.ne.s32.totalorder %s105, %s108
    %p117 = scmp.eq.s32.totalorder %s16, 1
    %p118 = por %p116, %p117
    %p119 = scmp.ne.s32.totalorder %s108, %s109
    %p120 = scmp.eq.s32.totalorder %s16, 0
    %p121 = por %p119, %p120
    %p122 = scmp.ne.s32.totalorder %s108, %s109
    %p123 = scmp.eq.s32.totalorder %s17, 1
    %p124 = por %p122, %p123
    %p126 = scmp.ne.s32.totalorder %s109, %s125
    %p127 = scmp.eq.s32.totalorder %s17, 0
    %p128 = por %p126, %p127
    %s129 = ssub.s32 %s18, %s30
    %p130 = scmp.eq.s32.totalorder %s129, 0
    %s132 = sadd.s32 %s131, 1
    %s133 = scalar_select %p130, %s131, %s132
    %p136 = pneg %p130
    %p137 = scmp.eq.s32.totalorder %s11, 1
    %p138 = por %p136, %p137
    %p139 = scmp.ne.s32.totalorder %s131, %s134
    %p140 = scmp.eq.s32.totalorder %s11, 0
    %p141 = por %p139, %p140
    %p142 = scmp.ne.s32.totalorder %s131, %s134
    %p143 = scmp.eq.s32.totalorder %s16, 1
    %p144 = por %p142, %p143
    %p145 = scmp.ne.s32.totalorder %s134, %s135
    %p146 = scmp.eq.s32.totalorder %s16, 0
    %p147 = por %p145, %p146
    %p148 = scmp.ne.s32.totalorder %s134, %s135
    %p149 = scmp.eq.s32.totalorder %s17, 1
    %p150 = por %p148, %p149
    %p152 = scmp.ne.s32.totalorder %s135, %s151
    %p153 = scmp.eq.s32.totalorder %s17, 0
    %p154 = por %p152, %p153
    %s155 = ssub.s32 %s18, %s30
    %s156 = ssub.s32 %s19, %s26
    %s157 = sor.u32 %s155, %s156
    %p158 = scmp.eq.s32.totalorder %s157, 0
    %s160 = sadd.s32 %s159, 1
    %s161 = scalar_select %p158, %s159, %s160
    %p164 = pneg %p158
    %p165 = scmp.eq.s32.totalorder %s11, 1
    %p166 = por %p164, %p165
    %p167 = scmp.ne.s32.totalorder %s159, %s162
    %p168 = scmp.eq.s32.totalorder %s11, 0
    %p169 = por %p167, %p168
    %p170 = scmp.ne.s32.totalorder %s159, %s162
    %p171 = scmp.eq.s32.totalorder %s16, 1
    %p172 = por %p170, %p171
    %p173 = scmp.ne.s32.totalorder %s162, %s163
    %p174 = scmp.eq.s32.totalorder %s16, 0
    %p175 = por %p173, %p174
    %p176 = scmp.ne.s32.totalorder %s162, %s163
    %p177 = scmp.eq.s32.totalorder %s17, 1
    %p178 = por %p176, %p177
    %p180 = scmp.ne.s32.totalorder %s163, %s179
    %p181 = scmp.eq.s32.totalorder %s17, 0
    %p182 = por %p180, %p181
    %p183 = scmp.le.s32.totalorder 1, %s11
    %p184 = scmp.lt.s32.totalorder %s11, 3
    %p185 = pnand %p183, %p184
    %p186 = pneg %p185
    // Predicated region
    $region9: #{dit_block_forward.13} parent=5 // pred_check
      _
    $region10: #{dit_block_forward.13} parent=5 // pred_check_branch
      %188 = sbr.rel (%p185) target = $region12
    $region11: #{dit_block_forward.13} parent=5 // pred_region
      %s189 = ssub.s32 %s11, 1
      // Predicated region
      $region13: #{dit_block_forward.13} parent=11 // pred_check
        %p190 = pneg %p72
      $region14: #{dit_block_forward.13} parent=11 // pred_check_branch
        %192 = sbr.rel (%p190) target = $region16
      $region15: #{dit_block_forward.13} parent=11 // pred_region
        _
      $region16: #{dit_block_forward.13} parent=11 // pred_fallthru
        _
      // Predicated region
      $region17: #{dit_block_forward.13} parent=11 // pred_check
        %p193 = pneg %p93
      $region18: #{dit_block_forward.13} parent=11 // pred_check_branch
        %195 = sbr.rel (%p193) target = $region20
      $region19: #{dit_block_forward.13} parent=11 // pred_region
        _
      $region20: #{dit_block_forward.13} parent=11 // pred_fallthru
        _
    $region12: #{dit_block_forward.13} parent=5 // pred_fallthru
      _
    %p196 = scmp.lt.s32.totalorder %s11, 2
    // Predicated region
    $region21: #{dit_block_forward.13} parent=5 // pred_check
      %p197 = pneg %p196
    $region22: #{dit_block_forward.13} parent=5 // pred_check_branch
      %199 = sbr.rel (%p197) target = $region24
    $region23: #{dit_block_forward.13} parent=5 // pred_region
      // Predicated region
      $region25: #{dit_block_forward.13} parent=23 // pred_check
        %p200 = pneg %p45
      $region26: #{dit_block_forward.13} parent=23 // pred_check_branch
        %202 = sbr.rel (%p200) target = $region28
      $region27: #{dit_block_forward.13} parent=23 // pred_region
        %s203 = smul.u32 4, %s19
        %p204 = scmp.lt.s32.totalorder %s18, 1
        %s205 = scalar_select %p204, %s18, 1
        %p206 = scmp.lt.s32.totalorder %s203, 3
        %s207 = scalar_select %p206, %s203, 3
        %s208 = smul.addr %s207, 4
        %s209 = smul.addr %s205, 16
        %s210 = sadd.s32 %s208, %s209
        %s211 = smul.addr %s210, 4
        %s212 = scalar_lea.vmem %s0, %s211
        %s213 = smul.u32 4, %s19
      $region28: #{dit_block_forward.13} parent=23 // pred_fallthru
        _
      // Predicated region
      $region29: #{dit_block_forward.13} parent=23 // pred_check
        %p214 = pneg %p115
      $region30: #{dit_block_forward.13} parent=23 // pred_check_branch
        %216 = sbr.rel (%p214) target = $region32
      $region31: #{dit_block_forward.13} parent=23 // pred_region
        %s217 = smul.u32 4, %s19
        %p218 = scmp.lt.s32.totalorder %s18, 1
        %s219 = scalar_select %p218, %s18, 1
        %p220 = scmp.lt.s32.totalorder %s217, 3
        %s221 = scalar_select %p220, %s217, 3
        %s222 = smul.addr %s219, 4
        %s223 = sadd.s32 %s221, %s222
        %s224 = smul.addr %s223, 8
        %s225 = scalar_lea.vmem %s3, %s224
        %s226 = smul.u32 4, %s19
      $region32: #{dit_block_forward.13} parent=23 // pred_fallthru
        _
      // Predicated region
      $region33: #{dit_block_forward.13} parent=23 // pred_check
        %p227 = pneg %p141
      $region34: #{dit_block_forward.13} parent=23 // pred_check_branch
        %229 = sbr.rel (%p227) target = $region36
      $region35: #{dit_block_forward.13} parent=23 // pred_region
        %p230 = scmp.lt.s32.totalorder %s18, 1
        %s231 = scalar_select %p230, %s18, 1
        %s232 = smul.addr %s231, 2
        %s233 = smul.addr %s232, 8
        %s234 = scalar_lea.vmem %s4, %s233
      $region36: #{dit_block_forward.13} parent=23 // pred_fallthru
        _
    $region24: #{dit_block_forward.13} parent=5 // pred_fallthru
      _
    %p235 = scmp.le.s32.totalorder 1, %s11
    %p236 = scmp.lt.s32.totalorder %s11, 3
    %p237 = pnand %p235, %p236
    %p238 = pneg %p237
    // Predicated region
    $region37: #{dit_block_forward.13} parent=5 // pred_check
      _
    $region38: #{dit_block_forward.13} parent=5 // pred_check_branch
      %240 = sbr.rel (%p237) target = $region40
    $region39: #{dit_block_forward.13} parent=5 // pred_region
      %s241 = ssub.s32 %s11, 1
      %s242 = smul.u32 4, %s21
      %p243 = scmp.lt.s32.totalorder %s20, 1
      %s244 = scalar_select %p243, %s20, 1
      %p245 = scmp.lt.s32.totalorder %s242, 3
      %s246 = scalar_select %p245, %s242, 3
      %s247 = smul.addr %s246, 4
      %s248 = smul.addr %s244, 16
      %s249 = sadd.s32 %s247, %s248
      %s250 = smul.addr %s249, 4
      %s251 = scalar_lea.vmem %s0, %s250
      %p252 = pneg %p51
      %p253 = pneg %p48
      %p254 = pneg %p72
      %p255 = pneg %p69
      %p256 = pneg %p93
      %p257 = pneg %p90
      %s258 = smul.u32 4, %s21
      %p259 = scmp.lt.s32.totalorder %s20, 1
      %s260 = scalar_select %p259, %s20, 1
      %p261 = scmp.lt.s32.totalorder %s258, 3
      %s262 = scalar_select %p261, %s258, 3
      %s263 = smul.addr %s260, 4
      %s264 = sadd.s32 %s262, %s263
      %s265 = smul.addr %s264, 8
      %s266 = scalar_lea.vmem %s3, %s265
      %p267 = pneg %p121
      %p268 = pneg %p118
      %p269 = scmp.lt.s32.totalorder %s20, 1
      %s270 = scalar_select %p269, %s20, 1
      %s271 = smul.addr %s270, 2
      %s272 = smul.addr %s271, 8
      %s273 = scalar_lea.vmem %s4, %s272
      %p274 = pneg %p147
      %p275 = pneg %p144
      %p276 = pneg %p175
      %p277 = pneg %p172
      %s278 = smul.u32 4, %s21
      %p279 = scmp.lt.s32.totalorder %s20, 1
      %s280 = scalar_select %p279, %s20, 1
      %p281 = scmp.lt.s32.totalorder %s278, 3
      %s282 = scalar_select %p281, %s278, 3
      %s283 = smul.addr %s280, 4
      %s284 = sadd.s32 %s282, %s283
      %s285 = smul.addr %s284, 8
      %s286 = scalar_lea.vmem %s5, %s285
      %s287 = smul.u32 4, %s21
      %p288 = scmp.lt.s32.totalorder %s20, 1
      %s289 = scalar_select %p288, %s20, 1
      %p290 = scmp.lt.s32.totalorder %s287, 3
      %s291 = scalar_select %p290, %s287, 3
      %s292 = smul.addr %s291, 4
      %s293 = smul.addr %s289, 16
      %s294 = sadd.s32 %s292, %s293
      %s295 = smul.addr %s294, 4
      %s296 = scalar_lea.vmem %s0, %s295
      %s297 = smul.u32 4, %s21
      %s298 = smul.u32 4, %s21
      %p299 = scmp.lt.s32.totalorder %s20, 1
      %s300 = scalar_select %p299, %s20, 1
      %p301 = scmp.lt.s32.totalorder %s298, 3
      %s302 = scalar_select %p301, %s298, 3
      %s303 = smul.addr %s300, 4
      %s304 = sadd.s32 %s302, %s303
      %s305 = smul.addr %s304, 8
      %s306 = scalar_lea.vmem %s3, %s305
      %s307 = smul.u32 4, %s21
      %p308 = scmp.lt.s32.totalorder %s20, 1
      %s309 = scalar_select %p308, %s20, 1
      %s310 = smul.addr %s309, 2
      %s311 = smul.addr %s310, 8
      %s312 = scalar_lea.vmem %s4, %s311
      %s313 = smul.u32 4, %s21
      %p314 = scmp.lt.s32.totalorder %s20, 1
      %s315 = scalar_select %p314, %s20, 1
      %p316 = scmp.lt.s32.totalorder %s313, 3
      %s317 = scalar_select %p316, %s313, 3
      %s318 = smul.addr %s315, 4
      %s319 = sadd.s32 %s317, %s318
      %s320 = smul.addr %s319, 8
      %s321 = scalar_lea.vmem %s5, %s320
      %s322 = smul.u32 4, %s21
      %v324 = vld [vmem:[%s296] sm:$0xff]
      %v325 = vld [vmem:[%s296 + $0x8] sm:$0xff]
      %v326 = vld [vmem:[%s296 + $0x10] sm:$0xff]
      %v327 = vld [vmem:[%s296 + $0x18] sm:$0xff]
      %v328 = vld [vmem:[%s296 + $0x20] sm:$0xff]
      %v329 = vld [vmem:[%s296 + $0x28] sm:$0xff]
      %v330 = vld [vmem:[%s296 + $0x30] sm:$0xff]
      %v331 = vld [vmem:[%s296 + $0x38] sm:$0xff]
      %v332 = vld [vmem:[%s1] sm:$0xf]
      %v333 = vld [vmem:[%s1 + $0x4] sm:$0xf]
      %v334 = vld [vmem:[%s1 + $0x8] sm:$0xf]
      %v335 = vld [vmem:[%s1 + $0xc] sm:$0xf]
      %v336 = vld [vmem:[%s1 + $0x10] sm:$0xf]
      %v337 = vld [vmem:[%s1 + $0x14] sm:$0xf]
      %v338 = vld [vmem:[%s1 + $0x18] sm:$0xf]
      %v339 = vld [vmem:[%s1 + $0x1c] sm:$0xf]
      %v340 = vld [vmem:[%s1 + $0x20] sm:$0xf]
      %v341 = vld [vmem:[%s1 + $0x24] sm:$0xf]
      %v342 = vld [vmem:[%s1 + $0x28] sm:$0xf]
      %v343 = vld [vmem:[%s1 + $0x2c] sm:$0xf]
      %v344 = vld [vmem:[%s1 + $0x30] sm:$0xf]
      %v345 = vld [vmem:[%s1 + $0x34] sm:$0xf]
      %v346 = vld [vmem:[%s1 + $0x38] sm:$0xf]
      %v347 = vld [vmem:[%s1 + $0x3c] sm:$0xf]
      %v348 = vld [vmem:[%s1 + $0x40] sm:$0xf]
      %v349 = vld [vmem:[%s1 + $0x44] sm:$0xf]
      %v350 = vld [vmem:[%s1 + $0x48] sm:$0xf]
      %v351 = vld [vmem:[%s1 + $0x4c] sm:$0xf]
      %v352 = vld [vmem:[%s1 + $0x50] sm:$0xf]
      %v353 = vld [vmem:[%s1 + $0x54] sm:$0xf]
      %v354 = vld [vmem:[%s1 + $0x58] sm:$0xf]
      %v355 = vld [vmem:[%s1 + $0x5c] sm:$0xf]
      %v356 = vld [vmem:[%s1 + $0x60] sm:$0xf]
      %v357 = vld [vmem:[%s1 + $0x64] sm:$0xf]
      %v358 = vld [vmem:[%s1 + $0x68] sm:$0xf]
      %v359 = vld [vmem:[%s1 + $0x6c] sm:$0xf]
      %v360 = vld [vmem:[%s1 + $0x70] sm:$0xf]
      %v361 = vld [vmem:[%s1 + $0x74] sm:$0xf]
      %v362 = vld [vmem:[%s1 + $0x78] sm:$0xf]
      %v363 = vld [vmem:[%s1 + $0x7c] sm:$0xf]
      %v364 = vld [vmem:[%s1 + $0x80] sm:$0xf]
      %v365 = vld [vmem:[%s1 + $0x84] sm:$0xf]
      %v366 = vld [vmem:[%s1 + $0x88] sm:$0xf]
      %v367 = vld [vmem:[%s1 + $0x8c] sm:$0xf]
      %v368 = vld [vmem:[%s1 + $0x90] sm:$0xf]
      %v369 = vld [vmem:[%s1 + $0x94] sm:$0xf]
      %v370 = vld [vmem:[%s1 + $0x98] sm:$0xf]
      %v371 = vld [vmem:[%s1 + $0x9c] sm:$0xf]
      %v372 = vld [vmem:[%s1 + $0xa0] sm:$0xf]
      %v373 = vld [vmem:[%s1 + $0xa4] sm:$0xf]
      %v374 = vld [vmem:[%s1 + $0xa8] sm:$0xf]
      %v375 = vld [vmem:[%s1 + $0xac] sm:$0xf]
      %v376 = vld [vmem:[%s1 + $0xb0] sm:$0xf]
      %v377 = vld [vmem:[%s1 + $0xb4] sm:$0xf]
      %v378 = vld [vmem:[%s1 + $0xb8] sm:$0xf]
      %v379 = vld [vmem:[%s1 + $0xbc] sm:$0xf]
      %v380 = vld [vmem:[%s1 + $0xc0] sm:$0xf]
      %v381 = vld [vmem:[%s1 + $0xc4] sm:$0xf]
      %v382 = vld [vmem:[%s1 + $0xc8] sm:$0xf]
      %v383 = vld [vmem:[%s1 + $0xcc] sm:$0xf]
      %v384 = vld [vmem:[%s1 + $0xd0] sm:$0xf]
      %v385 = vld [vmem:[%s1 + $0xd4] sm:$0xf]
      %v386 = vld [vmem:[%s1 + $0xd8] sm:$0xf]
      %v387 = vld [vmem:[%s1 + $0xdc] sm:$0xf]
      %v388 = vld [vmem:[%s1 + $0xe0] sm:$0xf]
      %v389 = vld [vmem:[%s1 + $0xe4] sm:$0xf]
      %v390 = vld [vmem:[%s1 + $0xe8] sm:$0xf]
      %v391 = vld [vmem:[%s1 + $0xec] sm:$0xf]
      %v392 = vld [vmem:[%s1 + $0xf0] sm:$0xf]
      %v393 = vld [vmem:[%s1 + $0xf4] sm:$0xf]
      %v394 = vld [vmem:[%s1 + $0xf8] sm:$0xf]
      %v395 = vld [vmem:[%s1 + $0xfc] sm:$0xf]
      %v396 = vld [vmem:[%s2] sm:$0x1]
      %v398 = vlaneseq
      %v399 = vshrl.u32 %v398, 7
      %v400 = vsub.s32 0, %v399
      %v401 = vrot.slane %v396, %v400
      %v411 = vunpack.c.l.b16 %v324
      %v412 = vunpack.c.h.b16 %v324
      %v413 = vunpack.c.l.b16 %v325
      %v414 = vunpack.c.h.b16 %v325
      %v415 = vunpack.c.l.b16 %v326
      %v416 = vunpack.c.h.b16 %v326
      %v417 = vunpack.c.l.b16 %v327
      %v418 = vunpack.c.h.b16 %v327
      %v419 = vunpack.c.l.b16 %v328
      %v420 = vunpack.c.h.b16 %v328
      %v421 = vunpack.c.l.b16 %v329
      %v422 = vunpack.c.h.b16 %v329
      %v423 = vunpack.c.l.b16 %v330
      %v424 = vunpack.c.h.b16 %v330
      %v425 = vunpack.c.l.b16 %v331
      %v426 = vunpack.c.h.b16 %v331
      %v427 = vpack.c.b16 %v415, %v411
      %v428 = vpack.c.b16 %v416, %v412
      %v429 = vpack.c.b16 %v417, %v413
      %v430 = vpack.c.b16 %v418, %v414
      %v431 = vpack.c.b16 %v423, %v419
      %v432 = vpack.c.b16 %v424, %v420
      %v433 = vpack.c.b16 %v425, %v421
      %v434 = vpack.c.b16 %v426, %v422
      %v507 = vunpack.c.l.b16 %v332
      %v508 = vunpack.c.l.b16 %v333
      %v509 = vunpack.c.l.b16 %v334
      %v510 = vunpack.c.l.b16 %v335
      %v511 = vunpack.c.l.b16 %v336
      %v512 = vunpack.c.l.b16 %v337
      %v513 = vunpack.c.l.b16 %v338
      %v514 = vunpack.c.l.b16 %v339
      %v515 = vunpack.c.l.b16 %v340
      %v516 = vunpack.c.l.b16 %v341
      %v517 = vunpack.c.l.b16 %v342
      %v518 = vunpack.c.l.b16 %v343
      %v519 = vunpack.c.l.b16 %v344
      %v520 = vunpack.c.l.b16 %v345
      %v521 = vunpack.c.l.b16 %v346
      %v522 = vunpack.c.l.b16 %v347
      %v523 = vunpack.c.l.b16 %v348
      %v524 = vunpack.c.l.b16 %v349
      %v525 = vunpack.c.l.b16 %v350
      %v526 = vunpack.c.l.b16 %v351
      %v527 = vunpack.c.l.b16 %v352
      %v528 = vunpack.c.l.b16 %v353
      %v529 = vunpack.c.l.b16 %v354
      %v530 = vunpack.c.l.b16 %v355
      %v531 = vunpack.c.l.b16 %v356
      %v532 = vunpack.c.l.b16 %v357
      %v533 = vunpack.c.l.b16 %v358
      %v534 = vunpack.c.l.b16 %v359
      %v535 = vunpack.c.l.b16 %v360
      %v536 = vunpack.c.l.b16 %v361
      %v537 = vunpack.c.l.b16 %v362
      %v538 = vunpack.c.l.b16 %v363
      %v539 = vunpack.c.l.b16 %v364
      %v540 = vunpack.c.l.b16 %v365
      %v541 = vunpack.c.l.b16 %v366
      %v542 = vunpack.c.l.b16 %v367
      %v543 = vunpack.c.l.b16 %v368
      %v544 = vunpack.c.l.b16 %v369
      %v545 = vunpack.c.l.b16 %v370
      %v546 = vunpack.c.l.b16 %v371
      %v547 = vunpack.c.l.b16 %v372
      %v548 = vunpack.c.l.b16 %v373
      %v549 = vunpack.c.l.b16 %v374
      %v550 = vunpack.c.l.b16 %v375
      %v551 = vunpack.c.l.b16 %v376
      %v552 = vunpack.c.l.b16 %v377
      %v553 = vunpack.c.l.b16 %v378
      %v554 = vunpack.c.l.b16 %v379
      %v555 = vunpack.c.l.b16 %v380
      %v556 = vunpack.c.l.b16 %v381
      %v557 = vunpack.c.l.b16 %v382
      %v558 = vunpack.c.l.b16 %v383
      %v559 = vunpack.c.l.b16 %v384
      %v560 = vunpack.c.l.b16 %v385
      %v561 = vunpack.c.l.b16 %v386
      %v562 = vunpack.c.l.b16 %v387
      %v563 = vunpack.c.l.b16 %v388
      %v564 = vunpack.c.l.b16 %v389
      %v565 = vunpack.c.l.b16 %v390
      %v566 = vunpack.c.l.b16 %v391
      %v567 = vunpack.c.l.b16 %v392
      %v568 = vunpack.c.l.b16 %v393
      %v569 = vunpack.c.l.b16 %v394
      %v570 = vunpack.c.l.b16 %v395
      %v571 = vpack.c.b16 %v508, %v507
      %v572 = vpack.c.b16 %v510, %v509
      %v573 = vpack.c.b16 %v512, %v511
      %v574 = vpack.c.b16 %v514, %v513
      %v575 = vpack.c.b16 %v516, %v515
      %v576 = vpack.c.b16 %v518, %v517
      %v577 = vpack.c.b16 %v520, %v519
      %v578 = vpack.c.b16 %v522, %v521
      %v579 = vpack.c.b16 %v524, %v523
      %v580 = vpack.c.b16 %v526, %v525
      %v581 = vpack.c.b16 %v528, %v527
      %v582 = vpack.c.b16 %v530, %v529
      %v583 = vpack.c.b16 %v532, %v531
      %v584 = vpack.c.b16 %v534, %v533
      %v585 = vpack.c.b16 %v536, %v535
      %v586 = vpack.c.b16 %v538, %v537
      %v587 = vpack.c.b16 %v540, %v539
      %v588 = vpack.c.b16 %v542, %v541
      %v589 = vpack.c.b16 %v544, %v543
      %v590 = vpack.c.b16 %v546, %v545
      %v591 = vpack.c.b16 %v548, %v547
      %v592 = vpack.c.b16 %v550, %v549
      %v593 = vpack.c.b16 %v552, %v551
      %v594 = vpack.c.b16 %v554, %v553
      %v595 = vpack.c.b16 %v556, %v555
      %v596 = vpack.c.b16 %v558, %v557
      %v597 = vpack.c.b16 %v560, %v559
      %v598 = vpack.c.b16 %v562, %v561
      %v599 = vpack.c.b16 %v564, %v563
      %v600 = vpack.c.b16 %v566, %v565
      %v601 = vpack.c.b16 %v568, %v567
      %v602 = vpack.c.b16 %v570, %v569
      %635 = vmatprep.subr.bf16.mxu0 0
      %636 = vmatpush1.bf16.msra.mxu0 %v578
      %637 = vmatprep.subr.bf16.mxu0 0
      %638 = vmatpush1.bf16.msra.mxu0 %v577
      %639 = vmatprep.subr.bf16.mxu0 0
      %640 = vmatpush1.bf16.msra.mxu0 %v576
      %641 = vmatprep.subr.bf16.mxu0 0
      %642 = vmatpush1.bf16.msra.mxu0 %v575
      %643 = vmatprep.subr.bf16.mxu0 0
      %644 = vmatpush1.bf16.msra.mxu0 %v574
      %645 = vmatprep.subr.bf16.mxu0 0
      %646 = vmatpush1.bf16.msra.mxu0 %v573
      %647 = vmatprep.subr.bf16.mxu0 0
      %648 = vmatpush1.bf16.msra.mxu0 %v572
      %649 = vmatprep.subr.bf16.mxu0 0
      %650 = vmatpush1.bf16.msra.mxu0 %v571
      %651 = vmatprep.subr.bf16.mxu0 0
      %652 = vmatpush2.bf16.msra.mxu0 %v586
      %653 = vmatprep.subr.bf16.mxu0 0
      %654 = vmatpush2.bf16.msra.mxu0 %v585
      %655 = vmatprep.subr.bf16.mxu0 0
      %656 = vmatpush2.bf16.msra.mxu0 %v584
      %657 = vmatprep.subr.bf16.mxu0 0
      %658 = vmatpush2.bf16.msra.mxu0 %v583
      %659 = vmatprep.subr.bf16.mxu0 0
      %660 = vmatpush2.bf16.msra.mxu0 %v582
      %661 = vmatprep.subr.bf16.mxu0 0
      %662 = vmatpush2.bf16.msra.mxu0 %v581
      %663 = vmatprep.subr.bf16.mxu0 0
      %664 = vmatpush2.bf16.msra.mxu0 %v580
      %665 = vmatprep.subr.bf16.mxu0 0
      %666 = vmatpush2.bf16.msra.mxu0 %v579
      %667 = vmatprep.mubr.bf16.mxu0 %v428
      %668 = vmatmul.mubr.bf16.gmra.mxu0 %v427
      %v669 = vpop.f32.mrf.mxu0
      %v670 = vadd.f32 %v401, %v669
      %v671 = vpop.f32.mrf.mxu0
      %v672 = vpop.f32.mrf.mxu0
      %v673 = vadd.f32 %v401, %v672
      %v674 = vpop.f32.mrf.mxu0
      %675 = vmatprep.mubr.bf16.mxu0 %v432
      %676 = vmatmul.mubr.bf16.gmra.mxu0 %v431
      %v677 = vpop.f32.mrf.mxu0
      %v678 = vadd.f32 %v401, %v677
      %v679 = vpop.f32.mrf.mxu0
      %v680 = vpop.f32.mrf.mxu0
      %v681 = vadd.f32 %v401, %v680
      %v682 = vpop.f32.mrf.mxu0
      %683 = vdwg.mxu0
      %684 = vmatprep.subr.bf16.mxu0 0
      %685 = vmatpush1.bf16.msra.mxu0 %v594
      %686 = vmatprep.subr.bf16.mxu0 0
      %687 = vmatpush1.bf16.msra.mxu0 %v593
      %688 = vmatprep.subr.bf16.mxu0 0
      %689 = vmatpush1.bf16.msra.mxu0 %v592
      %690 = vmatprep.subr.bf16.mxu0 0
      %691 = vmatpush1.bf16.msra.mxu0 %v591
      %692 = vmatprep.subr.bf16.mxu0 0
      %693 = vmatpush1.bf16.msra.mxu0 %v590
      %694 = vmatprep.subr.bf16.mxu0 0
      %695 = vmatpush1.bf16.msra.mxu0 %v589
      %696 = vmatprep.subr.bf16.mxu0 0
      %697 = vmatpush1.bf16.msra.mxu0 %v588
      %698 = vmatprep.subr.bf16.mxu0 0
      %699 = vmatpush1.bf16.msra.mxu0 %v587
      %700 = vmatprep.subr.bf16.mxu0 0
      %701 = vmatpush2.bf16.msra.mxu0 %v602
      %702 = vmatprep.subr.bf16.mxu0 0
      %703 = vmatpush2.bf16.msra.mxu0 %v601
      %704 = vmatprep.subr.bf16.mxu0 0
      %705 = vmatpush2.bf16.msra.mxu0 %v600
      %706 = vmatprep.subr.bf16.mxu0 0
      %707 = vmatpush2.bf16.msra.mxu0 %v599
      %708 = vmatprep.subr.bf16.mxu0 0
      %709 = vmatpush2.bf16.msra.mxu0 %v598
      %710 = vmatprep.subr.bf16.mxu0 0
      %711 = vmatpush2.bf16.msra.mxu0 %v597
      %712 = vmatprep.subr.bf16.mxu0 0
      %713 = vmatpush2.bf16.msra.mxu0 %v596
      %714 = vmatprep.subr.bf16.mxu0 0
      %715 = vmatpush2.bf16.msra.mxu0 %v595
      %716 = vmatprep.mubr.bf16.mxu0 %v430
      %717 = vmatmul.mubr.bf16.gmra.mxu0 %v429
      %v718 = vpop.f32.mrf.mxu0
      %v719 = vadd.f32 %v670, %v718
      %v720 = vpop.f32.mrf.mxu0
      %v721 = vpop.f32.mrf.mxu0
      %v722 = vadd.f32 %v673, %v721
      %v723 = vpop.f32.mrf.mxu0
      %724 = vmatprep.mubr.bf16.mxu0 %v434
      %725 = vmatmul.mubr.bf16.gmra.mxu0 %v433
      %v726 = vpop.f32.mrf.mxu0
      %v727 = vadd.f32 %v678, %v726
      %v728 = vpop.f32.mrf.mxu0
      %v729 = vpop.f32.mrf.mxu0
      %v730 = vadd.f32 %v681, %v729
      %v731 = vpop.f32.mrf.mxu0
      %732 = vdwg.mxu0
      %v733 = vld [vmem:[%s312 + $0x8] sm:$0x1]
      %v734 = vld [vmem:[%s306] sm:$0xff]
      %v735 = vld [vmem:[%s306 + $0x8] sm:$0xff]
      %v736 = vld [vmem:[%s306 + $0x10] sm:$0xff]
      %v737 = vld [vmem:[%s306 + $0x18] sm:$0xff]
      %v738 = vlaneseq
      %v739 = vshrl.u32 %v738, 7
      %v740 = vsub.s32 0, %v739
      %v741 = vrot.slane %v733, %v740
      %v742 = vmul.f32 %v719, %v741
      %v743 = vmul.f32 %v722, %v741
      %v744 = vmul.f32 %v727, %v741
      %v745 = vmul.f32 %v730, %v741
      %v746 = vadd.f32 %v734, %v742
      %v747 = vadd.f32 %v735, %v743
      %v748 = vadd.f32 %v736, %v744
      %v749 = vadd.f32 %v737, %v745
      %750 = vst [vmem:[%s321] sm:$0xff] %v746
      %751 = vst [vmem:[%s321 + $0x8] sm:$0xff] %v747
      %752 = vst [vmem:[%s321 + $0x10] sm:$0xff] %v748
      %753 = vst [vmem:[%s321 + $0x18] sm:$0xff] %v749
      %s754 = smul.u32 4, %s21
      %p755 = scmp.lt.s32.totalorder %s20, 1
      %s756 = scalar_select %p755, %s20, 1
      %p757 = scmp.lt.s32.totalorder %s754, 3
      %s758 = scalar_select %p757, %s754, 3
      %s759 = smul.addr %s756, 4
      %s760 = sadd.s32 %s758, %s759
      %s761 = smul.addr %s760, 8
      %s762 = scalar_lea.vmem %s5, %s761
      // Predicated region
      $region41: #{dit_block_forward.13} parent=39 // pred_check
        %p763 = pneg %p172
      $region42: #{dit_block_forward.13} parent=39 // pred_check_branch
        %765 = sbr.rel (%p763) target = $region44
      $region43: #{dit_block_forward.13} parent=39 // pred_region
        %s766 = smul.u32 4, %s21
      $region44: #{dit_block_forward.13} parent=39 // pred_fallthru
        _
    $region40: #{dit_block_forward.13} parent=5 // pred_fallthru
      _
    %p767 = scmp.le.s32.totalorder 2, %s11
    // Predicated region
    $region45: #{dit_block_forward.13} parent=5 // pred_check
      %p768 = pneg %p767
    $region46: #{dit_block_forward.13} parent=5 // pred_check_branch
      %770 = sbr.rel (%p768) target = $region48
    $region47: #{dit_block_forward.13} parent=5 // pred_region
      %s771 = ssub.s32 %s11, 2
      // Predicated region
      $region49: #{dit_block_forward.13} parent=47 // pred_check
        %p772 = pneg %p178
      $region50: #{dit_block_forward.13} parent=47 // pred_check_branch
        %774 = sbr.rel (%p772) target = $region52
      $region51: #{dit_block_forward.13} parent=47 // pred_region
        %s775 = smul.u32 4, %s23
        %p776 = scmp.lt.s32.totalorder %s22, 1
        %s777 = scalar_select %p776, %s22, 1
        %p778 = scmp.lt.s32.totalorder %s775, 3
        %s779 = scalar_select %p778, %s775, 3
        %s780 = smul.addr %s777, 4
        %s781 = sadd.s32 %s779, %s780
        %s782 = smul.addr %s781, 8
        %s783 = scalar_lea.vmem %s5, %s782
      $region52: #{dit_block_forward.13} parent=47 // pred_fallthru
        _
    $region48: #{dit_block_forward.13} parent=5 // pred_fallthru
      _
  $region6: #{dit_block_forward.13} parent=0 // loop_footer
    %s15 = sadd.s32 1, %s11
  $region7: #{dit_block_forward.13} parent=0 // loop_footer_branch
    %10 = sbr.rel target = $region3
  $region8: #{dit_block_forward.13} parent=0 // loop_exit
    _

// kernel: dit_block_forward.11
$region0: #{dit_block_forward.11}
  #allocation0 [shape = 'u32[]', space=smem, size = 0x4, offset = 0x4, fixed_abs, tag = 'smem constant byte address 0x4 - core index']
  #allocation1 [shape = 'u32[144,128]{1,0:T(1,128)}', space=vmem, size = 0x12000, scoped, tag = 'internal scratch']
  %s0 = inlined_call_operand.vmem [shape: bf16[2,32,128], index: 0, kind: input, shape index: {}]
  %s1 = inlined_call_operand.vmem [shape: bf16[2,16,256], index: 1, kind: input, shape index: {}, may-alias: {1,2}]
  %s2 = inlined_call_operand.vmem [shape: bf16[2,16,256], index: 2, kind: input, shape index: {}, may-alias: {1,2}]
  %s3 = inlined_call_operand.vmem [shape: bf16[128,128], index: 3, kind: input, shape index: {}]
  %s4 = inlined_call_operand.vmem [shape: f32[2,9,128], index: 4, kind: input, shape index: {}]
  %s5 = inlined_call_operand.vmem [shape: f32[2,32,128], index: 5, kind: input, shape index: {}, may-alias: {5,6}]
  %s6 = inlined_call_operand.vmem [shape: f32[2,32,128], index: 6, kind: output, shape index: {}, may-alias: {5,6}]
  %s7 = sld [smem:[#allocation0]]
  $region139: #{dit_block_forward.11} parent=0
    _
  %s9 = ssub.s32 1, %s7
  %s10 = scalar_select 0, %s9, %s7
  $region1: #{dit_block_forward.11} parent=0
    #allocation2 [shape = 'u8[8192]{0}', space=vmem, size = 0x2000, scoped, tag = 'input window, operand 1']
    #allocation3 [shape = 'u8[8192]{0}', space=vmem, size = 0x2000, scoped, tag = 'input window, operand 2']
    loop: start=0, step=1, limit=4
    $region2: #{dit_block_forward.11} parent=1 // loop_pre_header
      _
    $region3: #{dit_block_forward.11} parent=1 // loop_header
      %s12 = sphi 0, %s16
      %p13 = scmp.ge.s32.totalorder %s12, 4
      %s19 = sphi 0, %s31
      %s20 = sphi 0, %s27
      %s21 = sphi 0, %s19
      %s22 = sphi 0, %s20
      %s23 = sphi 0, %s21
      %s24 = sphi 0, %s22
      %s36 = sphi 0, %s38
      %s39 = sphi 0, %s36
      %s40 = sphi 0, %s39
      %s56 = sphi 0, %s40
      %s62 = sphi 0, %s64
      %s65 = sphi 0, %s62
      %s66 = sphi 0, %s65
      %s82 = sphi 0, %s66
      %s88 = sphi 0, %s90
      %s91 = sphi 0, %s88
      %s92 = sphi 0, %s91
      %s108 = sphi 0, %s92
      %s112 = sphi 0, %s112
      %s114 = sphi 0, %s112
      %s115 = sphi 0, %s114
      %s129 = sphi 0, %s115
      %s135 = sphi 0, %s137
      %s138 = sphi 0, %s135
      %s139 = sphi 0, %s138
      %s155 = sphi 0, %s139
      %s163 = sphi 0, %s165
      %s166 = sphi 0, %s163
      %s167 = sphi 0, %s166
      %s183 = sphi 0, %s167
      %s191 = sphi 0, %s193
      %s194 = sphi 0, %s191
      %s195 = sphi 0, %s194
      %s211 = sphi 0, %s195
    $region4: #{dit_block_forward.11} parent=1 // loop_header_branch
      %15 = sbr.rel (%p13) target = $region8
    $region5: #{dit_block_forward.11} parent=1 // loop_body
      %s17 = ssub.s32 %s12, 1
      %s18 = ssub.s32 %s12, 2
      %s25 = sadd.s32 1, %s20
      %p26 = scmp.ge.s32.totalorder %s25, 1
      %s27 = scalar_select %p26, 0, %s25
      %s28 = sadd.s32 1, %s19
      %s29 = scalar_select %p26, %s28, %s19
      %p30 = scmp.ge.s32.totalorder %s29, 2
      %s31 = scalar_select %p30, 0, %s29
      %s32 = ssub.s32 %s19, %s31
      %s33 = ssub.s32 %s20, %s27
      %s34 = sor.u32 %s32, %s33
      %p35 = scmp.eq.s32.totalorder %s34, 0
      %s37 = sadd.s32 %s36, 1
      %s38 = scalar_select %p35, %s36, %s37
      %p41 = pneg %p35
      %p42 = scmp.eq.s32.totalorder %s12, 1
      %p43 = por %p41, %p42
      %p44 = scmp.ne.s32.totalorder %s36, %s39
      %p45 = scmp.eq.s32.totalorder %s12, 0
      %p46 = por %p44, %p45
      %p47 = scmp.ne.s32.totalorder %s36, %s39
      %p48 = scmp.eq.s32.totalorder %s17, 1
      %p49 = por %p47, %p48
      %p50 = scmp.ne.s32.totalorder %s39, %s40
      %p51 = scmp.eq.s32.totalorder %s17, 0
      %p52 = por %p50, %p51
      %p53 = scmp.ne.s32.totalorder %s39, %s40
      %p54 = scmp.eq.s32.totalorder %s18, 1
      %p55 = por %p53, %p54
      %p57 = scmp.ne.s32.totalorder %s40, %s56
      %p58 = scmp.eq.s32.totalorder %s18, 0
      %p59 = por %p57, %p58
      %s60 = ssub.s32 %s19, %s31
      %p61 = scmp.eq.s32.totalorder %s60, 0
      %s63 = sadd.s32 %s62, 1
      %s64 = scalar_select %p61, %s62, %s63
      %p67 = pneg %p61
      %p68 = scmp.eq.s32.totalorder %s12, 1
      %p69 = por %p67, %p68
      %p70 = scmp.ne.s32.totalorder %s62, %s65
      %p71 = scmp.eq.s32.totalorder %s12, 0
      %p72 = por %p70, %p71
      %p73 = scmp.ne.s32.totalorder %s62, %s65
      %p74 = scmp.eq.s32.totalorder %s17, 1
      %p75 = por %p73, %p74
      %p76 = scmp.ne.s32.totalorder %s65, %s66
      %p77 = scmp.eq.s32.totalorder %s17, 0
      %p78 = por %p76, %p77
      %p79 = scmp.ne.s32.totalorder %s65, %s66
      %p80 = scmp.eq.s32.totalorder %s18, 1
      %p81 = por %p79, %p80
      %p83 = scmp.ne.s32.totalorder %s66, %s82
      %p84 = scmp.eq.s32.totalorder %s18, 0
      %p85 = por %p83, %p84
      %s86 = ssub.s32 %s19, %s31
      %p87 = scmp.eq.s32.totalorder %s86, 0
      %s89 = sadd.s32 %s88, 1
      %s90 = scalar_select %p87, %s88, %s89
      %p93 = pneg %p87
      %p94 = scmp.eq.s32.totalorder %s12, 1
      %p95 = por %p93, %p94
      %p96 = scmp.ne.s32.totalorder %s88, %s91
      %p97 = scmp.eq.s32.totalorder %s12, 0
      %p98 = por %p96, %p97
      %p99 = scmp.ne.s32.totalorder %s88, %s91
      %p100 = scmp.eq.s32.totalorder %s17, 1
      %p101 = por %p99, %p100
      %p102 = scmp.ne.s32.totalorder %s91, %s92
      %p103 = scmp.eq.s32.totalorder %s17, 0
      %p104 = por %p102, %p103
      %p105 = scmp.ne.s32.totalorder %s91, %s92
      %p106 = scmp.eq.s32.totalorder %s18, 1
      %p107 = por %p105, %p106
      %p109 = scmp.ne.s32.totalorder %s92, %s108
      %p110 = scmp.eq.s32.totalorder %s18, 0
      %p111 = por %p109, %p110
      %s113 = sadd.s32 %s112, 1
      %p116 = scmp.eq.s32.totalorder %s12, 1
      %p117 = scmp.ne.s32.totalorder %s112, %s114
      %p118 = scmp.eq.s32.totalorder %s12, 0
      %p119 = por %p117, %p118
      %p120 = scmp.ne.s32.totalorder %s112, %s114
      %p121 = scmp.eq.s32.totalorder %s17, 1
      %p122 = por %p120, %p121
      %p123 = scmp.ne.s32.totalorder %s114, %s115
      %p124 = scmp.eq.s32.totalorder %s17, 0
      %p125 = por %p123, %p124
      %p126 = scmp.ne.s32.totalorder %s114, %s115
      %p127 = scmp.eq.s32.totalorder %s18, 1
      %p128 = por %p126, %p127
      %p130 = scmp.ne.s32.totalorder %s115, %s129
      %p131 = scmp.eq.s32.totalorder %s18, 0
      %p132 = por %p130, %p131
      %s133 = ssub.s32 %s19, %s31
      %p134 = scmp.eq.s32.totalorder %s133, 0
      %s136 = sadd.s32 %s135, 1
      %s137 = scalar_select %p134, %s135, %s136
      %p140 = pneg %p134
      %p141 = scmp.eq.s32.totalorder %s12, 1
      %p142 = por %p140, %p141
      %p143 = scmp.ne.s32.totalorder %s135, %s138
      %p144 = scmp.eq.s32.totalorder %s12, 0
      %p145 = por %p143, %p144
      %p146 = scmp.ne.s32.totalorder %s135, %s138
      %p147 = scmp.eq.s32.totalorder %s17, 1
      %p148 = por %p146, %p147
      %p149 = scmp.ne.s32.totalorder %s138, %s139
      %p150 = scmp.eq.s32.totalorder %s17, 0
      %p151 = por %p149, %p150
      %p152 = scmp.ne.s32.totalorder %s138, %s139
      %p153 = scmp.eq.s32.totalorder %s18, 1
      %p154 = por %p152, %p153
      %p156 = scmp.ne.s32.totalorder %s139, %s155
      %p157 = scmp.eq.s32.totalorder %s18, 0
      %p158 = por %p156, %p157
      %s159 = ssub.s32 %s19, %s31
      %s160 = ssub.s32 %s20, %s27
      %s161 = sor.u32 %s159, %s160
      %p162 = scmp.eq.s32.totalorder %s161, 0
      %s164 = sadd.s32 %s163, 1
      %s165 = scalar_select %p162, %s163, %s164
      %p168 = pneg %p162
      %p169 = scmp.eq.s32.totalorder %s12, 1
      %p170 = por %p168, %p169
      %p171 = scmp.ne.s32.totalorder %s163, %s166
      %p172 = scmp.eq.s32.totalorder %s12, 0
      %p173 = por %p171, %p172
      %p174 = scmp.ne.s32.totalorder %s163, %s166
      %p175 = scmp.eq.s32.totalorder %s17, 1
      %p176 = por %p174, %p175
      %p177 = scmp.ne.s32.totalorder %s166, %s167
      %p178 = scmp.eq.s32.totalorder %s17, 0
      %p179 = por %p177, %p178
      %p180 = scmp.ne.s32.totalorder %s166, %s167
      %p181 = scmp.eq.s32.totalorder %s18, 1
      %p182 = por %p180, %p181
      %p184 = scmp.ne.s32.totalorder %s167, %s183
      %p185 = scmp.eq.s32.totalorder %s18, 0
      %p186 = por %p184, %p185
      %s187 = ssub.s32 %s19, %s31
      %s188 = ssub.s32 %s20, %s27
      %s189 = sor.u32 %s187, %s188
      %p190 = scmp.eq.s32.totalorder %s189, 0
      %s192 = sadd.s32 %s191, 1
      %s193 = scalar_select %p190, %s191, %s192
      %p196 = pneg %p190
      %p197 = scmp.eq.s32.totalorder %s12, 1
      %p198 = por %p196, %p197
      %p199 = scmp.ne.s32.totalorder %s191, %s194
      %p200 = scmp.eq.s32.totalorder %s12, 0
      %p201 = por %p199, %p200
      %p202 = scmp.ne.s32.totalorder %s191, %s194
      %p203 = scmp.eq.s32.totalorder %s17, 1
      %p204 = por %p202, %p203
      %p205 = scmp.ne.s32.totalorder %s194, %s195
      %p206 = scmp.eq.s32.totalorder %s17, 0
      %p207 = por %p205, %p206
      %p208 = scmp.ne.s32.totalorder %s194, %s195
      %p209 = scmp.eq.s32.totalorder %s18, 1
      %p210 = por %p208, %p209
      %p212 = scmp.ne.s32.totalorder %s195, %s211
      %p213 = scmp.eq.s32.totalorder %s18, 0
      %p214 = por %p212, %p213
      %p215 = scmp.le.s32.totalorder 1, %s12
      %p216 = scmp.lt.s32.totalorder %s12, 3
      %p217 = pnand %p215, %p216
      %p218 = pneg %p217
      // Predicated region
      $region9: #{dit_block_forward.11} parent=5 // pred_check
        _
      $region10: #{dit_block_forward.11} parent=5 // pred_check_branch
        %220 = sbr.rel (%p217) target = $region12
      $region11: #{dit_block_forward.11} parent=5 // pred_region
        %s221 = ssub.s32 %s12, 1
        // Predicated region
        $region13: #{dit_block_forward.11} parent=11 // pred_check
          %p222 = pneg %p125
        $region14: #{dit_block_forward.11} parent=11 // pred_check_branch
          %224 = sbr.rel (%p222) target = $region16
        $region15: #{dit_block_forward.11} parent=11 // pred_region
          _
        $region16: #{dit_block_forward.11} parent=11 // pred_fallthru
          _
      $region12: #{dit_block_forward.11} parent=5 // pred_fallthru
        _
      %p225 = scmp.lt.s32.totalorder %s12, 2
      // Predicated region
      $region17: #{dit_block_forward.11} parent=5 // pred_check
        %p226 = pneg %p225
      $region18: #{dit_block_forward.11} parent=5 // pred_check_branch
        %228 = sbr.rel (%p226) target = $region20
      $region19: #{dit_block_forward.11} parent=5 // pred_region
        // Predicated region
        $region21: #{dit_block_forward.11} parent=19 // pred_check
          %p229 = pneg %p46
        $region22: #{dit_block_forward.11} parent=19 // pred_check_branch
          %231 = sbr.rel (%p229) target = $region24
        $region23: #{dit_block_forward.11} parent=19 // pred_region
          %s232 = smul.u32 4, %s20
          %p233 = scmp.lt.s32.totalorder %s19, 1
          %s234 = scalar_select %p233, %s19, 1
          %p235 = scmp.lt.s32.totalorder %s232, 3
          %s236 = scalar_select %p235, %s232, 3
          %s237 = smul.addr %s234, 4
          %s238 = sadd.s32 %s236, %s237
          %s239 = smul.addr %s238, 4
          %s240 = scalar_lea.vmem %s0, %s239
          %s241 = smul.u32 4, %s20
        $region24: #{dit_block_forward.11} parent=19 // pred_fallthru
          _
        // Predicated region
        $region25: #{dit_block_forward.11} parent=19 // pred_check
          %p242 = pneg %p72
        $region26: #{dit_block_forward.11} parent=19 // pred_check_branch
          %244 = sbr.rel (%p242) target = $region28
        $region27: #{dit_block_forward.11} parent=19 // pred_region
          %s245 = sand.u32 %s62, 1
          %s246 = sand.u32 %s62, 1
          %s247 = smul.addr %s246, 8
          %s248 = scalar_lea.vmem [#allocation2], %s247
          %s249 = smul.addr %s19, 4
          %s250 = smul.addr %s249, 4
          %s251 = scalar_lea.vmem %s1, %s250
          // Predicated region
          $region29: #{dit_block_forward.11} parent=27 // pred_check
            _
          $region30: #{dit_block_forward.11} parent=27 // pred_check_branch
            %253 = sbr.rel (0) target = $region32
          $region31: #{dit_block_forward.11} parent=27 // pred_region
            // Predicated region
            $region33: #{dit_block_forward.11} parent=31 // pred_check
              _
            $region34: #{dit_block_forward.11} parent=31 // pred_check_branch
              %255 = sbr.rel target = $region36
            $region35: #{dit_block_forward.11} parent=31 // pred_region
              // Predicated region
              $region48: #{dit_block_forward.11} parent=35 // pred_check
                _
              $region49: #{dit_block_forward.11} parent=35 // pred_check_branch
                %273 = sbr.rel (0) target = $region51
              $region50: #{dit_block_forward.11} parent=35 // pred_region
                loop: start=0, step=1, limit=1
                $region52: #{dit_block_forward.11} parent=50 // loop_pre_header
                  _
                $region53: #{dit_block_forward.11} parent=50 // loop_header
                  %s275 = sphi 0, %s279
                  %p276 = scmp.ge.s32.totalorder %s275, 1
                  %s280 = sphi %s251, %s251
                  %s281 = sphi %s248, %s248
                $region54: #{dit_block_forward.11} parent=50 // loop_header_branch
                  %278 = sbr.rel (%p276) target = $region58
                $region55: #{dit_block_forward.11} parent=50 // loop_body
                  _
                $region56: #{dit_block_forward.11} parent=50 // loop_footer
                  %s279 = sadd.s32 1, %s275
                $region57: #{dit_block_forward.11} parent=50 // loop_footer_branch
                  %274 = sbr.rel target = $region53
                $region58: #{dit_block_forward.11} parent=50 // loop_exit
                  _
                %s283 = ssub.s32 16, 1
                loop: start=0, step=1, limit=1
                $region59: #{dit_block_forward.11} parent=50 // loop_pre_header
                  _
                $region60: #{dit_block_forward.11} parent=50 // loop_header
                  %s285 = sphi 0, %s289
                  %p286 = scmp.ge.s32.totalorder %s285, 1
                  %s290 = sphi %s251, %s251
                  %s291 = sphi %s248, %s248
                $region61: #{dit_block_forward.11} parent=50 // loop_header_branch
                  %288 = sbr.rel (%p286) target = $region65
                $region62: #{dit_block_forward.11} parent=50 // loop_body
                  %v292 = vld [vmem:[%s290] sm:%s283]
                  %293 = vst [vmem:[%s291] sm:%s283] %v292
                  %v294 = vld [vmem:[%s290 + $0x8] sm:%s283]
                  %295 = vst [vmem:[%s291 + $0x4] sm:%s283] %v294
                $region63: #{dit_block_forward.11} parent=50 // loop_footer
                  %s289 = sadd.s32 1, %s285
                $region64: #{dit_block_forward.11} parent=50 // loop_footer_branch
                  %284 = sbr.rel target = $region60
                $region65: #{dit_block_forward.11} parent=50 // loop_exit
                  _
              $region51: #{dit_block_forward.11} parent=35 // pred_fallthru
                _
            $region36: #{dit_block_forward.11} parent=31 // pred_fallthru
              _
            // Predicated region
            $region37: #{dit_block_forward.11} parent=31 // pred_check
              _
            $region38: #{dit_block_forward.11} parent=31 // pred_check_branch
              %257 = sbr.rel (0) target = $region40
            $region39: #{dit_block_forward.11} parent=31 // pred_region
              %s259 = ssub.s32 16, 1
              loop: start=0, step=1, limit=1
              $region41: #{dit_block_forward.11} parent=39 // loop_pre_header
                _
              $region42: #{dit_block_forward.11} parent=39 // loop_header
                %s261 = sphi 0, %s265
                %p262 = scmp.ge.s32.totalorder %s261, 1
                %s266 = sphi %s251, %s251
                %s267 = sphi %s248, %s248
              $region43: #{dit_block_forward.11} parent=39 // loop_header_branch
                %264 = sbr.rel (%p262) target = $region47
              $region44: #{dit_block_forward.11} parent=39 // loop_body
                %v268 = vld [vmem:[%s266] sm:%s259]
                %269 = vst [vmem:[%s267] sm:%s259] %v268
                %v270 = vld [vmem:[%s266 + $0x8] sm:%s259]
                %271 = vst [vmem:[%s267 + $0x4] sm:%s259] %v270
              $region45: #{dit_block_forward.11} parent=39 // loop_footer
                %s265 = sadd.s32 1, %s261
              $region46: #{dit_block_forward.11} parent=39 // loop_footer_branch
                %260 = sbr.rel target = $region42
              $region47: #{dit_block_forward.11} parent=39 // loop_exit
                _
            $region40: #{dit_block_forward.11} parent=31 // pred_fallthru
              _
          $region32: #{dit_block_forward.11} parent=27 // pred_fallthru
            _
          %296 = vnop
        $region28: #{dit_block_forward.11} parent=19 // pred_fallthru
          _
        // Predicated region
        $region66: #{dit_block_forward.11} parent=19 // pred_check
          %p297 = pneg %p98
        $region67: #{dit_block_forward.11} parent=19 // pred_check_branch
          %299 = sbr.rel (%p297) target = $region69
        $region68: #{dit_block_forward.11} parent=19 // pred_region
          %s300 = sand.u32 %s88, 1
          %s301 = sand.u32 %s88, 1
          %s302 = smul.addr %s301, 8
          %s303 = scalar_lea.vmem [#allocation3], %s302
          %s304 = smul.addr %s19, 4
          %s305 = sadd.s32 1, %s304
          %s306 = smul.addr %s305, 4
          %s307 = scalar_lea.vmem %s2, %s306
          // Predicated region
          $region70: #{dit_block_forward.11} parent=68 // pred_check
            _
          $region71: #{dit_block_forward.11} parent=68 // pred_check_branch
            %309 = sbr.rel (0) target = $region73
          $region72: #{dit_block_forward.11} parent=68 // pred_region
            // Predicated region
            $region74: #{dit_block_forward.11} parent=72 // pred_check
              _
            $region75: #{dit_block_forward.11} parent=72 // pred_check_branch
              %311 = sbr.rel target = $region77
            $region76: #{dit_block_forward.11} parent=72 // pred_region
              // Predicated region
              $region89: #{dit_block_forward.11} parent=76 // pred_check
                _
              $region90: #{dit_block_forward.11} parent=76 // pred_check_branch
                %329 = sbr.rel (0) target = $region92
              $region91: #{dit_block_forward.11} parent=76 // pred_region
                loop: start=0, step=1, limit=1
                $region93: #{dit_block_forward.11} parent=91 // loop_pre_header
                  _
                $region94: #{dit_block_forward.11} parent=91 // loop_header
                  %s331 = sphi 0, %s335
                  %p332 = scmp.ge.s32.totalorder %s331, 1
                  %s336 = sphi %s307, %s307
                  %s337 = sphi %s303, %s303
                $region95: #{dit_block_forward.11} parent=91 // loop_header_branch
                  %334 = sbr.rel (%p332) target = $region99
                $region96: #{dit_block_forward.11} parent=91 // loop_body
                  _
                $region97: #{dit_block_forward.11} parent=91 // loop_footer
                  %s335 = sadd.s32 1, %s331
                $region98: #{dit_block_forward.11} parent=91 // loop_footer_branch
                  %330 = sbr.rel target = $region94
                $region99: #{dit_block_forward.11} parent=91 // loop_exit
                  _
                %s339 = ssub.s32 16, 1
                loop: start=0, step=1, limit=1
                $region100: #{dit_block_forward.11} parent=91 // loop_pre_header
                  _
                $region101: #{dit_block_forward.11} parent=91 // loop_header
                  %s341 = sphi 0, %s345
                  %p342 = scmp.ge.s32.totalorder %s341, 1
                  %s346 = sphi %s307, %s307
                  %s347 = sphi %s303, %s303
                $region102: #{dit_block_forward.11} parent=91 // loop_header_branch
                  %344 = sbr.rel (%p342) target = $region106
                $region103: #{dit_block_forward.11} parent=91 // loop_body
                  %v348 = vld [vmem:[%s346] sm:%s339]
                  %349 = vst [vmem:[%s347] sm:%s339] %v348
                  %v350 = vld [vmem:[%s346 + $0x8] sm:%s339]
                  %351 = vst [vmem:[%s347 + $0x4] sm:%s339] %v350
                $region104: #{dit_block_forward.11} parent=91 // loop_footer
                  %s345 = sadd.s32 1, %s341
                $region105: #{dit_block_forward.11} parent=91 // loop_footer_branch
                  %340 = sbr.rel target = $region101
                $region106: #{dit_block_forward.11} parent=91 // loop_exit
                  _
              $region92: #{dit_block_forward.11} parent=76 // pred_fallthru
                _
            $region77: #{dit_block_forward.11} parent=72 // pred_fallthru
              _
            // Predicated region
            $region78: #{dit_block_forward.11} parent=72 // pred_check
              _
            $region79: #{dit_block_forward.11} parent=72 // pred_check_branch
              %313 = sbr.rel (0) target = $region81
            $region80: #{dit_block_forward.11} parent=72 // pred_region
              %s315 = ssub.s32 16, 1
              loop: start=0, step=1, limit=1
              $region82: #{dit_block_forward.11} parent=80 // loop_pre_header
                _
              $region83: #{dit_block_forward.11} parent=80 // loop_header
                %s317 = sphi 0, %s321
                %p318 = scmp.ge.s32.totalorder %s317, 1
                %s322 = sphi %s307, %s307
                %s323 = sphi %s303, %s303
              $region84: #{dit_block_forward.11} parent=80 // loop_header_branch
                %320 = sbr.rel (%p318) target = $region88
              $region85: #{dit_block_forward.11} parent=80 // loop_body
                %v324 = vld [vmem:[%s322] sm:%s315]
                %325 = vst [vmem:[%s323] sm:%s315] %v324
                %v326 = vld [vmem:[%s322 + $0x8] sm:%s315]
                %327 = vst [vmem:[%s323 + $0x4] sm:%s315] %v326
              $region86: #{dit_block_forward.11} parent=80 // loop_footer
                %s321 = sadd.s32 1, %s317
              $region87: #{dit_block_forward.11} parent=80 // loop_footer_branch
                %316 = sbr.rel target = $region83
              $region88: #{dit_block_forward.11} parent=80 // loop_exit
                _
            $region81: #{dit_block_forward.11} parent=72 // pred_fallthru
              _
          $region73: #{dit_block_forward.11} parent=68 // pred_fallthru
            _
          %352 = vnop
        $region69: #{dit_block_forward.11} parent=19 // pred_fallthru
          _
        // Predicated region
        $region107: #{dit_block_forward.11} parent=19 // pred_check
          %p353 = pneg %p145
        $region108: #{dit_block_forward.11} parent=19 // pred_check_branch
          %355 = sbr.rel (%p353) target = $region110
        $region109: #{dit_block_forward.11} parent=19 // pred_region
          %p356 = scmp.lt.s32.totalorder %s19, 1
          %s357 = scalar_select %p356, %s19, 1
          %s358 = smul.addr %s357, 2
          %s359 = smul.addr %s358, 8
          %s360 = scalar_lea.vmem %s4, %s359
        $region110: #{dit_block_forward.11} parent=19 // pred_fallthru
          _
        // Predicated region
        $region111: #{dit_block_forward.11} parent=19 // pred_check
          %p361 = pneg %p173
        $region112: #{dit_block_forward.11} parent=19 // pred_check_branch
          %363 = sbr.rel (%p361) target = $region114
        $region113: #{dit_block_forward.11} parent=19 // pred_region
          %s364 = smul.u32 4, %s20
          %p365 = scmp.lt.s32.totalorder %s19, 1
          %s366 = scalar_select %p365, %s19, 1
          %p367 = scmp.lt.s32.totalorder %s364, 3
          %s368 = scalar_select %p367, %s364, 3
          %s369 = smul.addr %s366, 4
          %s370 = sadd.s32 %s368, %s369
          %s371 = smul.addr %s370, 8
          %s372 = scalar_lea.vmem %s5, %s371
          %s373 = smul.u32 4, %s20
        $region114: #{dit_block_forward.11} parent=19 // pred_fallthru
          _
      $region20: #{dit_block_forward.11} parent=5 // pred_fallthru
        _
      %p374 = scmp.le.s32.totalorder 1, %s12
      %p375 = scmp.lt.s32.totalorder %s12, 3
      %p376 = pnand %p374, %p375
      %p377 = pneg %p376
      // Predicated region
      $region115: #{dit_block_forward.11} parent=5 // pred_check
        _
      $region116: #{dit_block_forward.11} parent=5 // pred_check_branch
        %379 = sbr.rel (%p376) target = $region118
      $region117: #{dit_block_forward.11} parent=5 // pred_region
        %s380 = ssub.s32 %s12, 1
        %s381 = sand.u32 %s65, 1
        %s382 = sand.u32 %s65, 1
        %s383 = smul.addr %s382, 8
        %s384 = scalar_lea.vmem [#allocation2], %s383
        // Predicated region
        $region119: #{dit_block_forward.11} parent=117 // pred_check
          %p385 = pneg %p78
        $region120: #{dit_block_forward.11} parent=117 // pred_check_branch
          %387 = sbr.rel (%p385) target = $region122
        $region121: #{dit_block_forward.11} parent=117 // pred_region
          _
        $region122: #{dit_block_forward.11} parent=117 // pred_fallthru
          _
        %s388 = sand.u32 %s91, 1
        %s389 = sand.u32 %s91, 1
        %s390 = smul.addr %s389, 8
        %s391 = scalar_lea.vmem [#allocation3], %s390
        // Predicated region
        $region123: #{dit_block_forward.11} parent=117 // pred_check
          %p392 = pneg %p104
        $region124: #{dit_block_forward.11} parent=117 // pred_check_branch
          %394 = sbr.rel (%p392) target = $region126
        $region125: #{dit_block_forward.11} parent=117 // pred_region
          _
        $region126: #{dit_block_forward.11} parent=117 // pred_fallthru
          _
        %s395 = smul.u32 4, %s22
        %p396 = scmp.lt.s32.totalorder %s21, 1
        %s397 = scalar_select %p396, %s21, 1
        %p398 = scmp.lt.s32.totalorder %s395, 3
        %s399 = scalar_select %p398, %s395, 3
        %s400 = smul.addr %s397, 4
        %s401 = sadd.s32 %s399, %s400
        %s402 = smul.addr %s401, 4
        %s403 = scalar_lea.vmem %s0, %s402
        %p404 = pneg %p52
        %p405 = pneg %p49
        %s406 = sand.u32 %s65, 1
        %s407 = sand.u32 %s65, 1
        %s408 = smul.addr %s407, 8
        %s409 = scalar_lea.vmem [#allocation2], %s408
        %p410 = pneg %p78
        %p411 = pneg %p75
        %s412 = sand.u32 %s91, 1
        %s413 = sand.u32 %s91, 1
        %s414 = smul.addr %s413, 8
        %s415 = scalar_lea.vmem [#allocation3], %s414
        %p416 = pneg %p104
        %p417 = pneg %p101
        %p418 = pneg %p125
        %p419 = pneg %p122
        %p420 = scmp.lt.s32.totalorder %s21, 1
        %s421 = scalar_select %p420, %s21, 1
        %s422 = smul.addr %s421, 2
        %s423 = smul.addr %s422, 8
        %s424 = scalar_lea.vmem %s4, %s423
        %p425 = pneg %p151
        %p426 = pneg %p148
        %s427 = smul.u32 4, %s22
        %p428 = scmp.lt.s32.totalorder %s21, 1
        %s429 = scalar_select %p428, %s21, 1
        %p430 = scmp.lt.s32.totalorder %s427, 3
        %s431 = scalar_select %p430, %s427, 3
        %s432 = smul.addr %s429, 4
        %s433 = sadd.s32 %s431, %s432
        %s434 = smul.addr %s433, 8
        %s435 = scalar_lea.vmem %s5, %s434
        %p436 = pneg %p179
        %p437 = pneg %p176
        %p438 = pneg %p207
        %p439 = pneg %p204
        %s440 = smul.u32 4, %s22
        %p441 = scmp.lt.s32.totalorder %s21, 1
        %s442 = scalar_select %p441, %s21, 1
        %p443 = scmp.lt.s32.totalorder %s440, 3
        %s444 = scalar_select %p443, %s440, 3
        %s445 = smul.addr %s442, 4
        %s446 = sadd.s32 %s444, %s445
        %s447 = smul.addr %s446, 8
        %s448 = scalar_lea.vmem %s6, %s447
        %s449 = smul.u32 4, %s22
        %p450 = scmp.lt.s32.totalorder %s21, 1
        %s451 = scalar_select %p450, %s21, 1
        %p452 = scmp.lt.s32.totalorder %s449, 3
        %s453 = scalar_select %p452, %s449, 3
        %s454 = smul.addr %s451, 4
        %s455 = sadd.s32 %s453, %s454
        %s456 = smul.addr %s455, 4
        %s457 = scalar_lea.vmem %s0, %s456
        %s458 = smul.u32 4, %s22
        %p459 = scmp.lt.s32.totalorder %s21, 1
        %s460 = scalar_select %p459, %s21, 1
        %s461 = smul.addr %s460, 2
        %s462 = smul.addr %s461, 8
        %s463 = scalar_lea.vmem %s4, %s462
        %s464 = smul.u32 4, %s22
        %p465 = scmp.lt.s32.totalorder %s21, 1
        %s466 = scalar_select %p465, %s21, 1
        %p467 = scmp.lt.s32.totalorder %s464, 3
        %s468 = scalar_select %p467, %s464, 3
        %s469 = smul.addr %s466, 4
        %s470 = sadd.s32 %s468, %s469
        %s471 = smul.addr %s470, 8
        %s472 = scalar_lea.vmem %s5, %s471
        %s473 = smul.u32 4, %s22
        %s474 = smul.u32 4, %s22
        %p475 = scmp.lt.s32.totalorder %s21, 1
        %s476 = scalar_select %p475, %s21, 1
        %p477 = scmp.lt.s32.totalorder %s474, 3
        %s478 = scalar_select %p477, %s474, 3
        %s479 = smul.addr %s476, 4
        %s480 = sadd.s32 %s478, %s479
        %s481 = smul.addr %s480, 8
        %s482 = scalar_lea.vmem %s6, %s481
        %s483 = smul.u32 4, %s22
        %v485 = vld [vmem:[%s457] sm:$0xf]
        %v486 = vld [vmem:[%s457 + $0x4] sm:$0xf]
        %v487 = vld [vmem:[%s457 + $0x8] sm:$0xf]
        %v488 = vld [vmem:[%s457 + $0xc] sm:$0xf]
        %v489 = vunpack.c.l.bf16 %v485
        %v490 = vunpack.c.l.bf16 %v486
        %v491 = vunpack.c.l.bf16 %v487
        %v492 = vunpack.c.l.bf16 %v488
        %v493 = vld [vmem:[%s384] sm:$0xf]
        %v494 = vld [vmem:[%s384 + $0x4] sm:$0xf]
        %v495 = vunpack.c.l.bf16 %v493
        %v496 = vunpack.c.l.bf16 %v494
        %v497 = vmul.f32 %v489, %v489
        %v498 = vmul.f32 %v490, %v490
        %v499 = vmul.f32 %v491, %v491
        %v500 = vmul.f32 %v492, %v492
        %vm501 = vcmask 261120
        %v502 = vsel %vm501, %v497, 0.0
        %503 = vadd.xlane.f32.xlu0 %v502
        %v504 = vpop.xlane.xlu0 %503
        %v505 = vsel %vm501, %v498, 0.0
        %506 = vadd.xlane.f32.xlu0 %v505
        %v507 = vpop.xlane.xlu0 %506
        %v508 = vsel %vm501, %v499, 0.0
        %509 = vadd.xlane.f32.xlu0 %v508
        %v510 = vpop.xlane.xlu0 %509
        %v511 = vsel %vm501, %v500, 0.0
        %512 = vadd.xlane.f32.xlu0 %v511
        %v513 = vpop.xlane.xlu0 %512
        %v514 = vrcp.pop 32.0
        %v515 = vmul.f32 %v504, %v514
        %v516 = vmul.f32 %v507, %v514
        %v517 = vmul.f32 %v510, %v514
        %v518 = vmul.f32 %v513, %v514
        %v519 = vadd.f32 %v515, 1e-06
        %v520 = vadd.f32 %v516, 1e-06
        %v521 = vadd.f32 %v517, 1e-06
        %v522 = vadd.f32 %v518, 1e-06
        %v523 = vrsqrt.pop %v519
        %v524 = vrsqrt.pop %v520
        %v525 = vrsqrt.pop %v521
        %v526 = vrsqrt.pop %v522
        %v527 = vmul.f32 %v523, 0.17677669
        %v528 = vmul.f32 %v524, 0.17677669
        %v529 = vmul.f32 %v525, 0.17677669
        %v530 = vmul.f32 %v526, 0.17677669
        %v531 = vmul.f32 %v489, %v527
        %v532 = vmul.f32 %v490, %v528
        %v533 = vmul.f32 %v491, %v529
        %v534 = vmul.f32 %v492, %v530
        %v535 = vmul.f32 %v495, %v495
        %v536 = vmul.f32 %v496, %v496
        %v537 = vsel %vm501, %v535, 0.0
        %538 = vadd.xlane.f32.xlu0 %v537
        %v539 = vpop.xlane.xlu0 %538
        %v540 = vsel %vm501, %v536, 0.0
        %541 = vadd.xlane.f32.xlu0 %v540
        %v542 = vpop.xlane.xlu0 %541
        %v543 = vmul.f32 %v539, %v514
        %v544 = vmul.f32 %v542, %v514
        %v545 = vadd.f32 %v543, 1e-06
        %v546 = vadd.f32 %v544, 1e-06
        %v547 = vrsqrt.pop %v545
        %v548 = vrsqrt.pop %v546
        %v549 = vmul.f32 %v495, %v547
        %v550 = vmul.f32 %v496, %v548
        %v551 = vpack.c.bf16 %v532, %v531
        %v552 = vpack.c.bf16 %v534, %v533
        %v553 = vpack.c.bf16 %v550, %v549
        %v555 = vsel %vm501, %v551, 0
        %v558 = vsel %vm501, %v552, 0
        %v561 = vsel %vm501, %v553, 0
        %563 = vmatprep.subr.bf16.mxu0 0
        %564 = vmatpush1.bf16.xpose.msra.mxu0 0
        %565 = vmatprep.subr.bf16.mxu0 0
        %566 = vmatpush1.bf16.xpose.msra.mxu0 0
        %567 = vmatprep.subr.bf16.mxu0 0
        %568 = vmatpush1.bf16.xpose.msra.mxu0 0
        %569 = vmatprep.subr.bf16.mxu0 0
        %570 = vmatpush1.bf16.xpose.msra.mxu0 0
        %571 = vmatprep.subr.bf16.mxu0 0
        %572 = vmatpush1.bf16.xpose.msra.mxu0 0
        %573 = vmatprep.subr.bf16.mxu0 0
        %574 = vmatpush1.bf16.xpose.msra.mxu0 0
        %575 = vmatprep.subr.bf16.mxu0 0
        %576 = vmatpush1.bf16.xpose.msra.mxu0 0
        %577 = vmatprep.subr.bf16.mxu0 0
        %578 = vmatpush1.bf16.xpose.msra.mxu0 %v561
        %579 = vmatprep.subr.bf16.mxu0 0
        %580 = vmatpush2.bf16.xpose.msra.mxu0 0
        %581 = vmatprep.subr.bf16.mxu0 0
        %582 = vmatpush2.bf16.xpose.msra.mxu0 0
        %583 = vmatprep.subr.bf16.mxu0 0
        %584 = vmatpush2.bf16.xpose.msra.mxu0 0
        %585 = vmatprep.subr.bf16.mxu0 0
        %586 = vmatpush2.bf16.xpose.msra.mxu0 0
        %587 = vmatprep.subr.bf16.mxu0 0
        %588 = vmatpush2.bf16.xpose.msra.mxu0 0
        %589 = vmatprep.subr.bf16.mxu0 0
        %590 = vmatpush2.bf16.xpose.msra.mxu0 0
        %591 = vmatprep.subr.bf16.mxu0 0
        %592 = vmatpush2.bf16.xpose.msra.mxu0 0
        %593 = vmatprep.subr.bf16.mxu0 0
        %594 = vmatpush2.bf16.xpose.msra.mxu0 0
        %595 = vmatprep.mubr.bf16.mxu0 0
        %596 = vmatmul.mubr.bf16.gmra.mxu0 %v555
        %v597 = vpop.f32.mrf.mxu0
        %v598 = vadd.f32 0.0, %v597
        %v599 = vpop.f32.mrf.mxu0
        %v600 = vpop.f32.mrf.mxu0
        %v601 = vadd.f32 0.0, %v600
        %v602 = vpop.f32.mrf.mxu0
        %603 = vmatprep.mubr.bf16.mxu0 0
        %604 = vmatmul.mubr.bf16.gmra.mxu0 %v558
        %v605 = vpop.f32.mrf.mxu0
        %v606 = vadd.f32 0.0, %v605
        %v607 = vpop.f32.mrf.mxu0
        %v608 = vpop.f32.mrf.mxu0
        %v609 = vadd.f32 0.0, %v608
        %v610 = vpop.f32.mrf.mxu0
        %611 = vdwg.mxu0
        %vm612 = vcmask 130048
        %v613 = vsel %vm612, %v598, -inf
        %614 = vmax.xlane.f32.xlu0 %v613
        %v615 = vpop.xlane.xlu0 %614
        %v616 = vsel %vm612, %v601, -inf
        %617 = vmax.xlane.f32.xlu0 %v616
        %v618 = vpop.xlane.xlu0 %617
        %v619 = vsel %vm612, %v606, -inf
        %620 = vmax.xlane.f32.xlu0 %v619
        %v621 = vpop.xlane.xlu0 %620
        %v622 = vsel %vm612, %v609, -inf
        %623 = vmax.xlane.f32.xlu0 %v622
        %v624 = vpop.xlane.xlu0 %623
        %v625 = vsub.f32 %v598, %v615
        %v626 = vsub.f32 %v601, %v618
        %v627 = vsub.f32 %v606, %v621
        %v628 = vsub.f32 %v609, %v624
        %v629 = vmul.f32 %v625, 1.442695
        %v630 = vpow.pop %v629
        %v631 = vmul.f32 %v626, 1.442695
        %v632 = vpow.pop %v631
        %v633 = vmul.f32 %v627, 1.442695
        %v634 = vpow.pop %v633
        %v635 = vmul.f32 %v628, 1.442695
        %v636 = vpow.pop %v635
        %v637 = vsel %vm612, %v630, 0.0
        %638 = vadd.xlane.f32.xlu0 %v637
        %v639 = vpop.xlane.xlu0 %638
        %v640 = vsel %vm612, %v632, 0.0
        %641 = vadd.xlane.f32.xlu0 %v640
        %v642 = vpop.xlane.xlu0 %641
        %v643 = vsel %vm612, %v634, 0.0
        %644 = vadd.xlane.f32.xlu0 %v643
        %v645 = vpop.xlane.xlu0 %644
        %v646 = vsel %vm612, %v636, 0.0
        %647 = vadd.xlane.f32.xlu0 %v646
        %v648 = vpop.xlane.xlu0 %647
        %v649 = vrcp.pop %v639
        %v650 = vrcp.pop %v642
        %v651 = vrcp.pop %v645
        %v652 = vrcp.pop %v648
        %v653 = vmul.f32 %v630, %v649
        %v654 = vmul.f32 %v632, %v650
        %v655 = vmul.f32 %v634, %v651
        %v656 = vmul.f32 %v636, %v652
        %v657 = vpack.c.bf16 %v654, %v653
        %v658 = vpack.c.bf16 %v656, %v655
        %v659 = vld [vmem:[%s391] sm:$0xf]
        %v660 = vld [vmem:[%s391 + $0x4] sm:$0xf]
        %v663 = vunpack.c.l.b16 %v659
        %v664 = vunpack.c.l.b16 %v660
        %v665 = vpack.c.b16 %v664, %v663
        %v668 = vsel %vm612, %v657, 0
        %v671 = vsel %vm612, %v658, 0
        %673 = vmatprep.subr.bf16.mxu0 0
        %674 = vmatpush1.bf16.msra.mxu0 0
        %675 = vmatprep.subr.bf16.mxu0 0
        %676 = vmatpush1.bf16.msra.mxu0 0
        %677 = vmatprep.subr.bf16.mxu0 0
        %678 = vmatpush1.bf16.msra.mxu0 0
        %679 = vmatprep.subr.bf16.mxu0 0
        %680 = vmatpush1.bf16.msra.mxu0 0
        %681 = vmatprep.subr.bf16.mxu0 0
        %682 = vmatpush1.bf16.msra.mxu0 0
        %683 = vmatprep.subr.bf16.mxu0 0
        %684 = vmatpush1.bf16.msra.mxu0 0
        %685 = vmatprep.subr.bf16.mxu0 0
        %686 = vmatpush1.bf16.msra.mxu0 0
        %687 = vmatprep.subr.bf16.mxu0 0
        %688 = vmatpush1.bf16.msra.mxu0 %v665
        %689 = vmatprep.subr.bf16.mxu0 0
        %690 = vmatpush2.bf16.msra.mxu0 0
        %691 = vmatprep.subr.bf16.mxu0 0
        %692 = vmatpush2.bf16.msra.mxu0 0
        %693 = vmatprep.subr.bf16.mxu0 0
        %694 = vmatpush2.bf16.msra.mxu0 0
        %695 = vmatprep.subr.bf16.mxu0 0
        %696 = vmatpush2.bf16.msra.mxu0 0
        %697 = vmatprep.subr.bf16.mxu0 0
        %698 = vmatpush2.bf16.msra.mxu0 0
        %699 = vmatprep.subr.bf16.mxu0 0
        %700 = vmatpush2.bf16.msra.mxu0 0
        %701 = vmatprep.subr.bf16.mxu0 0
        %702 = vmatpush2.bf16.msra.mxu0 0
        %703 = vmatprep.subr.bf16.mxu0 0
        %704 = vmatpush2.bf16.msra.mxu0 0
        %705 = vmatprep.mubr.bf16.mxu0 0
        %706 = vmatmul.mubr.bf16.gmra.mxu0 %v668
        %v707 = vpop.f32.mrf.mxu0
        %v708 = vadd.f32 0.0, %v707
        %v709 = vpop.f32.mrf.mxu0
        %v710 = vpop.f32.mrf.mxu0
        %v711 = vadd.f32 0.0, %v710
        %v712 = vpop.f32.mrf.mxu0
        %713 = vmatprep.mubr.bf16.mxu0 0
        %714 = vmatmul.mubr.bf16.gmra.mxu0 %v671
        %v715 = vpop.f32.mrf.mxu0
        %v716 = vadd.f32 0.0, %v715
        %v717 = vpop.f32.mrf.mxu0
        %v718 = vpop.f32.mrf.mxu0
        %v719 = vadd.f32 0.0, %v718
        %v720 = vpop.f32.mrf.mxu0
        %721 = vdwg.mxu0
        %v722 = vpack.c.bf16 %v711, %v708
        %v723 = vpack.c.bf16 %v719, %v716
        %v724 = vld [vmem:[%s3] sm:$0xf]
        %v725 = vld [vmem:[%s3 + $0x4] sm:$0xf]
        %v726 = vld [vmem:[%s3 + $0x8] sm:$0xf]
        %v727 = vld [vmem:[%s3 + $0xc] sm:$0xf]
        %732 = vrot.lane.b32.xlu0 %v497, 96
        %v733 = vpop.permute.xlu0 %732
        %734 = vrot.lane.b32.xlu0 %v498, 96
        %v735 = vpop.permute.xlu0 %734
        %736 = vrot.lane.b32.xlu0 %v499, 96
        %v737 = vpop.permute.xlu0 %736
        %738 = vrot.lane.b32.xlu0 %v500, 96
        %v739 = vpop.permute.xlu0 %738
        %v744 = vsel %vm501, %v733, 0.0
        %745 = vadd.xlane.f32.xlu0 %v744
        %v746 = vpop.xlane.xlu0 %745
        %v747 = vsel %vm501, %v735, 0.0
        %748 = vadd.xlane.f32.xlu0 %v747
        %v749 = vpop.xlane.xlu0 %748
        %v750 = vsel %vm501, %v737, 0.0
        %751 = vadd.xlane.f32.xlu0 %v750
        %v752 = vpop.xlane.xlu0 %751
        %v753 = vsel %vm501, %v739, 0.0
        %754 = vadd.xlane.f32.xlu0 %v753
        %v755 = vpop.xlane.xlu0 %754
        %v756 = vmul.f32 %v746, %v514
        %v757 = vmul.f32 %v749, %v514
        %v758 = vmul.f32 %v752, %v514
        %v759 = vmul.f32 %v755, %v514
        %v760 = vadd.f32 %v756, 1e-06
        %v761 = vadd.f32 %v757, 1e-06
        %v762 = vadd.f32 %v758, 1e-06
        %v763 = vadd.f32 %v759, 1e-06
        %v764 = vrsqrt.pop %v760
        %v765 = vrsqrt.pop %v761
        %v766 = vrsqrt.pop %v762
        %v767 = vrsqrt.pop %v763
        %v768 = vmul.f32 %v764, 0.17677669
        %v769 = vmul.f32 %v765, 0.17677669
        %v770 = vmul.f32 %v766, 0.17677669
        %v771 = vmul.f32 %v767, 0.17677669
        %v772 = vmul.f32 %v489, %v768
        %v773 = vmul.f32 %v490, %v769
        %v774 = vmul.f32 %v491, %v770
        %v775 = vmul.f32 %v492, %v771
        %778 = vrot.lane.b32.xlu0 %v535, 96
        %v779 = vpop.permute.xlu0 %778
        %780 = vrot.lane.b32.xlu0 %v536, 96
        %v781 = vpop.permute.xlu0 %780
        %v784 = vsel %vm501, %v779, 0.0
        %785 = vadd.xlane.f32.xlu0 %v784
        %v786 = vpop.xlane.xlu0 %785
        %v787 = vsel %vm501, %v781, 0.0
        %788 = vadd.xlane.f32.xlu0 %v787
        %v789 = vpop.xlane.xlu0 %788
        %v790 = vmul.f32 %v786, %v514
        %v791 = vmul.f32 %v789, %v514
        %v792 = vadd.f32 %v790, 1e-06
        %v793 = vadd.f32 %v791, 1e-06
        %v794 = vrsqrt.pop %v792
        %v795 = vrsqrt.pop %v793
        %v796 = vmul.f32 %v495, %v794
        %v797 = vmul.f32 %v496, %v795
        %v798 = vpack.c.bf16 %v773, %v772
        %v799 = vpack.c.bf16 %v775, %v774
        %v800 = vpack.c.bf16 %v797, %v796
        %803 = vrot.lane.b32.xlu0 %v798, 96
        %v804 = vpop.permute.xlu0 %803
        %805 = vrot.lane.b32.xlu0 %v799, 96
        %v806 = vpop.permute.xlu0 %805
        %808 = vrot.lane.b32.xlu0 %v800, 96
        %v809 = vpop.permute.xlu0 %808
        %v811 = vsel %vm501, %v804, 0
        %v814 = vsel %vm501, %v806, 0
        %v817 = vsel %vm501, %v809, 0
        %819 = vmatprep.subr.bf16.mxu0 0
        %820 = vmatpush1.bf16.xpose.msra.mxu0 0
        %821 = vmatprep.subr.bf16.mxu0 0
        %822 = vmatpush1.bf16.xpose.msra.mxu0 0
        %823 = vmatprep.subr.bf16.mxu0 0
        %824 = vmatpush1.bf16.xpose.msra.mxu0 0
        %825 = vmatprep.subr.bf16.mxu0 0
        %826 = vmatpush1.bf16.xpose.msra.mxu0 0
        %827 = vmatprep.subr.bf16.mxu0 0
        %828 = vmatpush1.bf16.xpose.msra.mxu0 0
        %829 = vmatprep.subr.bf16.mxu0 0
        %830 = vmatpush1.bf16.xpose.msra.mxu0 0
        %831 = vmatprep.subr.bf16.mxu0 0
        %832 = vmatpush1.bf16.xpose.msra.mxu0 0
        %833 = vmatprep.subr.bf16.mxu0 0
        %834 = vmatpush1.bf16.xpose.msra.mxu0 %v817
        %835 = vmatprep.subr.bf16.mxu0 0
        %836 = vmatpush2.bf16.xpose.msra.mxu0 0
        %837 = vmatprep.subr.bf16.mxu0 0
        %838 = vmatpush2.bf16.xpose.msra.mxu0 0
        %839 = vmatprep.subr.bf16.mxu0 0
        %840 = vmatpush2.bf16.xpose.msra.mxu0 0
        %841 = vmatprep.subr.bf16.mxu0 0
        %842 = vmatpush2.bf16.xpose.msra.mxu0 0
        %843 = vmatprep.subr.bf16.mxu0 0
        %844 = vmatpush2.bf16.xpose.msra.mxu0 0
        %845 = vmatprep.subr.bf16.mxu0 0
        %846 = vmatpush2.bf16.xpose.msra.mxu0 0
        %847 = vmatprep.subr.bf16.mxu0 0
        %848 = vmatpush2.bf16.xpose.msra.mxu0 0
        %849 = vmatprep.subr.bf16.mxu0 0
        %850 = vmatpush2.bf16.xpose.msra.mxu0 0
        %851 = vmatprep.mubr.bf16.mxu0 0
        %852 = vmatmul.mubr.bf16.gmra.mxu0 %v811
        %v853 = vpop.f32.mrf.mxu0
        %v854 = vadd.f32 0.0, %v853
        %v855 = vpop.f32.mrf.mxu0
        %v856 = vpop.f32.mrf.mxu0
        %v857 = vadd.f32 0.0, %v856
        %v858 = vpop.f32.mrf.mxu0
        %859 = vmatprep.mubr.bf16.mxu0 0
        %860 = vmatmul.mubr.bf16.gmra.mxu0 %v814
        %v861 = vpop.f32.mrf.mxu0
        %v862 = vadd.f32 0.0, %v861
        %v863 = vpop.f32.mrf.mxu0
        %v864 = vpop.f32.mrf.mxu0
        %v865 = vadd.f32 0.0, %v864
        %v866 = vpop.f32.mrf.mxu0
        %867 = vdwg.mxu0
        %v868 = vsel %vm612, %v854, -inf
        %869 = vmax.xlane.f32.xlu0 %v868
        %v870 = vpop.xlane.xlu0 %869
        %v871 = vsel %vm612, %v857, -inf
        %872 = vmax.xlane.f32.xlu0 %v871
        %v873 = vpop.xlane.xlu0 %872
        %v874 = vsel %vm612, %v862, -inf
        %875 = vmax.xlane.f32.xlu0 %v874
        %v876 = vpop.xlane.xlu0 %875
        %v877 = vsel %vm612, %v865, -inf
        %878 = vmax.xlane.f32.xlu0 %v877
        %v879 = vpop.xlane.xlu0 %878
        %v880 = vsub.f32 %v854, %v870
        %v881 = vsub.f32 %v857, %v873
        %v882 = vsub.f32 %v862, %v876
        %v883 = vsub.f32 %v865, %v879
        %v884 = vmul.f32 %v880, 1.442695
        %v885 = vpow.pop %v884
        %v886 = vmul.f32 %v881, 1.442695
        %v887 = vpow.pop %v886
        %v888 = vmul.f32 %v882, 1.442695
        %v889 = vpow.pop %v888
        %v890 = vmul.f32 %v883, 1.442695
        %v891 = vpow.pop %v890
        %v892 = vsel %vm612, %v885, 0.0
        %893 = vadd.xlane.f32.xlu0 %v892
        %v894 = vpop.xlane.xlu0 %893
        %v895 = vsel %vm612, %v887, 0.0
        %896 = vadd.xlane.f32.xlu0 %v895
        %v897 = vpop.xlane.xlu0 %896
        %v898 = vsel %vm612, %v889, 0.0
        %899 = vadd.xlane.f32.xlu0 %v898
        %v900 = vpop.xlane.xlu0 %899
        %v901 = vsel %vm612, %v891, 0.0
        %902 = vadd.xlane.f32.xlu0 %v901
        %v903 = vpop.xlane.xlu0 %902
        %v904 = vrcp.pop %v894
        %v905 = vrcp.pop %v897
        %v906 = vrcp.pop %v900
        %v907 = vrcp.pop %v903
        %v908 = vmul.f32 %v885, %v904
        %v909 = vmul.f32 %v887, %v905
        %v910 = vmul.f32 %v889, %v906
        %v911 = vmul.f32 %v891, %v907
        %v912 = vpack.c.bf16 %v909, %v908
        %v913 = vpack.c.bf16 %v911, %v910
        %914 = vrot.lane.b32.xlu0 %v665, 96
        %v915 = vpop.permute.xlu0 %914
        %v918 = vsel %vm612, %v912, 0
        %v921 = vsel %vm612, %v913, 0
        %923 = vmatprep.subr.bf16.mxu0 0
        %924 = vmatpush1.bf16.msra.mxu0 0
        %925 = vmatprep.subr.bf16.mxu0 0
        %926 = vmatpush1.bf16.msra.mxu0 0
        %927 = vmatprep.subr.bf16.mxu0 0
        %928 = vmatpush1.bf16.msra.mxu0 0
        %929 = vmatprep.subr.bf16.mxu0 0
        %930 = vmatpush1.bf16.msra.mxu0 0
        %931 = vmatprep.subr.bf16.mxu0 0
        %932 = vmatpush1.bf16.msra.mxu0 0
        %933 = vmatprep.subr.bf16.mxu0 0
        %934 = vmatpush1.bf16.msra.mxu0 0
        %935 = vmatprep.subr.bf16.mxu0 0
        %936 = vmatpush1.bf16.msra.mxu0 0
        %937 = vmatprep.subr.bf16.mxu0 0
        %938 = vmatpush1.bf16.msra.mxu0 %v915
        %939 = vmatprep.subr.bf16.mxu0 0
        %940 = vmatpush2.bf16.msra.mxu0 0
        %941 = vmatprep.subr.bf16.mxu0 0
        %942 = vmatpush2.bf16.msra.mxu0 0
        %943 = vmatprep.subr.bf16.mxu0 0
        %944 = vmatpush2.bf16.msra.mxu0 0
        %945 = vmatprep.subr.bf16.mxu0 0
        %946 = vmatpush2.bf16.msra.mxu0 0
        %947 = vmatprep.subr.bf16.mxu0 0
        %948 = vmatpush2.bf16.msra.mxu0 0
        %949 = vmatprep.subr.bf16.mxu0 0
        %950 = vmatpush2.bf16.msra.mxu0 0
        %951 = vmatprep.subr.bf16.mxu0 0
        %952 = vmatpush2.bf16.msra.mxu0 0
        %953 = vmatprep.subr.bf16.mxu0 0
        %954 = vmatpush2.bf16.msra.mxu0 0
        %955 = vmatprep.mubr.bf16.mxu0 0
        %956 = vmatmul.mubr.bf16.gmra.mxu0 %v918
        %v957 = vpop.f32.mrf.mxu0
        %v958 = vadd.f32 0.0, %v957
        %v959 = vpop.f32.mrf.mxu0
        %v960 = vpop.f32.mrf.mxu0
        %v961 = vadd.f32 0.0, %v960
        %v962 = vpop.f32.mrf.mxu0
        %963 = vmatprep.mubr.bf16.mxu0 0
        %964 = vmatmul.mubr.bf16.gmra.mxu0 %v921
        %v965 = vpop.f32.mrf.mxu0
        %v966 = vadd.f32 0.0, %v965
        %v967 = vpop.f32.mrf.mxu0
        %v968 = vpop.f32.mrf.mxu0
        %v969 = vadd.f32 0.0, %v968
        %v970 = vpop.f32.mrf.mxu0
        %971 = vdwg.mxu0
        %v972 = vpack.c.bf16 %v961, %v958
        %v973 = vpack.c.bf16 %v969, %v966
        %v974 = vld [vmem:[%s3 + $0x10] sm:$0xf]
        %v975 = vld [vmem:[%s3 + $0x14] sm:$0xf]
        %v976 = vld [vmem:[%s3 + $0x18] sm:$0xf]
        %v977 = vld [vmem:[%s3 + $0x1c] sm:$0xf]
        %v982 = vunpack.c.l.b16 %v974
        %v983 = vunpack.c.l.b16 %v975
        %v984 = vunpack.c.l.b16 %v976
        %v985 = vunpack.c.l.b16 %v977
        %v986 = vpack.c.b16 %v983, %v982
        %v987 = vpack.c.b16 %v985, %v984
        %v991 = vsel %vm501, %v972, 0
        %v994 = vsel %vm501, %v973, 0
        %996 = vmatprep.subr.bf16.mxu0 0
        %997 = vmatpush1.bf16.msra.mxu0 0
        %998 = vmatprep.subr.bf16.mxu0 0
        %999 = vmatpush1.bf16.msra.mxu0 0
        %1000 = vmatprep.subr.bf16.mxu0 0
        %1001 = vmatpush1.bf16.msra.mxu0 0
        %1002 = vmatprep.subr.bf16.mxu0 0
        %1003 = vmatpush1.bf16.msra.mxu0 0
        %1004 = vmatprep.subr.bf16.mxu0 0
        %1005 = vmatpush1.bf16.msra.mxu0 0
        %1006 = vmatprep.subr.bf16.mxu0 0
        %1007 = vmatpush1.bf16.msra.mxu0 0
        %1008 = vmatprep.subr.bf16.mxu0 0
        %1009 = vmatpush1.bf16.msra.mxu0 %v987
        %1010 = vmatprep.subr.bf16.mxu0 0
        %1011 = vmatpush1.bf16.msra.mxu0 %v986
        %1012 = vmatprep.subr.bf16.mxu0 0
        %1013 = vmatpush2.bf16.msra.mxu0 0
        %1014 = vmatprep.subr.bf16.mxu0 0
        %1015 = vmatpush2.bf16.msra.mxu0 0
        %1016 = vmatprep.subr.bf16.mxu0 0
        %1017 = vmatpush2.bf16.msra.mxu0 0
        %1018 = vmatprep.subr.bf16.mxu0 0
        %1019 = vmatpush2.bf16.msra.mxu0 0
        %1020 = vmatprep.subr.bf16.mxu0 0
        %1021 = vmatpush2.bf16.msra.mxu0 0
        %1022 = vmatprep.subr.bf16.mxu0 0
        %1023 = vmatpush2.bf16.msra.mxu0 0
        %1024 = vmatprep.subr.bf16.mxu0 0
        %1025 = vmatpush2.bf16.msra.mxu0 0
        %1026 = vmatprep.subr.bf16.mxu0 0
        %1027 = vmatpush2.bf16.msra.mxu0 0
        %1028 = vmatprep.mubr.bf16.mxu0 0
        %1029 = vmatmul.mubr.bf16.gmra.mxu0 %v991
        %v1030 = vpop.f32.mrf.mxu0
        %v1031 = vadd.f32 0.0, %v1030
        %v1032 = vpop.f32.mrf.mxu0
        %v1033 = vpop.f32.mrf.mxu0
        %v1034 = vadd.f32 0.0, %v1033
        %v1035 = vpop.f32.mrf.mxu0
        %1036 = vmatprep.mubr.bf16.mxu0 0
        %1037 = vmatmul.mubr.bf16.gmra.mxu0 %v994
        %v1038 = vpop.f32.mrf.mxu0
        %v1039 = vadd.f32 0.0, %v1038
        %v1040 = vpop.f32.mrf.mxu0
        %v1041 = vpop.f32.mrf.mxu0
        %v1042 = vadd.f32 0.0, %v1041
        %v1043 = vpop.f32.mrf.mxu0
        %1044 = vdwg.mxu0
        %v1049 = vunpack.c.l.b16 %v724
        %v1050 = vunpack.c.l.b16 %v725
        %v1051 = vunpack.c.l.b16 %v726
        %v1052 = vunpack.c.l.b16 %v727
        %v1053 = vpack.c.b16 %v1050, %v1049
        %v1054 = vpack.c.b16 %v1052, %v1051
        %v1058 = vsel %vm501, %v722, 0
        %v1061 = vsel %vm501, %v723, 0
        %1063 = vmatprep.subr.bf16.mxu0 0
        %1064 = vmatpush1.bf16.msra.mxu0 0
        %1065 = vmatprep.subr.bf16.mxu0 0
        %1066 = vmatpush1.bf16.msra.mxu0 0
        %1067 = vmatprep.subr.bf16.mxu0 0
        %1068 = vmatpush1.bf16.msra.mxu0 0
        %1069 = vmatprep.subr.bf16.mxu0 0
        %1070 = vmatpush1.bf16.msra.mxu0 0
        %1071 = vmatprep.subr.bf16.mxu0 0
        %1072 = vmatpush1.bf16.msra.mxu0 0
        %1073 = vmatprep.subr.bf16.mxu0 0
        %1074 = vmatpush1.bf16.msra.mxu0 0
        %1075 = vmatprep.subr.bf16.mxu0 0
        %1076 = vmatpush1.bf16.msra.mxu0 %v1054
        %1077 = vmatprep.subr.bf16.mxu0 0
        %1078 = vmatpush1.bf16.msra.mxu0 %v1053
        %1079 = vmatprep.subr.bf16.mxu0 0
        %1080 = vmatpush2.bf16.msra.mxu0 0
        %1081 = vmatprep.subr.bf16.mxu0 0
        %1082 = vmatpush2.bf16.msra.mxu0 0
        %1083 = vmatprep.subr.bf16.mxu0 0
        %1084 = vmatpush2.bf16.msra.mxu0 0
        %1085 = vmatprep.subr.bf16.mxu0 0
        %1086 = vmatpush2.bf16.msra.mxu0 0
        %1087 = vmatprep.subr.bf16.mxu0 0
        %1088 = vmatpush2.bf16.msra.mxu0 0
        %1089 = vmatprep.subr.bf16.mxu0 0
        %1090 = vmatpush2.bf16.msra.mxu0 0
        %1091 = vmatprep.subr.bf16.mxu0 0
        %1092 = vmatpush2.bf16.msra.mxu0 0
        %1093 = vmatprep.subr.bf16.mxu0 0
        %1094 = vmatpush2.bf16.msra.mxu0 0
        %1095 = vmatprep.mubr.bf16.mxu0 0
        %1096 = vmatmul.mubr.bf16.gmra.mxu0 %v1058
        %v1097 = vpop.f32.mrf.mxu0
        %v1098 = vadd.f32 %v1031, %v1097
        %v1099 = vpop.f32.mrf.mxu0
        %v1100 = vpop.f32.mrf.mxu0
        %v1101 = vadd.f32 %v1034, %v1100
        %v1102 = vpop.f32.mrf.mxu0
        %1103 = vmatprep.mubr.bf16.mxu0 0
        %1104 = vmatmul.mubr.bf16.gmra.mxu0 %v1061
        %v1105 = vpop.f32.mrf.mxu0
        %v1106 = vadd.f32 %v1039, %v1105
        %v1107 = vpop.f32.mrf.mxu0
        %v1108 = vpop.f32.mrf.mxu0
        %v1109 = vadd.f32 %v1042, %v1108
        %v1110 = vpop.f32.mrf.mxu0
        %1111 = vdwg.mxu0
        %1112 = vrot.lane.b32.xlu0 %v497, 64
        %v1113 = vpop.permute.xlu0 %1112
        %1114 = vrot.lane.b32.xlu0 %v498, 64
        %v1115 = vpop.permute.xlu0 %1114
        %1116 = vrot.lane.b32.xlu0 %v499, 64
        %v1117 = vpop.permute.xlu0 %1116
        %1118 = vrot.lane.b32.xlu0 %v500, 64
        %v1119 = vpop.permute.xlu0 %1118
        %v1124 = vsel %vm501, %v1113, 0.0
        %1125 = vadd.xlane.f32.xlu0 %v1124
        %v1126 = vpop.xlane.xlu0 %1125
        %v1127 = vsel %vm501, %v1115, 0.0
        %1128 = vadd.xlane.f32.xlu0 %v1127
        %v1129 = vpop.xlane.xlu0 %1128
        %v1130 = vsel %vm501, %v1117, 0.0
        %1131 = vadd.xlane.f32.xlu0 %v1130
        %v1132 = vpop.xlane.xlu0 %1131
        %v1133 = vsel %vm501, %v1119, 0.0
        %1134 = vadd.xlane.f32.xlu0 %v1133
        %v1135 = vpop.xlane.xlu0 %1134
        %v1136 = vmul.f32 %v1126, %v514
        %v1137 = vmul.f32 %v1129, %v514
        %v1138 = vmul.f32 %v1132, %v514
        %v1139 = vmul.f32 %v1135, %v514
        %v1140 = vadd.f32 %v1136, 1e-06
        %v1141 = vadd.f32 %v1137, 1e-06
        %v1142 = vadd.f32 %v1138, 1e-06
        %v1143 = vadd.f32 %v1139, 1e-06
        %v1144 = vrsqrt.pop %v1140
        %v1145 = vrsqrt.pop %v1141
        %v1146 = vrsqrt.pop %v1142
        %v1147 = vrsqrt.pop %v1143
        %v1148 = vmul.f32 %v1144, 0.17677669
        %v1149 = vmul.f32 %v1145, 0.17677669
        %v1150 = vmul.f32 %v1146, 0.17677669
        %v1151 = vmul.f32 %v1147, 0.17677669
        %v1152 = vmul.f32 %v489, %v1148
        %v1153 = vmul.f32 %v490, %v1149
        %v1154 = vmul.f32 %v491, %v1150
        %v1155 = vmul.f32 %v492, %v1151
        %1156 = vrot.lane.b32.xlu0 %v535, 64
        %v1157 = vpop.permute.xlu0 %1156
        %1158 = vrot.lane.b32.xlu0 %v536, 64
        %v1159 = vpop.permute.xlu0 %1158
        %v1162 = vsel %vm501, %v1157, 0.0
        %1163 = vadd.xlane.f32.xlu0 %v1162
        %v1164 = vpop.xlane.xlu0 %1163
        %v1165 = vsel %vm501, %v1159, 0.0
        %1166 = vadd.xlane.f32.xlu0 %v1165
        %v1167 = vpop.xlane.xlu0 %1166
        %v1168 = vmul.f32 %v1164, %v514
        %v1169 = vmul.f32 %v1167, %v514
        %v1170 = vadd.f32 %v1168, 1e-06
        %v1171 = vadd.f32 %v1169, 1e-06
        %v1172 = vrsqrt.pop %v1170
        %v1173 = vrsqrt.pop %v1171
        %v1174 = vmul.f32 %v495, %v1172
        %v1175 = vmul.f32 %v496, %v1173
        %v1176 = vpack.c.bf16 %v1153, %v1152
        %v1177 = vpack.c.bf16 %v1155, %v1154
        %v1178 = vpack.c.bf16 %v1175, %v1174
        %1181 = vrot.lane.b32.xlu0 %v1176, 64
        %v1182 = vpop.permute.xlu0 %1181
        %1183 = vrot.lane.b32.xlu0 %v1177, 64
        %v1184 = vpop.permute.xlu0 %1183
        %1186 = vrot.lane.b32.xlu0 %v1178, 64
        %v1187 = vpop.permute.xlu0 %1186
        %v1189 = vsel %vm501, %v1182, 0
        %v1192 = vsel %vm501, %v1184, 0
        %v1195 = vsel %vm501, %v1187, 0
        %1197 = vmatprep.subr.bf16.mxu0 0
        %1198 = vmatpush1.bf16.xpose.msra.mxu0 0
        %1199 = vmatprep.subr.bf16.mxu0 0
        %1200 = vmatpush1.bf16.xpose.msra.mxu0 0
        %1201 = vmatprep.subr.bf16.mxu0 0
        %1202 = vmatpush1.bf16.xpose.msra.mxu0 0
        %1203 = vmatprep.subr.bf16.mxu0 0
        %1204 = vmatpush1.bf16.xpose.msra.mxu0 0
        %1205 = vmatprep.subr.bf16.mxu0 0
        %1206 = vmatpush1.bf16.xpose.msra.mxu0 0
        %1207 = vmatprep.subr.bf16.mxu0 0
        %1208 = vmatpush1.bf16.xpose.msra.mxu0 0
        %1209 = vmatprep.subr.bf16.mxu0 0
        %1210 = vmatpush1.bf16.xpose.msra.mxu0 0
        %1211 = vmatprep.subr.bf16.mxu0 0
        %1212 = vmatpush1.bf16.xpose.msra.mxu0 %v1195
        %1213 = vmatprep.subr.bf16.mxu0 0
        %1214 = vmatpush2.bf16.xpose.msra.mxu0 0
        %1215 = vmatprep.subr.bf16.mxu0 0
        %1216 = vmatpush2.bf16.xpose.msra.mxu0 0
        %1217 = vmatprep.subr.bf16.mxu0 0
        %1218 = vmatpush2.bf16.xpose.msra.mxu0 0
        %1219 = vmatprep.subr.bf16.mxu0 0
        %1220 = vmatpush2.bf16.xpose.msra.mxu0 0
        %1221 = vmatprep.subr.bf16.mxu0 0
        %1222 = vmatpush2.bf16.xpose.msra.mxu0 0
        %1223 = vmatprep.subr.bf16.mxu0 0
        %1224 = vmatpush2.bf16.xpose.msra.mxu0 0
        %1225 = vmatprep.subr.bf16.mxu0 0
        %1226 = vmatpush2.bf16.xpose.msra.mxu0 0
        %1227 = vmatprep.subr.bf16.mxu0 0
        %1228 = vmatpush2.bf16.xpose.msra.mxu0 0
        %1229 = vmatprep.mubr.bf16.mxu0 0
        %1230 = vmatmul.mubr.bf16.gmra.mxu0 %v1189
        %v1231 = vpop.f32.mrf.mxu0
        %v1232 = vadd.f32 0.0, %v1231
        %v1233 = vpop.f32.mrf.mxu0
        %v1234 = vpop.f32.mrf.mxu0
        %v1235 = vadd.f32 0.0, %v1234
        %v1236 = vpop.f32.mrf.mxu0
        %1237 = vmatprep.mubr.bf16.mxu0 0
        %1238 = vmatmul.mubr.bf16.gmra.mxu0 %v1192
        %v1239 = vpop.f32.mrf.mxu0
        %v1240 = vadd.f32 0.0, %v1239
        %v1241 = vpop.f32.mrf.mxu0
        %v1242 = vpop.f32.mrf.mxu0
        %v1243 = vadd.f32 0.0, %v1242
        %v1244 = vpop.f32.mrf.mxu0
        %1245 = vdwg.mxu0
        %v1246 = vsel %vm612, %v1232, -inf
        %1247 = vmax.xlane.f32.xlu0 %v1246
        %v1248 = vpop.xlane.xlu0 %1247
        %v1249 = vsel %vm612, %v1235, -inf
        %1250 = vmax.xlane.f32.xlu0 %v1249
        %v1251 = vpop.xlane.xlu0 %1250
        %v1252 = vsel %vm612, %v1240, -inf
        %1253 = vmax.xlane.f32.xlu0 %v1252
        %v1254 = vpop.xlane.xlu0 %1253
        %v1255 = vsel %vm612, %v1243, -inf
        %1256 = vmax.xlane.f32.xlu0 %v1255
        %v1257 = vpop.xlane.xlu0 %1256
        %v1258 = vsub.f32 %v1232, %v1248
        %v1259 = vsub.f32 %v1235, %v1251
        %v1260 = vsub.f32 %v1240, %v1254
        %v1261 = vsub.f32 %v1243, %v1257
        %v1262 = vmul.f32 %v1258, 1.442695
        %v1263 = vpow.pop %v1262
        %v1264 = vmul.f32 %v1259, 1.442695
        %v1265 = vpow.pop %v1264
        %v1266 = vmul.f32 %v1260, 1.442695
        %v1267 = vpow.pop %v1266
        %v1268 = vmul.f32 %v1261, 1.442695
        %v1269 = vpow.pop %v1268
        %v1270 = vsel %vm612, %v1263, 0.0
        %1271 = vadd.xlane.f32.xlu0 %v1270
        %v1272 = vpop.xlane.xlu0 %1271
        %v1273 = vsel %vm612, %v1265, 0.0
        %1274 = vadd.xlane.f32.xlu0 %v1273
        %v1275 = vpop.xlane.xlu0 %1274
        %v1276 = vsel %vm612, %v1267, 0.0
        %1277 = vadd.xlane.f32.xlu0 %v1276
        %v1278 = vpop.xlane.xlu0 %1277
        %v1279 = vsel %vm612, %v1269, 0.0
        %1280 = vadd.xlane.f32.xlu0 %v1279
        %v1281 = vpop.xlane.xlu0 %1280
        %v1282 = vrcp.pop %v1272
        %v1283 = vrcp.pop %v1275
        %v1284 = vrcp.pop %v1278
        %v1285 = vrcp.pop %v1281
        %v1286 = vmul.f32 %v1263, %v1282
        %v1287 = vmul.f32 %v1265, %v1283
        %v1288 = vmul.f32 %v1267, %v1284
        %v1289 = vmul.f32 %v1269, %v1285
        %v1290 = vpack.c.bf16 %v1287, %v1286
        %v1291 = vpack.c.bf16 %v1289, %v1288
        %1292 = vrot.lane.b32.xlu0 %v665, 64
        %v1293 = vpop.permute.xlu0 %1292
        %v1296 = vsel %vm612, %v1290, 0
        %v1299 = vsel %vm612, %v1291, 0
        %1301 = vmatprep.subr.bf16.mxu0 0
        %1302 = vmatpush1.bf16.msra.mxu0 0
        %1303 = vmatprep.subr.bf16.mxu0 0
        %1304 = vmatpush1.bf16.msra.mxu0 0
        %1305 = vmatprep.subr.bf16.mxu0 0
        %1306 = vmatpush1.bf16.msra.mxu0 0
        %1307 = vmatprep.subr.bf16.mxu0 0
        %1308 = vmatpush1.bf16.msra.mxu0 0
        %1309 = vmatprep.subr.bf16.mxu0 0
        %1310 = vmatpush1.bf16.msra.mxu0 0
        %1311 = vmatprep.subr.bf16.mxu0 0
        %1312 = vmatpush1.bf16.msra.mxu0 0
        %1313 = vmatprep.subr.bf16.mxu0 0
        %1314 = vmatpush1.bf16.msra.mxu0 0
        %1315 = vmatprep.subr.bf16.mxu0 0
        %1316 = vmatpush1.bf16.msra.mxu0 %v1293
        %1317 = vmatprep.subr.bf16.mxu0 0
        %1318 = vmatpush2.bf16.msra.mxu0 0
        %1319 = vmatprep.subr.bf16.mxu0 0
        %1320 = vmatpush2.bf16.msra.mxu0 0
        %1321 = vmatprep.subr.bf16.mxu0 0
        %1322 = vmatpush2.bf16.msra.mxu0 0
        %1323 = vmatprep.subr.bf16.mxu0 0
        %1324 = vmatpush2.bf16.msra.mxu0 0
        %1325 = vmatprep.subr.bf16.mxu0 0
        %1326 = vmatpush2.bf16.msra.mxu0 0
        %1327 = vmatprep.subr.bf16.mxu0 0
        %1328 = vmatpush2.bf16.msra.mxu0 0
        %1329 = vmatprep.subr.bf16.mxu0 0
        %1330 = vmatpush2.bf16.msra.mxu0 0
        %1331 = vmatprep.subr.bf16.mxu0 0
        %1332 = vmatpush2.bf16.msra.mxu0 0
        %1333 = vmatprep.mubr.bf16.mxu0 0
        %1334 = vmatmul.mubr.bf16.gmra.mxu0 %v1296
        %v1335 = vpop.f32.mrf.mxu0
        %v1336 = vadd.f32 0.0, %v1335
        %v1337 = vpop.f32.mrf.mxu0
        %v1338 = vpop.f32.mrf.mxu0
        %v1339 = vadd.f32 0.0, %v1338
        %v1340 = vpop.f32.mrf.mxu0
        %1341 = vmatprep.mubr.bf16.mxu0 0
        %1342 = vmatmul.mubr.bf16.gmra.mxu0 %v1299
        %v1343 = vpop.f32.mrf.mxu0
        %v1344 = vadd.f32 0.0, %v1343
        %v1345 = vpop.f32.mrf.mxu0
        %v1346 = vpop.f32.mrf.mxu0
        %v1347 = vadd.f32 0.0, %v1346
        %v1348 = vpop.f32.mrf.mxu0
        %1349 = vdwg.mxu0
        %v1350 = vpack.c.bf16 %v1339, %v1336
        %v1351 = vpack.c.bf16 %v1347, %v1344
        %v1352 = vld [vmem:[%s3 + $0x20] sm:$0xf]
        %v1353 = vld [vmem:[%s3 + $0x24] sm:$0xf]
        %v1354 = vld [vmem:[%s3 + $0x28] sm:$0xf]
        %v1355 = vld [vmem:[%s3 + $0x2c] sm:$0xf]
        %v1360 = vunpack.c.l.b16 %v1352
        %v1361 = vunpack.c.l.b16 %v1353
        %v1362 = vunpack.c.l.b16 %v1354
        %v1363 = vunpack.c.l.b16 %v1355
        %v1364 = vpack.c.b16 %v1361, %v1360
        %v1365 = vpack.c.b16 %v1363, %v1362
        %v1369 = vsel %vm501, %v1350, 0
        %v1372 = vsel %vm501, %v1351, 0
        %1374 = vmatprep.subr.bf16.mxu0 0
        %1375 = vmatpush1.bf16.msra.mxu0 0
        %1376 = vmatprep.subr.bf16.mxu0 0
        %1377 = vmatpush1.bf16.msra.mxu0 0
        %1378 = vmatprep.subr.bf16.mxu0 0
        %1379 = vmatpush1.bf16.msra.mxu0 0
        %1380 = vmatprep.subr.bf16.mxu0 0
        %1381 = vmatpush1.bf16.msra.mxu0 0
        %1382 = vmatprep.subr.bf16.mxu0 0
        %1383 = vmatpush1.bf16.msra.mxu0 0
        %1384 = vmatprep.subr.bf16.mxu0 0
        %1385 = vmatpush1.bf16.msra.mxu0 0
        %1386 = vmatprep.subr.bf16.mxu0 0
        %1387 = vmatpush1.bf16.msra.mxu0 %v1365
        %1388 = vmatprep.subr.bf16.mxu0 0
        %1389 = vmatpush1.bf16.msra.mxu0 %v1364
        %1390 = vmatprep.subr.bf16.mxu0 0
        %1391 = vmatpush2.bf16.msra.mxu0 0
        %1392 = vmatprep.subr.bf16.mxu0 0
        %1393 = vmatpush2.bf16.msra.mxu0 0
        %1394 = vmatprep.subr.bf16.mxu0 0
        %1395 = vmatpush2.bf16.msra.mxu0 0
        %1396 = vmatprep.subr.bf16.mxu0 0
        %1397 = vmatpush2.bf16.msra.mxu0 0
        %1398 = vmatprep.subr.bf16.mxu0 0
        %1399 = vmatpush2.bf16.msra.mxu0 0
        %1400 = vmatprep.subr.bf16.mxu0 0
        %1401 = vmatpush2.bf16.msra.mxu0 0
        %1402 = vmatprep.subr.bf16.mxu0 0
        %1403 = vmatpush2.bf16.msra.mxu0 0
        %1404 = vmatprep.subr.bf16.mxu0 0
        %1405 = vmatpush2.bf16.msra.mxu0 0
        %1406 = vmatprep.mubr.bf16.mxu0 0
        %1407 = vmatmul.mubr.bf16.gmra.mxu0 %v1369
        %v1408 = vpop.f32.mrf.mxu0
        %v1409 = vadd.f32 0.0, %v1408
        %v1410 = vpop.f32.mrf.mxu0
        %v1411 = vpop.f32.mrf.mxu0
        %v1412 = vadd.f32 0.0, %v1411
        %v1413 = vpop.f32.mrf.mxu0
        %1414 = vmatprep.mubr.bf16.mxu0 0
        %1415 = vmatmul.mubr.bf16.gmra.mxu0 %v1372
        %v1416 = vpop.f32.mrf.mxu0
        %v1417 = vadd.f32 0.0, %v1416
        %v1418 = vpop.f32.mrf.mxu0
        %v1419 = vpop.f32.mrf.mxu0
        %v1420 = vadd.f32 0.0, %v1419
        %v1421 = vpop.f32.mrf.mxu0
        %1422 = vdwg.mxu0
        %v1423 = vadd.f32 %v1098, %v1409
        %v1424 = vadd.f32 %v1101, %v1412
        %v1425 = vadd.f32 %v1106, %v1417
        %v1426 = vadd.f32 %v1109, %v1420
        %1427 = vrot.lane.b32.xlu0 %v497, 32
        %v1428 = vpop.permute.xlu0 %1427
        %1429 = vrot.lane.b32.xlu0 %v498, 32
        %v1430 = vpop.permute.xlu0 %1429
        %1431 = vrot.lane.b32.xlu0 %v499, 32
        %v1432 = vpop.permute.xlu0 %1431
        %1433 = vrot.lane.b32.xlu0 %v500, 32
        %v1434 = vpop.permute.xlu0 %1433
        %v1439 = vsel %vm501, %v1428, 0.0
        %1440 = vadd.xlane.f32.xlu0 %v1439
        %v1441 = vpop.xlane.xlu0 %1440
        %v1442 = vsel %vm501, %v1430, 0.0
        %1443 = vadd.xlane.f32.xlu0 %v1442
        %v1444 = vpop.xlane.xlu0 %1443
        %v1445 = vsel %vm501, %v1432, 0.0
        %1446 = vadd.xlane.f32.xlu0 %v1445
        %v1447 = vpop.xlane.xlu0 %1446
        %v1448 = vsel %vm501, %v1434, 0.0
        %1449 = vadd.xlane.f32.xlu0 %v1448
        %v1450 = vpop.xlane.xlu0 %1449
        %v1451 = vmul.f32 %v1441, %v514
        %v1452 = vmul.f32 %v1444, %v514
        %v1453 = vmul.f32 %v1447, %v514
        %v1454 = vmul.f32 %v1450, %v514
        %v1455 = vadd.f32 %v1451, 1e-06
        %v1456 = vadd.f32 %v1452, 1e-06
        %v1457 = vadd.f32 %v1453, 1e-06
        %v1458 = vadd.f32 %v1454, 1e-06
        %v1459 = vrsqrt.pop %v1455
        %v1460 = vrsqrt.pop %v1456
        %v1461 = vrsqrt.pop %v1457
        %v1462 = vrsqrt.pop %v1458
        %v1463 = vmul.f32 %v1459, 0.17677669
        %v1464 = vmul.f32 %v1460, 0.17677669
        %v1465 = vmul.f32 %v1461, 0.17677669
        %v1466 = vmul.f32 %v1462, 0.17677669
        %v1467 = vmul.f32 %v489, %v1463
        %v1468 = vmul.f32 %v490, %v1464
        %v1469 = vmul.f32 %v491, %v1465
        %v1470 = vmul.f32 %v492, %v1466
        %1471 = vrot.lane.b32.xlu0 %v535, 32
        %v1472 = vpop.permute.xlu0 %1471
        %1473 = vrot.lane.b32.xlu0 %v536, 32
        %v1474 = vpop.permute.xlu0 %1473
        %v1477 = vsel %vm501, %v1472, 0.0
        %1478 = vadd.xlane.f32.xlu0 %v1477
        %v1479 = vpop.xlane.xlu0 %1478
        %v1480 = vsel %vm501, %v1474, 0.0
        %1481 = vadd.xlane.f32.xlu0 %v1480
        %v1482 = vpop.xlane.xlu0 %1481
        %v1483 = vmul.f32 %v1479, %v514
        %v1484 = vmul.f32 %v1482, %v514
        %v1485 = vadd.f32 %v1483, 1e-06
        %v1486 = vadd.f32 %v1484, 1e-06
        %v1487 = vrsqrt.pop %v1485
        %v1488 = vrsqrt.pop %v1486
        %v1489 = vmul.f32 %v495, %v1487
        %v1490 = vmul.f32 %v496, %v1488
        %v1491 = vpack.c.bf16 %v1468, %v1467
        %v1492 = vpack.c.bf16 %v1470, %v1469
        %v1493 = vpack.c.bf16 %v1490, %v1489
        %1496 = vrot.lane.b32.xlu0 %v1491, 32
        %v1497 = vpop.permute.xlu0 %1496
        %1498 = vrot.lane.b32.xlu0 %v1492, 32
        %v1499 = vpop.permute.xlu0 %1498
        %1501 = vrot.lane.b32.xlu0 %v1493, 32
        %v1502 = vpop.permute.xlu0 %1501
        %v1504 = vsel %vm501, %v1497, 0
        %v1507 = vsel %vm501, %v1499, 0
        %v1510 = vsel %vm501, %v1502, 0
        %1512 = vmatprep.subr.bf16.mxu0 0
        %1513 = vmatpush1.bf16.xpose.msra.mxu0 0
        %1514 = vmatprep.subr.bf16.mxu0 0
        %1515 = vmatpush1.bf16.xpose.msra.mxu0 0
        %1516 = vmatprep.subr.bf16.mxu0 0
        %1517 = vmatpush1.bf16.xpose.msra.mxu0 0
        %1518 = vmatprep.subr.bf16.mxu0 0
        %1519 = vmatpush1.bf16.xpose.msra.mxu0 0
        %1520 = vmatprep.subr.bf16.mxu0 0
        %1521 = vmatpush1.bf16.xpose.msra.mxu0 0
        %1522 = vmatprep.subr.bf16.mxu0 0
        %1523 = vmatpush1.bf16.xpose.msra.mxu0 0
        %1524 = vmatprep.subr.bf16.mxu0 0
        %1525 = vmatpush1.bf16.xpose.msra.mxu0 0
        %1526 = vmatprep.subr.bf16.mxu0 0
        %1527 = vmatpush1.bf16.xpose.msra.mxu0 %v1510
        %1528 = vmatprep.subr.bf16.mxu0 0
        %1529 = vmatpush2.bf16.xpose.msra.mxu0 0
        %1530 = vmatprep.subr.bf16.mxu0 0
        %1531 = vmatpush2.bf16.xpose.msra.mxu0 0
        %1532 = vmatprep.subr.bf16.mxu0 0
        %1533 = vmatpush2.bf16.xpose.msra.mxu0 0
        %1534 = vmatprep.subr.bf16.mxu0 0
        %1535 = vmatpush2.bf16.xpose.msra.mxu0 0
        %1536 = vmatprep.subr.bf16.mxu0 0
        %1537 = vmatpush2.bf16.xpose.msra.mxu0 0
        %1538 = vmatprep.subr.bf16.mxu0 0
        %1539 = vmatpush2.bf16.xpose.msra.mxu0 0
        %1540 = vmatprep.subr.bf16.mxu0 0
        %1541 = vmatpush2.bf16.xpose.msra.mxu0 0
        %1542 = vmatprep.subr.bf16.mxu0 0
        %1543 = vmatpush2.bf16.xpose.msra.mxu0 0
        %1544 = vmatprep.mubr.bf16.mxu0 0
        %1545 = vmatmul.mubr.bf16.gmra.mxu0 %v1504
        %v1546 = vpop.f32.mrf.mxu0
        %v1547 = vadd.f32 0.0, %v1546
        %v1548 = vpop.f32.mrf.mxu0
        %v1549 = vpop.f32.mrf.mxu0
        %v1550 = vadd.f32 0.0, %v1549
        %v1551 = vpop.f32.mrf.mxu0
        %1552 = vmatprep.mubr.bf16.mxu0 0
        %1553 = vmatmul.mubr.bf16.gmra.mxu0 %v1507
        %v1554 = vpop.f32.mrf.mxu0
        %v1555 = vadd.f32 0.0, %v1554
        %v1556 = vpop.f32.mrf.mxu0
        %v1557 = vpop.f32.mrf.mxu0
        %v1558 = vadd.f32 0.0, %v1557
        %v1559 = vpop.f32.mrf.mxu0
        %1560 = vdwg.mxu0
        %v1561 = vsel %vm612, %v1547, -inf
        %1562 = vmax.xlane.f32.xlu0 %v1561
        %v1563 = vpop.xlane.xlu0 %1562
        %v1564 = vsel %vm612, %v1550, -inf
        %1565 = vmax.xlane.f32.xlu0 %v1564
        %v1566 = vpop.xlane.xlu0 %1565
        %v1567 = vsel %vm612, %v1555, -inf
        %1568 = vmax.xlane.f32.xlu0 %v1567
        %v1569 = vpop.xlane.xlu0 %1568
        %v1570 = vsel %vm612, %v1558, -inf
        %1571 = vmax.xlane.f32.xlu0 %v1570
        %v1572 = vpop.xlane.xlu0 %1571
        %v1573 = vsub.f32 %v1547, %v1563
        %v1574 = vsub.f32 %v1550, %v1566
        %v1575 = vsub.f32 %v1555, %v1569
        %v1576 = vsub.f32 %v1558, %v1572
        %v1577 = vmul.f32 %v1573, 1.442695
        %v1578 = vpow.pop %v1577
        %v1579 = vmul.f32 %v1574, 1.442695
        %v1580 = vpow.pop %v1579
        %v1581 = vmul.f32 %v1575, 1.442695
        %v1582 = vpow.pop %v1581
        %v1583 = vmul.f32 %v1576, 1.442695
        %v1584 = vpow.pop %v1583
        %v1585 = vsel %vm612, %v1578, 0.0
        %1586 = vadd.xlane.f32.xlu0 %v1585
        %v1587 = vpop.xlane.xlu0 %1586
        %v1588 = vsel %vm612, %v1580, 0.0
        %1589 = vadd.xlane.f32.xlu0 %v1588
        %v1590 = vpop.xlane.xlu0 %1589
        %v1591 = vsel %vm612, %v1582, 0.0
        %1592 = vadd.xlane.f32.xlu0 %v1591
        %v1593 = vpop.xlane.xlu0 %1592
        %v1594 = vsel %vm612, %v1584, 0.0
        %1595 = vadd.xlane.f32.xlu0 %v1594
        %v1596 = vpop.xlane.xlu0 %1595
        %v1597 = vrcp.pop %v1587
        %v1598 = vrcp.pop %v1590
        %v1599 = vrcp.pop %v1593
        %v1600 = vrcp.pop %v1596
        %v1601 = vmul.f32 %v1578, %v1597
        %v1602 = vmul.f32 %v1580, %v1598
        %v1603 = vmul.f32 %v1582, %v1599
        %v1604 = vmul.f32 %v1584, %v1600
        %v1605 = vpack.c.bf16 %v1602, %v1601
        %v1606 = vpack.c.bf16 %v1604, %v1603
        %1607 = vrot.lane.b32.xlu0 %v665, 32
        %v1608 = vpop.permute.xlu0 %1607
        %v1611 = vsel %vm612, %v1605, 0
        %v1614 = vsel %vm612, %v1606, 0
        %1616 = vmatprep.subr.bf16.mxu0 0
        %1617 = vmatpush1.bf16.msra.mxu0 0
        %1618 = vmatprep.subr.bf16.mxu0 0
        %1619 = vmatpush1.bf16.msra.mxu0 0
        %1620 = vmatprep.subr.bf16.mxu0 0
        %1621 = vmatpush1.bf16.msra.mxu0 0
        %1622 = vmatprep.subr.bf16.mxu0 0
        %1623 = vmatpush1.bf16.msra.mxu0 0
        %1624 = vmatprep.subr.bf16.mxu0 0
        %1625 = vmatpush1.bf16.msra.mxu0 0
        %1626 = vmatprep.subr.bf16.mxu0 0
        %1627 = vmatpush1.bf16.msra.mxu0 0
        %1628 = vmatprep.subr.bf16.mxu0 0
        %1629 = vmatpush1.bf16.msra.mxu0 0
        %1630 = vmatprep.subr.bf16.mxu0 0
        %1631 = vmatpush1.bf16.msra.mxu0 %v1608
        %1632 = vmatprep.subr.bf16.mxu0 0
        %1633 = vmatpush2.bf16.msra.mxu0 0
        %1634 = vmatprep.subr.bf16.mxu0 0
        %1635 = vmatpush2.bf16.msra.mxu0 0
        %1636 = vmatprep.subr.bf16.mxu0 0
        %1637 = vmatpush2.bf16.msra.mxu0 0
        %1638 = vmatprep.subr.bf16.mxu0 0
        %1639 = vmatpush2.bf16.msra.mxu0 0
        %1640 = vmatprep.subr.bf16.mxu0 0
        %1641 = vmatpush2.bf16.msra.mxu0 0
        %1642 = vmatprep.subr.bf16.mxu0 0
        %1643 = vmatpush2.bf16.msra.mxu0 0
        %1644 = vmatprep.subr.bf16.mxu0 0
        %1645 = vmatpush2.bf16.msra.mxu0 0
        %1646 = vmatprep.subr.bf16.mxu0 0
        %1647 = vmatpush2.bf16.msra.mxu0 0
        %1648 = vmatprep.mubr.bf16.mxu0 0
        %1649 = vmatmul.mubr.bf16.gmra.mxu0 %v1611
        %v1650 = vpop.f32.mrf.mxu0
        %v1651 = vadd.f32 0.0, %v1650
        %v1652 = vpop.f32.mrf.mxu0
        %v1653 = vpop.f32.mrf.mxu0
        %v1654 = vadd.f32 0.0, %v1653
        %v1655 = vpop.f32.mrf.mxu0
        %1656 = vmatprep.mubr.bf16.mxu0 0
        %1657 = vmatmul.mubr.bf16.gmra.mxu0 %v1614
        %v1658 = vpop.f32.mrf.mxu0
        %v1659 = vadd.f32 0.0, %v1658
        %v1660 = vpop.f32.mrf.mxu0
        %v1661 = vpop.f32.mrf.mxu0
        %v1662 = vadd.f32 0.0, %v1661
        %v1663 = vpop.f32.mrf.mxu0
        %1664 = vdwg.mxu0
        %v1665 = vpack.c.bf16 %v1654, %v1651
        %v1666 = vpack.c.bf16 %v1662, %v1659
        %v1667 = vld [vmem:[%s3 + $0x30] sm:$0xf]
        %v1668 = vld [vmem:[%s3 + $0x34] sm:$0xf]
        %v1669 = vld [vmem:[%s3 + $0x38] sm:$0xf]
        %v1670 = vld [vmem:[%s3 + $0x3c] sm:$0xf]
        %v1675 = vunpack.c.l.b16 %v1667
        %v1676 = vunpack.c.l.b16 %v1668
        %v1677 = vunpack.c.l.b16 %v1669
        %v1678 = vunpack.c.l.b16 %v1670
        %v1679 = vpack.c.b16 %v1676, %v1675
        %v1680 = vpack.c.b16 %v1678, %v1677
        %v1684 = vsel %vm501, %v1665, 0
        %v1687 = vsel %vm501, %v1666, 0
        %1689 = vmatprep.subr.bf16.mxu0 0
        %1690 = vmatpush1.bf16.msra.mxu0 0
        %1691 = vmatprep.subr.bf16.mxu0 0
        %1692 = vmatpush1.bf16.msra.mxu0 0
        %1693 = vmatprep.subr.bf16.mxu0 0
        %1694 = vmatpush1.bf16.msra.mxu0 0
        %1695 = vmatprep.subr.bf16.mxu0 0
        %1696 = vmatpush1.bf16.msra.mxu0 0
        %1697 = vmatprep.subr.bf16.mxu0 0
        %1698 = vmatpush1.bf16.msra.mxu0 0
        %1699 = vmatprep.subr.bf16.mxu0 0
        %1700 = vmatpush1.bf16.msra.mxu0 0
        %1701 = vmatprep.subr.bf16.mxu0 0
        %1702 = vmatpush1.bf16.msra.mxu0 %v1680
        %1703 = vmatprep.subr.bf16.mxu0 0
        %1704 = vmatpush1.bf16.msra.mxu0 %v1679
        %1705 = vmatprep.subr.bf16.mxu0 0
        %1706 = vmatpush2.bf16.msra.mxu0 0
        %1707 = vmatprep.subr.bf16.mxu0 0
        %1708 = vmatpush2.bf16.msra.mxu0 0
        %1709 = vmatprep.subr.bf16.mxu0 0
        %1710 = vmatpush2.bf16.msra.mxu0 0
        %1711 = vmatprep.subr.bf16.mxu0 0
        %1712 = vmatpush2.bf16.msra.mxu0 0
        %1713 = vmatprep.subr.bf16.mxu0 0
        %1714 = vmatpush2.bf16.msra.mxu0 0
        %1715 = vmatprep.subr.bf16.mxu0 0
        %1716 = vmatpush2.bf16.msra.mxu0 0
        %1717 = vmatprep.subr.bf16.mxu0 0
        %1718 = vmatpush2.bf16.msra.mxu0 0
        %1719 = vmatprep.subr.bf16.mxu0 0
        %1720 = vmatpush2.bf16.msra.mxu0 0
        %1721 = vmatprep.mubr.bf16.mxu0 0
        %1722 = vmatmul.mubr.bf16.gmra.mxu0 %v1684
        %v1723 = vpop.f32.mrf.mxu0
        %v1724 = vadd.f32 0.0, %v1723
        %v1725 = vpop.f32.mrf.mxu0
        %v1726 = vpop.f32.mrf.mxu0
        %v1727 = vadd.f32 0.0, %v1726
        %v1728 = vpop.f32.mrf.mxu0
        %1729 = vmatprep.mubr.bf16.mxu0 0
        %1730 = vmatmul.mubr.bf16.gmra.mxu0 %v1687
        %v1731 = vpop.f32.mrf.mxu0
        %v1732 = vadd.f32 0.0, %v1731
        %v1733 = vpop.f32.mrf.mxu0
        %v1734 = vpop.f32.mrf.mxu0
        %v1735 = vadd.f32 0.0, %v1734
        %v1736 = vpop.f32.mrf.mxu0
        %1737 = vdwg.mxu0
        %v1738 = vadd.f32 %v1423, %v1724
        %v1739 = vadd.f32 %v1424, %v1727
        %v1740 = vadd.f32 %v1425, %v1732
        %v1741 = vadd.f32 %v1426, %v1735
        %v1742 = vld [vmem:[%s463 + $0x5] sm:$0x1]
        %v1743 = vld [vmem:[%s472] sm:$0xff]
        %v1744 = vld [vmem:[%s472 + $0x8] sm:$0xff]
        %v1745 = vld [vmem:[%s472 + $0x10] sm:$0xff]
        %v1746 = vld [vmem:[%s472 + $0x18] sm:$0xff]
        %v1747 = vlaneseq
        %v1748 = vshrl.u32 %v1747, 7
        %v1749 = vsub.s32 0, %v1748
        %v1750 = vrot.slane %v1742, %v1749
        %v1751 = vmul.f32 %v1738, %v1750
        %v1752 = vmul.f32 %v1739, %v1750
        %v1753 = vmul.f32 %v1740, %v1750
        %v1754 = vmul.f32 %v1741, %v1750
        %v1755 = vadd.f32 %v1743, %v1751
        %v1756 = vadd.f32 %v1744, %v1752
        %v1757 = vadd.f32 %v1745, %v1753
        %v1758 = vadd.f32 %v1746, %v1754
        %1759 = vst [vmem:[%s482] sm:$0xff] %v1755
        %1760 = vst [vmem:[%s482 + $0x8] sm:$0xff] %v1756
        %1761 = vst [vmem:[%s482 + $0x10] sm:$0xff] %v1757
        %1762 = vst [vmem:[%s482 + $0x18] sm:$0xff] %v1758
        %s1763 = smul.u32 4, %s22
        %p1764 = scmp.lt.s32.totalorder %s21, 1
        %s1765 = scalar_select %p1764, %s21, 1
        %p1766 = scmp.lt.s32.totalorder %s1763, 3
        %s1767 = scalar_select %p1766, %s1763, 3
        %s1768 = smul.addr %s1765, 4
        %s1769 = sadd.s32 %s1767, %s1768
        %s1770 = smul.addr %s1769, 8
        %s1771 = scalar_lea.vmem %s6, %s1770
        // Predicated region
        $region127: #{dit_block_forward.11} parent=117 // pred_check
          %p1772 = pneg %p204
        $region128: #{dit_block_forward.11} parent=117 // pred_check_branch
          %1774 = sbr.rel (%p1772) target = $region130
        $region129: #{dit_block_forward.11} parent=117 // pred_region
          %s1775 = smul.u32 4, %s22
        $region130: #{dit_block_forward.11} parent=117 // pred_fallthru
          _
      $region118: #{dit_block_forward.11} parent=5 // pred_fallthru
        _
      %p1776 = scmp.le.s32.totalorder 2, %s12
      // Predicated region
      $region131: #{dit_block_forward.11} parent=5 // pred_check
        %p1777 = pneg %p1776
      $region132: #{dit_block_forward.11} parent=5 // pred_check_branch
        %1779 = sbr.rel (%p1777) target = $region134
      $region133: #{dit_block_forward.11} parent=5 // pred_region
        %s1780 = ssub.s32 %s12, 2
        // Predicated region
        $region135: #{dit_block_forward.11} parent=133 // pred_check
          %p1781 = pneg %p210
        $region136: #{dit_block_forward.11} parent=133 // pred_check_branch
          %1783 = sbr.rel (%p1781) target = $region138
        $region137: #{dit_block_forward.11} parent=133 // pred_region
          %s1784 = smul.u32 4, %s24
          %p1785 = scmp.lt.s32.totalorder %s23, 1
          %s1786 = scalar_select %p1785, %s23, 1
          %p1787 = scmp.lt.s32.totalorder %s1784, 3
          %s1788 = scalar_select %p1787, %s1784, 3
          %s1789 = smul.addr %s1786, 4
          %s1790 = sadd.s32 %s1788, %s1789
          %s1791 = smul.addr %s1790, 8
          %s1792 = scalar_lea.vmem %s6, %s1791
        $region138: #{dit_block_forward.11} parent=133 // pred_fallthru
          _
      $region134: #{dit_block_forward.11} parent=5 // pred_fallthru
        _
    $region6: #{dit_block_forward.11} parent=1 // loop_footer
      %s16 = sadd.s32 1, %s12
    $region7: #{dit_block_forward.11} parent=1 // loop_footer_branch
      %11 = sbr.rel target = $region3
    $region8: #{dit_block_forward.11} parent=1 // loop_exit
      _

</llo_original>
